<compile_context>
chip_gen: v7x
topology: tpu7x:2x2x1
jax: 0.10.0
libtpu: 0.0.40
codegen_flags: <defaults>
</compile_context>

<pallas_src>
import jax
import jax.numpy as jnp
from jax.experimental import pallas as pl
from jax.experimental.pallas import tpu as pltpu

EPS = 1e-5                      # nn.BatchNorm2d default eps
LANES = 128                     # TPU lane width -> pad channels to multiple
VMEM_LIMIT = 32 * 1024 * 1024   # safe on v5e/v6e/v7x; raise toward 96 MiB on
                                # v5e/v6e if you grow the tiles


def _round_up(x, m):
    return (x + m - 1) // m * m


def _pick_tile_m(m):
    """Largest row tile (<=512) dividing m that still gives >=2 grid steps."""
    for t in (512, 256, 128, 64, 32, 16, 8):
        if m % t == 0 and m // t >= 2:
            return t
    return m


# --------------------------- kernel building blocks ------------------------ #

def _conv3x3_accumulate(acc_sc, xpad_sc, w_ref, H, W, Cp):
    """3x3 conv as 9 shifted bf16 MXU matmuls accumulated into a f32 scratch.

    xpad_sc : [H+2, W+2, Cp] f32 VMEM scratch (zero halo, interior = input)
    w_ref   : [9, Cp, Cp]    bf16 per-tap weights (tap index = dh*3 + dw)
    returns : [H*W, Cp]      f32 conv output
    """
    HW = H * W
    acc_sc[...] = jnp.zeros_like(acc_sc)
    for dh in range(3):
        for dw in range(3):
            xs = xpad_sc[dh:dh + H, dw:dw + W, :]            # [H, W, Cp] f32
            xs = xs.reshape(HW, Cp).astype(jnp.bfloat16)     # MXU operand
            acc_sc[...] += jnp.dot(xs, w_ref[dh * 3 + dw],
                                   preferred_element_type=jnp.float32)
    return acc_sc[...]


def _accumulate_stats(stat_sc, y):
    """Accumulate per-channel sum / sum-of-squares (f32) across grid steps."""
    stat_sc[0:1, :] = stat_sc[0:1, :] + jnp.sum(y, axis=0, keepdims=True)
    stat_sc[1:2, :] = stat_sc[1:2, :] + jnp.sum(y * y, axis=0, keepdims=True)


# ------------------------------ pallas_calls ------------------------------- #

def _conv_stats_call(x_bf, w_taps):
    """conv3x3 (stride 1, pad 1) + BN batch-statistics accumulation.

    x_bf [N,H,W,Cp] bf16, w_taps [9,Cp,Cp] bf16 ->
      y [N,H,W,Cp] f32 (raw conv output), stats [2,Cp] f32 (sum, sum-sq).
    """
    N, H, W, Cp = x_bf.shape
    HW = H * W

    def kernel(x_ref, w_ref, y_ref, stats_ref, xpad_sc, acc_sc, stat_sc):
        n = pl.program_id(0)

        @pl.when(n == 0)
        def _init():
            xpad_sc[...] = jnp.zeros_like(xpad_sc)   # zero the halo once
            stat_sc[...] = jnp.zeros_like(stat_sc)

        xpad_sc[1:H + 1, 1:W + 1, :] = x_ref[...].astype(jnp.float32)
        y = _conv3x3_accumulate(acc_sc, xpad_sc, w_ref, H, W, Cp)
        _accumulate_stats(stat_sc, y)
        y_ref[...] = y.reshape(H, W, Cp)
        stats_ref[...] = stat_sc[...]                # resident block: last write wins

    flops = 2 * N * HW * (9 * Cp) * Cp
    bytes_accessed = x_bf.size * 2 + w_taps.size * 2 + N * HW * Cp * 4 + 2 * Cp * 4
    return pl.pallas_call(
        kernel,
        out_shape=(jax.ShapeDtypeStruct((N, H, W, Cp), jnp.float32),
                   jax.ShapeDtypeStruct((2, Cp), jnp.float32)),
        grid=(N,),
        in_specs=[pl.BlockSpec((None, H, W, Cp), lambda n: (n, 0, 0, 0)),
                  pl.BlockSpec((9, Cp, Cp), lambda n: (0, 0, 0))],
        out_specs=(pl.BlockSpec((None, H, W, Cp), lambda n: (n, 0, 0, 0)),
                   pl.BlockSpec((2, Cp), lambda n: (0, 0))),
        scratch_shapes=[pltpu.VMEM((H + 2, W + 2, Cp), jnp.float32),
                        pltpu.VMEM((HW, Cp), jnp.float32),
                        pltpu.VMEM((2, Cp), jnp.float32)],
        compiler_params=pltpu.CompilerParams(
            # stats accumulator carried across steps -> must stay sequential
            dimension_semantics=("arbitrary",),
            vmem_limit_bytes=VMEM_LIMIT),
        cost_estimate=pl.CostEstimate(flops=flops, transcendentals=0,
                                      bytes_accessed=bytes_accessed),
    )(x_bf, w_taps)


def _bn_relu_conv_stats_call(y_prev, sb_prev, w_taps):
    """(y*scale + bias) -> ReLU -> conv3x3 -> BN batch-statistics accumulation."""
    N, H, W, Cp = y_prev.shape
    HW = H * W

    def kernel(y1_ref, sb_ref, w_ref, y_ref, stats_ref, apad_sc, acc_sc, stat_sc):
        n = pl.program_id(0)

        @pl.when(n == 0)
        def _init():
            apad_sc[...] = jnp.zeros_like(apad_sc)
            stat_sc[...] = jnp.zeros_like(stat_sc)

        scale = sb_ref[0:1, :].reshape(1, 1, Cp)
        bias = sb_ref[1:2, :].reshape(1, 1, Cp)
        act = jnp.maximum(y1_ref[...] * scale + bias, 0.0)    # bn1 + relu (f32)
        apad_sc[1:H + 1, 1:W + 1, :] = act
        y = _conv3x3_accumulate(acc_sc, apad_sc, w_ref, H, W, Cp)
        _accumulate_stats(stat_sc, y)
        y_ref[...] = y.reshape(H, W, Cp)
        stats_ref[...] = stat_sc[...]

    flops = 2 * N * HW * (9 * Cp) * Cp + 3 * N * HW * Cp
    bytes_accessed = (y_prev.size * 4 + sb_prev.size * 4 + w_taps.size * 2
                      + N * HW * Cp * 4 + 2 * Cp * 4)
    return pl.pallas_call(
        kernel,
        out_shape=(jax.ShapeDtypeStruct((N, H, W, Cp), jnp.float32),
                   jax.ShapeDtypeStruct((2, Cp), jnp.float32)),
        grid=(N,),
        in_specs=[pl.BlockSpec((None, H, W, Cp), lambda n: (n, 0, 0, 0)),
                  pl.BlockSpec((2, Cp), lambda n: (0, 0)),
                  pl.BlockSpec((9, Cp, Cp), lambda n: (0, 0, 0))],
        out_specs=(pl.BlockSpec((None, H, W, Cp), lambda n: (n, 0, 0, 0)),
                   pl.BlockSpec((2, Cp), lambda n: (0, 0))),
        scratch_shapes=[pltpu.VMEM((H + 2, W + 2, Cp), jnp.float32),
                        pltpu.VMEM((HW, Cp), jnp.float32),
                        pltpu.VMEM((2, Cp), jnp.float32)],
        compiler_params=pltpu.CompilerParams(
            dimension_semantics=("arbitrary",),
            vmem_limit_bytes=VMEM_LIMIT),
        cost_estimate=pl.CostEstimate(flops=flops, transcendentals=0,
                                      bytes_accessed=bytes_accessed),
    )(y_prev, sb_prev, w_taps)


def _bn_add_relu_call(y_flat, idn_flat, sb):
    """out = relu(y*scale + bias + identity), tiled over lane-dense row blocks."""
    M, Cp = y_flat.shape
    tile_m = _pick_tile_m(M)

    def kernel(y_ref, i_ref, sb_ref, o_ref):
        scale = sb_ref[0:1, :]
        bias = sb_ref[1:2, :]
        o_ref[...] = jnp.maximum(y_ref[...] * scale + bias + i_ref[...], 0.0)

    return pl.pallas_call(
        kernel,
        out_shape=jax.ShapeDtypeStruct((M, Cp), jnp.float32),
        grid=(M // tile_m,),
        in_specs=[pl.BlockSpec((tile_m, Cp), lambda i: (i, 0)),
                  pl.BlockSpec((tile_m, Cp), lambda i: (i, 0)),
                  pl.BlockSpec((2, Cp), lambda i: (0, 0))],
        out_specs=pl.BlockSpec((tile_m, Cp), lambda i: (i, 0)),
        compiler_params=pltpu.CompilerParams(
            dimension_semantics=("parallel",),   # independent tiles; 2 TCs on v7x
            vmem_limit_bytes=VMEM_LIMIT),
    )(y_flat, idn_flat, sb)


# ------------------------------ JAX glue ----------------------------------- #

def _weight_to_taps(w_oihw, Cp):
    """PyTorch [out, in, 3, 3] -> [9, Cp, Cp] bf16 per-tap matmul weights."""
    o, i, kh, kw = w_oihw.shape
    w = jnp.transpose(w_oihw, (2, 3, 1, 0)).reshape(kh * kw, i, o)  # [9, Cin, Cout]
    w = jnp.pad(w, ((0, 0), (0, Cp - i), (0, Cp - o)))
    return w.astype(jnp.bfloat16)


def _pad_channels(v, Cp):
    v = v.reshape(-1).astype(jnp.float32)
    return jnp.pad(v, (0, Cp - v.shape[0]))


def _fold_bn(stats, gamma, beta, count):
    """(sum, sum-sq) -> per-channel (scale, bias) so bn(y) = y*scale + bias."""
    mean = stats[0] / count
    var = stats[1] / count - mean * mean          # biased variance (training BN)
    scale = gamma * jax.lax.rsqrt(var + EPS)
    bias = beta - mean * scale
    return jnp.stack([scale, bias], axis=0)       # [2, Cp] f32


def basic_block_forward(x_nchw, params):
    N, Cin, H, W = x_nchw.shape
    Cp = _round_up(max(Cin, LANES), LANES)
    M = N * H * W

    x_nhwc = jnp.transpose(x_nchw, (0, 2, 3, 1)).astype(jnp.float32)
    x_pad = jnp.pad(x_nhwc, ((0, 0), (0, 0), (0, 0), (0, Cp - Cin)))  # [N,H,W,Cp]

    w1 = _weight_to_taps(params["w1"], Cp)
    w2 = _weight_to_taps(params["w2"], Cp)
    g1, b1 = _pad_channels(params["g1"], Cp), _pad_channels(params["b1"], Cp)
    g2, b2 = _pad_channels(params["g2"], Cp), _pad_channels(params["b2"], Cp)

    # conv1 + bn1 batch statistics (cross-tile sum / sum-sq)
    y1, stats1 = _conv_stats_call(x_pad.astype(jnp.bfloat16), w1)
    sb1 = _fold_bn(stats1, g1, b1, M)

    # bn1 -> relu -> conv2 + bn2 batch statistics (fused, no HBM im2col)
    y2, stats2 = _bn_relu_conv_stats_call(y1, sb1, w2)
    sb2 = _fold_bn(stats2, g2, b2, M)

    # bn2 -> + identity -> relu   (lane-dense [tile_m, 128] blocks, parallel)
    out = _bn_add_relu_call(y2.reshape(M, Cp), x_pad.reshape(M, Cp), sb2)

    out = out.reshape(N, H, W, Cp)[:, :, :, :Cin]
    return jnp.transpose(out, (0, 3, 1, 2))


# Pure-JAX reference (numerical sanity check on the same params).
def reference_forward(x, params):
    def conv(x, w):
        return jax.lax.conv_general_dilated(
            x, w, window_strides=(1, 1), padding=((1, 1), (1, 1)),
            dimension_numbers=("NCHW", "OIHW", "NCHW"))

    def bn(y, g, b):
        mean = jnp.mean(y, axis=(0, 2, 3), keepdims=True)
        var = jnp.mean((y - mean) ** 2, axis=(0, 2, 3), keepdims=True)
        return ((y - mean) * jax.lax.rsqrt(var + EPS)
                * g.reshape(1, -1, 1, 1) + b.reshape(1, -1, 1, 1))

    out = jnp.maximum(bn(conv(x, params["w1"]), params["g1"][0], params["b1"][0]), 0.0)
    out = bn(conv(out, params["w2"]), params["g2"][0], params["b2"][0]) + x
    return jnp.maximum(out, 0.0)


# --------------------------------- main ------------------------------------ #

if __name__ == "__main__":
    key = jax.random.PRNGKey(0)
    k_x, k_w1, k_w2, k_g1, k_b1, k_g2, k_b2 = jax.random.split(key, 7)

    N, C, H, W = 2, 4, 16, 16          # inplanes = planes = 4, stride = 1
    x = jax.random.normal(k_x, (N, C, H, W), dtype=jnp.float32)

    params = {
        "w1": jax.random.normal(k_w1, (C, C, 3, 3), dtype=jnp.float32) * 0.2,
        "w2": jax.random.normal(k_w2, (C, C, 3, 3), dtype=jnp.float32) * 0.2,
        "g1": 1.0 + 0.1 * jax.random.normal(k_g1, (1, C), dtype=jnp.float32),
        "b1": 0.1 * jax.random.normal(k_b1, (1, C), dtype=jnp.float32),
        "g2": 1.0 + 0.1 * jax.random.normal(k_g2, (1, C), dtype=jnp.float32),
        "b2": 0.1 * jax.random.normal(k_b2, (1, C), dtype=jnp.float32),
    }

    fwd = jax.jit(basic_block_forward)
    out = jax.block_until_ready(fwd(x, params))
    ref = jax.block_until_ready(reference_forward(x, params))

    assert out.shape == (N, C, H, W)
    # bf16 MXU operands (f32 accumulation / BN math) -> slightly looser tolerance.
    assert jnp.allclose(out, ref, rtol=5e-2, atol=5e-2), "mismatch vs reference"

    print("KERNEL_OK")
</pallas_src>

<mosaic_0001>
module attributes {stable_mosaic.version = 11 : i64} {
  func.func @kernel(%arg0: i32, %arg1: memref<1x16x16x128xbf16, #tpu.memory_space<vmem>>, %arg2: memref<9x128x128xbf16, #tpu.memory_space<vmem>>, %arg3: memref<1x16x16x128xf32, #tpu.memory_space<vmem>>, %arg4: memref<2x128xf32, #tpu.memory_space<vmem>>, %arg5: memref<18x18x128xf32, #tpu.memory_space<vmem>>, %arg6: memref<256x128xf32, #tpu.memory_space<vmem>>, %arg7: memref<2x128xf32, #tpu.memory_space<vmem>>) attributes {dimension_semantics = [#tpu.dimension_semantics<arbitrary>], iteration_bounds = array<i64: 2>, scalar_prefetch = 0 : i64, scratch_operands = 3 : i64, tpu.core_type = #tpu.core_type<tc>, window_params = [{transform_indices = @transform_0, window_bounds = array<i64: 1, 16, 16, 128>}, {pipeline_mode = #tpu.pipeline_mode<synchronous>, transform_indices = @transform_1, window_bounds = array<i64: 9, 128, 128>}, {transform_indices = @transform_2, window_bounds = array<i64: 1, 16, 16, 128>}, {pipeline_mode = #tpu.pipeline_mode<synchronous>, transform_indices = @transform_3, window_bounds = array<i64: 2, 128>}]} {
    %c0_i32 = arith.constant 0 : i32
    %0 = arith.cmpi eq, %arg0, %c0_i32 : i32
    %1 = arith.extui %0 : i1 to i32
    %c0_i32_0 = arith.constant 0 : i32
    %2 = arith.cmpi ne, %1, %c0_i32_0 : i32
    scf.if %2 {
      %cst_120 = arith.constant 0.000000e+00 : f32
      %108 = vector.broadcast %cst_120 : f32 to vector<18x18x128xf32>
      %c0_121 = arith.constant 0 : index
      %c0_122 = arith.constant 0 : index
      %c0_123 = arith.constant 0 : index
      %109 = vector.load %arg5[%c0_121, %c0_122, %c0_123] : memref<18x18x128xf32, #tpu.memory_space<vmem>>, vector<18x18x128xf32>
      tpu.vector_store %arg5[%c0_121, %c0_122, %c0_123], %108 {strides = array<i32>} : memref<18x18x128xf32, #tpu.memory_space<vmem>>, vector<18x18x128xf32>,
      %cst_124 = arith.constant 0.000000e+00 : f32
      %110 = vector.broadcast %cst_124 : f32 to vector<2x128xf32>
      %c0_125 = arith.constant 0 : index
      %c0_126 = arith.constant 0 : index
      %111 = vector.load %arg7[%c0_125, %c0_126] : memref<2x128xf32, #tpu.memory_space<vmem>>, vector<2x128xf32>
      tpu.vector_store %arg7[%c0_125, %c0_126], %110 {strides = array<i32>} : memref<2x128xf32, #tpu.memory_space<vmem>>, vector<2x128xf32>,
    } else {
    }
    %c0 = arith.constant 0 : index
    %c0_1 = arith.constant 0 : index
    %c0_2 = arith.constant 0 : index
    %c0_3 = arith.constant 0 : index
    %3 = vector.load %arg1[%c0, %c0_1, %c0_2, %c0_3] : memref<1x16x16x128xbf16, #tpu.memory_space<vmem>>, vector<1x16x16x128xbf16>
    %4 = vector.shape_cast %3 : vector<1x16x16x128xbf16> to vector<16x16x128xbf16>
    %5 = arith.extf %4 : vector<16x16x128xbf16> to vector<16x16x128xf32>
    %c1 = arith.constant 1 : index
    %c1_4 = arith.constant 1 : index
    %c0_5 = arith.constant 0 : index
    %6 = vector.load %arg5[%c1, %c1_4, %c0_5] : memref<18x18x128xf32, #tpu.memory_space<vmem>>, vector<16x16x128xf32>
    tpu.vector_store %arg5[%c1, %c1_4, %c0_5], %5 {strides = array<i32>} : memref<18x18x128xf32, #tpu.memory_space<vmem>>, vector<16x16x128xf32>,
    %cst = arith.constant 0.000000e+00 : f32
    %7 = vector.broadcast %cst : f32 to vector<256x128xf32>
    %c0_6 = arith.constant 0 : index
    %c0_7 = arith.constant 0 : index
    %8 = vector.load %arg6[%c0_6, %c0_7] : memref<256x128xf32, #tpu.memory_space<vmem>>, vector<256x128xf32>
    tpu.vector_store %arg6[%c0_6, %c0_7], %7 {strides = array<i32>} : memref<256x128xf32, #tpu.memory_space<vmem>>, vector<256x128xf32>,
    %c0_8 = arith.constant 0 : index
    %c0_9 = arith.constant 0 : index
    %c0_10 = arith.constant 0 : index
    %9 = vector.load %arg5[%c0_8, %c0_9, %c0_10] : memref<18x18x128xf32, #tpu.memory_space<vmem>>, vector<16x16x128xf32>
    %10 = vector.shape_cast %9 : vector<16x16x128xf32> to vector<256x128xf32>
    %11 = arith.truncf %10 : vector<256x128xf32> to vector<256x128xbf16>
    %c0_11 = arith.constant 0 : index
    %c0_12 = arith.constant 0 : index
    %12 = vector.load %arg6[%c0_11, %c0_12] : memref<256x128xf32, #tpu.memory_space<vmem>>, vector<256x128xf32>
    %c0_13 = arith.constant 0 : index
    %c0_14 = arith.constant 0 : index
    %c0_15 = arith.constant 0 : index
    %13 = vector.load %arg2[%c0_13, %c0_14, %c0_15] : memref<9x128x128xbf16, #tpu.memory_space<vmem>>, vector<1x128x128xbf16>
    %14 = vector.shape_cast %13 : vector<1x128x128xbf16> to vector<128x128xbf16>
    %cst_16 = arith.constant dense<0.000000e+00> : vector<256x128xf32>
    %15 = tpu.matmul %11, %14, %cst_16 {dimension_numbers = #tpu.dot_dimension_numbers<[1], [0], [0], [1], [0, 0, 1, 1], [], []>} : vector<256x128xbf16>, vector<128x128xbf16>, vector<256x128xf32> -> vector<256x128xf32>
    %16 = arith.addf %12, %15 : vector<256x128xf32>
    %c0_17 = arith.constant 0 : index
    %c0_18 = arith.constant 0 : index
    %17 = vector.load %arg6[%c0_17, %c0_18] : memref<256x128xf32, #tpu.memory_space<vmem>>, vector<256x128xf32>
    tpu.vector_store %arg6[%c0_17, %c0_18], %16 {strides = array<i32>} : memref<256x128xf32, #tpu.memory_space<vmem>>, vector<256x128xf32>,
    %c0_19 = arith.constant 0 : index
    %c1_20 = arith.constant 1 : index
    %c0_21 = arith.constant 0 : index
    %18 = vector.load %arg5[%c0_19, %c1_20, %c0_21] : memref<18x18x128xf32, #tpu.memory_space<vmem>>, vector<16x16x128xf32>
    %19 = vector.shape_cast %18 : vector<16x16x128xf32> to vector<256x128xf32>
    %20 = arith.truncf %19 : vector<256x128xf32> to vector<256x128xbf16>
    %c0_22 = arith.constant 0 : index
    %c0_23 = arith.constant 0 : index
    %21 = vector.load %arg6[%c0_22, %c0_23] : memref<256x128xf32, #tpu.memory_space<vmem>>, vector<256x128xf32>
    %c1_24 = arith.constant 1 : index
    %c0_25 = arith.constant 0 : index
    %c0_26 = arith.constant 0 : index
    %22 = vector.load %arg2[%c1_24, %c0_25, %c0_26] : memref<9x128x128xbf16, #tpu.memory_space<vmem>>, vector<1x128x128xbf16>
    %23 = vector.shape_cast %22 : vector<1x128x128xbf16> to vector<128x128xbf16>
    %cst_27 = arith.constant dense<0.000000e+00> : vector<256x128xf32>
    %24 = tpu.matmul %20, %23, %cst_27 {dimension_numbers = #tpu.dot_dimension_numbers<[1], [0], [0], [1], [0, 0, 1, 1], [], []>} : vector<256x128xbf16>, vector<128x128xbf16>, vector<256x128xf32> -> vector<256x128xf32>
    %25 = arith.addf %21, %24 : vector<256x128xf32>
    %c0_28 = arith.constant 0 : index
    %c0_29 = arith.constant 0 : index
    %26 = vector.load %arg6[%c0_28, %c0_29] : memref<256x128xf32, #tpu.memory_space<vmem>>, vector<256x128xf32>
    tpu.vector_store %arg6[%c0_28, %c0_29], %25 {strides = array<i32>} : memref<256x128xf32, #tpu.memory_space<vmem>>, vector<256x128xf32>,
    %c0_30 = arith.constant 0 : index
    %c2 = arith.constant 2 : index
    %c0_31 = arith.constant 0 : index
    %27 = vector.load %arg5[%c0_30, %c2, %c0_31] : memref<18x18x128xf32, #tpu.memory_space<vmem>>, vector<16x16x128xf32>
    %28 = vector.shape_cast %27 : vector<16x16x128xf32> to vector<256x128xf32>
    %29 = arith.truncf %28 : vector<256x128xf32> to vector<256x128xbf16>
    %c0_32 = arith.constant 0 : index
    %c0_33 = arith.constant 0 : index
    %30 = vector.load %arg6[%c0_32, %c0_33] : memref<256x128xf32, #tpu.memory_space<vmem>>, vector<256x128xf32>
    %c2_34 = arith.constant 2 : index
    %c0_35 = arith.constant 0 : index
    %c0_36 = arith.constant 0 : index
    %31 = vector.load %arg2[%c2_34, %c0_35, %c0_36] : memref<9x128x128xbf16, #tpu.memory_space<vmem>>, vector<1x128x128xbf16>
    %32 = vector.shape_cast %31 : vector<1x128x128xbf16> to vector<128x128xbf16>
    %cst_37 = arith.constant dense<0.000000e+00> : vector<256x128xf32>
    %33 = tpu.matmul %29, %32, %cst_37 {dimension_numbers = #tpu.dot_dimension_numbers<[1], [0], [0], [1], [0, 0, 1, 1], [], []>} : vector<256x128xbf16>, vector<128x128xbf16>, vector<256x128xf32> -> vector<256x128xf32>
    %34 = arith.addf %30, %33 : vector<256x128xf32>
    %c0_38 = arith.constant 0 : index
    %c0_39 = arith.constant 0 : index
    %35 = vector.load %arg6[%c0_38, %c0_39] : memref<256x128xf32, #tpu.memory_space<vmem>>, vector<256x128xf32>
    tpu.vector_store %arg6[%c0_38, %c0_39], %34 {strides = array<i32>} : memref<256x128xf32, #tpu.memory_space<vmem>>, vector<256x128xf32>,
    %c1_40 = arith.constant 1 : index
    %c0_41 = arith.constant 0 : index
    %c0_42 = arith.constant 0 : index
    %36 = vector.load %arg5[%c1_40, %c0_41, %c0_42] : memref<18x18x128xf32, #tpu.memory_space<vmem>>, vector<16x16x128xf32>
    %37 = vector.shape_cast %36 : vector<16x16x128xf32> to vector<256x128xf32>
    %38 = arith.truncf %37 : vector<256x128xf32> to vector<256x128xbf16>
    %c0_43 = arith.constant 0 : index
    %c0_44 = arith.constant 0 : index
    %39 = vector.load %arg6[%c0_43, %c0_44] : memref<256x128xf32, #tpu.memory_space<vmem>>, vector<256x128xf32>
    %c3 = arith.constant 3 : index
    %c0_45 = arith.constant 0 : index
    %c0_46 = arith.constant 0 : index
    %40 = vector.load %arg2[%c3, %c0_45, %c0_46] : memref<9x128x128xbf16, #tpu.memory_space<vmem>>, vector<1x128x128xbf16>
    %41 = vector.shape_cast %40 : vector<1x128x128xbf16> to vector<128x128xbf16>
    %cst_47 = arith.constant dense<0.000000e+00> : vector<256x128xf32>
    %42 = tpu.matmul %38, %41, %cst_47 {dimension_numbers = #tpu.dot_dimension_numbers<[1], [0], [0], [1], [0, 0, 1, 1], [], []>} : vector<256x128xbf16>, vector<128x128xbf16>, vector<256x128xf32> -> vector<256x128xf32>
    %43 = arith.addf %39, %42 : vector<256x128xf32>
    %c0_48 = arith.constant 0 : index
    %c0_49 = arith.constant 0 : index
    %44 = vector.load %arg6[%c0_48, %c0_49] : memref<256x128xf32, #tpu.memory_space<vmem>>, vector<256x128xf32>
    tpu.vector_store %arg6[%c0_48, %c0_49], %43 {strides = array<i32>} : memref<256x128xf32, #tpu.memory_space<vmem>>, vector<256x128xf32>,
    %c1_50 = arith.constant 1 : index
    %c1_51 = arith.constant 1 : index
    %c0_52 = arith.constant 0 : index
    %45 = vector.load %arg5[%c1_50, %c1_51, %c0_52] : memref<18x18x128xf32, #tpu.memory_space<vmem>>, vector<16x16x128xf32>
    %46 = vector.shape_cast %45 : vector<16x16x128xf32> to vector<256x128xf32>
    %47 = arith.truncf %46 : vector<256x128xf32> to vector<256x128xbf16>
    %c0_53 = arith.constant 0 : index
    %c0_54 = arith.constant 0 : index
    %48 = vector.load %arg6[%c0_53, %c0_54] : memref<256x128xf32, #tpu.memory_space<vmem>>, vector<256x128xf32>
    %c4 = arith.constant 4 : index
    %c0_55 = arith.constant 0 : index
    %c0_56 = arith.constant 0 : index
    %49 = vector.load %arg2[%c4, %c0_55, %c0_56] : memref<9x128x128xbf16, #tpu.memory_space<vmem>>, vector<1x128x128xbf16>
    %50 = vector.shape_cast %49 : vector<1x128x128xbf16> to vector<128x128xbf16>
    %cst_57 = arith.constant dense<0.000000e+00> : vector<256x128xf32>
    %51 = tpu.matmul %47, %50, %cst_57 {dimension_numbers = #tpu.dot_dimension_numbers<[1], [0], [0], [1], [0, 0, 1, 1], [], []>} : vector<256x128xbf16>, vector<128x128xbf16>, vector<256x128xf32> -> vector<256x128xf32>
    %52 = arith.addf %48, %51 : vector<256x128xf32>
    %c0_58 = arith.constant 0 : index
    %c0_59 = arith.constant 0 : index
    %53 = vector.load %arg6[%c0_58, %c0_59] : memref<256x128xf32, #tpu.memory_space<vmem>>, vector<256x128xf32>
    tpu.vector_store %arg6[%c0_58, %c0_59], %52 {strides = array<i32>} : memref<256x128xf32, #tpu.memory_space<vmem>>, vector<256x128xf32>,
    %c1_60 = arith.constant 1 : index
    %c2_61 = arith.constant 2 : index
    %c0_62 = arith.constant 0 : index
    %54 = vector.load %arg5[%c1_60, %c2_61, %c0_62] : memref<18x18x128xf32, #tpu.memory_space<vmem>>, vector<16x16x128xf32>
    %55 = vector.shape_cast %54 : vector<16x16x128xf32> to vector<256x128xf32>
    %56 = arith.truncf %55 : vector<256x128xf32> to vector<256x128xbf16>
    %c0_63 = arith.constant 0 : index
    %c0_64 = arith.constant 0 : index
    %57 = vector.load %arg6[%c0_63, %c0_64] : memref<256x128xf32, #tpu.memory_space<vmem>>, vector<256x128xf32>
    %c5 = arith.constant 5 : index
    %c0_65 = arith.constant 0 : index
    %c0_66 = arith.constant 0 : index
    %58 = vector.load %arg2[%c5, %c0_65, %c0_66] : memref<9x128x128xbf16, #tpu.memory_space<vmem>>, vector<1x128x128xbf16>
    %59 = vector.shape_cast %58 : vector<1x128x128xbf16> to vector<128x128xbf16>
    %cst_67 = arith.constant dense<0.000000e+00> : vector<256x128xf32>
    %60 = tpu.matmul %56, %59, %cst_67 {dimension_numbers = #tpu.dot_dimension_numbers<[1], [0], [0], [1], [0, 0, 1, 1], [], []>} : vector<256x128xbf16>, vector<128x128xbf16>, vector<256x128xf32> -> vector<256x128xf32>
    %61 = arith.addf %57, %60 : vector<256x128xf32>
    %c0_68 = arith.constant 0 : index
    %c0_69 = arith.constant 0 : index
    %62 = vector.load %arg6[%c0_68, %c0_69] : memref<256x128xf32, #tpu.memory_space<vmem>>, vector<256x128xf32>
    tpu.vector_store %arg6[%c0_68, %c0_69], %61 {strides = array<i32>} : memref<256x128xf32, #tpu.memory_space<vmem>>, vector<256x128xf32>,
    %c2_70 = arith.constant 2 : index
    %c0_71 = arith.constant 0 : index
    %c0_72 = arith.constant 0 : index
    %63 = vector.load %arg5[%c2_70, %c0_71, %c0_72] : memref<18x18x128xf32, #tpu.memory_space<vmem>>, vector<16x16x128xf32>
    %64 = vector.shape_cast %63 : vector<16x16x128xf32> to vector<256x128xf32>
    %65 = arith.truncf %64 : vector<256x128xf32> to vector<256x128xbf16>
    %c0_73 = arith.constant 0 : index
    %c0_74 = arith.constant 0 : index
    %66 = vector.load %arg6[%c0_73, %c0_74] : memref<256x128xf32, #tpu.memory_space<vmem>>, vector<256x128xf32>
    %c6 = arith.constant 6 : index
    %c0_75 = arith.constant 0 : index
    %c0_76 = arith.constant 0 : index
    %67 = vector.load %arg2[%c6, %c0_75, %c0_76] : memref<9x128x128xbf16, #tpu.memory_space<vmem>>, vector<1x128x128xbf16>
    %68 = vector.shape_cast %67 : vector<1x128x128xbf16> to vector<128x128xbf16>
    %cst_77 = arith.constant dense<0.000000e+00> : vector<256x128xf32>
    %69 = tpu.matmul %65, %68, %cst_77 {dimension_numbers = #tpu.dot_dimension_numbers<[1], [0], [0], [1], [0, 0, 1, 1], [], []>} : vector<256x128xbf16>, vector<128x128xbf16>, vector<256x128xf32> -> vector<256x128xf32>
    %70 = arith.addf %66, %69 : vector<256x128xf32>
    %c0_78 = arith.constant 0 : index
    %c0_79 = arith.constant 0 : index
    %71 = vector.load %arg6[%c0_78, %c0_79] : memref<256x128xf32, #tpu.memory_space<vmem>>, vector<256x128xf32>
    tpu.vector_store %arg6[%c0_78, %c0_79], %70 {strides = array<i32>} : memref<256x128xf32, #tpu.memory_space<vmem>>, vector<256x128xf32>,
    %c2_80 = arith.constant 2 : index
    %c1_81 = arith.constant 1 : index
    %c0_82 = arith.constant 0 : index
    %72 = vector.load %arg5[%c2_80, %c1_81, %c0_82] : memref<18x18x128xf32, #tpu.memory_space<vmem>>, vector<16x16x128xf32>
    %73 = vector.shape_cast %72 : vector<16x16x128xf32> to vector<256x128xf32>
    %74 = arith.truncf %73 : vector<256x128xf32> to vector<256x128xbf16>
    %c0_83 = arith.constant 0 : index
    %c0_84 = arith.constant 0 : index
    %75 = vector.load %arg6[%c0_83, %c0_84] : memref<256x128xf32, #tpu.memory_space<vmem>>, vector<256x128xf32>
    %c7 = arith.constant 7 : index
    %c0_85 = arith.constant 0 : index
    %c0_86 = arith.constant 0 : index
    %76 = vector.load %arg2[%c7, %c0_85, %c0_86] : memref<9x128x128xbf16, #tpu.memory_space<vmem>>, vector<1x128x128xbf16>
    %77 = vector.shape_cast %76 : vector<1x128x128xbf16> to vector<128x128xbf16>
    %cst_87 = arith.constant dense<0.000000e+00> : vector<256x128xf32>
    %78 = tpu.matmul %74, %77, %cst_87 {dimension_numbers = #tpu.dot_dimension_numbers<[1], [0], [0], [1], [0, 0, 1, 1], [], []>} : vector<256x128xbf16>, vector<128x128xbf16>, vector<256x128xf32> -> vector<256x128xf32>
    %79 = arith.addf %75, %78 : vector<256x128xf32>
    %c0_88 = arith.constant 0 : index
    %c0_89 = arith.constant 0 : index
    %80 = vector.load %arg6[%c0_88, %c0_89] : memref<256x128xf32, #tpu.memory_space<vmem>>, vector<256x128xf32>
    tpu.vector_store %arg6[%c0_88, %c0_89], %79 {strides = array<i32>} : memref<256x128xf32, #tpu.memory_space<vmem>>, vector<256x128xf32>,
    %c2_90 = arith.constant 2 : index
    %c2_91 = arith.constant 2 : index
    %c0_92 = arith.constant 0 : index
    %81 = vector.load %arg5[%c2_90, %c2_91, %c0_92] : memref<18x18x128xf32, #tpu.memory_space<vmem>>, vector<16x16x128xf32>
    %82 = vector.shape_cast %81 : vector<16x16x128xf32> to vector<256x128xf32>
    %83 = arith.truncf %82 : vector<256x128xf32> to vector<256x128xbf16>
    %c0_93 = arith.constant 0 : index
    %c0_94 = arith.constant 0 : index
    %84 = vector.load %arg6[%c0_93, %c0_94] : memref<256x128xf32, #tpu.memory_space<vmem>>, vector<256x128xf32>
    %c8 = arith.constant 8 : index
    %c0_95 = arith.constant 0 : index
    %c0_96 = arith.constant 0 : index
    %85 = vector.load %arg2[%c8, %c0_95, %c0_96] : memref<9x128x128xbf16, #tpu.memory_space<vmem>>, vector<1x128x128xbf16>
    %86 = vector.shape_cast %85 : vector<1x128x128xbf16> to vector<128x128xbf16>
    %cst_97 = arith.constant dense<0.000000e+00> : vector<256x128xf32>
    %87 = tpu.matmul %83, %86, %cst_97 {dimension_numbers = #tpu.dot_dimension_numbers<[1], [0], [0], [1], [0, 0, 1, 1], [], []>} : vector<256x128xbf16>, vector<128x128xbf16>, vector<256x128xf32> -> vector<256x128xf32>
    %88 = arith.addf %84, %87 : vector<256x128xf32>
    %c0_98 = arith.constant 0 : index
    %c0_99 = arith.constant 0 : index
    %89 = vector.load %arg6[%c0_98, %c0_99] : memref<256x128xf32, #tpu.memory_space<vmem>>, vector<256x128xf32>
    tpu.vector_store %arg6[%c0_98, %c0_99], %88 {strides = array<i32>} : memref<256x128xf32, #tpu.memory_space<vmem>>, vector<256x128xf32>,
    %c0_100 = arith.constant 0 : index
    %c0_101 = arith.constant 0 : index
    %90 = vector.load %arg6[%c0_100, %c0_101] : memref<256x128xf32, #tpu.memory_space<vmem>>, vector<256x128xf32>
    %c0_102 = arith.constant 0 : index
    %c0_103 = arith.constant 0 : index
    %91 = vector.load %arg7[%c0_102, %c0_103] : memref<2x128xf32, #tpu.memory_space<vmem>>, vector<1x128xf32>
    %cst_104 = arith.constant dense<0.000000e+00> : vector<128xf32>
    %92 = vector.multi_reduction <add>, %90, %cst_104 [0] : vector<256x128xf32> to vector<128xf32>
    %93 = vector.shape_cast %92 : vector<128xf32> to vector<1x128xf32>
    %94 = arith.addf %91, %93 : vector<1x128xf32>
    %c0_105 = arith.constant 0 : index
    %c0_106 = arith.constant 0 : index
    %95 = vector.load %arg7[%c0_105, %c0_106] : memref<2x128xf32, #tpu.memory_space<vmem>>, vector<1x128xf32>
    tpu.vector_store %arg7[%c0_105, %c0_106], %94 {strides = array<i32>} : memref<2x128xf32, #tpu.memory_space<vmem>>, vector<1x128xf32>,
    %c1_107 = arith.constant 1 : index
    %c0_108 = arith.constant 0 : index
    %96 = vector.load %arg7[%c1_107, %c0_108] : memref<2x128xf32, #tpu.memory_space<vmem>>, vector<1x128xf32>
    %97 = arith.mulf %90, %90 : vector<256x128xf32>
    %cst_109 = arith.constant dense<0.000000e+00> : vector<128xf32>
    %98 = vector.multi_reduction <add>, %97, %cst_109 [0] : vector<256x128xf32> to vector<128xf32>
    %99 = vector.shape_cast %98 : vector<128xf32> to vector<1x128xf32>
    %100 = arith.addf %96, %99 : vector<1x128xf32>
    %c1_110 = arith.constant 1 : index
    %c0_111 = arith.constant 0 : index
    %101 = vector.load %arg7[%c1_110, %c0_111] : memref<2x128xf32, #tpu.memory_space<vmem>>, vector<1x128xf32>
    tpu.vector_store %arg7[%c1_110, %c0_111], %100 {strides = array<i32>} : memref<2x128xf32, #tpu.memory_space<vmem>>, vector<1x128xf32>,
    %102 = vector.shape_cast %90 : vector<256x128xf32> to vector<16x16x128xf32>
    %c0_112 = arith.constant 0 : index
    %c0_113 = arith.constant 0 : index
    %c0_114 = arith.constant 0 : index
    %c0_115 = arith.constant 0 : index
    %103 = vector.load %arg3[%c0_112, %c0_113, %c0_114, %c0_115] : memref<1x16x16x128xf32, #tpu.memory_space<vmem>>, vector<1x16x16x128xf32>
    %104 = vector.shape_cast %103 : vector<1x16x16x128xf32> to vector<16x16x128xf32>
    %105 = vector.shape_cast %102 : vector<16x16x128xf32> to vector<1x16x16x128xf32>
    tpu.vector_store %arg3[%c0_112, %c0_113, %c0_114, %c0_115], %105 {strides = array<i32>} : memref<1x16x16x128xf32, #tpu.memory_space<vmem>>, vector<1x16x16x128xf32>,
    %c0_116 = arith.constant 0 : index
    %c0_117 = arith.constant 0 : index
    %106 = vector.load %arg7[%c0_116, %c0_117] : memref<2x128xf32, #tpu.memory_space<vmem>>, vector<2x128xf32>
    %c0_118 = arith.constant 0 : index
    %c0_119 = arith.constant 0 : index
    %107 = vector.load %arg4[%c0_118, %c0_119] : memref<2x128xf32, #tpu.memory_space<vmem>>, vector<2x128xf32>
    tpu.vector_store %arg4[%c0_118, %c0_119], %106 {strides = array<i32>} : memref<2x128xf32, #tpu.memory_space<vmem>>, vector<2x128xf32>,
    return
  }
  func.func @transform_0(%arg0: i32) -> (i32, i32, i32, i32) {
    %c0_i32 = arith.constant 0 : i32
    %c0_i32_0 = arith.constant 0 : i32
    %c0_i32_1 = arith.constant 0 : i32
    %c0_i32_2 = arith.constant 0 : i32
    return %arg0, %c0_i32, %c0_i32_0, %c0_i32_1 : i32, i32, i32, i32
  }
  func.func @transform_1(%arg0: i32) -> (i32, i32, i32) {
    %c0_i32 = arith.constant 0 : i32
    %c0_i32_0 = arith.constant 0 : i32
    %c0_i32_1 = arith.constant 0 : i32
    %c0_i32_2 = arith.constant 0 : i32
    return %c0_i32, %c0_i32_0, %c0_i32_1 : i32, i32, i32
  }
  func.func @transform_2(%arg0: i32) -> (i32, i32, i32, i32) {
    %c0_i32 = arith.constant 0 : i32
    %c0_i32_0 = arith.constant 0 : i32
    %c0_i32_1 = arith.constant 0 : i32
    %c0_i32_2 = arith.constant 0 : i32
    return %arg0, %c0_i32, %c0_i32_0, %c0_i32_1 : i32, i32, i32, i32
  }
  func.func @transform_3(%arg0: i32) -> (i32, i32) {
    %c0_i32 = arith.constant 0 : i32
    %c0_i32_0 = arith.constant 0 : i32
    %c0_i32_1 = arith.constant 0 : i32
    return %c0_i32, %c0_i32_0 : i32, i32
  }
}

module attributes {stable_mosaic.version = 11 : i64} {
  func.func @kernel(%arg0: i32, %arg1: memref<1x16x16x128xf32, #tpu.memory_space<vmem>>, %arg2: memref<2x128xf32, #tpu.memory_space<vmem>>, %arg3: memref<9x128x128xbf16, #tpu.memory_space<vmem>>, %arg4: memref<1x16x16x128xf32, #tpu.memory_space<vmem>>, %arg5: memref<2x128xf32, #tpu.memory_space<vmem>>, %arg6: memref<18x18x128xf32, #tpu.memory_space<vmem>>, %arg7: memref<256x128xf32, #tpu.memory_space<vmem>>, %arg8: memref<2x128xf32, #tpu.memory_space<vmem>>) attributes {dimension_semantics = [#tpu.dimension_semantics<arbitrary>], iteration_bounds = array<i64: 2>, scalar_prefetch = 0 : i64, scratch_operands = 3 : i64, tpu.core_type = #tpu.core_type<tc>, window_params = [{transform_indices = @transform_0, window_bounds = array<i64: 1, 16, 16, 128>}, {pipeline_mode = #tpu.pipeline_mode<synchronous>, transform_indices = @transform_1, window_bounds = array<i64: 2, 128>}, {pipeline_mode = #tpu.pipeline_mode<synchronous>, transform_indices = @transform_2, window_bounds = array<i64: 9, 128, 128>}, {transform_indices = @transform_3, window_bounds = array<i64: 1, 16, 16, 128>}, {pipeline_mode = #tpu.pipeline_mode<synchronous>, transform_indices = @transform_4, window_bounds = array<i64: 2, 128>}]} {
    %c0_i32 = arith.constant 0 : i32
    %0 = arith.cmpi eq, %arg0, %c0_i32 : i32
    %1 = arith.extui %0 : i1 to i32
    %c0_i32_0 = arith.constant 0 : i32
    %2 = arith.cmpi ne, %1, %c0_i32_0 : i32
    scf.if %2 {
      %cst_125 = arith.constant 0.000000e+00 : f32
      %117 = vector.broadcast %cst_125 : f32 to vector<18x18x128xf32>
      %c0_126 = arith.constant 0 : index
      %c0_127 = arith.constant 0 : index
      %c0_128 = arith.constant 0 : index
      %118 = vector.load %arg6[%c0_126, %c0_127, %c0_128] : memref<18x18x128xf32, #tpu.memory_space<vmem>>, vector<18x18x128xf32>
      tpu.vector_store %arg6[%c0_126, %c0_127, %c0_128], %117 {strides = array<i32>} : memref<18x18x128xf32, #tpu.memory_space<vmem>>, vector<18x18x128xf32>,
      %cst_129 = arith.constant 0.000000e+00 : f32
      %119 = vector.broadcast %cst_129 : f32 to vector<2x128xf32>
      %c0_130 = arith.constant 0 : index
      %c0_131 = arith.constant 0 : index
      %120 = vector.load %arg8[%c0_130, %c0_131] : memref<2x128xf32, #tpu.memory_space<vmem>>, vector<2x128xf32>
      tpu.vector_store %arg8[%c0_130, %c0_131], %119 {strides = array<i32>} : memref<2x128xf32, #tpu.memory_space<vmem>>, vector<2x128xf32>,
    } else {
    }
    %c0 = arith.constant 0 : index
    %c0_1 = arith.constant 0 : index
    %3 = vector.load %arg2[%c0, %c0_1] : memref<2x128xf32, #tpu.memory_space<vmem>>, vector<1x128xf32>
    %4 = vector.shape_cast %3 : vector<1x128xf32> to vector<1x1x128xf32>
    %c1 = arith.constant 1 : index
    %c0_2 = arith.constant 0 : index
    %5 = vector.load %arg2[%c1, %c0_2] : memref<2x128xf32, #tpu.memory_space<vmem>>, vector<1x128xf32>
    %6 = vector.shape_cast %5 : vector<1x128xf32> to vector<1x1x128xf32>
    %c0_3 = arith.constant 0 : index
    %c0_4 = arith.constant 0 : index
    %c0_5 = arith.constant 0 : index
    %c0_6 = arith.constant 0 : index
    %7 = vector.load %arg1[%c0_3, %c0_4, %c0_5, %c0_6] : memref<1x16x16x128xf32, #tpu.memory_space<vmem>>, vector<1x16x16x128xf32>
    %8 = vector.shape_cast %7 : vector<1x16x16x128xf32> to vector<16x16x128xf32>
    %9 = vector.broadcast %4 : vector<1x1x128xf32> to vector<16x16x128xf32>
    %10 = arith.mulf %8, %9 : vector<16x16x128xf32>
    %11 = vector.broadcast %6 : vector<1x1x128xf32> to vector<16x16x128xf32>
    %12 = arith.addf %10, %11 : vector<16x16x128xf32>
    %cst = arith.constant 0.000000e+00 : f32
    %13 = vector.broadcast %cst : f32 to vector<16x16x128xf32>
    %14 = arith.maximumf %12, %13 : vector<16x16x128xf32>
    %c1_7 = arith.constant 1 : index
    %c1_8 = arith.constant 1 : index
    %c0_9 = arith.constant 0 : index
    %15 = vector.load %arg6[%c1_7, %c1_8, %c0_9] : memref<18x18x128xf32, #tpu.memory_space<vmem>>, vector<16x16x128xf32>
    tpu.vector_store %arg6[%c1_7, %c1_8, %c0_9], %14 {strides = array<i32>} : memref<18x18x128xf32, #tpu.memory_space<vmem>>, vector<16x16x128xf32>,
    %cst_10 = arith.constant 0.000000e+00 : f32
    %16 = vector.broadcast %cst_10 : f32 to vector<256x128xf32>
    %c0_11 = arith.constant 0 : index
    %c0_12 = arith.constant 0 : index
    %17 = vector.load %arg7[%c0_11, %c0_12] : memref<256x128xf32, #tpu.memory_space<vmem>>, vector<256x128xf32>
    tpu.vector_store %arg7[%c0_11, %c0_12], %16 {strides = array<i32>} : memref<256x128xf32, #tpu.memory_space<vmem>>, vector<256x128xf32>,
    %c0_13 = arith.constant 0 : index
    %c0_14 = arith.constant 0 : index
    %c0_15 = arith.constant 0 : index
    %18 = vector.load %arg6[%c0_13, %c0_14, %c0_15] : memref<18x18x128xf32, #tpu.memory_space<vmem>>, vector<16x16x128xf32>
    %19 = vector.shape_cast %18 : vector<16x16x128xf32> to vector<256x128xf32>
    %20 = arith.truncf %19 : vector<256x128xf32> to vector<256x128xbf16>
    %c0_16 = arith.constant 0 : index
    %c0_17 = arith.constant 0 : index
    %21 = vector.load %arg7[%c0_16, %c0_17] : memref<256x128xf32, #tpu.memory_space<vmem>>, vector<256x128xf32>
    %c0_18 = arith.constant 0 : index
    %c0_19 = arith.constant 0 : index
    %c0_20 = arith.constant 0 : index
    %22 = vector.load %arg3[%c0_18, %c0_19, %c0_20] : memref<9x128x128xbf16, #tpu.memory_space<vmem>>, vector<1x128x128xbf16>
    %23 = vector.shape_cast %22 : vector<1x128x128xbf16> to vector<128x128xbf16>
    %cst_21 = arith.constant dense<0.000000e+00> : vector<256x128xf32>
    %24 = tpu.matmul %20, %23, %cst_21 {dimension_numbers = #tpu.dot_dimension_numbers<[1], [0], [0], [1], [0, 0, 1, 1], [], []>} : vector<256x128xbf16>, vector<128x128xbf16>, vector<256x128xf32> -> vector<256x128xf32>
    %25 = arith.addf %21, %24 : vector<256x128xf32>
    %c0_22 = arith.constant 0 : index
    %c0_23 = arith.constant 0 : index
    %26 = vector.load %arg7[%c0_22, %c0_23] : memref<256x128xf32, #tpu.memory_space<vmem>>, vector<256x128xf32>
    tpu.vector_store %arg7[%c0_22, %c0_23], %25 {strides = array<i32>} : memref<256x128xf32, #tpu.memory_space<vmem>>, vector<256x128xf32>,
    %c0_24 = arith.constant 0 : index
    %c1_25 = arith.constant 1 : index
    %c0_26 = arith.constant 0 : index
    %27 = vector.load %arg6[%c0_24, %c1_25, %c0_26] : memref<18x18x128xf32, #tpu.memory_space<vmem>>, vector<16x16x128xf32>
    %28 = vector.shape_cast %27 : vector<16x16x128xf32> to vector<256x128xf32>
    %29 = arith.truncf %28 : vector<256x128xf32> to vector<256x128xbf16>
    %c0_27 = arith.constant 0 : index
    %c0_28 = arith.constant 0 : index
    %30 = vector.load %arg7[%c0_27, %c0_28] : memref<256x128xf32, #tpu.memory_space<vmem>>, vector<256x128xf32>
    %c1_29 = arith.constant 1 : index
    %c0_30 = arith.constant 0 : index
    %c0_31 = arith.constant 0 : index
    %31 = vector.load %arg3[%c1_29, %c0_30, %c0_31] : memref<9x128x128xbf16, #tpu.memory_space<vmem>>, vector<1x128x128xbf16>
    %32 = vector.shape_cast %31 : vector<1x128x128xbf16> to vector<128x128xbf16>
    %cst_32 = arith.constant dense<0.000000e+00> : vector<256x128xf32>
    %33 = tpu.matmul %29, %32, %cst_32 {dimension_numbers = #tpu.dot_dimension_numbers<[1], [0], [0], [1], [0, 0, 1, 1], [], []>} : vector<256x128xbf16>, vector<128x128xbf16>, vector<256x128xf32> -> vector<256x128xf32>
    %34 = arith.addf %30, %33 : vector<256x128xf32>
    %c0_33 = arith.constant 0 : index
    %c0_34 = arith.constant 0 : index
    %35 = vector.load %arg7[%c0_33, %c0_34] : memref<256x128xf32, #tpu.memory_space<vmem>>, vector<256x128xf32>
    tpu.vector_store %arg7[%c0_33, %c0_34], %34 {strides = array<i32>} : memref<256x128xf32, #tpu.memory_space<vmem>>, vector<256x128xf32>,
    %c0_35 = arith.constant 0 : index
    %c2 = arith.constant 2 : index
    %c0_36 = arith.constant 0 : index
    %36 = vector.load %arg6[%c0_35, %c2, %c0_36] : memref<18x18x128xf32, #tpu.memory_space<vmem>>, vector<16x16x128xf32>
    %37 = vector.shape_cast %36 : vector<16x16x128xf32> to vector<256x128xf32>
    %38 = arith.truncf %37 : vector<256x128xf32> to vector<256x128xbf16>
    %c0_37 = arith.constant 0 : index
    %c0_38 = arith.constant 0 : index
    %39 = vector.load %arg7[%c0_37, %c0_38] : memref<256x128xf32, #tpu.memory_space<vmem>>, vector<256x128xf32>
    %c2_39 = arith.constant 2 : index
    %c0_40 = arith.constant 0 : index
    %c0_41 = arith.constant 0 : index
    %40 = vector.load %arg3[%c2_39, %c0_40, %c0_41] : memref<9x128x128xbf16, #tpu.memory_space<vmem>>, vector<1x128x128xbf16>
    %41 = vector.shape_cast %40 : vector<1x128x128xbf16> to vector<128x128xbf16>
    %cst_42 = arith.constant dense<0.000000e+00> : vector<256x128xf32>
    %42 = tpu.matmul %38, %41, %cst_42 {dimension_numbers = #tpu.dot_dimension_numbers<[1], [0], [0], [1], [0, 0, 1, 1], [], []>} : vector<256x128xbf16>, vector<128x128xbf16>, vector<256x128xf32> -> vector<256x128xf32>
    %43 = arith.addf %39, %42 : vector<256x128xf32>
    %c0_43 = arith.constant 0 : index
    %c0_44 = arith.constant 0 : index
    %44 = vector.load %arg7[%c0_43, %c0_44] : memref<256x128xf32, #tpu.memory_space<vmem>>, vector<256x128xf32>
    tpu.vector_store %arg7[%c0_43, %c0_44], %43 {strides = array<i32>} : memref<256x128xf32, #tpu.memory_space<vmem>>, vector<256x128xf32>,
    %c1_45 = arith.constant 1 : index
    %c0_46 = arith.constant 0 : index
    %c0_47 = arith.constant 0 : index
    %45 = vector.load %arg6[%c1_45, %c0_46, %c0_47] : memref<18x18x128xf32, #tpu.memory_space<vmem>>, vector<16x16x128xf32>
    %46 = vector.shape_cast %45 : vector<16x16x128xf32> to vector<256x128xf32>
    %47 = arith.truncf %46 : vector<256x128xf32> to vector<256x128xbf16>
    %c0_48 = arith.constant 0 : index
    %c0_49 = arith.constant 0 : index
    %48 = vector.load %arg7[%c0_48, %c0_49] : memref<256x128xf32, #tpu.memory_space<vmem>>, vector<256x128xf32>
    %c3 = arith.constant 3 : index
    %c0_50 = arith.constant 0 : index
    %c0_51 = arith.constant 0 : index
    %49 = vector.load %arg3[%c3, %c0_50, %c0_51] : memref<9x128x128xbf16, #tpu.memory_space<vmem>>, vector<1x128x128xbf16>
    %50 = vector.shape_cast %49 : vector<1x128x128xbf16> to vector<128x128xbf16>
    %cst_52 = arith.constant dense<0.000000e+00> : vector<256x128xf32>
    %51 = tpu.matmul %47, %50, %cst_52 {dimension_numbers = #tpu.dot_dimension_numbers<[1], [0], [0], [1], [0, 0, 1, 1], [], []>} : vector<256x128xbf16>, vector<128x128xbf16>, vector<256x128xf32> -> vector<256x128xf32>
    %52 = arith.addf %48, %51 : vector<256x128xf32>
    %c0_53 = arith.constant 0 : index
    %c0_54 = arith.constant 0 : index
    %53 = vector.load %arg7[%c0_53, %c0_54] : memref<256x128xf32, #tpu.memory_space<vmem>>, vector<256x128xf32>
    tpu.vector_store %arg7[%c0_53, %c0_54], %52 {strides = array<i32>} : memref<256x128xf32, #tpu.memory_space<vmem>>, vector<256x128xf32>,
    %c1_55 = arith.constant 1 : index
    %c1_56 = arith.constant 1 : index
    %c0_57 = arith.constant 0 : index
    %54 = vector.load %arg6[%c1_55, %c1_56, %c0_57] : memref<18x18x128xf32, #tpu.memory_space<vmem>>, vector<16x16x128xf32>
    %55 = vector.shape_cast %54 : vector<16x16x128xf32> to vector<256x128xf32>
    %56 = arith.truncf %55 : vector<256x128xf32> to vector<256x128xbf16>
    %c0_58 = arith.constant 0 : index
    %c0_59 = arith.constant 0 : index
    %57 = vector.load %arg7[%c0_58, %c0_59] : memref<256x128xf32, #tpu.memory_space<vmem>>, vector<256x128xf32>
    %c4 = arith.constant 4 : index
    %c0_60 = arith.constant 0 : index
    %c0_61 = arith.constant 0 : index
    %58 = vector.load %arg3[%c4, %c0_60, %c0_61] : memref<9x128x128xbf16, #tpu.memory_space<vmem>>, vector<1x128x128xbf16>
    %59 = vector.shape_cast %58 : vector<1x128x128xbf16> to vector<128x128xbf16>
    %cst_62 = arith.constant dense<0.000000e+00> : vector<256x128xf32>
    %60 = tpu.matmul %56, %59, %cst_62 {dimension_numbers = #tpu.dot_dimension_numbers<[1], [0], [0], [1], [0, 0, 1, 1], [], []>} : vector<256x128xbf16>, vector<128x128xbf16>, vector<256x128xf32> -> vector<256x128xf32>
    %61 = arith.addf %57, %60 : vector<256x128xf32>
    %c0_63 = arith.constant 0 : index
    %c0_64 = arith.constant 0 : index
    %62 = vector.load %arg7[%c0_63, %c0_64] : memref<256x128xf32, #tpu.memory_space<vmem>>, vector<256x128xf32>
    tpu.vector_store %arg7[%c0_63, %c0_64], %61 {strides = array<i32>} : memref<256x128xf32, #tpu.memory_space<vmem>>, vector<256x128xf32>,
    %c1_65 = arith.constant 1 : index
    %c2_66 = arith.constant 2 : index
    %c0_67 = arith.constant 0 : index
    %63 = vector.load %arg6[%c1_65, %c2_66, %c0_67] : memref<18x18x128xf32, #tpu.memory_space<vmem>>, vector<16x16x128xf32>
    %64 = vector.shape_cast %63 : vector<16x16x128xf32> to vector<256x128xf32>
    %65 = arith.truncf %64 : vector<256x128xf32> to vector<256x128xbf16>
    %c0_68 = arith.constant 0 : index
    %c0_69 = arith.constant 0 : index
    %66 = vector.load %arg7[%c0_68, %c0_69] : memref<256x128xf32, #tpu.memory_space<vmem>>, vector<256x128xf32>
    %c5 = arith.constant 5 : index
    %c0_70 = arith.constant 0 : index
    %c0_71 = arith.constant 0 : index
    %67 = vector.load %arg3[%c5, %c0_70, %c0_71] : memref<9x128x128xbf16, #tpu.memory_space<vmem>>, vector<1x128x128xbf16>
    %68 = vector.shape_cast %67 : vector<1x128x128xbf16> to vector<128x128xbf16>
    %cst_72 = arith.constant dense<0.000000e+00> : vector<256x128xf32>
    %69 = tpu.matmul %65, %68, %cst_72 {dimension_numbers = #tpu.dot_dimension_numbers<[1], [0], [0], [1], [0, 0, 1, 1], [], []>} : vector<256x128xbf16>, vector<128x128xbf16>, vector<256x128xf32> -> vector<256x128xf32>
    %70 = arith.addf %66, %69 : vector<256x128xf32>
    %c0_73 = arith.constant 0 : index
    %c0_74 = arith.constant 0 : index
    %71 = vector.load %arg7[%c0_73, %c0_74] : memref<256x128xf32, #tpu.memory_space<vmem>>, vector<256x128xf32>
    tpu.vector_store %arg7[%c0_73, %c0_74], %70 {strides = array<i32>} : memref<256x128xf32, #tpu.memory_space<vmem>>, vector<256x128xf32>,
    %c2_75 = arith.constant 2 : index
    %c0_76 = arith.constant 0 : index
    %c0_77 = arith.constant 0 : index
    %72 = vector.load %arg6[%c2_75, %c0_76, %c0_77] : memref<18x18x128xf32, #tpu.memory_space<vmem>>, vector<16x16x128xf32>
    %73 = vector.shape_cast %72 : vector<16x16x128xf32> to vector<256x128xf32>
    %74 = arith.truncf %73 : vector<256x128xf32> to vector<256x128xbf16>
    %c0_78 = arith.constant 0 : index
    %c0_79 = arith.constant 0 : index
    %75 = vector.load %arg7[%c0_78, %c0_79] : memref<256x128xf32, #tpu.memory_space<vmem>>, vector<256x128xf32>
    %c6 = arith.constant 6 : index
    %c0_80 = arith.constant 0 : index
    %c0_81 = arith.constant 0 : index
    %76 = vector.load %arg3[%c6, %c0_80, %c0_81] : memref<9x128x128xbf16, #tpu.memory_space<vmem>>, vector<1x128x128xbf16>
    %77 = vector.shape_cast %76 : vector<1x128x128xbf16> to vector<128x128xbf16>
    %cst_82 = arith.constant dense<0.000000e+00> : vector<256x128xf32>
    %78 = tpu.matmul %74, %77, %cst_82 {dimension_numbers = #tpu.dot_dimension_numbers<[1], [0], [0], [1], [0, 0, 1, 1], [], []>} : vector<256x128xbf16>, vector<128x128xbf16>, vector<256x128xf32> -> vector<256x128xf32>
    %79 = arith.addf %75, %78 : vector<256x128xf32>
    %c0_83 = arith.constant 0 : index
    %c0_84 = arith.constant 0 : index
    %80 = vector.load %arg7[%c0_83, %c0_84] : memref<256x128xf32, #tpu.memory_space<vmem>>, vector<256x128xf32>
    tpu.vector_store %arg7[%c0_83, %c0_84], %79 {strides = array<i32>} : memref<256x128xf32, #tpu.memory_space<vmem>>, vector<256x128xf32>,
    %c2_85 = arith.constant 2 : index
    %c1_86 = arith.constant 1 : index
    %c0_87 = arith.constant 0 : index
    %81 = vector.load %arg6[%c2_85, %c1_86, %c0_87] : memref<18x18x128xf32, #tpu.memory_space<vmem>>, vector<16x16x128xf32>
    %82 = vector.shape_cast %81 : vector<16x16x128xf32> to vector<256x128xf32>
    %83 = arith.truncf %82 : vector<256x128xf32> to vector<256x128xbf16>
    %c0_88 = arith.constant 0 : index
    %c0_89 = arith.constant 0 : index
    %84 = vector.load %arg7[%c0_88, %c0_89] : memref<256x128xf32, #tpu.memory_space<vmem>>, vector<256x128xf32>
    %c7 = arith.constant 7 : index
    %c0_90 = arith.constant 0 : index
    %c0_91 = arith.constant 0 : index
    %85 = vector.load %arg3[%c7, %c0_90, %c0_91] : memref<9x128x128xbf16, #tpu.memory_space<vmem>>, vector<1x128x128xbf16>
    %86 = vector.shape_cast %85 : vector<1x128x128xbf16> to vector<128x128xbf16>
    %cst_92 = arith.constant dense<0.000000e+00> : vector<256x128xf32>
    %87 = tpu.matmul %83, %86, %cst_92 {dimension_numbers = #tpu.dot_dimension_numbers<[1], [0], [0], [1], [0, 0, 1, 1], [], []>} : vector<256x128xbf16>, vector<128x128xbf16>, vector<256x128xf32> -> vector<256x128xf32>
    %88 = arith.addf %84, %87 : vector<256x128xf32>
    %c0_93 = arith.constant 0 : index
    %c0_94 = arith.constant 0 : index
    %89 = vector.load %arg7[%c0_93, %c0_94] : memref<256x128xf32, #tpu.memory_space<vmem>>, vector<256x128xf32>
    tpu.vector_store %arg7[%c0_93, %c0_94], %88 {strides = array<i32>} : memref<256x128xf32, #tpu.memory_space<vmem>>, vector<256x128xf32>,
    %c2_95 = arith.constant 2 : index
    %c2_96 = arith.constant 2 : index
    %c0_97 = arith.constant 0 : index
    %90 = vector.load %arg6[%c2_95, %c2_96, %c0_97] : memref<18x18x128xf32, #tpu.memory_space<vmem>>, vector<16x16x128xf32>
    %91 = vector.shape_cast %90 : vector<16x16x128xf32> to vector<256x128xf32>
    %92 = arith.truncf %91 : vector<256x128xf32> to vector<256x128xbf16>
    %c0_98 = arith.constant 0 : index
    %c0_99 = arith.constant 0 : index
    %93 = vector.load %arg7[%c0_98, %c0_99] : memref<256x128xf32, #tpu.memory_space<vmem>>, vector<256x128xf32>
    %c8 = arith.constant 8 : index
    %c0_100 = arith.constant 0 : index
    %c0_101 = arith.constant 0 : index
    %94 = vector.load %arg3[%c8, %c0_100, %c0_101] : memref<9x128x128xbf16, #tpu.memory_space<vmem>>, vector<1x128x128xbf16>
    %95 = vector.shape_cast %94 : vector<1x128x128xbf16> to vector<128x128xbf16>
    %cst_102 = arith.constant dense<0.000000e+00> : vector<256x128xf32>
    %96 = tpu.matmul %92, %95, %cst_102 {dimension_numbers = #tpu.dot_dimension_numbers<[1], [0], [0], [1], [0, 0, 1, 1], [], []>} : vector<256x128xbf16>, vector<128x128xbf16>, vector<256x128xf32> -> vector<256x128xf32>
    %97 = arith.addf %93, %96 : vector<256x128xf32>
    %c0_103 = arith.constant 0 : index
    %c0_104 = arith.constant 0 : index
    %98 = vector.load %arg7[%c0_103, %c0_104] : memref<256x128xf32, #tpu.memory_space<vmem>>, vector<256x128xf32>
    tpu.vector_store %arg7[%c0_103, %c0_104], %97 {strides = array<i32>} : memref<256x128xf32, #tpu.memory_space<vmem>>, vector<256x128xf32>,
    %c0_105 = arith.constant 0 : index
    %c0_106 = arith.constant 0 : index
    %99 = vector.load %arg7[%c0_105, %c0_106] : memref<256x128xf32, #tpu.memory_space<vmem>>, vector<256x128xf32>
    %c0_107 = arith.constant 0 : index
    %c0_108 = arith.constant 0 : index
    %100 = vector.load %arg8[%c0_107, %c0_108] : memref<2x128xf32, #tpu.memory_space<vmem>>, vector<1x128xf32>
    %cst_109 = arith.constant dense<0.000000e+00> : vector<128xf32>
    %101 = vector.multi_reduction <add>, %99, %cst_109 [0] : vector<256x128xf32> to vector<128xf32>
    %102 = vector.shape_cast %101 : vector<128xf32> to vector<1x128xf32>
    %103 = arith.addf %100, %102 : vector<1x128xf32>
    %c0_110 = arith.constant 0 : index
    %c0_111 = arith.constant 0 : index
    %104 = vector.load %arg8[%c0_110, %c0_111] : memref<2x128xf32, #tpu.memory_space<vmem>>, vector<1x128xf32>
    tpu.vector_store %arg8[%c0_110, %c0_111], %103 {strides = array<i32>} : memref<2x128xf32, #tpu.memory_space<vmem>>, vector<1x128xf32>,
    %c1_112 = arith.constant 1 : index
    %c0_113 = arith.constant 0 : index
    %105 = vector.load %arg8[%c1_112, %c0_113] : memref<2x128xf32, #tpu.memory_space<vmem>>, vector<1x128xf32>
    %106 = arith.mulf %99, %99 : vector<256x128xf32>
    %cst_114 = arith.constant dense<0.000000e+00> : vector<128xf32>
    %107 = vector.multi_reduction <add>, %106, %cst_114 [0] : vector<256x128xf32> to vector<128xf32>
    %108 = vector.shape_cast %107 : vector<128xf32> to vector<1x128xf32>
    %109 = arith.addf %105, %108 : vector<1x128xf32>
    %c1_115 = arith.constant 1 : index
    %c0_116 = arith.constant 0 : index
    %110 = vector.load %arg8[%c1_115, %c0_116] : memref<2x128xf32, #tpu.memory_space<vmem>>, vector<1x128xf32>
    tpu.vector_store %arg8[%c1_115, %c0_116], %109 {strides = array<i32>} : memref<2x128xf32, #tpu.memory_space<vmem>>, vector<1x128xf32>,
    %111 = vector.shape_cast %99 : vector<256x128xf32> to vector<16x16x128xf32>
    %c0_117 = arith.constant 0 : index
    %c0_118 = arith.constant 0 : index
    %c0_119 = arith.constant 0 : index
    %c0_120 = arith.constant 0 : index
    %112 = vector.load %arg4[%c0_117, %c0_118, %c0_119, %c0_120] : memref<1x16x16x128xf32, #tpu.memory_space<vmem>>, vector<1x16x16x128xf32>
    %113 = vector.shape_cast %112 : vector<1x16x16x128xf32> to vector<16x16x128xf32>
    %114 = vector.shape_cast %111 : vector<16x16x128xf32> to vector<1x16x16x128xf32>
    tpu.vector_store %arg4[%c0_117, %c0_118, %c0_119, %c0_120], %114 {strides = array<i32>} : memref<1x16x16x128xf32, #tpu.memory_space<vmem>>, vector<1x16x16x128xf32>,
    %c0_121 = arith.constant 0 : index
    %c0_122 = arith.constant 0 : index
    %115 = vector.load %arg8[%c0_121, %c0_122] : memref<2x128xf32, #tpu.memory_space<vmem>>, vector<2x128xf32>
    %c0_123 = arith.constant 0 : index
    %c0_124 = arith.constant 0 : index
    %116 = vector.load %arg5[%c0_123, %c0_124] : memref<2x128xf32, #tpu.memory_space<vmem>>, vector<2x128xf32>
    tpu.vector_store %arg5[%c0_123, %c0_124], %115 {strides = array<i32>} : memref<2x128xf32, #tpu.memory_space<vmem>>, vector<2x128xf32>,
    return
  }
  func.func @transform_0(%arg0: i32) -> (i32, i32, i32, i32) {
    %c0_i32 = arith.constant 0 : i32
    %c0_i32_0 = arith.constant 0 : i32
    %c0_i32_1 = arith.constant 0 : i32
    %c0_i32_2 = arith.constant 0 : i32
    return %arg0, %c0_i32, %c0_i32_0, %c0_i32_1 : i32, i32, i32, i32
  }
  func.func @transform_1(%arg0: i32) -> (i32, i32) {
    %c0_i32 = arith.constant 0 : i32
    %c0_i32_0 = arith.constant 0 : i32
    %c0_i32_1 = arith.constant 0 : i32
    return %c0_i32, %c0_i32_0 : i32, i32
  }
  func.func @transform_2(%arg0: i32) -> (i32, i32, i32) {
    %c0_i32 = arith.constant 0 : i32
    %c0_i32_0 = arith.constant 0 : i32
    %c0_i32_1 = arith.constant 0 : i32
    %c0_i32_2 = arith.constant 0 : i32
    return %c0_i32, %c0_i32_0, %c0_i32_1 : i32, i32, i32
  }
  func.func @transform_3(%arg0: i32) -> (i32, i32, i32, i32) {
    %c0_i32 = arith.constant 0 : i32
    %c0_i32_0 = arith.constant 0 : i32
    %c0_i32_1 = arith.constant 0 : i32
    %c0_i32_2 = arith.constant 0 : i32
    return %arg0, %c0_i32, %c0_i32_0, %c0_i32_1 : i32, i32, i32, i32
  }
  func.func @transform_4(%arg0: i32) -> (i32, i32) {
    %c0_i32 = arith.constant 0 : i32
    %c0_i32_0 = arith.constant 0 : i32
    %c0_i32_1 = arith.constant 0 : i32
    return %c0_i32, %c0_i32_0 : i32, i32
  }
}

module attributes {stable_mosaic.version = 11 : i64} {
  func.func @kernel(%arg0: i32, %arg1: memref<256x128xf32, #tpu.memory_space<vmem>>, %arg2: memref<256x128xf32, #tpu.memory_space<vmem>>, %arg3: memref<2x128xf32, #tpu.memory_space<vmem>>, %arg4: memref<256x128xf32, #tpu.memory_space<vmem>>) attributes {dimension_semantics = [#tpu.dimension_semantics<parallel>], iteration_bounds = array<i64: 2>, scalar_prefetch = 0 : i64, scratch_operands = 0 : i64, tpu.core_type = #tpu.core_type<tc>, window_params = [{transform_indices = @transform_0, window_bounds = array<i64: 256, 128>}, {transform_indices = @transform_1, window_bounds = array<i64: 256, 128>}, {pipeline_mode = #tpu.pipeline_mode<synchronous>, transform_indices = @transform_2, window_bounds = array<i64: 2, 128>}, {transform_indices = @transform_3, window_bounds = array<i64: 256, 128>}]} {
    %c0 = arith.constant 0 : index
    %c0_0 = arith.constant 0 : index
    %0 = vector.load %arg3[%c0, %c0_0] : memref<2x128xf32, #tpu.memory_space<vmem>>, vector<1x128xf32>
    %c1 = arith.constant 1 : index
    %c0_1 = arith.constant 0 : index
    %1 = vector.load %arg3[%c1, %c0_1] : memref<2x128xf32, #tpu.memory_space<vmem>>, vector<1x128xf32>
    %c0_2 = arith.constant 0 : index
    %c0_3 = arith.constant 0 : index
    %2 = vector.load %arg1[%c0_2, %c0_3] : memref<256x128xf32, #tpu.memory_space<vmem>>, vector<256x128xf32>
    %3 = vector.broadcast %0 : vector<1x128xf32> to vector<256x128xf32>
    %4 = arith.mulf %2, %3 : vector<256x128xf32>
    %5 = vector.broadcast %1 : vector<1x128xf32> to vector<256x128xf32>
    %6 = arith.addf %4, %5 : vector<256x128xf32>
    %c0_4 = arith.constant 0 : index
    %c0_5 = arith.constant 0 : index
    %7 = vector.load %arg2[%c0_4, %c0_5] : memref<256x128xf32, #tpu.memory_space<vmem>>, vector<256x128xf32>
    %8 = arith.addf %6, %7 : vector<256x128xf32>
    %cst = arith.constant 0.000000e+00 : f32
    %9 = vector.broadcast %cst : f32 to vector<256x128xf32>
    %10 = arith.maximumf %8, %9 : vector<256x128xf32>
    %c0_6 = arith.constant 0 : index
    %c0_7 = arith.constant 0 : index
    %11 = vector.load %arg4[%c0_6, %c0_7] : memref<256x128xf32, #tpu.memory_space<vmem>>, vector<256x128xf32>
    tpu.vector_store %arg4[%c0_6, %c0_7], %10 {strides = array<i32>} : memref<256x128xf32, #tpu.memory_space<vmem>>, vector<256x128xf32>,
    return
  }
  func.func @transform_0(%arg0: i32) -> (i32, i32) {
    %c0_i32 = arith.constant 0 : i32
    %c0_i32_0 = arith.constant 0 : i32
    return %arg0, %c0_i32 : i32, i32
  }
  func.func @transform_1(%arg0: i32) -> (i32, i32) {
    %c0_i32 = arith.constant 0 : i32
    %c0_i32_0 = arith.constant 0 : i32
    return %arg0, %c0_i32 : i32, i32
  }
  func.func @transform_2(%arg0: i32) -> (i32, i32) {
    %c0_i32 = arith.constant 0 : i32
    %c0_i32_0 = arith.constant 0 : i32
    %c0_i32_1 = arith.constant 0 : i32
    return %c0_i32, %c0_i32_0 : i32, i32
  }
  func.func @transform_3(%arg0: i32) -> (i32, i32) {
    %c0_i32 = arith.constant 0 : i32
    %c0_i32_0 = arith.constant 0 : i32
    return %arg0, %c0_i32 : i32, i32
  }
}

</mosaic_0001>

<llo_original>
// kernel: basic_block_forward.5
$region0: #{basic_block_forward.5}
  #allocation0 [shape = 'u32[]', space=smem, size = 0x4, offset = 0x4, fixed_abs, tag = 'smem constant byte address 0x4 - core index']
  #allocation1 [shape = 'u32[144,128]{1,0:T(1,128)}', space=vmem, size = 0x12000, scoped, tag = 'internal scratch']
  %s0 = inlined_call_operand.vmem [shape: f32[512,128], index: 0, kind: input, shape index: {}]
  %s1 = inlined_call_operand.vmem [shape: f32[512,128], index: 1, kind: input, shape index: {}]
  %s2 = inlined_call_operand.vmem [shape: f32[2,128], index: 2, kind: input, shape index: {}]
  %s3 = inlined_call_operand.vmem [shape: f32[512,128], index: 3, kind: output, shape index: {}]
  %s4 = sld [smem:[#allocation0]]
  $region45: #{basic_block_forward.5} parent=0
    _
  %s6 = ssub.s32 1, %s4
  %s7 = scalar_select 0, %s6, %s4
  loop: start=0, step=1, limit=4
  $region2: #{basic_block_forward.5} parent=0 // loop_pre_header
    _
  $region3: #{basic_block_forward.5} parent=0 // loop_header
    %s9 = sphi 0, %s13
    %p10 = scmp.ge.s32.totalorder %s9, 4
    %s19 = sphi 0, %s21
    %s22 = sphi 0, %s19
    %s23 = sphi 0, %s22
    %s39 = sphi 0, %s23
    %s45 = sphi 0, %s47
    %s48 = sphi 0, %s45
    %s49 = sphi 0, %s48
    %s65 = sphi 0, %s49
    %s69 = sphi 0, %s69
    %s71 = sphi 0, %s69
    %s72 = sphi 0, %s71
    %s86 = sphi 0, %s72
    %s92 = sphi 0, %s94
    %s95 = sphi 0, %s92
    %s96 = sphi 0, %s95
    %s112 = sphi 0, %s96
  $region4: #{basic_block_forward.5} parent=0 // loop_header_branch
    %12 = sbr.rel (%p10) target = $region8
  $region5: #{basic_block_forward.5} parent=0 // loop_body
    %s14 = ssub.s32 %s9, 1
    %s15 = ssub.s32 %s9, 2
    %s16 = sadd.s32 %s9, 1
    %s17 = ssub.s32 %s9, %s16
    %p18 = scmp.eq.s32.totalorder %s17, 0
    %s20 = sadd.s32 %s19, 1
    %s21 = scalar_select %p18, %s19, %s20
    %p24 = pneg %p18
    %p25 = scmp.eq.s32.totalorder %s9, 1
    %p26 = por %p24, %p25
    %p27 = scmp.ne.s32.totalorder %s19, %s22
    %p28 = scmp.eq.s32.totalorder %s9, 0
    %p29 = por %p27, %p28
    %p30 = scmp.ne.s32.totalorder %s19, %s22
    %p31 = scmp.eq.s32.totalorder %s14, 1
    %p32 = por %p30, %p31
    %p33 = scmp.ne.s32.totalorder %s22, %s23
    %p34 = scmp.eq.s32.totalorder %s14, 0
    %p35 = por %p33, %p34
    %p36 = scmp.ne.s32.totalorder %s22, %s23
    %p37 = scmp.eq.s32.totalorder %s15, 1
    %p38 = por %p36, %p37
    %p40 = scmp.ne.s32.totalorder %s23, %s39
    %p41 = scmp.eq.s32.totalorder %s15, 0
    %p42 = por %p40, %p41
    %s43 = ssub.s32 %s9, %s16
    %p44 = scmp.eq.s32.totalorder %s43, 0
    %s46 = sadd.s32 %s45, 1
    %s47 = scalar_select %p44, %s45, %s46
    %p50 = pneg %p44
    %p51 = scmp.eq.s32.totalorder %s9, 1
    %p52 = por %p50, %p51
    %p53 = scmp.ne.s32.totalorder %s45, %s48
    %p54 = scmp.eq.s32.totalorder %s9, 0
    %p55 = por %p53, %p54
    %p56 = scmp.ne.s32.totalorder %s45, %s48
    %p57 = scmp.eq.s32.totalorder %s14, 1
    %p58 = por %p56, %p57
    %p59 = scmp.ne.s32.totalorder %s48, %s49
    %p60 = scmp.eq.s32.totalorder %s14, 0
    %p61 = por %p59, %p60
    %p62 = scmp.ne.s32.totalorder %s48, %s49
    %p63 = scmp.eq.s32.totalorder %s15, 1
    %p64 = por %p62, %p63
    %p66 = scmp.ne.s32.totalorder %s49, %s65
    %p67 = scmp.eq.s32.totalorder %s15, 0
    %p68 = por %p66, %p67
    %s70 = sadd.s32 %s69, 1
    %p73 = scmp.eq.s32.totalorder %s9, 1
    %p74 = scmp.ne.s32.totalorder %s69, %s71
    %p75 = scmp.eq.s32.totalorder %s9, 0
    %p76 = por %p74, %p75
    %p77 = scmp.ne.s32.totalorder %s69, %s71
    %p78 = scmp.eq.s32.totalorder %s14, 1
    %p79 = por %p77, %p78
    %p80 = scmp.ne.s32.totalorder %s71, %s72
    %p81 = scmp.eq.s32.totalorder %s14, 0
    %p82 = por %p80, %p81
    %p83 = scmp.ne.s32.totalorder %s71, %s72
    %p84 = scmp.eq.s32.totalorder %s15, 1
    %p85 = por %p83, %p84
    %p87 = scmp.ne.s32.totalorder %s72, %s86
    %p88 = scmp.eq.s32.totalorder %s15, 0
    %p89 = por %p87, %p88
    %s90 = ssub.s32 %s9, %s16
    %p91 = scmp.eq.s32.totalorder %s90, 0
    %s93 = sadd.s32 %s92, 1
    %s94 = scalar_select %p91, %s92, %s93
    %p97 = pneg %p91
    %p98 = scmp.eq.s32.totalorder %s9, 1
    %p99 = por %p97, %p98
    %p100 = scmp.ne.s32.totalorder %s92, %s95
    %p101 = scmp.eq.s32.totalorder %s9, 0
    %p102 = por %p100, %p101
    %p103 = scmp.ne.s32.totalorder %s92, %s95
    %p104 = scmp.eq.s32.totalorder %s14, 1
    %p105 = por %p103, %p104
    %p106 = scmp.ne.s32.totalorder %s95, %s96
    %p107 = scmp.eq.s32.totalorder %s14, 0
    %p108 = por %p106, %p107
    %p109 = scmp.ne.s32.totalorder %s95, %s96
    %p110 = scmp.eq.s32.totalorder %s15, 1
    %p111 = por %p109, %p110
    %p113 = scmp.ne.s32.totalorder %s96, %s112
    %p114 = scmp.eq.s32.totalorder %s15, 0
    %p115 = por %p113, %p114
    %p116 = scmp.le.s32.totalorder 1, %s9
    %p117 = scmp.lt.s32.totalorder %s9, 3
    %p118 = pnand %p116, %p117
    %p119 = pneg %p118
    // Predicated region
    $region9: #{basic_block_forward.5} parent=5 // pred_check
      _
    $region10: #{basic_block_forward.5} parent=5 // pred_check_branch
      %121 = sbr.rel (%p118) target = $region12
    $region11: #{basic_block_forward.5} parent=5 // pred_region
      %s122 = ssub.s32 %s9, 1
      // Predicated region
      $region13: #{basic_block_forward.5} parent=11 // pred_check
        %p123 = pneg %p82
      $region14: #{basic_block_forward.5} parent=11 // pred_check_branch
        %125 = sbr.rel (%p123) target = $region16
      $region15: #{basic_block_forward.5} parent=11 // pred_region
        _
      $region16: #{basic_block_forward.5} parent=11 // pred_fallthru
        _
    $region12: #{basic_block_forward.5} parent=5 // pred_fallthru
      _
    %p126 = scmp.lt.s32.totalorder %s9, 2
    // Predicated region
    $region17: #{basic_block_forward.5} parent=5 // pred_check
      %p127 = pneg %p126
    $region18: #{basic_block_forward.5} parent=5 // pred_check_branch
      %129 = sbr.rel (%p127) target = $region20
    $region19: #{basic_block_forward.5} parent=5 // pred_region
      // Predicated region
      $region21: #{basic_block_forward.5} parent=19 // pred_check
        %p130 = pneg %p29
      $region22: #{basic_block_forward.5} parent=19 // pred_check_branch
        %132 = sbr.rel (%p130) target = $region24
      $region23: #{basic_block_forward.5} parent=19 // pred_region
        %s133 = smul.u32 32, %s9
        %p134 = scmp.lt.s32.totalorder %s133, 63
        %s135 = scalar_select %p134, %s133, 63
        %s136 = smul.addr %s135, 8
        %s137 = scalar_lea.vmem %s0, %s136
        %s138 = smul.u32 32, %s9
      $region24: #{basic_block_forward.5} parent=19 // pred_fallthru
        _
      // Predicated region
      $region25: #{basic_block_forward.5} parent=19 // pred_check
        %p139 = pneg %p55
      $region26: #{basic_block_forward.5} parent=19 // pred_check_branch
        %141 = sbr.rel (%p139) target = $region28
      $region27: #{basic_block_forward.5} parent=19 // pred_region
        %s142 = smul.u32 32, %s9
        %p143 = scmp.lt.s32.totalorder %s142, 63
        %s144 = scalar_select %p143, %s142, 63
        %s145 = smul.addr %s144, 8
        %s146 = scalar_lea.vmem %s1, %s145
        %s147 = smul.u32 32, %s9
      $region28: #{basic_block_forward.5} parent=19 // pred_fallthru
        _
    $region20: #{basic_block_forward.5} parent=5 // pred_fallthru
      _
    %p148 = scmp.le.s32.totalorder 1, %s9
    %p149 = scmp.lt.s32.totalorder %s9, 3
    %p150 = pnand %p148, %p149
    %p151 = pneg %p150
    // Predicated region
    $region29: #{basic_block_forward.5} parent=5 // pred_check
      _
    $region30: #{basic_block_forward.5} parent=5 // pred_check_branch
      %153 = sbr.rel (%p150) target = $region32
    $region31: #{basic_block_forward.5} parent=5 // pred_region
      %s154 = ssub.s32 %s9, 1
      %s155 = smul.u32 32, %s14
      %p156 = scmp.lt.s32.totalorder %s155, 63
      %s157 = scalar_select %p156, %s155, 63
      %s158 = smul.addr %s157, 8
      %s159 = scalar_lea.vmem %s0, %s158
      %p160 = pneg %p35
      %p161 = pneg %p32
      %s162 = smul.u32 32, %s14
      %p163 = scmp.lt.s32.totalorder %s162, 63
      %s164 = scalar_select %p163, %s162, 63
      %s165 = smul.addr %s164, 8
      %s166 = scalar_lea.vmem %s1, %s165
      %p167 = pneg %p61
      %p168 = pneg %p58
      %p169 = pneg %p82
      %p170 = pneg %p79
      %p171 = pneg %p108
      %p172 = pneg %p105
      %s173 = smul.u32 32, %s14
      %p174 = scmp.lt.s32.totalorder %s173, 63
      %s175 = scalar_select %p174, %s173, 63
      %s176 = smul.addr %s175, 8
      %s177 = scalar_lea.vmem %s3, %s176
      %s178 = smul.u32 32, %s14
      %p179 = scmp.lt.s32.totalorder %s178, 63
      %s180 = scalar_select %p179, %s178, 63
      %s181 = smul.addr %s180, 8
      %s182 = scalar_lea.vmem %s0, %s181
      %s183 = smul.u32 32, %s14
      %s184 = smul.u32 32, %s14
      %p185 = scmp.lt.s32.totalorder %s184, 63
      %s186 = scalar_select %p185, %s184, 63
      %s187 = smul.addr %s186, 8
      %s188 = scalar_lea.vmem %s1, %s187
      %s189 = smul.u32 32, %s14
      %s190 = smul.u32 32, %s14
      %p191 = scmp.lt.s32.totalorder %s190, 63
      %s192 = scalar_select %p191, %s190, 63
      %s193 = smul.addr %s192, 8
      %s194 = scalar_lea.vmem %s3, %s193
      %s195 = smul.u32 32, %s14
      %v196 = vld [vmem:[%s2] sm:$0x1]
      %v197 = vld [vmem:[%s2 + $0x1] sm:$0x1]
      %v198 = vld [vmem:[%s182] sm:$0xff]
      %v199 = vld [vmem:[%s182 + $0x8] sm:$0xff]
      %v200 = vld [vmem:[%s182 + $0x10] sm:$0xff]
      %v201 = vld [vmem:[%s182 + $0x18] sm:$0xff]
      %v202 = vld [vmem:[%s182 + $0x20] sm:$0xff]
      %v203 = vld [vmem:[%s182 + $0x28] sm:$0xff]
      %v204 = vld [vmem:[%s182 + $0x30] sm:$0xff]
      %v205 = vld [vmem:[%s182 + $0x38] sm:$0xff]
      %v206 = vld [vmem:[%s182 + $0x40] sm:$0xff]
      %v207 = vld [vmem:[%s182 + $0x48] sm:$0xff]
      %v208 = vld [vmem:[%s182 + $0x50] sm:$0xff]
      %v209 = vld [vmem:[%s182 + $0x58] sm:$0xff]
      %v210 = vld [vmem:[%s182 + $0x60] sm:$0xff]
      %v211 = vld [vmem:[%s182 + $0x68] sm:$0xff]
      %v212 = vld [vmem:[%s182 + $0x70] sm:$0xff]
      %v213 = vld [vmem:[%s182 + $0x78] sm:$0xff]
      %v214 = vld [vmem:[%s182 + $0x80] sm:$0xff]
      %v215 = vld [vmem:[%s182 + $0x88] sm:$0xff]
      %v216 = vld [vmem:[%s182 + $0x90] sm:$0xff]
      %v217 = vld [vmem:[%s182 + $0x98] sm:$0xff]
      %v218 = vld [vmem:[%s182 + $0xa0] sm:$0xff]
      %v219 = vld [vmem:[%s182 + $0xa8] sm:$0xff]
      %v220 = vld [vmem:[%s182 + $0xb0] sm:$0xff]
      %v221 = vld [vmem:[%s182 + $0xb8] sm:$0xff]
      %v222 = vld [vmem:[%s182 + $0xc0] sm:$0xff]
      %v223 = vld [vmem:[%s182 + $0xc8] sm:$0xff]
      %v224 = vld [vmem:[%s182 + $0xd0] sm:$0xff]
      %v225 = vld [vmem:[%s182 + $0xd8] sm:$0xff]
      %v226 = vld [vmem:[%s182 + $0xe0] sm:$0xff]
      %v227 = vld [vmem:[%s182 + $0xe8] sm:$0xff]
      %v228 = vld [vmem:[%s182 + $0xf0] sm:$0xff]
      %v229 = vld [vmem:[%s182 + $0xf8] sm:$0xff]
      %v230 = vlaneseq
      %v231 = vshrl.u32 %v230, 7
      %v232 = vsub.s32 0, %v231
      %v233 = vrot.slane %v196, %v232
      %v234 = vmul.f32 %v198, %v233
      %v235 = vmul.f32 %v199, %v233
      %v236 = vmul.f32 %v200, %v233
      %v237 = vmul.f32 %v201, %v233
      %v238 = vmul.f32 %v202, %v233
      %v239 = vmul.f32 %v203, %v233
      %v240 = vmul.f32 %v204, %v233
      %v241 = vmul.f32 %v205, %v233
      %v242 = vmul.f32 %v206, %v233
      %v243 = vmul.f32 %v207, %v233
      %v244 = vmul.f32 %v208, %v233
      %v245 = vmul.f32 %v209, %v233
      %v246 = vmul.f32 %v210, %v233
      %v247 = vmul.f32 %v211, %v233
      %v248 = vmul.f32 %v212, %v233
      %v249 = vmul.f32 %v213, %v233
      %v250 = vmul.f32 %v214, %v233
      %v251 = vmul.f32 %v215, %v233
      %v252 = vmul.f32 %v216, %v233
      %v253 = vmul.f32 %v217, %v233
      %v254 = vmul.f32 %v218, %v233
      %v255 = vmul.f32 %v219, %v233
      %v256 = vmul.f32 %v220, %v233
      %v257 = vmul.f32 %v221, %v233
      %v258 = vmul.f32 %v222, %v233
      %v259 = vmul.f32 %v223, %v233
      %v260 = vmul.f32 %v224, %v233
      %v261 = vmul.f32 %v225, %v233
      %v262 = vmul.f32 %v226, %v233
      %v263 = vmul.f32 %v227, %v233
      %v264 = vmul.f32 %v228, %v233
      %v265 = vmul.f32 %v229, %v233
      %v266 = vlaneseq
      %v267 = vshrl.u32 %v266, 7
      %v268 = vsub.s32 0, %v267
      %v269 = vrot.slane %v197, %v268
      %v270 = vadd.f32 %v234, %v269
      %v271 = vadd.f32 %v235, %v269
      %v272 = vadd.f32 %v236, %v269
      %v273 = vadd.f32 %v237, %v269
      %v274 = vadd.f32 %v238, %v269
      %v275 = vadd.f32 %v239, %v269
      %v276 = vadd.f32 %v240, %v269
      %v277 = vadd.f32 %v241, %v269
      %v278 = vadd.f32 %v242, %v269
      %v279 = vadd.f32 %v243, %v269
      %v280 = vadd.f32 %v244, %v269
      %v281 = vadd.f32 %v245, %v269
      %v282 = vadd.f32 %v246, %v269
      %v283 = vadd.f32 %v247, %v269
      %v284 = vadd.f32 %v248, %v269
      %v285 = vadd.f32 %v249, %v269
      %v286 = vadd.f32 %v250, %v269
      %v287 = vadd.f32 %v251, %v269
      %v288 = vadd.f32 %v252, %v269
      %v289 = vadd.f32 %v253, %v269
      %v290 = vadd.f32 %v254, %v269
      %v291 = vadd.f32 %v255, %v269
      %v292 = vadd.f32 %v256, %v269
      %v293 = vadd.f32 %v257, %v269
      %v294 = vadd.f32 %v258, %v269
      %v295 = vadd.f32 %v259, %v269
      %v296 = vadd.f32 %v260, %v269
      %v297 = vadd.f32 %v261, %v269
      %v298 = vadd.f32 %v262, %v269
      %v299 = vadd.f32 %v263, %v269
      %v300 = vadd.f32 %v264, %v269
      %v301 = vadd.f32 %v265, %v269
      %v302 = vld [vmem:[%s188] sm:$0xff]
      %v303 = vld [vmem:[%s188 + $0x8] sm:$0xff]
      %v304 = vld [vmem:[%s188 + $0x10] sm:$0xff]
      %v305 = vld [vmem:[%s188 + $0x18] sm:$0xff]
      %v306 = vld [vmem:[%s188 + $0x20] sm:$0xff]
      %v307 = vld [vmem:[%s188 + $0x28] sm:$0xff]
      %v308 = vld [vmem:[%s188 + $0x30] sm:$0xff]
      %v309 = vld [vmem:[%s188 + $0x38] sm:$0xff]
      %v310 = vld [vmem:[%s188 + $0x40] sm:$0xff]
      %v311 = vld [vmem:[%s188 + $0x48] sm:$0xff]
      %v312 = vld [vmem:[%s188 + $0x50] sm:$0xff]
      %v313 = vld [vmem:[%s188 + $0x58] sm:$0xff]
      %v314 = vld [vmem:[%s188 + $0x60] sm:$0xff]
      %v315 = vld [vmem:[%s188 + $0x68] sm:$0xff]
      %v316 = vld [vmem:[%s188 + $0x70] sm:$0xff]
      %v317 = vld [vmem:[%s188 + $0x78] sm:$0xff]
      %v318 = vld [vmem:[%s188 + $0x80] sm:$0xff]
      %v319 = vld [vmem:[%s188 + $0x88] sm:$0xff]
      %v320 = vld [vmem:[%s188 + $0x90] sm:$0xff]
      %v321 = vld [vmem:[%s188 + $0x98] sm:$0xff]
      %v322 = vld [vmem:[%s188 + $0xa0] sm:$0xff]
      %v323 = vld [vmem:[%s188 + $0xa8] sm:$0xff]
      %v324 = vld [vmem:[%s188 + $0xb0] sm:$0xff]
      %v325 = vld [vmem:[%s188 + $0xb8] sm:$0xff]
      %v326 = vld [vmem:[%s188 + $0xc0] sm:$0xff]
      %v327 = vld [vmem:[%s188 + $0xc8] sm:$0xff]
      %v328 = vld [vmem:[%s188 + $0xd0] sm:$0xff]
      %v329 = vld [vmem:[%s188 + $0xd8] sm:$0xff]
      %v330 = vld [vmem:[%s188 + $0xe0] sm:$0xff]
      %v331 = vld [vmem:[%s188 + $0xe8] sm:$0xff]
      %v332 = vld [vmem:[%s188 + $0xf0] sm:$0xff]
      %v333 = vld [vmem:[%s188 + $0xf8] sm:$0xff]
      %v334 = vadd.f32 %v270, %v302
      %v335 = vadd.f32 %v271, %v303
      %v336 = vadd.f32 %v272, %v304
      %v337 = vadd.f32 %v273, %v305
      %v338 = vadd.f32 %v274, %v306
      %v339 = vadd.f32 %v275, %v307
      %v340 = vadd.f32 %v276, %v308
      %v341 = vadd.f32 %v277, %v309
      %v342 = vadd.f32 %v278, %v310
      %v343 = vadd.f32 %v279, %v311
      %v344 = vadd.f32 %v280, %v312
      %v345 = vadd.f32 %v281, %v313
      %v346 = vadd.f32 %v282, %v314
      %v347 = vadd.f32 %v283, %v315
      %v348 = vadd.f32 %v284, %v316
      %v349 = vadd.f32 %v285, %v317
      %v350 = vadd.f32 %v286, %v318
      %v351 = vadd.f32 %v287, %v319
      %v352 = vadd.f32 %v288, %v320
      %v353 = vadd.f32 %v289, %v321
      %v354 = vadd.f32 %v290, %v322
      %v355 = vadd.f32 %v291, %v323
      %v356 = vadd.f32 %v292, %v324
      %v357 = vadd.f32 %v293, %v325
      %v358 = vadd.f32 %v294, %v326
      %v359 = vadd.f32 %v295, %v327
      %v360 = vadd.f32 %v296, %v328
      %v361 = vadd.f32 %v297, %v329
      %v362 = vadd.f32 %v298, %v330
      %v363 = vadd.f32 %v299, %v331
      %v364 = vadd.f32 %v300, %v332
      %v365 = vadd.f32 %v301, %v333
      %v366 = vmax.f32 %v334, 0.0
      %v367 = vmax.f32 %v335, 0.0
      %v368 = vmax.f32 %v336, 0.0
      %v369 = vmax.f32 %v337, 0.0
      %v370 = vmax.f32 %v338, 0.0
      %v371 = vmax.f32 %v339, 0.0
      %v372 = vmax.f32 %v340, 0.0
      %v373 = vmax.f32 %v341, 0.0
      %v374 = vmax.f32 %v342, 0.0
      %v375 = vmax.f32 %v343, 0.0
      %v376 = vmax.f32 %v344, 0.0
      %v377 = vmax.f32 %v345, 0.0
      %v378 = vmax.f32 %v346, 0.0
      %v379 = vmax.f32 %v347, 0.0
      %v380 = vmax.f32 %v348, 0.0
      %v381 = vmax.f32 %v349, 0.0
      %v382 = vmax.f32 %v350, 0.0
      %v383 = vmax.f32 %v351, 0.0
      %v384 = vmax.f32 %v352, 0.0
      %v385 = vmax.f32 %v353, 0.0
      %v386 = vmax.f32 %v354, 0.0
      %v387 = vmax.f32 %v355, 0.0
      %v388 = vmax.f32 %v356, 0.0
      %v389 = vmax.f32 %v357, 0.0
      %v390 = vmax.f32 %v358, 0.0
      %v391 = vmax.f32 %v359, 0.0
      %v392 = vmax.f32 %v360, 0.0
      %v393 = vmax.f32 %v361, 0.0
      %v394 = vmax.f32 %v362, 0.0
      %v395 = vmax.f32 %v363, 0.0
      %v396 = vmax.f32 %v364, 0.0
      %v397 = vmax.f32 %v365, 0.0
      %398 = vst [vmem:[%s194] sm:$0xff] %v366
      %399 = vst [vmem:[%s194 + $0x8] sm:$0xff] %v367
      %400 = vst [vmem:[%s194 + $0x10] sm:$0xff] %v368
      %401 = vst [vmem:[%s194 + $0x18] sm:$0xff] %v369
      %402 = vst [vmem:[%s194 + $0x20] sm:$0xff] %v370
      %403 = vst [vmem:[%s194 + $0x28] sm:$0xff] %v371
      %404 = vst [vmem:[%s194 + $0x30] sm:$0xff] %v372
      %405 = vst [vmem:[%s194 + $0x38] sm:$0xff] %v373
      %406 = vst [vmem:[%s194 + $0x40] sm:$0xff] %v374
      %407 = vst [vmem:[%s194 + $0x48] sm:$0xff] %v375
      %408 = vst [vmem:[%s194 + $0x50] sm:$0xff] %v376
      %409 = vst [vmem:[%s194 + $0x58] sm:$0xff] %v377
      %410 = vst [vmem:[%s194 + $0x60] sm:$0xff] %v378
      %411 = vst [vmem:[%s194 + $0x68] sm:$0xff] %v379
      %412 = vst [vmem:[%s194 + $0x70] sm:$0xff] %v380
      %413 = vst [vmem:[%s194 + $0x78] sm:$0xff] %v381
      %414 = vst [vmem:[%s194 + $0x80] sm:$0xff] %v382
      %415 = vst [vmem:[%s194 + $0x88] sm:$0xff] %v383
      %416 = vst [vmem:[%s194 + $0x90] sm:$0xff] %v384
      %417 = vst [vmem:[%s194 + $0x98] sm:$0xff] %v385
      %418 = vst [vmem:[%s194 + $0xa0] sm:$0xff] %v386
      %419 = vst [vmem:[%s194 + $0xa8] sm:$0xff] %v387
      %420 = vst [vmem:[%s194 + $0xb0] sm:$0xff] %v388
      %421 = vst [vmem:[%s194 + $0xb8] sm:$0xff] %v389
      %422 = vst [vmem:[%s194 + $0xc0] sm:$0xff] %v390
      %423 = vst [vmem:[%s194 + $0xc8] sm:$0xff] %v391
      %424 = vst [vmem:[%s194 + $0xd0] sm:$0xff] %v392
      %425 = vst [vmem:[%s194 + $0xd8] sm:$0xff] %v393
      %426 = vst [vmem:[%s194 + $0xe0] sm:$0xff] %v394
      %427 = vst [vmem:[%s194 + $0xe8] sm:$0xff] %v395
      %428 = vst [vmem:[%s194 + $0xf0] sm:$0xff] %v396
      %429 = vst [vmem:[%s194 + $0xf8] sm:$0xff] %v397
      %s430 = smul.u32 32, %s14
      %p431 = scmp.lt.s32.totalorder %s430, 63
      %s432 = scalar_select %p431, %s430, 63
      %s433 = smul.addr %s432, 8
      %s434 = scalar_lea.vmem %s3, %s433
      // Predicated region
      $region33: #{basic_block_forward.5} parent=31 // pred_check
        %p435 = pneg %p105
      $region34: #{basic_block_forward.5} parent=31 // pred_check_branch
        %437 = sbr.rel (%p435) target = $region36
      $region35: #{basic_block_forward.5} parent=31 // pred_region
        %s438 = smul.u32 32, %s14
      $region36: #{basic_block_forward.5} parent=31 // pred_fallthru
        _
    $region32: #{basic_block_forward.5} parent=5 // pred_fallthru
      _
    %p439 = scmp.le.s32.totalorder 2, %s9
    // Predicated region
    $region37: #{basic_block_forward.5} parent=5 // pred_check
      %p440 = pneg %p439
    $region38: #{basic_block_forward.5} parent=5 // pred_check_branch
      %442 = sbr.rel (%p440) target = $region40
    $region39: #{basic_block_forward.5} parent=5 // pred_region
      %s443 = ssub.s32 %s9, 2
      // Predicated region
      $region41: #{basic_block_forward.5} parent=39 // pred_check
        %p444 = pneg %p111
      $region42: #{basic_block_forward.5} parent=39 // pred_check_branch
        %446 = sbr.rel (%p444) target = $region44
      $region43: #{basic_block_forward.5} parent=39 // pred_region
        %s447 = smul.u32 32, %s15
        %p448 = scmp.lt.s32.totalorder %s447, 63
        %s449 = scalar_select %p448, %s447, 63
        %s450 = smul.addr %s449, 8
        %s451 = scalar_lea.vmem %s3, %s450
      $region44: #{basic_block_forward.5} parent=39 // pred_fallthru
        _
    $region40: #{basic_block_forward.5} parent=5 // pred_fallthru
      _
  $region6: #{basic_block_forward.5} parent=0 // loop_footer
    %s13 = sadd.s32 1, %s9
  $region7: #{basic_block_forward.5} parent=0 // loop_footer_branch
    %8 = sbr.rel target = $region3
  $region8: #{basic_block_forward.5} parent=0 // loop_exit
    _

// kernel: basic_block_forward.3
$region0: #{basic_block_forward.3}
  #allocation0 [shape = 'u32[]', space=smem, size = 0x4, offset = 0x4, fixed_abs, tag = 'smem constant byte address 0x4 - core index']
  #allocation1 [shape = 'u32[144,128]{1,0:T(1,128)}', space=vmem, size = 0x12000, scoped, tag = 'internal scratch']
  #allocation2 [shape = 'f32[18,18,128]{2,1,0:T(8,128)}', space=vmem, size = 0x36000, scoped, tag = 'scratch operand']
  #allocation3 [shape = 'f32[256,128]{1,0:T(8,128)}', space=vmem, size = 0x20000, scoped, tag = 'scratch operand']
  #allocation4 [shape = 'f32[2,128]{1,0:T(2,128)}', space=vmem, size = 0x400, scoped, tag = 'scratch operand']
  %s0 = inlined_call_operand.vmem [shape: bf16[2,16,16,128], index: 0, kind: input, shape index: {}]
  %s1 = inlined_call_operand.vmem [shape: bf16[9,128,128], index: 1, kind: input, shape index: {}]
  %s2 = inlined_call_operand.vmem [shape: f32[2,16,16,128], index: 2, kind: output, shape index: {0}]
  %s3 = inlined_call_operand.vmem [shape: f32[2,128], index: 3, kind: output, shape index: {1}]
  %4 = xla_tuple %s2, %s3
  %s5 = sld [smem:[#allocation0]]
  $region53: #{basic_block_forward.3} parent=0
    _
  %s7 = ssub.s32 1, %s5
  %s8 = scalar_select 0, %s7, %s5
  loop: start=0, step=1, limit=4
  $region2: #{basic_block_forward.3} parent=0 // loop_pre_header
    _
  $region3: #{basic_block_forward.3} parent=0 // loop_header
    %s10 = sphi 0, %s14
    %p11 = scmp.ge.s32.totalorder %s10, 4
    %s20 = sphi 0, %s22
    %s23 = sphi 0, %s20
    %s24 = sphi 0, %s23
    %s40 = sphi 0, %s24
    %s44 = sphi 0, %s44
    %s46 = sphi 0, %s44
    %s47 = sphi 0, %s46
    %s61 = sphi 0, %s47
    %s67 = sphi 0, %s69
    %s70 = sphi 0, %s67
    %s71 = sphi 0, %s70
    %s87 = sphi 0, %s71
    %s91 = sphi 0, %s91
    %s93 = sphi 0, %s91
    %s94 = sphi 0, %s93
    %s108 = sphi 0, %s94
  $region4: #{basic_block_forward.3} parent=0 // loop_header_branch
    %13 = sbr.rel (%p11) target = $region8
  $region5: #{basic_block_forward.3} parent=0 // loop_body
    %s15 = ssub.s32 %s10, 1
    %s16 = ssub.s32 %s10, 2
    %s17 = sadd.s32 %s10, 1
    %s18 = ssub.s32 %s10, %s17
    %p19 = scmp.eq.s32.totalorder %s18, 0
    %s21 = sadd.s32 %s20, 1
    %s22 = scalar_select %p19, %s20, %s21
    %p25 = pneg %p19
    %p26 = scmp.eq.s32.totalorder %s10, 1
    %p27 = por %p25, %p26
    %p28 = scmp.ne.s32.totalorder %s20, %s23
    %p29 = scmp.eq.s32.totalorder %s10, 0
    %p30 = por %p28, %p29
    %p31 = scmp.ne.s32.totalorder %s20, %s23
    %p32 = scmp.eq.s32.totalorder %s15, 1
    %p33 = por %p31, %p32
    %p34 = scmp.ne.s32.totalorder %s23, %s24
    %p35 = scmp.eq.s32.totalorder %s15, 0
    %p36 = por %p34, %p35
    %p37 = scmp.ne.s32.totalorder %s23, %s24
    %p38 = scmp.eq.s32.totalorder %s16, 1
    %p39 = por %p37, %p38
    %p41 = scmp.ne.s32.totalorder %s24, %s40
    %p42 = scmp.eq.s32.totalorder %s16, 0
    %p43 = por %p41, %p42
    %s45 = sadd.s32 %s44, 1
    %p48 = scmp.eq.s32.totalorder %s10, 1
    %p49 = scmp.ne.s32.totalorder %s44, %s46
    %p50 = scmp.eq.s32.totalorder %s10, 0
    %p51 = por %p49, %p50
    %p52 = scmp.ne.s32.totalorder %s44, %s46
    %p53 = scmp.eq.s32.totalorder %s15, 1
    %p54 = por %p52, %p53
    %p55 = scmp.ne.s32.totalorder %s46, %s47
    %p56 = scmp.eq.s32.totalorder %s15, 0
    %p57 = por %p55, %p56
    %p58 = scmp.ne.s32.totalorder %s46, %s47
    %p59 = scmp.eq.s32.totalorder %s16, 1
    %p60 = por %p58, %p59
    %p62 = scmp.ne.s32.totalorder %s47, %s61
    %p63 = scmp.eq.s32.totalorder %s16, 0
    %p64 = por %p62, %p63
    %s65 = ssub.s32 %s10, %s17
    %p66 = scmp.eq.s32.totalorder %s65, 0
    %s68 = sadd.s32 %s67, 1
    %s69 = scalar_select %p66, %s67, %s68
    %p72 = pneg %p66
    %p73 = scmp.eq.s32.totalorder %s10, 1
    %p74 = por %p72, %p73
    %p75 = scmp.ne.s32.totalorder %s67, %s70
    %p76 = scmp.eq.s32.totalorder %s10, 0
    %p77 = por %p75, %p76
    %p78 = scmp.ne.s32.totalorder %s67, %s70
    %p79 = scmp.eq.s32.totalorder %s15, 1
    %p80 = por %p78, %p79
    %p81 = scmp.ne.s32.totalorder %s70, %s71
    %p82 = scmp.eq.s32.totalorder %s15, 0
    %p83 = por %p81, %p82
    %p84 = scmp.ne.s32.totalorder %s70, %s71
    %p85 = scmp.eq.s32.totalorder %s16, 1
    %p86 = por %p84, %p85
    %p88 = scmp.ne.s32.totalorder %s71, %s87
    %p89 = scmp.eq.s32.totalorder %s16, 0
    %p90 = por %p88, %p89
    %s92 = sadd.s32 %s91, 1
    %p95 = scmp.eq.s32.totalorder %s10, 1
    %p96 = scmp.ne.s32.totalorder %s91, %s93
    %p97 = scmp.eq.s32.totalorder %s10, 0
    %p98 = por %p96, %p97
    %p99 = scmp.ne.s32.totalorder %s91, %s93
    %p100 = scmp.eq.s32.totalorder %s15, 1
    %p101 = por %p99, %p100
    %p102 = scmp.ne.s32.totalorder %s93, %s94
    %p103 = scmp.eq.s32.totalorder %s15, 0
    %p104 = por %p102, %p103
    %p105 = scmp.ne.s32.totalorder %s93, %s94
    %p106 = scmp.eq.s32.totalorder %s16, 1
    %p107 = por %p105, %p106
    %p109 = scmp.ne.s32.totalorder %s94, %s108
    %p110 = scmp.eq.s32.totalorder %s16, 0
    %p111 = por %p109, %p110
    %p112 = scmp.le.s32.totalorder 1, %s10
    %p113 = scmp.lt.s32.totalorder %s10, 3
    %p114 = pnand %p112, %p113
    %p115 = pneg %p114
    // Predicated region
    $region9: #{basic_block_forward.3} parent=5 // pred_check
      _
    $region10: #{basic_block_forward.3} parent=5 // pred_check_branch
      %117 = sbr.rel (%p114) target = $region12
    $region11: #{basic_block_forward.3} parent=5 // pred_region
      %s118 = ssub.s32 %s10, 1
      // Predicated region
      $region13: #{basic_block_forward.3} parent=11 // pred_check
        %p119 = pneg %p57
      $region14: #{basic_block_forward.3} parent=11 // pred_check_branch
        %121 = sbr.rel (%p119) target = $region16
      $region15: #{basic_block_forward.3} parent=11 // pred_region
        _
      $region16: #{basic_block_forward.3} parent=11 // pred_fallthru
        _
    $region12: #{basic_block_forward.3} parent=5 // pred_fallthru
      _
    %p122 = scmp.lt.s32.totalorder %s10, 2
    // Predicated region
    $region17: #{basic_block_forward.3} parent=5 // pred_check
      %p123 = pneg %p122
    $region18: #{basic_block_forward.3} parent=5 // pred_check_branch
      %125 = sbr.rel (%p123) target = $region20
    $region19: #{basic_block_forward.3} parent=5 // pred_region
      // Predicated region
      $region21: #{basic_block_forward.3} parent=19 // pred_check
        %p126 = pneg %p30
      $region22: #{basic_block_forward.3} parent=19 // pred_check_branch
        %128 = sbr.rel (%p126) target = $region24
      $region23: #{basic_block_forward.3} parent=19 // pred_region
        %p129 = scmp.lt.s32.totalorder %s10, 1
        %s130 = scalar_select %p129, %s10, 1
        %s131 = smul.addr %s130, 32
        %s132 = smul.addr %s131, 4
        %s133 = scalar_lea.vmem %s0, %s132
      $region24: #{basic_block_forward.3} parent=19 // pred_fallthru
        _
    $region20: #{basic_block_forward.3} parent=5 // pred_fallthru
      _
    %p134 = scmp.le.s32.totalorder 1, %s10
    %p135 = scmp.lt.s32.totalorder %s10, 3
    %p136 = pnand %p134, %p135
    %p137 = pneg %p136
    // Predicated region
    $region25: #{basic_block_forward.3} parent=5 // pred_check
      _
    $region26: #{basic_block_forward.3} parent=5 // pred_check_branch
      %139 = sbr.rel (%p136) target = $region28
    $region27: #{basic_block_forward.3} parent=5 // pred_region
      %s140 = ssub.s32 %s10, 1
      %p141 = scmp.lt.s32.totalorder %s15, 1
      %s142 = scalar_select %p141, %s15, 1
      %s143 = smul.addr %s142, 32
      %s144 = smul.addr %s143, 4
      %s145 = scalar_lea.vmem %s0, %s144
      %p146 = pneg %p36
      %p147 = pneg %p33
      %p148 = pneg %p57
      %p149 = pneg %p54
      %p150 = pneg %p83
      %p151 = pneg %p80
      %p152 = scmp.lt.s32.totalorder %s15, 1
      %s153 = scalar_select %p152, %s15, 1
      %s154 = smul.addr %s153, 32
      %s155 = smul.addr %s154, 8
      %s156 = scalar_lea.vmem %s2, %s155
      %p157 = pneg %p104
      %p158 = pneg %p101
      %p159 = scmp.lt.s32.totalorder %s15, 1
      %s160 = scalar_select %p159, %s15, 1
      %s161 = smul.addr %s160, 32
      %s162 = smul.addr %s161, 4
      %s163 = scalar_lea.vmem %s0, %s162
      %p164 = scmp.lt.s32.totalorder %s15, 1
      %s165 = scalar_select %p164, %s15, 1
      %s166 = smul.addr %s165, 32
      %s167 = smul.addr %s166, 8
      %s168 = scalar_lea.vmem %s2, %s167
      %p170 = scmp.eq.s32.totalorder %s15, 0
      // Predicated region
      $region29: #{basic_block_forward.3} parent=27 // pred_check
        %p171 = pneg %p170
      $region30: #{basic_block_forward.3} parent=27 // pred_check_branch
        %173 = sbr.rel (%p171) target = $region32
      $region31: #{basic_block_forward.3} parent=27 // pred_region
        %174 = vst [vmem:[#allocation2] sm:$0xff] 0.0
        %175 = vst [vmem:[#allocation2 + $0x8] sm:$0xff] 0.0
        %176 = vst [vmem:[#allocation2 + $0x10] sm:$0x3] 0.0
        %177 = vst [vmem:[#allocation2 + $0x18] sm:$0xff] 0.0
        %178 = vst [vmem:[#allocation2 + $0x20] sm:$0xff] 0.0
        %179 = vst [vmem:[#allocation2 + $0x28] sm:$0x3] 0.0
        %180 = vst [vmem:[#allocation2 + $0x30] sm:$0xff] 0.0
        %181 = vst [vmem:[#allocation2 + $0x38] sm:$0xff] 0.0
        %182 = vst [vmem:[#allocation2 + $0x40] sm:$0x3] 0.0
        %183 = vst [vmem:[#allocation2 + $0x48] sm:$0xff] 0.0
        %184 = vst [vmem:[#allocation2 + $0x50] sm:$0xff] 0.0
        %185 = vst [vmem:[#allocation2 + $0x58] sm:$0x3] 0.0
        %186 = vst [vmem:[#allocation2 + $0x60] sm:$0xff] 0.0
        %187 = vst [vmem:[#allocation2 + $0x68] sm:$0xff] 0.0
        %188 = vst [vmem:[#allocation2 + $0x70] sm:$0x3] 0.0
        %189 = vst [vmem:[#allocation2 + $0x78] sm:$0xff] 0.0
        %190 = vst [vmem:[#allocation2 + $0x80] sm:$0xff] 0.0
        %191 = vst [vmem:[#allocation2 + $0x88] sm:$0x3] 0.0
        %192 = vst [vmem:[#allocation2 + $0x90] sm:$0xff] 0.0
        %193 = vst [vmem:[#allocation2 + $0x98] sm:$0xff] 0.0
        %194 = vst [vmem:[#allocation2 + $0xa0] sm:$0x3] 0.0
        %195 = vst [vmem:[#allocation2 + $0xa8] sm:$0xff] 0.0
        %196 = vst [vmem:[#allocation2 + $0xb0] sm:$0xff] 0.0
        %197 = vst [vmem:[#allocation2 + $0xb8] sm:$0x3] 0.0
        %198 = vst [vmem:[#allocation2 + $0xc0] sm:$0xff] 0.0
        %199 = vst [vmem:[#allocation2 + $0xc8] sm:$0xff] 0.0
        %200 = vst [vmem:[#allocation2 + $0xd0] sm:$0x3] 0.0
        %201 = vst [vmem:[#allocation2 + $0xd8] sm:$0xff] 0.0
        %202 = vst [vmem:[#allocation2 + $0xe0] sm:$0xff] 0.0
        %203 = vst [vmem:[#allocation2 + $0xe8] sm:$0x3] 0.0
        %204 = vst [vmem:[#allocation2 + $0xf0] sm:$0xff] 0.0
        %205 = vst [vmem:[#allocation2 + $0xf8] sm:$0xff] 0.0
        %206 = vst [vmem:[#allocation2 + $0x100] sm:$0x3] 0.0
        %207 = vst [vmem:[#allocation2 + $0x108] sm:$0xff] 0.0
        %208 = vst [vmem:[#allocation2 + $0x110] sm:$0xff] 0.0
        %209 = vst [vmem:[#allocation2 + $0x118] sm:$0x3] 0.0
        %210 = vst [vmem:[#allocation2 + $0x120] sm:$0xff] 0.0
        %211 = vst [vmem:[#allocation2 + $0x128] sm:$0xff] 0.0
        %212 = vst [vmem:[#allocation2 + $0x130] sm:$0x3] 0.0
        %213 = vst [vmem:[#allocation2 + $0x138] sm:$0xff] 0.0
        %214 = vst [vmem:[#allocation2 + $0x140] sm:$0xff] 0.0
        %215 = vst [vmem:[#allocation2 + $0x148] sm:$0x3] 0.0
        %216 = vst [vmem:[#allocation2 + $0x150] sm:$0xff] 0.0
        %217 = vst [vmem:[#allocation2 + $0x158] sm:$0xff] 0.0
        %218 = vst [vmem:[#allocation2 + $0x160] sm:$0x3] 0.0
        %219 = vst [vmem:[#allocation2 + $0x168] sm:$0xff] 0.0
        %220 = vst [vmem:[#allocation2 + $0x170] sm:$0xff] 0.0
        %221 = vst [vmem:[#allocation2 + $0x178] sm:$0x3] 0.0
        %222 = vst [vmem:[#allocation2 + $0x180] sm:$0xff] 0.0
        %223 = vst [vmem:[#allocation2 + $0x188] sm:$0xff] 0.0
        %224 = vst [vmem:[#allocation2 + $0x190] sm:$0x3] 0.0
        %225 = vst [vmem:[#allocation2 + $0x198] sm:$0xff] 0.0
        %226 = vst [vmem:[#allocation2 + $0x1a0] sm:$0xff] 0.0
        %227 = vst [vmem:[#allocation2 + $0x1a8] sm:$0x3] 0.0
        %228 = vst [vmem:[#allocation4] sm:$0x3] 0.0
      $region32: #{basic_block_forward.3} parent=27 // pred_fallthru
        _
      %v229 = vld [vmem:[%s163] sm:$0xf]
      %v230 = vld [vmem:[%s163 + $0x4] sm:$0xf]
      %v231 = vld [vmem:[%s163 + $0x8] sm:$0xf]
      %v232 = vld [vmem:[%s163 + $0xc] sm:$0xf]
      %v233 = vld [vmem:[%s163 + $0x10] sm:$0xf]
      %v234 = vld [vmem:[%s163 + $0x14] sm:$0xf]
      %v235 = vld [vmem:[%s163 + $0x18] sm:$0xf]
      %v236 = vld [vmem:[%s163 + $0x1c] sm:$0xf]
      %v237 = vld [vmem:[%s163 + $0x20] sm:$0xf]
      %v238 = vld [vmem:[%s163 + $0x24] sm:$0xf]
      %v239 = vld [vmem:[%s163 + $0x28] sm:$0xf]
      %v240 = vld [vmem:[%s163 + $0x2c] sm:$0xf]
      %v241 = vld [vmem:[%s163 + $0x30] sm:$0xf]
      %v242 = vld [vmem:[%s163 + $0x34] sm:$0xf]
      %v243 = vld [vmem:[%s163 + $0x38] sm:$0xf]
      %v244 = vld [vmem:[%s163 + $0x3c] sm:$0xf]
      %v245 = vld [vmem:[%s163 + $0x40] sm:$0xf]
      %v246 = vld [vmem:[%s163 + $0x44] sm:$0xf]
      %v247 = vld [vmem:[%s163 + $0x48] sm:$0xf]
      %v248 = vld [vmem:[%s163 + $0x4c] sm:$0xf]
      %v249 = vld [vmem:[%s163 + $0x50] sm:$0xf]
      %v250 = vld [vmem:[%s163 + $0x54] sm:$0xf]
      %v251 = vld [vmem:[%s163 + $0x58] sm:$0xf]
      %v252 = vld [vmem:[%s163 + $0x5c] sm:$0xf]
      %v253 = vld [vmem:[%s163 + $0x60] sm:$0xf]
      %v254 = vld [vmem:[%s163 + $0x64] sm:$0xf]
      %v255 = vld [vmem:[%s163 + $0x68] sm:$0xf]
      %v256 = vld [vmem:[%s163 + $0x6c] sm:$0xf]
      %v257 = vld [vmem:[%s163 + $0x70] sm:$0xf]
      %v258 = vld [vmem:[%s163 + $0x74] sm:$0xf]
      %v259 = vld [vmem:[%s163 + $0x78] sm:$0xf]
      %v260 = vld [vmem:[%s163 + $0x7c] sm:$0xf]
      %v261 = vunpack.c.l.bf16 %v229
      %v262 = vunpack.c.l.bf16 %v230
      %v263 = vunpack.c.l.bf16 %v231
      %v264 = vunpack.c.l.bf16 %v232
      %v265 = vunpack.c.l.bf16 %v233
      %v266 = vunpack.c.l.bf16 %v234
      %v267 = vunpack.c.l.bf16 %v235
      %v268 = vunpack.c.l.bf16 %v236
      %v269 = vunpack.c.l.bf16 %v237
      %v270 = vunpack.c.l.bf16 %v238
      %v271 = vunpack.c.l.bf16 %v239
      %v272 = vunpack.c.l.bf16 %v240
      %v273 = vunpack.c.l.bf16 %v241
      %v274 = vunpack.c.l.bf16 %v242
      %v275 = vunpack.c.l.bf16 %v243
      %v276 = vunpack.c.l.bf16 %v244
      %v277 = vunpack.c.l.bf16 %v245
      %v278 = vunpack.c.l.bf16 %v246
      %v279 = vunpack.c.l.bf16 %v247
      %v280 = vunpack.c.l.bf16 %v248
      %v281 = vunpack.c.l.bf16 %v249
      %v282 = vunpack.c.l.bf16 %v250
      %v283 = vunpack.c.l.bf16 %v251
      %v284 = vunpack.c.l.bf16 %v252
      %v285 = vunpack.c.l.bf16 %v253
      %v286 = vunpack.c.l.bf16 %v254
      %v287 = vunpack.c.l.bf16 %v255
      %v288 = vunpack.c.l.bf16 %v256
      %v289 = vunpack.c.l.bf16 %v257
      %v290 = vunpack.c.l.bf16 %v258
      %v291 = vunpack.c.l.bf16 %v259
      %v292 = vunpack.c.l.bf16 %v260
      %s293 = scalar_lea.vmem [#allocation2], 24
      %294 = vst [vmem:[%s293 + $0x1] sm:$0xff] %v261
      %295 = vst [vmem:[%s293 + $0x9] sm:$0xff] %v262
      %296 = vst [vmem:[%s293 + $0x19] sm:$0xff] %v263
      %297 = vst [vmem:[%s293 + $0x21] sm:$0xff] %v264
      %298 = vst [vmem:[%s293 + $0x31] sm:$0xff] %v265
      %299 = vst [vmem:[%s293 + $0x39] sm:$0xff] %v266
      %300 = vst [vmem:[%s293 + $0x49] sm:$0xff] %v267
      %301 = vst [vmem:[%s293 + $0x51] sm:$0xff] %v268
      %302 = vst [vmem:[%s293 + $0x61] sm:$0xff] %v269
      %303 = vst [vmem:[%s293 + $0x69] sm:$0xff] %v270
      %304 = vst [vmem:[%s293 + $0x79] sm:$0xff] %v271
      %305 = vst [vmem:[%s293 + $0x81] sm:$0xff] %v272
      %306 = vst [vmem:[%s293 + $0x91] sm:$0xff] %v273
      %307 = vst [vmem:[%s293 + $0x99] sm:$0xff] %v274
      %308 = vst [vmem:[%s293 + $0xa9] sm:$0xff] %v275
      %309 = vst [vmem:[%s293 + $0xb1] sm:$0xff] %v276
      %310 = vst [vmem:[%s293 + $0xc1] sm:$0xff] %v277
      %311 = vst [vmem:[%s293 + $0xc9] sm:$0xff] %v278
      %312 = vst [vmem:[%s293 + $0xd9] sm:$0xff] %v279
      %313 = vst [vmem:[%s293 + $0xe1] sm:$0xff] %v280
      %314 = vst [vmem:[%s293 + $0xf1] sm:$0xff] %v281
      %315 = vst [vmem:[%s293 + $0xf9] sm:$0xff] %v282
      %316 = vst [vmem:[%s293 + $0x109] sm:$0xff] %v283
      %317 = vst [vmem:[%s293 + $0x111] sm:$0xff] %v284
      %318 = vst [vmem:[%s293 + $0x121] sm:$0xff] %v285
      %319 = vst [vmem:[%s293 + $0x129] sm:$0xff] %v286
      %320 = vst [vmem:[%s293 + $0x139] sm:$0xff] %v287
      %321 = vst [vmem:[%s293 + $0x141] sm:$0xff] %v288
      %322 = vst [vmem:[%s293 + $0x151] sm:$0xff] %v289
      %323 = vst [vmem:[%s293 + $0x159] sm:$0xff] %v290
      %324 = vst [vmem:[%s293 + $0x169] sm:$0xff] %v291
      %325 = vst [vmem:[%s293 + $0x171] sm:$0xff] %v292
      %326 = vst [vmem:[#allocation3] sm:$0xff] 0.0
      %327 = vst [vmem:[#allocation3 + $0x8] sm:$0xff] 0.0
      %328 = vst [vmem:[#allocation3 + $0x10] sm:$0xff] 0.0
      %329 = vst [vmem:[#allocation3 + $0x18] sm:$0xff] 0.0
      %330 = vst [vmem:[#allocation3 + $0x20] sm:$0xff] 0.0
      %331 = vst [vmem:[#allocation3 + $0x28] sm:$0xff] 0.0
      %332 = vst [vmem:[#allocation3 + $0x30] sm:$0xff] 0.0
      %333 = vst [vmem:[#allocation3 + $0x38] sm:$0xff] 0.0
      %334 = vst [vmem:[#allocation3 + $0x40] sm:$0xff] 0.0
      %335 = vst [vmem:[#allocation3 + $0x48] sm:$0xff] 0.0
      %336 = vst [vmem:[#allocation3 + $0x50] sm:$0xff] 0.0
      %337 = vst [vmem:[#allocation3 + $0x58] sm:$0xff] 0.0
      %338 = vst [vmem:[#allocation3 + $0x60] sm:$0xff] 0.0
      %339 = vst [vmem:[#allocation3 + $0x68] sm:$0xff] 0.0
      %340 = vst [vmem:[#allocation3 + $0x70] sm:$0xff] 0.0
      %341 = vst [vmem:[#allocation3 + $0x78] sm:$0xff] 0.0
      %342 = vst [vmem:[#allocation3 + $0x80] sm:$0xff] 0.0
      %343 = vst [vmem:[#allocation3 + $0x88] sm:$0xff] 0.0
      %344 = vst [vmem:[#allocation3 + $0x90] sm:$0xff] 0.0
      %345 = vst [vmem:[#allocation3 + $0x98] sm:$0xff] 0.0
      %346 = vst [vmem:[#allocation3 + $0xa0] sm:$0xff] 0.0
      %347 = vst [vmem:[#allocation3 + $0xa8] sm:$0xff] 0.0
      %348 = vst [vmem:[#allocation3 + $0xb0] sm:$0xff] 0.0
      %349 = vst [vmem:[#allocation3 + $0xb8] sm:$0xff] 0.0
      %350 = vst [vmem:[#allocation3 + $0xc0] sm:$0xff] 0.0
      %351 = vst [vmem:[#allocation3 + $0xc8] sm:$0xff] 0.0
      %352 = vst [vmem:[#allocation3 + $0xd0] sm:$0xff] 0.0
      %353 = vst [vmem:[#allocation3 + $0xd8] sm:$0xff] 0.0
      %354 = vst [vmem:[#allocation3 + $0xe0] sm:$0xff] 0.0
      %355 = vst [vmem:[#allocation3 + $0xe8] sm:$0xff] 0.0
      %356 = vst [vmem:[#allocation3 + $0xf0] sm:$0xff] 0.0
      %357 = vst [vmem:[#allocation3 + $0xf8] sm:$0xff] 0.0
      %v358 = vld [vmem:[#allocation2] sm:$0xff]
      %v359 = vld [vmem:[#allocation2 + $0x8] sm:$0xff]
      %v360 = vld [vmem:[#allocation2 + $0x18] sm:$0xff]
      %v361 = vld [vmem:[#allocation2 + $0x20] sm:$0xff]
      %v362 = vld [vmem:[#allocation2 + $0x30] sm:$0xff]
      %v363 = vld [vmem:[#allocation2 + $0x38] sm:$0xff]
      %v364 = vld [vmem:[#allocation2 + $0x48] sm:$0xff]
      %v365 = vld [vmem:[#allocation2 + $0x50] sm:$0xff]
      %v366 = vld [vmem:[#allocation2 + $0x60] sm:$0xff]
      %v367 = vld [vmem:[#allocation2 + $0x68] sm:$0xff]
      %v368 = vld [vmem:[#allocation2 + $0x78] sm:$0xff]
      %v369 = vld [vmem:[#allocation2 + $0x80] sm:$0xff]
      %v370 = vld [vmem:[#allocation2 + $0x90] sm:$0xff]
      %v371 = vld [vmem:[#allocation2 + $0x98] sm:$0xff]
      %v372 = vld [vmem:[#allocation2 + $0xa8] sm:$0xff]
      %v373 = vld [vmem:[#allocation2 + $0xb0] sm:$0xff]
      %v374 = vld [vmem:[#allocation2 + $0xc0] sm:$0xff]
      %v375 = vld [vmem:[#allocation2 + $0xc8] sm:$0xff]
      %v376 = vld [vmem:[#allocation2 + $0xd8] sm:$0xff]
      %v377 = vld [vmem:[#allocation2 + $0xe0] sm:$0xff]
      %v378 = vld [vmem:[#allocation2 + $0xf0] sm:$0xff]
      %v379 = vld [vmem:[#allocation2 + $0xf8] sm:$0xff]
      %v380 = vld [vmem:[#allocation2 + $0x108] sm:$0xff]
      %v381 = vld [vmem:[#allocation2 + $0x110] sm:$0xff]
      %v382 = vld [vmem:[#allocation2 + $0x120] sm:$0xff]
      %v383 = vld [vmem:[#allocation2 + $0x128] sm:$0xff]
      %v384 = vld [vmem:[#allocation2 + $0x138] sm:$0xff]
      %v385 = vld [vmem:[#allocation2 + $0x140] sm:$0xff]
      %v386 = vld [vmem:[#allocation2 + $0x150] sm:$0xff]
      %v387 = vld [vmem:[#allocation2 + $0x158] sm:$0xff]
      %v388 = vld [vmem:[#allocation2 + $0x168] sm:$0xff]
      %v389 = vld [vmem:[#allocation2 + $0x170] sm:$0xff]
      %v390 = vpack.c.bf16 %v359, %v358
      %v391 = vpack.c.bf16 %v361, %v360
      %v392 = vpack.c.bf16 %v363, %v362
      %v393 = vpack.c.bf16 %v365, %v364
      %v394 = vpack.c.bf16 %v367, %v366
      %v395 = vpack.c.bf16 %v369, %v368
      %v396 = vpack.c.bf16 %v371, %v370
      %v397 = vpack.c.bf16 %v373, %v372
      %v398 = vpack.c.bf16 %v375, %v374
      %v399 = vpack.c.bf16 %v377, %v376
      %v400 = vpack.c.bf16 %v379, %v378
      %v401 = vpack.c.bf16 %v381, %v380
      %v402 = vpack.c.bf16 %v383, %v382
      %v403 = vpack.c.bf16 %v385, %v384
      %v404 = vpack.c.bf16 %v387, %v386
      %v405 = vpack.c.bf16 %v389, %v388
      %v406 = vld [vmem:[#allocation3] sm:$0xff]
      %v407 = vld [vmem:[#allocation3 + $0x8] sm:$0xff]
      %v408 = vld [vmem:[#allocation3 + $0x10] sm:$0xff]
      %v409 = vld [vmem:[#allocation3 + $0x18] sm:$0xff]
      %v410 = vld [vmem:[#allocation3 + $0x20] sm:$0xff]
      %v411 = vld [vmem:[#allocation3 + $0x28] sm:$0xff]
      %v412 = vld [vmem:[#allocation3 + $0x30] sm:$0xff]
      %v413 = vld [vmem:[#allocation3 + $0x38] sm:$0xff]
      %v414 = vld [vmem:[#allocation3 + $0x40] sm:$0xff]
      %v415 = vld [vmem:[#allocation3 + $0x48] sm:$0xff]
      %v416 = vld [vmem:[#allocation3 + $0x50] sm:$0xff]
      %v417 = vld [vmem:[#allocation3 + $0x58] sm:$0xff]
      %v418 = vld [vmem:[#allocation3 + $0x60] sm:$0xff]
      %v419 = vld [vmem:[#allocation3 + $0x68] sm:$0xff]
      %v420 = vld [vmem:[#allocation3 + $0x70] sm:$0xff]
      %v421 = vld [vmem:[#allocation3 + $0x78] sm:$0xff]
      %v422 = vld [vmem:[#allocation3 + $0x80] sm:$0xff]
      %v423 = vld [vmem:[#allocation3 + $0x88] sm:$0xff]
      %v424 = vld [vmem:[#allocation3 + $0x90] sm:$0xff]
      %v425 = vld [vmem:[#allocation3 + $0x98] sm:$0xff]
      %v426 = vld [vmem:[#allocation3 + $0xa0] sm:$0xff]
      %v427 = vld [vmem:[#allocation3 + $0xa8] sm:$0xff]
      %v428 = vld [vmem:[#allocation3 + $0xb0] sm:$0xff]
      %v429 = vld [vmem:[#allocation3 + $0xb8] sm:$0xff]
      %v430 = vld [vmem:[#allocation3 + $0xc0] sm:$0xff]
      %v431 = vld [vmem:[#allocation3 + $0xc8] sm:$0xff]
      %v432 = vld [vmem:[#allocation3 + $0xd0] sm:$0xff]
      %v433 = vld [vmem:[#allocation3 + $0xd8] sm:$0xff]
      %v434 = vld [vmem:[#allocation3 + $0xe0] sm:$0xff]
      %v435 = vld [vmem:[#allocation3 + $0xe8] sm:$0xff]
      %v436 = vld [vmem:[#allocation3 + $0xf0] sm:$0xff]
      %v437 = vld [vmem:[#allocation3 + $0xf8] sm:$0xff]
      %v438 = vld [vmem:[%s1] sm:$0xf]
      %v439 = vld [vmem:[%s1 + $0x4] sm:$0xf]
      %v440 = vld [vmem:[%s1 + $0x8] sm:$0xf]
      %v441 = vld [vmem:[%s1 + $0xc] sm:$0xf]
      %v442 = vld [vmem:[%s1 + $0x10] sm:$0xf]
      %v443 = vld [vmem:[%s1 + $0x14] sm:$0xf]
      %v444 = vld [vmem:[%s1 + $0x18] sm:$0xf]
      %v445 = vld [vmem:[%s1 + $0x1c] sm:$0xf]
      %v446 = vld [vmem:[%s1 + $0x20] sm:$0xf]
      %v447 = vld [vmem:[%s1 + $0x24] sm:$0xf]
      %v448 = vld [vmem:[%s1 + $0x28] sm:$0xf]
      %v449 = vld [vmem:[%s1 + $0x2c] sm:$0xf]
      %v450 = vld [vmem:[%s1 + $0x30] sm:$0xf]
      %v451 = vld [vmem:[%s1 + $0x34] sm:$0xf]
      %v452 = vld [vmem:[%s1 + $0x38] sm:$0xf]
      %v453 = vld [vmem:[%s1 + $0x3c] sm:$0xf]
      %v470 = vunpack.c.l.b16 %v438
      %v471 = vunpack.c.l.b16 %v439
      %v472 = vunpack.c.l.b16 %v440
      %v473 = vunpack.c.l.b16 %v441
      %v474 = vunpack.c.l.b16 %v442
      %v475 = vunpack.c.l.b16 %v443
      %v476 = vunpack.c.l.b16 %v444
      %v477 = vunpack.c.l.b16 %v445
      %v478 = vunpack.c.l.b16 %v446
      %v479 = vunpack.c.l.b16 %v447
      %v480 = vunpack.c.l.b16 %v448
      %v481 = vunpack.c.l.b16 %v449
      %v482 = vunpack.c.l.b16 %v450
      %v483 = vunpack.c.l.b16 %v451
      %v484 = vunpack.c.l.b16 %v452
      %v485 = vunpack.c.l.b16 %v453
      %v486 = vpack.c.b16 %v471, %v470
      %v487 = vpack.c.b16 %v473, %v472
      %v488 = vpack.c.b16 %v475, %v474
      %v489 = vpack.c.b16 %v477, %v476
      %v490 = vpack.c.b16 %v479, %v478
      %v491 = vpack.c.b16 %v481, %v480
      %v492 = vpack.c.b16 %v483, %v482
      %v493 = vpack.c.b16 %v485, %v484
      %502 = vmatprep.subr.bf16.mxu0 0
      %503 = vmatpush1.bf16.msra.mxu0 %v486
      %504 = vmatprep.subr.bf16.mxu0 0
      %505 = vmatpush1.bf16.msra.mxu0 %v487
      %506 = vmatprep.subr.bf16.mxu0 0
      %507 = vmatpush1.bf16.msra.mxu0 %v488
      %508 = vmatprep.subr.bf16.mxu0 0
      %509 = vmatpush1.bf16.msra.mxu0 %v489
      %510 = vmatprep.subr.bf16.mxu0 0
      %511 = vmatpush1.bf16.msra.mxu0 %v490
      %512 = vmatprep.subr.bf16.mxu0 0
      %513 = vmatpush1.bf16.msra.mxu0 %v491
      %514 = vmatprep.subr.bf16.mxu0 0
      %515 = vmatpush1.bf16.msra.mxu0 %v492
      %516 = vmatprep.subr.bf16.mxu0 0
      %517 = vmatpush1.bf16.msra.mxu0 %v493
      %518 = vmatprep.subr.bf16.mxu0 0
      %519 = vmatpush1.bf16.msra.mxu0 0
      %520 = vmatprep.subr.bf16.mxu0 0
      %521 = vmatpush1.bf16.msra.mxu0 0
      %522 = vmatprep.subr.bf16.mxu0 0
      %523 = vmatpush1.bf16.msra.mxu0 0
      %524 = vmatprep.subr.bf16.mxu0 0
      %525 = vmatpush1.bf16.msra.mxu0 0
      %526 = vmatprep.subr.bf16.mxu0 0
      %527 = vmatpush1.bf16.msra.mxu0 0
      %528 = vmatprep.subr.bf16.mxu0 0
      %529 = vmatpush1.bf16.msra.mxu0 0
      %530 = vmatprep.subr.bf16.mxu0 0
      %531 = vmatpush1.bf16.msra.mxu0 0
      %532 = vmatprep.subr.bf16.mxu0 0
      %533 = vmatpush1.bf16.msra.mxu0 0
      %534 = vmatprep.mubr.bf16.mxu0 0
      %535 = vmatmul.mubr.bf16.gmra.mrb[0].mxu0 %v390
      %v536 = vpop.f32.mrb[0].mxu0
      %v537 = vadd.f32 0.0, %v536
      %v538 = vpop.f32.mrb[0].mxu0
      %v539 = vpop.f32.mrb[0].mxu0
      %v540 = vadd.f32 0.0, %v539
      %v541 = vpop.f32.mrb[0].mxu0
      %542 = vmatprep.mubr.bf16.mxu0 0
      %543 = vmatmul.mubr.bf16.gmra.mrb[0].mxu0 %v391
      %v544 = vpop.f32.mrb[0].mxu0
      %v545 = vadd.f32 0.0, %v544
      %v546 = vpop.f32.mrb[0].mxu0
      %v547 = vpop.f32.mrb[0].mxu0
      %v548 = vadd.f32 0.0, %v547
      %v549 = vpop.f32.mrb[0].mxu0
      %550 = vmatprep.mubr.bf16.mxu0 0
      %551 = vmatmul.mubr.bf16.gmra.mrb[0].mxu0 %v392
      %v552 = vpop.f32.mrb[0].mxu0
      %v553 = vadd.f32 0.0, %v552
      %v554 = vpop.f32.mrb[0].mxu0
      %v555 = vpop.f32.mrb[0].mxu0
      %v556 = vadd.f32 0.0, %v555
      %v557 = vpop.f32.mrb[0].mxu0
      %558 = vmatprep.mubr.bf16.mxu0 0
      %559 = vmatmul.mubr.bf16.gmra.mrb[0].mxu0 %v393
      %v560 = vpop.f32.mrb[0].mxu0
      %v561 = vadd.f32 0.0, %v560
      %v562 = vpop.f32.mrb[0].mxu0
      %v563 = vpop.f32.mrb[0].mxu0
      %v564 = vadd.f32 0.0, %v563
      %v565 = vpop.f32.mrb[0].mxu0
      %566 = vmatprep.mubr.bf16.mxu0 0
      %567 = vmatmul.mubr.bf16.gmra.mrb[0].mxu0 %v394
      %v568 = vpop.f32.mrb[0].mxu0
      %v569 = vadd.f32 0.0, %v568
      %v570 = vpop.f32.mrb[0].mxu0
      %v571 = vpop.f32.mrb[0].mxu0
      %v572 = vadd.f32 0.0, %v571
      %v573 = vpop.f32.mrb[0].mxu0
      %574 = vmatprep.mubr.bf16.mxu0 0
      %575 = vmatmul.mubr.bf16.gmra.mrb[0].mxu0 %v395
      %v576 = vpop.f32.mrb[0].mxu0
      %v577 = vadd.f32 0.0, %v576
      %v578 = vpop.f32.mrb[0].mxu0
      %v579 = vpop.f32.mrb[0].mxu0
      %v580 = vadd.f32 0.0, %v579
      %v581 = vpop.f32.mrb[0].mxu0
      %582 = vmatprep.mubr.bf16.mxu0 0
      %583 = vmatmul.mubr.bf16.gmra.mrb[0].mxu0 %v396
      %v584 = vpop.f32.mrb[0].mxu0
      %v585 = vadd.f32 0.0, %v584
      %v586 = vpop.f32.mrb[0].mxu0
      %v587 = vpop.f32.mrb[0].mxu0
      %v588 = vadd.f32 0.0, %v587
      %v589 = vpop.f32.mrb[0].mxu0
      %590 = vmatprep.mubr.bf16.mxu0 0
      %591 = vmatmul.mubr.bf16.gmra.mrb[0].mxu0 %v397
      %v592 = vpop.f32.mrb[0].mxu0
      %v593 = vadd.f32 0.0, %v592
      %v594 = vpop.f32.mrb[0].mxu0
      %v595 = vpop.f32.mrb[0].mxu0
      %v596 = vadd.f32 0.0, %v595
      %v597 = vpop.f32.mrb[0].mxu0
      %598 = vmatprep.mubr.bf16.mxu0 0
      %599 = vmatmul.mubr.bf16.gmra.mrb[0].mxu0 %v398
      %v600 = vpop.f32.mrb[0].mxu0
      %v601 = vadd.f32 0.0, %v600
      %v602 = vpop.f32.mrb[0].mxu0
      %v603 = vpop.f32.mrb[0].mxu0
      %v604 = vadd.f32 0.0, %v603
      %v605 = vpop.f32.mrb[0].mxu0
      %606 = vmatprep.mubr.bf16.mxu0 0
      %607 = vmatmul.mubr.bf16.gmra.mrb[0].mxu0 %v399
      %v608 = vpop.f32.mrb[0].mxu0
      %v609 = vadd.f32 0.0, %v608
      %v610 = vpop.f32.mrb[0].mxu0
      %v611 = vpop.f32.mrb[0].mxu0
      %v612 = vadd.f32 0.0, %v611
      %v613 = vpop.f32.mrb[0].mxu0
      %614 = vmatprep.mubr.bf16.mxu0 0
      %615 = vmatmul.mubr.bf16.gmra.mrb[0].mxu0 %v400
      %v616 = vpop.f32.mrb[0].mxu0
      %v617 = vadd.f32 0.0, %v616
      %v618 = vpop.f32.mrb[0].mxu0
      %v619 = vpop.f32.mrb[0].mxu0
      %v620 = vadd.f32 0.0, %v619
      %v621 = vpop.f32.mrb[0].mxu0
      %622 = vmatprep.mubr.bf16.mxu0 0
      %623 = vmatmul.mubr.bf16.gmra.mrb[0].mxu0 %v401
      %v624 = vpop.f32.mrb[0].mxu0
      %v625 = vadd.f32 0.0, %v624
      %v626 = vpop.f32.mrb[0].mxu0
      %v627 = vpop.f32.mrb[0].mxu0
      %v628 = vadd.f32 0.0, %v627
      %v629 = vpop.f32.mrb[0].mxu0
      %630 = vmatprep.mubr.bf16.mxu0 0
      %631 = vmatmul.mubr.bf16.gmra.mrb[0].mxu0 %v402
      %v632 = vpop.f32.mrb[0].mxu0
      %v633 = vadd.f32 0.0, %v632
      %v634 = vpop.f32.mrb[0].mxu0
      %v635 = vpop.f32.mrb[0].mxu0
      %v636 = vadd.f32 0.0, %v635
      %v637 = vpop.f32.mrb[0].mxu0
      %638 = vmatprep.mubr.bf16.mxu0 0
      %639 = vmatmul.mubr.bf16.gmra.mrb[0].mxu0 %v403
      %v640 = vpop.f32.mrb[0].mxu0
      %v641 = vadd.f32 0.0, %v640
      %v642 = vpop.f32.mrb[0].mxu0
      %v643 = vpop.f32.mrb[0].mxu0
      %v644 = vadd.f32 0.0, %v643
      %v645 = vpop.f32.mrb[0].mxu0
      %646 = vmatprep.mubr.bf16.mxu0 0
      %647 = vmatmul.mubr.bf16.gmra.mrb[0].mxu0 %v404
      %v648 = vpop.f32.mrb[0].mxu0
      %v649 = vadd.f32 0.0, %v648
      %v650 = vpop.f32.mrb[0].mxu0
      %v651 = vpop.f32.mrb[0].mxu0
      %v652 = vadd.f32 0.0, %v651
      %v653 = vpop.f32.mrb[0].mxu0
      %654 = vmatprep.mubr.bf16.mxu0 0
      %655 = vmatmul.mubr.bf16.gmra.mrb[0].mxu0 %v405
      %v656 = vpop.f32.mrb[0].mxu0
      %v657 = vadd.f32 0.0, %v656
      %v658 = vpop.f32.mrb[0].mxu0
      %v659 = vpop.f32.mrb[0].mxu0
      %v660 = vadd.f32 0.0, %v659
      %v661 = vpop.f32.mrb[0].mxu0
      %662 = vdwg.mxu0
      %v663 = vadd.f32 %v406, %v537
      %v664 = vadd.f32 %v407, %v540
      %v665 = vadd.f32 %v408, %v545
      %v666 = vadd.f32 %v409, %v548
      %v667 = vadd.f32 %v410, %v553
      %v668 = vadd.f32 %v411, %v556
      %v669 = vadd.f32 %v412, %v561
      %v670 = vadd.f32 %v413, %v564
      %v671 = vadd.f32 %v414, %v569
      %v672 = vadd.f32 %v415, %v572
      %v673 = vadd.f32 %v416, %v577
      %v674 = vadd.f32 %v417, %v580
      %v675 = vadd.f32 %v418, %v585
      %v676 = vadd.f32 %v419, %v588
      %v677 = vadd.f32 %v420, %v593
      %v678 = vadd.f32 %v421, %v596
      %v679 = vadd.f32 %v422, %v601
      %v680 = vadd.f32 %v423, %v604
      %v681 = vadd.f32 %v424, %v609
      %v682 = vadd.f32 %v425, %v612
      %v683 = vadd.f32 %v426, %v617
      %v684 = vadd.f32 %v427, %v620
      %v685 = vadd.f32 %v428, %v625
      %v686 = vadd.f32 %v429, %v628
      %v687 = vadd.f32 %v430, %v633
      %v688 = vadd.f32 %v431, %v636
      %v689 = vadd.f32 %v432, %v641
      %v690 = vadd.f32 %v433, %v644
      %v691 = vadd.f32 %v434, %v649
      %v692 = vadd.f32 %v435, %v652
      %v693 = vadd.f32 %v436, %v657
      %v694 = vadd.f32 %v437, %v660
      %695 = vst [vmem:[#allocation3] sm:$0xff] %v663
      %696 = vst [vmem:[#allocation3 + $0x8] sm:$0xff] %v664
      %697 = vst [vmem:[#allocation3 + $0x10] sm:$0xff] %v665
      %698 = vst [vmem:[#allocation3 + $0x18] sm:$0xff] %v666
      %699 = vst [vmem:[#allocation3 + $0x20] sm:$0xff] %v667
      %700 = vst [vmem:[#allocation3 + $0x28] sm:$0xff] %v668
      %701 = vst [vmem:[#allocation3 + $0x30] sm:$0xff] %v669
      %702 = vst [vmem:[#allocation3 + $0x38] sm:$0xff] %v670
      %703 = vst [vmem:[#allocation3 + $0x40] sm:$0xff] %v671
      %704 = vst [vmem:[#allocation3 + $0x48] sm:$0xff] %v672
      %705 = vst [vmem:[#allocation3 + $0x50] sm:$0xff] %v673
      %706 = vst [vmem:[#allocation3 + $0x58] sm:$0xff] %v674
      %707 = vst [vmem:[#allocation3 + $0x60] sm:$0xff] %v675
      %708 = vst [vmem:[#allocation3 + $0x68] sm:$0xff] %v676
      %709 = vst [vmem:[#allocation3 + $0x70] sm:$0xff] %v677
      %710 = vst [vmem:[#allocation3 + $0x78] sm:$0xff] %v678
      %711 = vst [vmem:[#allocation3 + $0x80] sm:$0xff] %v679
      %712 = vst [vmem:[#allocation3 + $0x88] sm:$0xff] %v680
      %713 = vst [vmem:[#allocation3 + $0x90] sm:$0xff] %v681
      %714 = vst [vmem:[#allocation3 + $0x98] sm:$0xff] %v682
      %715 = vst [vmem:[#allocation3 + $0xa0] sm:$0xff] %v683
      %716 = vst [vmem:[#allocation3 + $0xa8] sm:$0xff] %v684
      %717 = vst [vmem:[#allocation3 + $0xb0] sm:$0xff] %v685
      %718 = vst [vmem:[#allocation3 + $0xb8] sm:$0xff] %v686
      %719 = vst [vmem:[#allocation3 + $0xc0] sm:$0xff] %v687
      %720 = vst [vmem:[#allocation3 + $0xc8] sm:$0xff] %v688
      %721 = vst [vmem:[#allocation3 + $0xd0] sm:$0xff] %v689
      %722 = vst [vmem:[#allocation3 + $0xd8] sm:$0xff] %v690
      %723 = vst [vmem:[#allocation3 + $0xe0] sm:$0xff] %v691
      %724 = vst [vmem:[#allocation3 + $0xe8] sm:$0xff] %v692
      %725 = vst [vmem:[#allocation3 + $0xf0] sm:$0xff] %v693
      %726 = vst [vmem:[#allocation3 + $0xf8] sm:$0xff] %v694
      %v727 = vld [vmem:[#allocation2 + $0x1] sm:$0xff]
      %v728 = vld [vmem:[#allocation2 + $0x9] sm:$0xff]
      %v729 = vld [vmem:[#allocation2 + $0x19] sm:$0xff]
      %v730 = vld [vmem:[#allocation2 + $0x21] sm:$0xff]
      %v731 = vld [vmem:[#allocation2 + $0x31] sm:$0xff]
      %v732 = vld [vmem:[#allocation2 + $0x39] sm:$0xff]
      %v733 = vld [vmem:[#allocation2 + $0x49] sm:$0xff]
      %v734 = vld [vmem:[#allocation2 + $0x51] sm:$0xff]
      %v735 = vld [vmem:[#allocation2 + $0x61] sm:$0xff]
      %v736 = vld [vmem:[#allocation2 + $0x69] sm:$0xff]
      %v737 = vld [vmem:[#allocation2 + $0x79] sm:$0xff]
      %v738 = vld [vmem:[#allocation2 + $0x81] sm:$0xff]
      %v739 = vld [vmem:[#allocation2 + $0x91] sm:$0xff]
      %v740 = vld [vmem:[#allocation2 + $0x99] sm:$0xff]
      %v741 = vld [vmem:[#allocation2 + $0xa9] sm:$0xff]
      %v742 = vld [vmem:[#allocation2 + $0xb1] sm:$0xff]
      %v743 = vld [vmem:[#allocation2 + $0xc1] sm:$0xff]
      %v744 = vld [vmem:[#allocation2 + $0xc9] sm:$0xff]
      %v745 = vld [vmem:[#allocation2 + $0xd9] sm:$0xff]
      %v746 = vld [vmem:[#allocation2 + $0xe1] sm:$0xff]
      %v747 = vld [vmem:[#allocation2 + $0xf1] sm:$0xff]
      %v748 = vld [vmem:[#allocation2 + $0xf9] sm:$0xff]
      %v749 = vld [vmem:[#allocation2 + $0x109] sm:$0xff]
      %v750 = vld [vmem:[#allocation2 + $0x111] sm:$0xff]
      %v751 = vld [vmem:[#allocation2 + $0x121] sm:$0xff]
      %v752 = vld [vmem:[#allocation2 + $0x129] sm:$0xff]
      %v753 = vld [vmem:[#allocation2 + $0x139] sm:$0xff]
      %v754 = vld [vmem:[#allocation2 + $0x141] sm:$0xff]
      %v755 = vld [vmem:[#allocation2 + $0x151] sm:$0xff]
      %v756 = vld [vmem:[#allocation2 + $0x159] sm:$0xff]
      %v757 = vld [vmem:[#allocation2 + $0x169] sm:$0xff]
      %v758 = vld [vmem:[#allocation2 + $0x171] sm:$0xff]
      %v759 = vpack.c.bf16 %v728, %v727
      %v760 = vpack.c.bf16 %v730, %v729
      %v761 = vpack.c.bf16 %v732, %v731
      %v762 = vpack.c.bf16 %v734, %v733
      %v763 = vpack.c.bf16 %v736, %v735
      %v764 = vpack.c.bf16 %v738, %v737
      %v765 = vpack.c.bf16 %v740, %v739
      %v766 = vpack.c.bf16 %v742, %v741
      %v767 = vpack.c.bf16 %v744, %v743
      %v768 = vpack.c.bf16 %v746, %v745
      %v769 = vpack.c.bf16 %v748, %v747
      %v770 = vpack.c.bf16 %v750, %v749
      %v771 = vpack.c.bf16 %v752, %v751
      %v772 = vpack.c.bf16 %v754, %v753
      %v773 = vpack.c.bf16 %v756, %v755
      %v774 = vpack.c.bf16 %v758, %v757
      %v775 = vld [vmem:[#allocation3] sm:$0xff]
      %v776 = vld [vmem:[#allocation3 + $0x8] sm:$0xff]
      %v777 = vld [vmem:[#allocation3 + $0x10] sm:$0xff]
      %v778 = vld [vmem:[#allocation3 + $0x18] sm:$0xff]
      %v779 = vld [vmem:[#allocation3 + $0x20] sm:$0xff]
      %v780 = vld [vmem:[#allocation3 + $0x28] sm:$0xff]
      %v781 = vld [vmem:[#allocation3 + $0x30] sm:$0xff]
      %v782 = vld [vmem:[#allocation3 + $0x38] sm:$0xff]
      %v783 = vld [vmem:[#allocation3 + $0x40] sm:$0xff]
      %v784 = vld [vmem:[#allocation3 + $0x48] sm:$0xff]
      %v785 = vld [vmem:[#allocation3 + $0x50] sm:$0xff]
      %v786 = vld [vmem:[#allocation3 + $0x58] sm:$0xff]
      %v787 = vld [vmem:[#allocation3 + $0x60] sm:$0xff]
      %v788 = vld [vmem:[#allocation3 + $0x68] sm:$0xff]
      %v789 = vld [vmem:[#allocation3 + $0x70] sm:$0xff]
      %v790 = vld [vmem:[#allocation3 + $0x78] sm:$0xff]
      %v791 = vld [vmem:[#allocation3 + $0x80] sm:$0xff]
      %v792 = vld [vmem:[#allocation3 + $0x88] sm:$0xff]
      %v793 = vld [vmem:[#allocation3 + $0x90] sm:$0xff]
      %v794 = vld [vmem:[#allocation3 + $0x98] sm:$0xff]
      %v795 = vld [vmem:[#allocation3 + $0xa0] sm:$0xff]
      %v796 = vld [vmem:[#allocation3 + $0xa8] sm:$0xff]
      %v797 = vld [vmem:[#allocation3 + $0xb0] sm:$0xff]
      %v798 = vld [vmem:[#allocation3 + $0xb8] sm:$0xff]
      %v799 = vld [vmem:[#allocation3 + $0xc0] sm:$0xff]
      %v800 = vld [vmem:[#allocation3 + $0xc8] sm:$0xff]
      %v801 = vld [vmem:[#allocation3 + $0xd0] sm:$0xff]
      %v802 = vld [vmem:[#allocation3 + $0xd8] sm:$0xff]
      %v803 = vld [vmem:[#allocation3 + $0xe0] sm:$0xff]
      %v804 = vld [vmem:[#allocation3 + $0xe8] sm:$0xff]
      %v805 = vld [vmem:[#allocation3 + $0xf0] sm:$0xff]
      %v806 = vld [vmem:[#allocation3 + $0xf8] sm:$0xff]
      %s807 = scalar_lea.vmem %s1, 64
      %v808 = vld [vmem:[%s807] sm:$0xf]
      %v809 = vld [vmem:[%s807 + $0x4] sm:$0xf]
      %v810 = vld [vmem:[%s807 + $0x8] sm:$0xf]
      %v811 = vld [vmem:[%s807 + $0xc] sm:$0xf]
      %v812 = vld [vmem:[%s807 + $0x10] sm:$0xf]
      %v813 = vld [vmem:[%s807 + $0x14] sm:$0xf]
      %v814 = vld [vmem:[%s807 + $0x18] sm:$0xf]
      %v815 = vld [vmem:[%s807 + $0x1c] sm:$0xf]
      %v816 = vld [vmem:[%s807 + $0x20] sm:$0xf]
      %v817 = vld [vmem:[%s807 + $0x24] sm:$0xf]
      %v818 = vld [vmem:[%s807 + $0x28] sm:$0xf]
      %v819 = vld [vmem:[%s807 + $0x2c] sm:$0xf]
      %v820 = vld [vmem:[%s807 + $0x30] sm:$0xf]
      %v821 = vld [vmem:[%s807 + $0x34] sm:$0xf]
      %v822 = vld [vmem:[%s807 + $0x38] sm:$0xf]
      %v823 = vld [vmem:[%s807 + $0x3c] sm:$0xf]
      %v840 = vunpack.c.l.b16 %v808
      %v841 = vunpack.c.l.b16 %v809
      %v842 = vunpack.c.l.b16 %v810
      %v843 = vunpack.c.l.b16 %v811
      %v844 = vunpack.c.l.b16 %v812
      %v845 = vunpack.c.l.b16 %v813
      %v846 = vunpack.c.l.b16 %v814
      %v847 = vunpack.c.l.b16 %v815
      %v848 = vunpack.c.l.b16 %v816
      %v849 = vunpack.c.l.b16 %v817
      %v850 = vunpack.c.l.b16 %v818
      %v851 = vunpack.c.l.b16 %v819
      %v852 = vunpack.c.l.b16 %v820
      %v853 = vunpack.c.l.b16 %v821
      %v854 = vunpack.c.l.b16 %v822
      %v855 = vunpack.c.l.b16 %v823
      %v856 = vpack.c.b16 %v841, %v840
      %v857 = vpack.c.b16 %v843, %v842
      %v858 = vpack.c.b16 %v845, %v844
      %v859 = vpack.c.b16 %v847, %v846
      %v860 = vpack.c.b16 %v849, %v848
      %v861 = vpack.c.b16 %v851, %v850
      %v862 = vpack.c.b16 %v853, %v852
      %v863 = vpack.c.b16 %v855, %v854
      %872 = vmatprep.subr.bf16.mxu0 0
      %873 = vmatpush1.bf16.msra.mxu0 %v856
      %874 = vmatprep.subr.bf16.mxu0 0
      %875 = vmatpush1.bf16.msra.mxu0 %v857
      %876 = vmatprep.subr.bf16.mxu0 0
      %877 = vmatpush1.bf16.msra.mxu0 %v858
      %878 = vmatprep.subr.bf16.mxu0 0
      %879 = vmatpush1.bf16.msra.mxu0 %v859
      %880 = vmatprep.subr.bf16.mxu0 0
      %881 = vmatpush1.bf16.msra.mxu0 %v860
      %882 = vmatprep.subr.bf16.mxu0 0
      %883 = vmatpush1.bf16.msra.mxu0 %v861
      %884 = vmatprep.subr.bf16.mxu0 0
      %885 = vmatpush1.bf16.msra.mxu0 %v862
      %886 = vmatprep.subr.bf16.mxu0 0
      %887 = vmatpush1.bf16.msra.mxu0 %v863
      %888 = vmatprep.subr.bf16.mxu0 0
      %889 = vmatpush1.bf16.msra.mxu0 0
      %890 = vmatprep.subr.bf16.mxu0 0
      %891 = vmatpush1.bf16.msra.mxu0 0
      %892 = vmatprep.subr.bf16.mxu0 0
      %893 = vmatpush1.bf16.msra.mxu0 0
      %894 = vmatprep.subr.bf16.mxu0 0
      %895 = vmatpush1.bf16.msra.mxu0 0
      %896 = vmatprep.subr.bf16.mxu0 0
      %897 = vmatpush1.bf16.msra.mxu0 0
      %898 = vmatprep.subr.bf16.mxu0 0
      %899 = vmatpush1.bf16.msra.mxu0 0
      %900 = vmatprep.subr.bf16.mxu0 0
      %901 = vmatpush1.bf16.msra.mxu0 0
      %902 = vmatprep.subr.bf16.mxu0 0
      %903 = vmatpush1.bf16.msra.mxu0 0
      %904 = vmatprep.mubr.bf16.mxu0 0
      %905 = vmatmul.mubr.bf16.gmra.mrb[0].mxu0 %v759
      %v906 = vpop.f32.mrb[0].mxu0
      %v907 = vadd.f32 0.0, %v906
      %v908 = vpop.f32.mrb[0].mxu0
      %v909 = vpop.f32.mrb[0].mxu0
      %v910 = vadd.f32 0.0, %v909
      %v911 = vpop.f32.mrb[0].mxu0
      %912 = vmatprep.mubr.bf16.mxu0 0
      %913 = vmatmul.mubr.bf16.gmra.mrb[0].mxu0 %v760
      %v914 = vpop.f32.mrb[0].mxu0
      %v915 = vadd.f32 0.0, %v914
      %v916 = vpop.f32.mrb[0].mxu0
      %v917 = vpop.f32.mrb[0].mxu0
      %v918 = vadd.f32 0.0, %v917
      %v919 = vpop.f32.mrb[0].mxu0
      %920 = vmatprep.mubr.bf16.mxu0 0
      %921 = vmatmul.mubr.bf16.gmra.mrb[0].mxu0 %v761
      %v922 = vpop.f32.mrb[0].mxu0
      %v923 = vadd.f32 0.0, %v922
      %v924 = vpop.f32.mrb[0].mxu0
      %v925 = vpop.f32.mrb[0].mxu0
      %v926 = vadd.f32 0.0, %v925
      %v927 = vpop.f32.mrb[0].mxu0
      %928 = vmatprep.mubr.bf16.mxu0 0
      %929 = vmatmul.mubr.bf16.gmra.mrb[0].mxu0 %v762
      %v930 = vpop.f32.mrb[0].mxu0
      %v931 = vadd.f32 0.0, %v930
      %v932 = vpop.f32.mrb[0].mxu0
      %v933 = vpop.f32.mrb[0].mxu0
      %v934 = vadd.f32 0.0, %v933
      %v935 = vpop.f32.mrb[0].mxu0
      %936 = vmatprep.mubr.bf16.mxu0 0
      %937 = vmatmul.mubr.bf16.gmra.mrb[0].mxu0 %v763
      %v938 = vpop.f32.mrb[0].mxu0
      %v939 = vadd.f32 0.0, %v938
      %v940 = vpop.f32.mrb[0].mxu0
      %v941 = vpop.f32.mrb[0].mxu0
      %v942 = vadd.f32 0.0, %v941
      %v943 = vpop.f32.mrb[0].mxu0
      %944 = vmatprep.mubr.bf16.mxu0 0
      %945 = vmatmul.mubr.bf16.gmra.mrb[0].mxu0 %v764
      %v946 = vpop.f32.mrb[0].mxu0
      %v947 = vadd.f32 0.0, %v946
      %v948 = vpop.f32.mrb[0].mxu0
      %v949 = vpop.f32.mrb[0].mxu0
      %v950 = vadd.f32 0.0, %v949
      %v951 = vpop.f32.mrb[0].mxu0
      %952 = vmatprep.mubr.bf16.mxu0 0
      %953 = vmatmul.mubr.bf16.gmra.mrb[0].mxu0 %v765
      %v954 = vpop.f32.mrb[0].mxu0
      %v955 = vadd.f32 0.0, %v954
      %v956 = vpop.f32.mrb[0].mxu0
      %v957 = vpop.f32.mrb[0].mxu0
      %v958 = vadd.f32 0.0, %v957
      %v959 = vpop.f32.mrb[0].mxu0
      %960 = vmatprep.mubr.bf16.mxu0 0
      %961 = vmatmul.mubr.bf16.gmra.mrb[0].mxu0 %v766
      %v962 = vpop.f32.mrb[0].mxu0
      %v963 = vadd.f32 0.0, %v962
      %v964 = vpop.f32.mrb[0].mxu0
      %v965 = vpop.f32.mrb[0].mxu0
      %v966 = vadd.f32 0.0, %v965
      %v967 = vpop.f32.mrb[0].mxu0
      %968 = vmatprep.mubr.bf16.mxu0 0
      %969 = vmatmul.mubr.bf16.gmra.mrb[0].mxu0 %v767
      %v970 = vpop.f32.mrb[0].mxu0
      %v971 = vadd.f32 0.0, %v970
      %v972 = vpop.f32.mrb[0].mxu0
      %v973 = vpop.f32.mrb[0].mxu0
      %v974 = vadd.f32 0.0, %v973
      %v975 = vpop.f32.mrb[0].mxu0
      %976 = vmatprep.mubr.bf16.mxu0 0
      %977 = vmatmul.mubr.bf16.gmra.mrb[0].mxu0 %v768
      %v978 = vpop.f32.mrb[0].mxu0
      %v979 = vadd.f32 0.0, %v978
      %v980 = vpop.f32.mrb[0].mxu0
      %v981 = vpop.f32.mrb[0].mxu0
      %v982 = vadd.f32 0.0, %v981
      %v983 = vpop.f32.mrb[0].mxu0
      %984 = vmatprep.mubr.bf16.mxu0 0
      %985 = vmatmul.mubr.bf16.gmra.mrb[0].mxu0 %v769
      %v986 = vpop.f32.mrb[0].mxu0
      %v987 = vadd.f32 0.0, %v986
      %v988 = vpop.f32.mrb[0].mxu0
      %v989 = vpop.f32.mrb[0].mxu0
      %v990 = vadd.f32 0.0, %v989
      %v991 = vpop.f32.mrb[0].mxu0
      %992 = vmatprep.mubr.bf16.mxu0 0
      %993 = vmatmul.mubr.bf16.gmra.mrb[0].mxu0 %v770
      %v994 = vpop.f32.mrb[0].mxu0
      %v995 = vadd.f32 0.0, %v994
      %v996 = vpop.f32.mrb[0].mxu0
      %v997 = vpop.f32.mrb[0].mxu0
      %v998 = vadd.f32 0.0, %v997
      %v999 = vpop.f32.mrb[0].mxu0
      %1000 = vmatprep.mubr.bf16.mxu0 0
      %1001 = vmatmul.mubr.bf16.gmra.mrb[0].mxu0 %v771
      %v1002 = vpop.f32.mrb[0].mxu0
      %v1003 = vadd.f32 0.0, %v1002
      %v1004 = vpop.f32.mrb[0].mxu0
      %v1005 = vpop.f32.mrb[0].mxu0
      %v1006 = vadd.f32 0.0, %v1005
      %v1007 = vpop.f32.mrb[0].mxu0
      %1008 = vmatprep.mubr.bf16.mxu0 0
      %1009 = vmatmul.mubr.bf16.gmra.mrb[0].mxu0 %v772
      %v1010 = vpop.f32.mrb[0].mxu0
      %v1011 = vadd.f32 0.0, %v1010
      %v1012 = vpop.f32.mrb[0].mxu0
      %v1013 = vpop.f32.mrb[0].mxu0
      %v1014 = vadd.f32 0.0, %v1013
      %v1015 = vpop.f32.mrb[0].mxu0
      %1016 = vmatprep.mubr.bf16.mxu0 0
      %1017 = vmatmul.mubr.bf16.gmra.mrb[0].mxu0 %v773
      %v1018 = vpop.f32.mrb[0].mxu0
      %v1019 = vadd.f32 0.0, %v1018
      %v1020 = vpop.f32.mrb[0].mxu0
      %v1021 = vpop.f32.mrb[0].mxu0
      %v1022 = vadd.f32 0.0, %v1021
      %v1023 = vpop.f32.mrb[0].mxu0
      %1024 = vmatprep.mubr.bf16.mxu0 0
      %1025 = vmatmul.mubr.bf16.gmra.mrb[0].mxu0 %v774
      %v1026 = vpop.f32.mrb[0].mxu0
      %v1027 = vadd.f32 0.0, %v1026
      %v1028 = vpop.f32.mrb[0].mxu0
      %v1029 = vpop.f32.mrb[0].mxu0
      %v1030 = vadd.f32 0.0, %v1029
      %v1031 = vpop.f32.mrb[0].mxu0
      %1032 = vdwg.mxu0
      %v1033 = vadd.f32 %v775, %v907
      %v1034 = vadd.f32 %v776, %v910
      %v1035 = vadd.f32 %v777, %v915
      %v1036 = vadd.f32 %v778, %v918
      %v1037 = vadd.f32 %v779, %v923
      %v1038 = vadd.f32 %v780, %v926
      %v1039 = vadd.f32 %v781, %v931
      %v1040 = vadd.f32 %v782, %v934
      %v1041 = vadd.f32 %v783, %v939
      %v1042 = vadd.f32 %v784, %v942
      %v1043 = vadd.f32 %v785, %v947
      %v1044 = vadd.f32 %v786, %v950
      %v1045 = vadd.f32 %v787, %v955
      %v1046 = vadd.f32 %v788, %v958
      %v1047 = vadd.f32 %v789, %v963
      %v1048 = vadd.f32 %v790, %v966
      %v1049 = vadd.f32 %v791, %v971
      %v1050 = vadd.f32 %v792, %v974
      %v1051 = vadd.f32 %v793, %v979
      %v1052 = vadd.f32 %v794, %v982
      %v1053 = vadd.f32 %v795, %v987
      %v1054 = vadd.f32 %v796, %v990
      %v1055 = vadd.f32 %v797, %v995
      %v1056 = vadd.f32 %v798, %v998
      %v1057 = vadd.f32 %v799, %v1003
      %v1058 = vadd.f32 %v800, %v1006
      %v1059 = vadd.f32 %v801, %v1011
      %v1060 = vadd.f32 %v802, %v1014
      %v1061 = vadd.f32 %v803, %v1019
      %v1062 = vadd.f32 %v804, %v1022
      %v1063 = vadd.f32 %v805, %v1027
      %v1064 = vadd.f32 %v806, %v1030
      %1065 = vst [vmem:[#allocation3] sm:$0xff] %v1033
      %1066 = vst [vmem:[#allocation3 + $0x8] sm:$0xff] %v1034
      %1067 = vst [vmem:[#allocation3 + $0x10] sm:$0xff] %v1035
      %1068 = vst [vmem:[#allocation3 + $0x18] sm:$0xff] %v1036
      %1069 = vst [vmem:[#allocation3 + $0x20] sm:$0xff] %v1037
      %1070 = vst [vmem:[#allocation3 + $0x28] sm:$0xff] %v1038
      %1071 = vst [vmem:[#allocation3 + $0x30] sm:$0xff] %v1039
      %1072 = vst [vmem:[#allocation3 + $0x38] sm:$0xff] %v1040
      %1073 = vst [vmem:[#allocation3 + $0x40] sm:$0xff] %v1041
      %1074 = vst [vmem:[#allocation3 + $0x48] sm:$0xff] %v1042
      %1075 = vst [vmem:[#allocation3 + $0x50] sm:$0xff] %v1043
      %1076 = vst [vmem:[#allocation3 + $0x58] sm:$0xff] %v1044
      %1077 = vst [vmem:[#allocation3 + $0x60] sm:$0xff] %v1045
      %1078 = vst [vmem:[#allocation3 + $0x68] sm:$0xff] %v1046
      %1079 = vst [vmem:[#allocation3 + $0x70] sm:$0xff] %v1047
      %1080 = vst [vmem:[#allocation3 + $0x78] sm:$0xff] %v1048
      %1081 = vst [vmem:[#allocation3 + $0x80] sm:$0xff] %v1049
      %1082 = vst [vmem:[#allocation3 + $0x88] sm:$0xff] %v1050
      %1083 = vst [vmem:[#allocation3 + $0x90] sm:$0xff] %v1051
      %1084 = vst [vmem:[#allocation3 + $0x98] sm:$0xff] %v1052
      %1085 = vst [vmem:[#allocation3 + $0xa0] sm:$0xff] %v1053
      %1086 = vst [vmem:[#allocation3 + $0xa8] sm:$0xff] %v1054
      %1087 = vst [vmem:[#allocation3 + $0xb0] sm:$0xff] %v1055
      %1088 = vst [vmem:[#allocation3 + $0xb8] sm:$0xff] %v1056
      %1089 = vst [vmem:[#allocation3 + $0xc0] sm:$0xff] %v1057
      %1090 = vst [vmem:[#allocation3 + $0xc8] sm:$0xff] %v1058
      %1091 = vst [vmem:[#allocation3 + $0xd0] sm:$0xff] %v1059
      %1092 = vst [vmem:[#allocation3 + $0xd8] sm:$0xff] %v1060
      %1093 = vst [vmem:[#allocation3 + $0xe0] sm:$0xff] %v1061
      %1094 = vst [vmem:[#allocation3 + $0xe8] sm:$0xff] %v1062
      %1095 = vst [vmem:[#allocation3 + $0xf0] sm:$0xff] %v1063
      %1096 = vst [vmem:[#allocation3 + $0xf8] sm:$0xff] %v1064
      %v1097 = vld [vmem:[#allocation2 + $0x2] sm:$0xff]
      %v1098 = vld [vmem:[#allocation2 + $0xa] sm:$0xff]
      %v1099 = vld [vmem:[#allocation2 + $0x1a] sm:$0xff]
      %v1100 = vld [vmem:[#allocation2 + $0x22] sm:$0xff]
      %v1101 = vld [vmem:[#allocation2 + $0x32] sm:$0xff]
      %v1102 = vld [vmem:[#allocation2 + $0x3a] sm:$0xff]
      %v1103 = vld [vmem:[#allocation2 + $0x4a] sm:$0xff]
      %v1104 = vld [vmem:[#allocation2 + $0x52] sm:$0xff]
      %v1105 = vld [vmem:[#allocation2 + $0x62] sm:$0xff]
      %v1106 = vld [vmem:[#allocation2 + $0x6a] sm:$0xff]
      %v1107 = vld [vmem:[#allocation2 + $0x7a] sm:$0xff]
      %v1108 = vld [vmem:[#allocation2 + $0x82] sm:$0xff]
      %v1109 = vld [vmem:[#allocation2 + $0x92] sm:$0xff]
      %v1110 = vld [vmem:[#allocation2 + $0x9a] sm:$0xff]
      %v1111 = vld [vmem:[#allocation2 + $0xaa] sm:$0xff]
      %v1112 = vld [vmem:[#allocation2 + $0xb2] sm:$0xff]
      %v1113 = vld [vmem:[#allocation2 + $0xc2] sm:$0xff]
      %v1114 = vld [vmem:[#allocation2 + $0xca] sm:$0xff]
      %v1115 = vld [vmem:[#allocation2 + $0xda] sm:$0xff]
      %v1116 = vld [vmem:[#allocation2 + $0xe2] sm:$0xff]
      %v1117 = vld [vmem:[#allocation2 + $0xf2] sm:$0xff]
      %v1118 = vld [vmem:[#allocation2 + $0xfa] sm:$0xff]
      %v1119 = vld [vmem:[#allocation2 + $0x10a] sm:$0xff]
      %v1120 = vld [vmem:[#allocation2 + $0x112] sm:$0xff]
      %v1121 = vld [vmem:[#allocation2 + $0x122] sm:$0xff]
      %v1122 = vld [vmem:[#allocation2 + $0x12a] sm:$0xff]
      %v1123 = vld [vmem:[#allocation2 + $0x13a] sm:$0xff]
      %v1124 = vld [vmem:[#allocation2 + $0x142] sm:$0xff]
      %v1125 = vld [vmem:[#allocation2 + $0x152] sm:$0xff]
      %v1126 = vld [vmem:[#allocation2 + $0x15a] sm:$0xff]
      %v1127 = vld [vmem:[#allocation2 + $0x16a] sm:$0xff]
      %v1128 = vld [vmem:[#allocation2 + $0x172] sm:$0xff]
      %v1129 = vpack.c.bf16 %v1098, %v1097
      %v1130 = vpack.c.bf16 %v1100, %v1099
      %v1131 = vpack.c.bf16 %v1102, %v1101
      %v1132 = vpack.c.bf16 %v1104, %v1103
      %v1133 = vpack.c.bf16 %v1106, %v1105
      %v1134 = vpack.c.bf16 %v1108, %v1107
      %v1135 = vpack.c.bf16 %v1110, %v1109
      %v1136 = vpack.c.bf16 %v1112, %v1111
      %v1137 = vpack.c.bf16 %v1114, %v1113
      %v1138 = vpack.c.bf16 %v1116, %v1115
      %v1139 = vpack.c.bf16 %v1118, %v1117
      %v1140 = vpack.c.bf16 %v1120, %v1119
      %v1141 = vpack.c.bf16 %v1122, %v1121
      %v1142 = vpack.c.bf16 %v1124, %v1123
      %v1143 = vpack.c.bf16 %v1126, %v1125
      %v1144 = vpack.c.bf16 %v1128, %v1127
      %v1145 = vld [vmem:[#allocation3] sm:$0xff]
      %v1146 = vld [vmem:[#allocation3 + $0x8] sm:$0xff]
      %v1147 = vld [vmem:[#allocation3 + $0x10] sm:$0xff]
      %v1148 = vld [vmem:[#allocation3 + $0x18] sm:$0xff]
      %v1149 = vld [vmem:[#allocation3 + $0x20] sm:$0xff]
      %v1150 = vld [vmem:[#allocation3 + $0x28] sm:$0xff]
      %v1151 = vld [vmem:[#allocation3 + $0x30] sm:$0xff]
      %v1152 = vld [vmem:[#allocation3 + $0x38] sm:$0xff]
      %v1153 = vld [vmem:[#allocation3 + $0x40] sm:$0xff]
      %v1154 = vld [vmem:[#allocation3 + $0x48] sm:$0xff]
      %v1155 = vld [vmem:[#allocation3 + $0x50] sm:$0xff]
      %v1156 = vld [vmem:[#allocation3 + $0x58] sm:$0xff]
      %v1157 = vld [vmem:[#allocation3 + $0x60] sm:$0xff]
      %v1158 = vld [vmem:[#allocation3 + $0x68] sm:$0xff]
      %v1159 = vld [vmem:[#allocation3 + $0x70] sm:$0xff]
      %v1160 = vld [vmem:[#allocation3 + $0x78] sm:$0xff]
      %v1161 = vld [vmem:[#allocation3 + $0x80] sm:$0xff]
      %v1162 = vld [vmem:[#allocation3 + $0x88] sm:$0xff]
      %v1163 = vld [vmem:[#allocation3 + $0x90] sm:$0xff]
      %v1164 = vld [vmem:[#allocation3 + $0x98] sm:$0xff]
      %v1165 = vld [vmem:[#allocation3 + $0xa0] sm:$0xff]
      %v1166 = vld [vmem:[#allocation3 + $0xa8] sm:$0xff]
      %v1167 = vld [vmem:[#allocation3 + $0xb0] sm:$0xff]
      %v1168 = vld [vmem:[#allocation3 + $0xb8] sm:$0xff]
      %v1169 = vld [vmem:[#allocation3 + $0xc0] sm:$0xff]
      %v1170 = vld [vmem:[#allocation3 + $0xc8] sm:$0xff]
      %v1171 = vld [vmem:[#allocation3 + $0xd0] sm:$0xff]
      %v1172 = vld [vmem:[#allocation3 + $0xd8] sm:$0xff]
      %v1173 = vld [vmem:[#allocation3 + $0xe0] sm:$0xff]
      %v1174 = vld [vmem:[#allocation3 + $0xe8] sm:$0xff]
      %v1175 = vld [vmem:[#allocation3 + $0xf0] sm:$0xff]
      %v1176 = vld [vmem:[#allocation3 + $0xf8] sm:$0xff]
      %s1177 = scalar_lea.vmem %s1, 128
      %v1178 = vld [vmem:[%s1177] sm:$0xf]
      %v1179 = vld [vmem:[%s1177 + $0x4] sm:$0xf]
      %v1180 = vld [vmem:[%s1177 + $0x8] sm:$0xf]
      %v1181 = vld [vmem:[%s1177 + $0xc] sm:$0xf]
      %v1182 = vld [vmem:[%s1177 + $0x10] sm:$0xf]
      %v1183 = vld [vmem:[%s1177 + $0x14] sm:$0xf]
      %v1184 = vld [vmem:[%s1177 + $0x18] sm:$0xf]
      %v1185 = vld [vmem:[%s1177 + $0x1c] sm:$0xf]
      %v1186 = vld [vmem:[%s1177 + $0x20] sm:$0xf]
      %v1187 = vld [vmem:[%s1177 + $0x24] sm:$0xf]
      %v1188 = vld [vmem:[%s1177 + $0x28] sm:$0xf]
      %v1189 = vld [vmem:[%s1177 + $0x2c] sm:$0xf]
      %v1190 = vld [vmem:[%s1177 + $0x30] sm:$0xf]
      %v1191 = vld [vmem:[%s1177 + $0x34] sm:$0xf]
      %v1192 = vld [vmem:[%s1177 + $0x38] sm:$0xf]
      %v1193 = vld [vmem:[%s1177 + $0x3c] sm:$0xf]
      %v1210 = vunpack.c.l.b16 %v1178
      %v1211 = vunpack.c.l.b16 %v1179
      %v1212 = vunpack.c.l.b16 %v1180
      %v1213 = vunpack.c.l.b16 %v1181
      %v1214 = vunpack.c.l.b16 %v1182
      %v1215 = vunpack.c.l.b16 %v1183
      %v1216 = vunpack.c.l.b16 %v1184
      %v1217 = vunpack.c.l.b16 %v1185
      %v1218 = vunpack.c.l.b16 %v1186
      %v1219 = vunpack.c.l.b16 %v1187
      %v1220 = vunpack.c.l.b16 %v1188
      %v1221 = vunpack.c.l.b16 %v1189
      %v1222 = vunpack.c.l.b16 %v1190
      %v1223 = vunpack.c.l.b16 %v1191
      %v1224 = vunpack.c.l.b16 %v1192
      %v1225 = vunpack.c.l.b16 %v1193
      %v1226 = vpack.c.b16 %v1211, %v1210
      %v1227 = vpack.c.b16 %v1213, %v1212
      %v1228 = vpack.c.b16 %v1215, %v1214
      %v1229 = vpack.c.b16 %v1217, %v1216
      %v1230 = vpack.c.b16 %v1219, %v1218
      %v1231 = vpack.c.b16 %v1221, %v1220
      %v1232 = vpack.c.b16 %v1223, %v1222
      %v1233 = vpack.c.b16 %v1225, %v1224
      %1242 = vmatprep.subr.bf16.mxu0 0
      %1243 = vmatpush1.bf16.msra.mxu0 %v1226
      %1244 = vmatprep.subr.bf16.mxu0 0
      %1245 = vmatpush1.bf16.msra.mxu0 %v1227
      %1246 = vmatprep.subr.bf16.mxu0 0
      %1247 = vmatpush1.bf16.msra.mxu0 %v1228
      %1248 = vmatprep.subr.bf16.mxu0 0
      %1249 = vmatpush1.bf16.msra.mxu0 %v1229
      %1250 = vmatprep.subr.bf16.mxu0 0
      %1251 = vmatpush1.bf16.msra.mxu0 %v1230
      %1252 = vmatprep.subr.bf16.mxu0 0
      %1253 = vmatpush1.bf16.msra.mxu0 %v1231
      %1254 = vmatprep.subr.bf16.mxu0 0
      %1255 = vmatpush1.bf16.msra.mxu0 %v1232
      %1256 = vmatprep.subr.bf16.mxu0 0
      %1257 = vmatpush1.bf16.msra.mxu0 %v1233
      %1258 = vmatprep.subr.bf16.mxu0 0
      %1259 = vmatpush1.bf16.msra.mxu0 0
      %1260 = vmatprep.subr.bf16.mxu0 0
      %1261 = vmatpush1.bf16.msra.mxu0 0
      %1262 = vmatprep.subr.bf16.mxu0 0
      %1263 = vmatpush1.bf16.msra.mxu0 0
      %1264 = vmatprep.subr.bf16.mxu0 0
      %1265 = vmatpush1.bf16.msra.mxu0 0
      %1266 = vmatprep.subr.bf16.mxu0 0
      %1267 = vmatpush1.bf16.msra.mxu0 0
      %1268 = vmatprep.subr.bf16.mxu0 0
      %1269 = vmatpush1.bf16.msra.mxu0 0
      %1270 = vmatprep.subr.bf16.mxu0 0
      %1271 = vmatpush1.bf16.msra.mxu0 0
      %1272 = vmatprep.subr.bf16.mxu0 0
      %1273 = vmatpush1.bf16.msra.mxu0 0
      %1274 = vmatprep.mubr.bf16.mxu0 0
      %1275 = vmatmul.mubr.bf16.gmra.mrb[0].mxu0 %v1129
      %v1276 = vpop.f32.mrb[0].mxu0
      %v1277 = vadd.f32 0.0, %v1276
      %v1278 = vpop.f32.mrb[0].mxu0
      %v1279 = vpop.f32.mrb[0].mxu0
      %v1280 = vadd.f32 0.0, %v1279
      %v1281 = vpop.f32.mrb[0].mxu0
      %1282 = vmatprep.mubr.bf16.mxu0 0
      %1283 = vmatmul.mubr.bf16.gmra.mrb[0].mxu0 %v1130
      %v1284 = vpop.f32.mrb[0].mxu0
      %v1285 = vadd.f32 0.0, %v1284
      %v1286 = vpop.f32.mrb[0].mxu0
      %v1287 = vpop.f32.mrb[0].mxu0
      %v1288 = vadd.f32 0.0, %v1287
      %v1289 = vpop.f32.mrb[0].mxu0
      %1290 = vmatprep.mubr.bf16.mxu0 0
      %1291 = vmatmul.mubr.bf16.gmra.mrb[0].mxu0 %v1131
      %v1292 = vpop.f32.mrb[0].mxu0
      %v1293 = vadd.f32 0.0, %v1292
      %v1294 = vpop.f32.mrb[0].mxu0
      %v1295 = vpop.f32.mrb[0].mxu0
      %v1296 = vadd.f32 0.0, %v1295
      %v1297 = vpop.f32.mrb[0].mxu0
      %1298 = vmatprep.mubr.bf16.mxu0 0
      %1299 = vmatmul.mubr.bf16.gmra.mrb[0].mxu0 %v1132
      %v1300 = vpop.f32.mrb[0].mxu0
      %v1301 = vadd.f32 0.0, %v1300
      %v1302 = vpop.f32.mrb[0].mxu0
      %v1303 = vpop.f32.mrb[0].mxu0
      %v1304 = vadd.f32 0.0, %v1303
      %v1305 = vpop.f32.mrb[0].mxu0
      %1306 = vmatprep.mubr.bf16.mxu0 0
      %1307 = vmatmul.mubr.bf16.gmra.mrb[0].mxu0 %v1133
      %v1308 = vpop.f32.mrb[0].mxu0
      %v1309 = vadd.f32 0.0, %v1308
      %v1310 = vpop.f32.mrb[0].mxu0
      %v1311 = vpop.f32.mrb[0].mxu0
      %v1312 = vadd.f32 0.0, %v1311
      %v1313 = vpop.f32.mrb[0].mxu0
      %1314 = vmatprep.mubr.bf16.mxu0 0
      %1315 = vmatmul.mubr.bf16.gmra.mrb[0].mxu0 %v1134
      %v1316 = vpop.f32.mrb[0].mxu0
      %v1317 = vadd.f32 0.0, %v1316
      %v1318 = vpop.f32.mrb[0].mxu0
      %v1319 = vpop.f32.mrb[0].mxu0
      %v1320 = vadd.f32 0.0, %v1319
      %v1321 = vpop.f32.mrb[0].mxu0
      %1322 = vmatprep.mubr.bf16.mxu0 0
      %1323 = vmatmul.mubr.bf16.gmra.mrb[0].mxu0 %v1135
      %v1324 = vpop.f32.mrb[0].mxu0
      %v1325 = vadd.f32 0.0, %v1324
      %v1326 = vpop.f32.mrb[0].mxu0
      %v1327 = vpop.f32.mrb[0].mxu0
      %v1328 = vadd.f32 0.0, %v1327
      %v1329 = vpop.f32.mrb[0].mxu0
      %1330 = vmatprep.mubr.bf16.mxu0 0
      %1331 = vmatmul.mubr.bf16.gmra.mrb[0].mxu0 %v1136
      %v1332 = vpop.f32.mrb[0].mxu0
      %v1333 = vadd.f32 0.0, %v1332
      %v1334 = vpop.f32.mrb[0].mxu0
      %v1335 = vpop.f32.mrb[0].mxu0
      %v1336 = vadd.f32 0.0, %v1335
      %v1337 = vpop.f32.mrb[0].mxu0
      %1338 = vmatprep.mubr.bf16.mxu0 0
      %1339 = vmatmul.mubr.bf16.gmra.mrb[0].mxu0 %v1137
      %v1340 = vpop.f32.mrb[0].mxu0
      %v1341 = vadd.f32 0.0, %v1340
      %v1342 = vpop.f32.mrb[0].mxu0
      %v1343 = vpop.f32.mrb[0].mxu0
      %v1344 = vadd.f32 0.0, %v1343
      %v1345 = vpop.f32.mrb[0].mxu0
      %1346 = vmatprep.mubr.bf16.mxu0 0
      %1347 = vmatmul.mubr.bf16.gmra.mrb[0].mxu0 %v1138
      %v1348 = vpop.f32.mrb[0].mxu0
      %v1349 = vadd.f32 0.0, %v1348
      %v1350 = vpop.f32.mrb[0].mxu0
      %v1351 = vpop.f32.mrb[0].mxu0
      %v1352 = vadd.f32 0.0, %v1351
      %v1353 = vpop.f32.mrb[0].mxu0
      %1354 = vmatprep.mubr.bf16.mxu0 0
      %1355 = vmatmul.mubr.bf16.gmra.mrb[0].mxu0 %v1139
      %v1356 = vpop.f32.mrb[0].mxu0
      %v1357 = vadd.f32 0.0, %v1356
      %v1358 = vpop.f32.mrb[0].mxu0
      %v1359 = vpop.f32.mrb[0].mxu0
      %v1360 = vadd.f32 0.0, %v1359
      %v1361 = vpop.f32.mrb[0].mxu0
      %1362 = vmatprep.mubr.bf16.mxu0 0
      %1363 = vmatmul.mubr.bf16.gmra.mrb[0].mxu0 %v1140
      %v1364 = vpop.f32.mrb[0].mxu0
      %v1365 = vadd.f32 0.0, %v1364
      %v1366 = vpop.f32.mrb[0].mxu0
      %v1367 = vpop.f32.mrb[0].mxu0
      %v1368 = vadd.f32 0.0, %v1367
      %v1369 = vpop.f32.mrb[0].mxu0
      %1370 = vmatprep.mubr.bf16.mxu0 0
      %1371 = vmatmul.mubr.bf16.gmra.mrb[0].mxu0 %v1141
      %v1372 = vpop.f32.mrb[0].mxu0
      %v1373 = vadd.f32 0.0, %v1372
      %v1374 = vpop.f32.mrb[0].mxu0
      %v1375 = vpop.f32.mrb[0].mxu0
      %v1376 = vadd.f32 0.0, %v1375
      %v1377 = vpop.f32.mrb[0].mxu0
      %1378 = vmatprep.mubr.bf16.mxu0 0
      %1379 = vmatmul.mubr.bf16.gmra.mrb[0].mxu0 %v1142
      %v1380 = vpop.f32.mrb[0].mxu0
      %v1381 = vadd.f32 0.0, %v1380
      %v1382 = vpop.f32.mrb[0].mxu0
      %v1383 = vpop.f32.mrb[0].mxu0
      %v1384 = vadd.f32 0.0, %v1383
      %v1385 = vpop.f32.mrb[0].mxu0
      %1386 = vmatprep.mubr.bf16.mxu0 0
      %1387 = vmatmul.mubr.bf16.gmra.mrb[0].mxu0 %v1143
      %v1388 = vpop.f32.mrb[0].mxu0
      %v1389 = vadd.f32 0.0, %v1388
      %v1390 = vpop.f32.mrb[0].mxu0
      %v1391 = vpop.f32.mrb[0].mxu0
      %v1392 = vadd.f32 0.0, %v1391
      %v1393 = vpop.f32.mrb[0].mxu0
      %1394 = vmatprep.mubr.bf16.mxu0 0
      %1395 = vmatmul.mubr.bf16.gmra.mrb[0].mxu0 %v1144
      %v1396 = vpop.f32.mrb[0].mxu0
      %v1397 = vadd.f32 0.0, %v1396
      %v1398 = vpop.f32.mrb[0].mxu0
      %v1399 = vpop.f32.mrb[0].mxu0
      %v1400 = vadd.f32 0.0, %v1399
      %v1401 = vpop.f32.mrb[0].mxu0
      %1402 = vdwg.mxu0
      %v1403 = vadd.f32 %v1145, %v1277
      %v1404 = vadd.f32 %v1146, %v1280
      %v1405 = vadd.f32 %v1147, %v1285
      %v1406 = vadd.f32 %v1148, %v1288
      %v1407 = vadd.f32 %v1149, %v1293
      %v1408 = vadd.f32 %v1150, %v1296
      %v1409 = vadd.f32 %v1151, %v1301
      %v1410 = vadd.f32 %v1152, %v1304
      %v1411 = vadd.f32 %v1153, %v1309
      %v1412 = vadd.f32 %v1154, %v1312
      %v1413 = vadd.f32 %v1155, %v1317
      %v1414 = vadd.f32 %v1156, %v1320
      %v1415 = vadd.f32 %v1157, %v1325
      %v1416 = vadd.f32 %v1158, %v1328
      %v1417 = vadd.f32 %v1159, %v1333
      %v1418 = vadd.f32 %v1160, %v1336
      %v1419 = vadd.f32 %v1161, %v1341
      %v1420 = vadd.f32 %v1162, %v1344
      %v1421 = vadd.f32 %v1163, %v1349
      %v1422 = vadd.f32 %v1164, %v1352
      %v1423 = vadd.f32 %v1165, %v1357
      %v1424 = vadd.f32 %v1166, %v1360
      %v1425 = vadd.f32 %v1167, %v1365
      %v1426 = vadd.f32 %v1168, %v1368
      %v1427 = vadd.f32 %v1169, %v1373
      %v1428 = vadd.f32 %v1170, %v1376
      %v1429 = vadd.f32 %v1171, %v1381
      %v1430 = vadd.f32 %v1172, %v1384
      %v1431 = vadd.f32 %v1173, %v1389
      %v1432 = vadd.f32 %v1174, %v1392
      %v1433 = vadd.f32 %v1175, %v1397
      %v1434 = vadd.f32 %v1176, %v1400
      %1435 = vst [vmem:[#allocation3] sm:$0xff] %v1403
      %1436 = vst [vmem:[#allocation3 + $0x8] sm:$0xff] %v1404
      %1437 = vst [vmem:[#allocation3 + $0x10] sm:$0xff] %v1405
      %1438 = vst [vmem:[#allocation3 + $0x18] sm:$0xff] %v1406
      %1439 = vst [vmem:[#allocation3 + $0x20] sm:$0xff] %v1407
      %1440 = vst [vmem:[#allocation3 + $0x28] sm:$0xff] %v1408
      %1441 = vst [vmem:[#allocation3 + $0x30] sm:$0xff] %v1409
      %1442 = vst [vmem:[#allocation3 + $0x38] sm:$0xff] %v1410
      %1443 = vst [vmem:[#allocation3 + $0x40] sm:$0xff] %v1411
      %1444 = vst [vmem:[#allocation3 + $0x48] sm:$0xff] %v1412
      %1445 = vst [vmem:[#allocation3 + $0x50] sm:$0xff] %v1413
      %1446 = vst [vmem:[#allocation3 + $0x58] sm:$0xff] %v1414
      %1447 = vst [vmem:[#allocation3 + $0x60] sm:$0xff] %v1415
      %1448 = vst [vmem:[#allocation3 + $0x68] sm:$0xff] %v1416
      %1449 = vst [vmem:[#allocation3 + $0x70] sm:$0xff] %v1417
      %1450 = vst [vmem:[#allocation3 + $0x78] sm:$0xff] %v1418
      %1451 = vst [vmem:[#allocation3 + $0x80] sm:$0xff] %v1419
      %1452 = vst [vmem:[#allocation3 + $0x88] sm:$0xff] %v1420
      %1453 = vst [vmem:[#allocation3 + $0x90] sm:$0xff] %v1421
      %1454 = vst [vmem:[#allocation3 + $0x98] sm:$0xff] %v1422
      %1455 = vst [vmem:[#allocation3 + $0xa0] sm:$0xff] %v1423
      %1456 = vst [vmem:[#allocation3 + $0xa8] sm:$0xff] %v1424
      %1457 = vst [vmem:[#allocation3 + $0xb0] sm:$0xff] %v1425
      %1458 = vst [vmem:[#allocation3 + $0xb8] sm:$0xff] %v1426
      %1459 = vst [vmem:[#allocation3 + $0xc0] sm:$0xff] %v1427
      %1460 = vst [vmem:[#allocation3 + $0xc8] sm:$0xff] %v1428
      %1461 = vst [vmem:[#allocation3 + $0xd0] sm:$0xff] %v1429
      %1462 = vst [vmem:[#allocation3 + $0xd8] sm:$0xff] %v1430
      %1463 = vst [vmem:[#allocation3 + $0xe0] sm:$0xff] %v1431
      %1464 = vst [vmem:[#allocation3 + $0xe8] sm:$0xff] %v1432
      %1465 = vst [vmem:[#allocation3 + $0xf0] sm:$0xff] %v1433
      %1466 = vst [vmem:[#allocation3 + $0xf8] sm:$0xff] %v1434
      %v1467 = vld [vmem:[%s293] sm:$0xff]
      %v1468 = vld [vmem:[%s293 + $0x8] sm:$0xff]
      %v1469 = vld [vmem:[%s293 + $0x18] sm:$0xff]
      %v1470 = vld [vmem:[%s293 + $0x20] sm:$0xff]
      %v1471 = vld [vmem:[%s293 + $0x30] sm:$0xff]
      %v1472 = vld [vmem:[%s293 + $0x38] sm:$0xff]
      %v1473 = vld [vmem:[%s293 + $0x48] sm:$0xff]
      %v1474 = vld [vmem:[%s293 + $0x50] sm:$0xff]
      %v1475 = vld [vmem:[%s293 + $0x60] sm:$0xff]
      %v1476 = vld [vmem:[%s293 + $0x68] sm:$0xff]
      %v1477 = vld [vmem:[%s293 + $0x78] sm:$0xff]
      %v1478 = vld [vmem:[%s293 + $0x80] sm:$0xff]
      %v1479 = vld [vmem:[%s293 + $0x90] sm:$0xff]
      %v1480 = vld [vmem:[%s293 + $0x98] sm:$0xff]
      %v1481 = vld [vmem:[%s293 + $0xa8] sm:$0xff]
      %v1482 = vld [vmem:[%s293 + $0xb0] sm:$0xff]
      %v1483 = vld [vmem:[%s293 + $0xc0] sm:$0xff]
      %v1484 = vld [vmem:[%s293 + $0xc8] sm:$0xff]
      %v1485 = vld [vmem:[%s293 + $0xd8] sm:$0xff]
      %v1486 = vld [vmem:[%s293 + $0xe0] sm:$0xff]
      %v1487 = vld [vmem:[%s293 + $0xf0] sm:$0xff]
      %v1488 = vld [vmem:[%s293 + $0xf8] sm:$0xff]
      %v1489 = vld [vmem:[%s293 + $0x108] sm:$0xff]
      %v1490 = vld [vmem:[%s293 + $0x110] sm:$0xff]
      %v1491 = vld [vmem:[%s293 + $0x120] sm:$0xff]
      %v1492 = vld [vmem:[%s293 + $0x128] sm:$0xff]
      %v1493 = vld [vmem:[%s293 + $0x138] sm:$0xff]
      %v1494 = vld [vmem:[%s293 + $0x140] sm:$0xff]
      %v1495 = vld [vmem:[%s293 + $0x150] sm:$0xff]
      %v1496 = vld [vmem:[%s293 + $0x158] sm:$0xff]
      %v1497 = vld [vmem:[%s293 + $0x168] sm:$0xff]
      %v1498 = vld [vmem:[%s293 + $0x170] sm:$0xff]
      %v1499 = vpack.c.bf16 %v1468, %v1467
      %v1500 = vpack.c.bf16 %v1470, %v1469
      %v1501 = vpack.c.bf16 %v1472, %v1471
      %v1502 = vpack.c.bf16 %v1474, %v1473
      %v1503 = vpack.c.bf16 %v1476, %v1475
      %v1504 = vpack.c.bf16 %v1478, %v1477
      %v1505 = vpack.c.bf16 %v1480, %v1479
      %v1506 = vpack.c.bf16 %v1482, %v1481
      %v1507 = vpack.c.bf16 %v1484, %v1483
      %v1508 = vpack.c.bf16 %v1486, %v1485
      %v1509 = vpack.c.bf16 %v1488, %v1487
      %v1510 = vpack.c.bf16 %v1490, %v1489
      %v1511 = vpack.c.bf16 %v1492, %v1491
      %v1512 = vpack.c.bf16 %v1494, %v1493
      %v1513 = vpack.c.bf16 %v1496, %v1495
      %v1514 = vpack.c.bf16 %v1498, %v1497
      %v1515 = vld [vmem:[#allocation3] sm:$0xff]
      %v1516 = vld [vmem:[#allocation3 + $0x8] sm:$0xff]
      %v1517 = vld [vmem:[#allocation3 + $0x10] sm:$0xff]
      %v1518 = vld [vmem:[#allocation3 + $0x18] sm:$0xff]
      %v1519 = vld [vmem:[#allocation3 + $0x20] sm:$0xff]
      %v1520 = vld [vmem:[#allocation3 + $0x28] sm:$0xff]
      %v1521 = vld [vmem:[#allocation3 + $0x30] sm:$0xff]
      %v1522 = vld [vmem:[#allocation3 + $0x38] sm:$0xff]
      %v1523 = vld [vmem:[#allocation3 + $0x40] sm:$0xff]
      %v1524 = vld [vmem:[#allocation3 + $0x48] sm:$0xff]
      %v1525 = vld [vmem:[#allocation3 + $0x50] sm:$0xff]
      %v1526 = vld [vmem:[#allocation3 + $0x58] sm:$0xff]
      %v1527 = vld [vmem:[#allocation3 + $0x60] sm:$0xff]
      %v1528 = vld [vmem:[#allocation3 + $0x68] sm:$0xff]
      %v1529 = vld [vmem:[#allocation3 + $0x70] sm:$0xff]
      %v1530 = vld [vmem:[#allocation3 + $0x78] sm:$0xff]
      %v1531 = vld [vmem:[#allocation3 + $0x80] sm:$0xff]
      %v1532 = vld [vmem:[#allocation3 + $0x88] sm:$0xff]
      %v1533 = vld [vmem:[#allocation3 + $0x90] sm:$0xff]
      %v1534 = vld [vmem:[#allocation3 + $0x98] sm:$0xff]
      %v1535 = vld [vmem:[#allocation3 + $0xa0] sm:$0xff]
      %v1536 = vld [vmem:[#allocation3 + $0xa8] sm:$0xff]
      %v1537 = vld [vmem:[#allocation3 + $0xb0] sm:$0xff]
      %v1538 = vld [vmem:[#allocation3 + $0xb8] sm:$0xff]
      %v1539 = vld [vmem:[#allocation3 + $0xc0] sm:$0xff]
      %v1540 = vld [vmem:[#allocation3 + $0xc8] sm:$0xff]
      %v1541 = vld [vmem:[#allocation3 + $0xd0] sm:$0xff]
      %v1542 = vld [vmem:[#allocation3 + $0xd8] sm:$0xff]
      %v1543 = vld [vmem:[#allocation3 + $0xe0] sm:$0xff]
      %v1544 = vld [vmem:[#allocation3 + $0xe8] sm:$0xff]
      %v1545 = vld [vmem:[#allocation3 + $0xf0] sm:$0xff]
      %v1546 = vld [vmem:[#allocation3 + $0xf8] sm:$0xff]
      %s1547 = scalar_lea.vmem %s1, 192
      %v1548 = vld [vmem:[%s1547] sm:$0xf]
      %v1549 = vld [vmem:[%s1547 + $0x4] sm:$0xf]
      %v1550 = vld [vmem:[%s1547 + $0x8] sm:$0xf]
      %v1551 = vld [vmem:[%s1547 + $0xc] sm:$0xf]
      %v1552 = vld [vmem:[%s1547 + $0x10] sm:$0xf]
      %v1553 = vld [vmem:[%s1547 + $0x14] sm:$0xf]
      %v1554 = vld [vmem:[%s1547 + $0x18] sm:$0xf]
      %v1555 = vld [vmem:[%s1547 + $0x1c] sm:$0xf]
      %v1556 = vld [vmem:[%s1547 + $0x20] sm:$0xf]
      %v1557 = vld [vmem:[%s1547 + $0x24] sm:$0xf]
      %v1558 = vld [vmem:[%s1547 + $0x28] sm:$0xf]
      %v1559 = vld [vmem:[%s1547 + $0x2c] sm:$0xf]
      %v1560 = vld [vmem:[%s1547 + $0x30] sm:$0xf]
      %v1561 = vld [vmem:[%s1547 + $0x34] sm:$0xf]
      %v1562 = vld [vmem:[%s1547 + $0x38] sm:$0xf]
      %v1563 = vld [vmem:[%s1547 + $0x3c] sm:$0xf]
      %v1580 = vunpack.c.l.b16 %v1548
      %v1581 = vunpack.c.l.b16 %v1549
      %v1582 = vunpack.c.l.b16 %v1550
      %v1583 = vunpack.c.l.b16 %v1551
      %v1584 = vunpack.c.l.b16 %v1552
      %v1585 = vunpack.c.l.b16 %v1553
      %v1586 = vunpack.c.l.b16 %v1554
      %v1587 = vunpack.c.l.b16 %v1555
      %v1588 = vunpack.c.l.b16 %v1556
      %v1589 = vunpack.c.l.b16 %v1557
      %v1590 = vunpack.c.l.b16 %v1558
      %v1591 = vunpack.c.l.b16 %v1559
      %v1592 = vunpack.c.l.b16 %v1560
      %v1593 = vunpack.c.l.b16 %v1561
      %v1594 = vunpack.c.l.b16 %v1562
      %v1595 = vunpack.c.l.b16 %v1563
      %v1596 = vpack.c.b16 %v1581, %v1580
      %v1597 = vpack.c.b16 %v1583, %v1582
      %v1598 = vpack.c.b16 %v1585, %v1584
      %v1599 = vpack.c.b16 %v1587, %v1586
      %v1600 = vpack.c.b16 %v1589, %v1588
      %v1601 = vpack.c.b16 %v1591, %v1590
      %v1602 = vpack.c.b16 %v1593, %v1592
      %v1603 = vpack.c.b16 %v1595, %v1594
      %1612 = vmatprep.subr.bf16.mxu0 0
      %1613 = vmatpush1.bf16.msra.mxu0 %v1596
      %1614 = vmatprep.subr.bf16.mxu0 0
      %1615 = vmatpush1.bf16.msra.mxu0 %v1597
      %1616 = vmatprep.subr.bf16.mxu0 0
      %1617 = vmatpush1.bf16.msra.mxu0 %v1598
      %1618 = vmatprep.subr.bf16.mxu0 0
      %1619 = vmatpush1.bf16.msra.mxu0 %v1599
      %1620 = vmatprep.subr.bf16.mxu0 0
      %1621 = vmatpush1.bf16.msra.mxu0 %v1600
      %1622 = vmatprep.subr.bf16.mxu0 0
      %1623 = vmatpush1.bf16.msra.mxu0 %v1601
      %1624 = vmatprep.subr.bf16.mxu0 0
      %1625 = vmatpush1.bf16.msra.mxu0 %v1602
      %1626 = vmatprep.subr.bf16.mxu0 0
      %1627 = vmatpush1.bf16.msra.mxu0 %v1603
      %1628 = vmatprep.subr.bf16.mxu0 0
      %1629 = vmatpush1.bf16.msra.mxu0 0
      %1630 = vmatprep.subr.bf16.mxu0 0
      %1631 = vmatpush1.bf16.msra.mxu0 0
      %1632 = vmatprep.subr.bf16.mxu0 0
      %1633 = vmatpush1.bf16.msra.mxu0 0
      %1634 = vmatprep.subr.bf16.mxu0 0
      %1635 = vmatpush1.bf16.msra.mxu0 0
      %1636 = vmatprep.subr.bf16.mxu0 0
      %1637 = vmatpush1.bf16.msra.mxu0 0
      %1638 = vmatprep.subr.bf16.mxu0 0
      %1639 = vmatpush1.bf16.msra.mxu0 0
      %1640 = vmatprep.subr.bf16.mxu0 0
      %1641 = vmatpush1.bf16.msra.mxu0 0
      %1642 = vmatprep.subr.bf16.mxu0 0
      %1643 = vmatpush1.bf16.msra.mxu0 0
      %1644 = vmatprep.mubr.bf16.mxu0 0
      %1645 = vmatmul.mubr.bf16.gmra.mrb[0].mxu0 %v1499
      %v1646 = vpop.f32.mrb[0].mxu0
      %v1647 = vadd.f32 0.0, %v1646
      %v1648 = vpop.f32.mrb[0].mxu0
      %v1649 = vpop.f32.mrb[0].mxu0
      %v1650 = vadd.f32 0.0, %v1649
      %v1651 = vpop.f32.mrb[0].mxu0
      %1652 = vmatprep.mubr.bf16.mxu0 0
      %1653 = vmatmul.mubr.bf16.gmra.mrb[0].mxu0 %v1500
      %v1654 = vpop.f32.mrb[0].mxu0
      %v1655 = vadd.f32 0.0, %v1654
      %v1656 = vpop.f32.mrb[0].mxu0
      %v1657 = vpop.f32.mrb[0].mxu0
      %v1658 = vadd.f32 0.0, %v1657
      %v1659 = vpop.f32.mrb[0].mxu0
      %1660 = vmatprep.mubr.bf16.mxu0 0
      %1661 = vmatmul.mubr.bf16.gmra.mrb[0].mxu0 %v1501
      %v1662 = vpop.f32.mrb[0].mxu0
      %v1663 = vadd.f32 0.0, %v1662
      %v1664 = vpop.f32.mrb[0].mxu0
      %v1665 = vpop.f32.mrb[0].mxu0
      %v1666 = vadd.f32 0.0, %v1665
      %v1667 = vpop.f32.mrb[0].mxu0
      %1668 = vmatprep.mubr.bf16.mxu0 0
      %1669 = vmatmul.mubr.bf16.gmra.mrb[0].mxu0 %v1502
      %v1670 = vpop.f32.mrb[0].mxu0
      %v1671 = vadd.f32 0.0, %v1670
      %v1672 = vpop.f32.mrb[0].mxu0
      %v1673 = vpop.f32.mrb[0].mxu0
      %v1674 = vadd.f32 0.0, %v1673
      %v1675 = vpop.f32.mrb[0].mxu0
      %1676 = vmatprep.mubr.bf16.mxu0 0
      %1677 = vmatmul.mubr.bf16.gmra.mrb[0].mxu0 %v1503
      %v1678 = vpop.f32.mrb[0].mxu0
      %v1679 = vadd.f32 0.0, %v1678
      %v1680 = vpop.f32.mrb[0].mxu0
      %v1681 = vpop.f32.mrb[0].mxu0
      %v1682 = vadd.f32 0.0, %v1681
      %v1683 = vpop.f32.mrb[0].mxu0
      %1684 = vmatprep.mubr.bf16.mxu0 0
      %1685 = vmatmul.mubr.bf16.gmra.mrb[0].mxu0 %v1504
      %v1686 = vpop.f32.mrb[0].mxu0
      %v1687 = vadd.f32 0.0, %v1686
      %v1688 = vpop.f32.mrb[0].mxu0
      %v1689 = vpop.f32.mrb[0].mxu0
      %v1690 = vadd.f32 0.0, %v1689
      %v1691 = vpop.f32.mrb[0].mxu0
      %1692 = vmatprep.mubr.bf16.mxu0 0
      %1693 = vmatmul.mubr.bf16.gmra.mrb[0].mxu0 %v1505
      %v1694 = vpop.f32.mrb[0].mxu0
      %v1695 = vadd.f32 0.0, %v1694
      %v1696 = vpop.f32.mrb[0].mxu0
      %v1697 = vpop.f32.mrb[0].mxu0
      %v1698 = vadd.f32 0.0, %v1697
      %v1699 = vpop.f32.mrb[0].mxu0
      %1700 = vmatprep.mubr.bf16.mxu0 0
      %1701 = vmatmul.mubr.bf16.gmra.mrb[0].mxu0 %v1506
      %v1702 = vpop.f32.mrb[0].mxu0
      %v1703 = vadd.f32 0.0, %v1702
      %v1704 = vpop.f32.mrb[0].mxu0
      %v1705 = vpop.f32.mrb[0].mxu0
      %v1706 = vadd.f32 0.0, %v1705
      %v1707 = vpop.f32.mrb[0].mxu0
      %1708 = vmatprep.mubr.bf16.mxu0 0
      %1709 = vmatmul.mubr.bf16.gmra.mrb[0].mxu0 %v1507
      %v1710 = vpop.f32.mrb[0].mxu0
      %v1711 = vadd.f32 0.0, %v1710
      %v1712 = vpop.f32.mrb[0].mxu0
      %v1713 = vpop.f32.mrb[0].mxu0
      %v1714 = vadd.f32 0.0, %v1713
      %v1715 = vpop.f32.mrb[0].mxu0
      %1716 = vmatprep.mubr.bf16.mxu0 0
      %1717 = vmatmul.mubr.bf16.gmra.mrb[0].mxu0 %v1508
      %v1718 = vpop.f32.mrb[0].mxu0
      %v1719 = vadd.f32 0.0, %v1718
      %v1720 = vpop.f32.mrb[0].mxu0
      %v1721 = vpop.f32.mrb[0].mxu0
      %v1722 = vadd.f32 0.0, %v1721
      %v1723 = vpop.f32.mrb[0].mxu0
      %1724 = vmatprep.mubr.bf16.mxu0 0
      %1725 = vmatmul.mubr.bf16.gmra.mrb[0].mxu0 %v1509
      %v1726 = vpop.f32.mrb[0].mxu0
      %v1727 = vadd.f32 0.0, %v1726
      %v1728 = vpop.f32.mrb[0].mxu0
      %v1729 = vpop.f32.mrb[0].mxu0
      %v1730 = vadd.f32 0.0, %v1729
      %v1731 = vpop.f32.mrb[0].mxu0
      %1732 = vmatprep.mubr.bf16.mxu0 0
      %1733 = vmatmul.mubr.bf16.gmra.mrb[0].mxu0 %v1510
      %v1734 = vpop.f32.mrb[0].mxu0
      %v1735 = vadd.f32 0.0, %v1734
      %v1736 = vpop.f32.mrb[0].mxu0
      %v1737 = vpop.f32.mrb[0].mxu0
      %v1738 = vadd.f32 0.0, %v1737
      %v1739 = vpop.f32.mrb[0].mxu0
      %1740 = vmatprep.mubr.bf16.mxu0 0
      %1741 = vmatmul.mubr.bf16.gmra.mrb[0].mxu0 %v1511
      %v1742 = vpop.f32.mrb[0].mxu0
      %v1743 = vadd.f32 0.0, %v1742
      %v1744 = vpop.f32.mrb[0].mxu0
      %v1745 = vpop.f32.mrb[0].mxu0
      %v1746 = vadd.f32 0.0, %v1745
      %v1747 = vpop.f32.mrb[0].mxu0
      %1748 = vmatprep.mubr.bf16.mxu0 0
      %1749 = vmatmul.mubr.bf16.gmra.mrb[0].mxu0 %v1512
      %v1750 = vpop.f32.mrb[0].mxu0
      %v1751 = vadd.f32 0.0, %v1750
      %v1752 = vpop.f32.mrb[0].mxu0
      %v1753 = vpop.f32.mrb[0].mxu0
      %v1754 = vadd.f32 0.0, %v1753
      %v1755 = vpop.f32.mrb[0].mxu0
      %1756 = vmatprep.mubr.bf16.mxu0 0
      %1757 = vmatmul.mubr.bf16.gmra.mrb[0].mxu0 %v1513
      %v1758 = vpop.f32.mrb[0].mxu0
      %v1759 = vadd.f32 0.0, %v1758
      %v1760 = vpop.f32.mrb[0].mxu0
      %v1761 = vpop.f32.mrb[0].mxu0
      %v1762 = vadd.f32 0.0, %v1761
      %v1763 = vpop.f32.mrb[0].mxu0
      %1764 = vmatprep.mubr.bf16.mxu0 0
      %1765 = vmatmul.mubr.bf16.gmra.mrb[0].mxu0 %v1514
      %v1766 = vpop.f32.mrb[0].mxu0
      %v1767 = vadd.f32 0.0, %v1766
      %v1768 = vpop.f32.mrb[0].mxu0
      %v1769 = vpop.f32.mrb[0].mxu0
      %v1770 = vadd.f32 0.0, %v1769
      %v1771 = vpop.f32.mrb[0].mxu0
      %1772 = vdwg.mxu0
      %v1773 = vadd.f32 %v1515, %v1647
      %v1774 = vadd.f32 %v1516, %v1650
      %v1775 = vadd.f32 %v1517, %v1655
      %v1776 = vadd.f32 %v1518, %v1658
      %v1777 = vadd.f32 %v1519, %v1663
      %v1778 = vadd.f32 %v1520, %v1666
      %v1779 = vadd.f32 %v1521, %v1671
      %v1780 = vadd.f32 %v1522, %v1674
      %v1781 = vadd.f32 %v1523, %v1679
      %v1782 = vadd.f32 %v1524, %v1682
      %v1783 = vadd.f32 %v1525, %v1687
      %v1784 = vadd.f32 %v1526, %v1690
      %v1785 = vadd.f32 %v1527, %v1695
      %v1786 = vadd.f32 %v1528, %v1698
      %v1787 = vadd.f32 %v1529, %v1703
      %v1788 = vadd.f32 %v1530, %v1706
      %v1789 = vadd.f32 %v1531, %v1711
      %v1790 = vadd.f32 %v1532, %v1714
      %v1791 = vadd.f32 %v1533, %v1719
      %v1792 = vadd.f32 %v1534, %v1722
      %v1793 = vadd.f32 %v1535, %v1727
      %v1794 = vadd.f32 %v1536, %v1730
      %v1795 = vadd.f32 %v1537, %v1735
      %v1796 = vadd.f32 %v1538, %v1738
      %v1797 = vadd.f32 %v1539, %v1743
      %v1798 = vadd.f32 %v1540, %v1746
      %v1799 = vadd.f32 %v1541, %v1751
      %v1800 = vadd.f32 %v1542, %v1754
      %v1801 = vadd.f32 %v1543, %v1759
      %v1802 = vadd.f32 %v1544, %v1762
      %v1803 = vadd.f32 %v1545, %v1767
      %v1804 = vadd.f32 %v1546, %v1770
      %1805 = vst [vmem:[#allocation3] sm:$0xff] %v1773
      %1806 = vst [vmem:[#allocation3 + $0x8] sm:$0xff] %v1774
      %1807 = vst [vmem:[#allocation3 + $0x10] sm:$0xff] %v1775
      %1808 = vst [vmem:[#allocation3 + $0x18] sm:$0xff] %v1776
      %1809 = vst [vmem:[#allocation3 + $0x20] sm:$0xff] %v1777
      %1810 = vst [vmem:[#allocation3 + $0x28] sm:$0xff] %v1778
      %1811 = vst [vmem:[#allocation3 + $0x30] sm:$0xff] %v1779
      %1812 = vst [vmem:[#allocation3 + $0x38] sm:$0xff] %v1780
      %1813 = vst [vmem:[#allocation3 + $0x40] sm:$0xff] %v1781
      %1814 = vst [vmem:[#allocation3 + $0x48] sm:$0xff] %v1782
      %1815 = vst [vmem:[#allocation3 + $0x50] sm:$0xff] %v1783
      %1816 = vst [vmem:[#allocation3 + $0x58] sm:$0xff] %v1784
      %1817 = vst [vmem:[#allocation3 + $0x60] sm:$0xff] %v1785
      %1818 = vst [vmem:[#allocation3 + $0x68] sm:$0xff] %v1786
      %1819 = vst [vmem:[#allocation3 + $0x70] sm:$0xff] %v1787
      %1820 = vst [vmem:[#allocation3 + $0x78] sm:$0xff] %v1788
      %1821 = vst [vmem:[#allocation3 + $0x80] sm:$0xff] %v1789
      %1822 = vst [vmem:[#allocation3 + $0x88] sm:$0xff] %v1790
      %1823 = vst [vmem:[#allocation3 + $0x90] sm:$0xff] %v1791
      %1824 = vst [vmem:[#allocation3 + $0x98] sm:$0xff] %v1792
      %1825 = vst [vmem:[#allocation3 + $0xa0] sm:$0xff] %v1793
      %1826 = vst [vmem:[#allocation3 + $0xa8] sm:$0xff] %v1794
      %1827 = vst [vmem:[#allocation3 + $0xb0] sm:$0xff] %v1795
      %1828 = vst [vmem:[#allocation3 + $0xb8] sm:$0xff] %v1796
      %1829 = vst [vmem:[#allocation3 + $0xc0] sm:$0xff] %v1797
      %1830 = vst [vmem:[#allocation3 + $0xc8] sm:$0xff] %v1798
      %1831 = vst [vmem:[#allocation3 + $0xd0] sm:$0xff] %v1799
      %1832 = vst [vmem:[#allocation3 + $0xd8] sm:$0xff] %v1800
      %1833 = vst [vmem:[#allocation3 + $0xe0] sm:$0xff] %v1801
      %1834 = vst [vmem:[#allocation3 + $0xe8] sm:$0xff] %v1802
      %1835 = vst [vmem:[#allocation3 + $0xf0] sm:$0xff] %v1803
      %1836 = vst [vmem:[#allocation3 + $0xf8] sm:$0xff] %v1804
      %v1837 = vld [vmem:[%s293 + $0x1] sm:$0xff]
      %v1838 = vld [vmem:[%s293 + $0x9] sm:$0xff]
      %v1839 = vld [vmem:[%s293 + $0x19] sm:$0xff]
      %v1840 = vld [vmem:[%s293 + $0x21] sm:$0xff]
      %v1841 = vld [vmem:[%s293 + $0x31] sm:$0xff]
      %v1842 = vld [vmem:[%s293 + $0x39] sm:$0xff]
      %v1843 = vld [vmem:[%s293 + $0x49] sm:$0xff]
      %v1844 = vld [vmem:[%s293 + $0x51] sm:$0xff]
      %v1845 = vld [vmem:[%s293 + $0x61] sm:$0xff]
      %v1846 = vld [vmem:[%s293 + $0x69] sm:$0xff]
      %v1847 = vld [vmem:[%s293 + $0x79] sm:$0xff]
      %v1848 = vld [vmem:[%s293 + $0x81] sm:$0xff]
      %v1849 = vld [vmem:[%s293 + $0x91] sm:$0xff]
      %v1850 = vld [vmem:[%s293 + $0x99] sm:$0xff]
      %v1851 = vld [vmem:[%s293 + $0xa9] sm:$0xff]
      %v1852 = vld [vmem:[%s293 + $0xb1] sm:$0xff]
      %v1853 = vld [vmem:[%s293 + $0xc1] sm:$0xff]
      %v1854 = vld [vmem:[%s293 + $0xc9] sm:$0xff]
      %v1855 = vld [vmem:[%s293 + $0xd9] sm:$0xff]
      %v1856 = vld [vmem:[%s293 + $0xe1] sm:$0xff]
      %v1857 = vld [vmem:[%s293 + $0xf1] sm:$0xff]
      %v1858 = vld [vmem:[%s293 + $0xf9] sm:$0xff]
      %v1859 = vld [vmem:[%s293 + $0x109] sm:$0xff]
      %v1860 = vld [vmem:[%s293 + $0x111] sm:$0xff]
      %v1861 = vld [vmem:[%s293 + $0x121] sm:$0xff]
      %v1862 = vld [vmem:[%s293 + $0x129] sm:$0xff]
      %v1863 = vld [vmem:[%s293 + $0x139] sm:$0xff]
      %v1864 = vld [vmem:[%s293 + $0x141] sm:$0xff]
      %v1865 = vld [vmem:[%s293 + $0x151] sm:$0xff]
      %v1866 = vld [vmem:[%s293 + $0x159] sm:$0xff]
      %v1867 = vld [vmem:[%s293 + $0x169] sm:$0xff]
      %v1868 = vld [vmem:[%s293 + $0x171] sm:$0xff]
      %v1869 = vpack.c.bf16 %v1838, %v1837
      %v1870 = vpack.c.bf16 %v1840, %v1839
      %v1871 = vpack.c.bf16 %v1842, %v1841
      %v1872 = vpack.c.bf16 %v1844, %v1843
      %v1873 = vpack.c.bf16 %v1846, %v1845
      %v1874 = vpack.c.bf16 %v1848, %v1847
      %v1875 = vpack.c.bf16 %v1850, %v1849
      %v1876 = vpack.c.bf16 %v1852, %v1851
      %v1877 = vpack.c.bf16 %v1854, %v1853
      %v1878 = vpack.c.bf16 %v1856, %v1855
      %v1879 = vpack.c.bf16 %v1858, %v1857
      %v1880 = vpack.c.bf16 %v1860, %v1859
      %v1881 = vpack.c.bf16 %v1862, %v1861
      %v1882 = vpack.c.bf16 %v1864, %v1863
      %v1883 = vpack.c.bf16 %v1866, %v1865
      %v1884 = vpack.c.bf16 %v1868, %v1867
      %v1885 = vld [vmem:[#allocation3] sm:$0xff]
      %v1886 = vld [vmem:[#allocation3 + $0x8] sm:$0xff]
      %v1887 = vld [vmem:[#allocation3 + $0x10] sm:$0xff]
      %v1888 = vld [vmem:[#allocation3 + $0x18] sm:$0xff]
      %v1889 = vld [vmem:[#allocation3 + $0x20] sm:$0xff]
      %v1890 = vld [vmem:[#allocation3 + $0x28] sm:$0xff]
      %v1891 = vld [vmem:[#allocation3 + $0x30] sm:$0xff]
      %v1892 = vld [vmem:[#allocation3 + $0x38] sm:$0xff]
      %v1893 = vld [vmem:[#allocation3 + $0x40] sm:$0xff]
      %v1894 = vld [vmem:[#allocation3 + $0x48] sm:$0xff]
      %v1895 = vld [vmem:[#allocation3 + $0x50] sm:$0xff]
      %v1896 = vld [vmem:[#allocation3 + $0x58] sm:$0xff]
      %v1897 = vld [vmem:[#allocation3 + $0x60] sm:$0xff]
      %v1898 = vld [vmem:[#allocation3 + $0x68] sm:$0xff]
      %v1899 = vld [vmem:[#allocation3 + $0x70] sm:$0xff]
      %v1900 = vld [vmem:[#allocation3 + $0x78] sm:$0xff]
      %v1901 = vld [vmem:[#allocation3 + $0x80] sm:$0xff]
      %v1902 = vld [vmem:[#allocation3 + $0x88] sm:$0xff]
      %v1903 = vld [vmem:[#allocation3 + $0x90] sm:$0xff]
      %v1904 = vld [vmem:[#allocation3 + $0x98] sm:$0xff]
      %v1905 = vld [vmem:[#allocation3 + $0xa0] sm:$0xff]
      %v1906 = vld [vmem:[#allocation3 + $0xa8] sm:$0xff]
      %v1907 = vld [vmem:[#allocation3 + $0xb0] sm:$0xff]
      %v1908 = vld [vmem:[#allocation3 + $0xb8] sm:$0xff]
      %v1909 = vld [vmem:[#allocation3 + $0xc0] sm:$0xff]
      %v1910 = vld [vmem:[#allocation3 + $0xc8] sm:$0xff]
      %v1911 = vld [vmem:[#allocation3 + $0xd0] sm:$0xff]
      %v1912 = vld [vmem:[#allocation3 + $0xd8] sm:$0xff]
      %v1913 = vld [vmem:[#allocation3 + $0xe0] sm:$0xff]
      %v1914 = vld [vmem:[#allocation3 + $0xe8] sm:$0xff]
      %v1915 = vld [vmem:[#allocation3 + $0xf0] sm:$0xff]
      %v1916 = vld [vmem:[#allocation3 + $0xf8] sm:$0xff]
      %s1917 = scalar_lea.vmem %s1, 256
      %v1918 = vld [vmem:[%s1917] sm:$0xf]
      %v1919 = vld [vmem:[%s1917 + $0x4] sm:$0xf]
      %v1920 = vld [vmem:[%s1917 + $0x8] sm:$0xf]
      %v1921 = vld [vmem:[%s1917 + $0xc] sm:$0xf]
      %v1922 = vld [vmem:[%s1917 + $0x10] sm:$0xf]
      %v1923 = vld [vmem:[%s1917 + $0x14] sm:$0xf]
      %v1924 = vld [vmem:[%s1917 + $0x18] sm:$0xf]
      %v1925 = vld [vmem:[%s1917 + $0x1c] sm:$0xf]
      %v1926 = vld [vmem:[%s1917 + $0x20] sm:$0xf]
      %v1927 = vld [vmem:[%s1917 + $0x24] sm:$0xf]
      %v1928 = vld [vmem:[%s1917 + $0x28] sm:$0xf]
      %v1929 = vld [vmem:[%s1917 + $0x2c] sm:$0xf]
      %v1930 = vld [vmem:[%s1917 + $0x30] sm:$0xf]
      %v1931 = vld [vmem:[%s1917 + $0x34] sm:$0xf]
      %v1932 = vld [vmem:[%s1917 + $0x38] sm:$0xf]
      %v1933 = vld [vmem:[%s1917 + $0x3c] sm:$0xf]
      %v1950 = vunpack.c.l.b16 %v1918
      %v1951 = vunpack.c.l.b16 %v1919
      %v1952 = vunpack.c.l.b16 %v1920
      %v1953 = vunpack.c.l.b16 %v1921
      %v1954 = vunpack.c.l.b16 %v1922
      %v1955 = vunpack.c.l.b16 %v1923
      %v1956 = vunpack.c.l.b16 %v1924
      %v1957 = vunpack.c.l.b16 %v1925
      %v1958 = vunpack.c.l.b16 %v1926
      %v1959 = vunpack.c.l.b16 %v1927
      %v1960 = vunpack.c.l.b16 %v1928
      %v1961 = vunpack.c.l.b16 %v1929
      %v1962 = vunpack.c.l.b16 %v1930
      %v1963 = vunpack.c.l.b16 %v1931
      %v1964 = vunpack.c.l.b16 %v1932
      %v1965 = vunpack.c.l.b16 %v1933
      %v1966 = vpack.c.b16 %v1951, %v1950
      %v1967 = vpack.c.b16 %v1953, %v1952
      %v1968 = vpack.c.b16 %v1955, %v1954
      %v1969 = vpack.c.b16 %v1957, %v1956
      %v1970 = vpack.c.b16 %v1959, %v1958
      %v1971 = vpack.c.b16 %v1961, %v1960
      %v1972 = vpack.c.b16 %v1963, %v1962
      %v1973 = vpack.c.b16 %v1965, %v1964
      %1982 = vmatprep.subr.bf16.mxu0 0
      %1983 = vmatpush1.bf16.msra.mxu0 %v1966
      %1984 = vmatprep.subr.bf16.mxu0 0
      %1985 = vmatpush1.bf16.msra.mxu0 %v1967
      %1986 = vmatprep.subr.bf16.mxu0 0
      %1987 = vmatpush1.bf16.msra.mxu0 %v1968
      %1988 = vmatprep.subr.bf16.mxu0 0
      %1989 = vmatpush1.bf16.msra.mxu0 %v1969
      %1990 = vmatprep.subr.bf16.mxu0 0
      %1991 = vmatpush1.bf16.msra.mxu0 %v1970
      %1992 = vmatprep.subr.bf16.mxu0 0
      %1993 = vmatpush1.bf16.msra.mxu0 %v1971
      %1994 = vmatprep.subr.bf16.mxu0 0
      %1995 = vmatpush1.bf16.msra.mxu0 %v1972
      %1996 = vmatprep.subr.bf16.mxu0 0
      %1997 = vmatpush1.bf16.msra.mxu0 %v1973
      %1998 = vmatprep.subr.bf16.mxu0 0
      %1999 = vmatpush1.bf16.msra.mxu0 0
      %2000 = vmatprep.subr.bf16.mxu0 0
      %2001 = vmatpush1.bf16.msra.mxu0 0
      %2002 = vmatprep.subr.bf16.mxu0 0
      %2003 = vmatpush1.bf16.msra.mxu0 0
      %2004 = vmatprep.subr.bf16.mxu0 0
      %2005 = vmatpush1.bf16.msra.mxu0 0
      %2006 = vmatprep.subr.bf16.mxu0 0
      %2007 = vmatpush1.bf16.msra.mxu0 0
      %2008 = vmatprep.subr.bf16.mxu0 0
      %2009 = vmatpush1.bf16.msra.mxu0 0
      %2010 = vmatprep.subr.bf16.mxu0 0
      %2011 = vmatpush1.bf16.msra.mxu0 0
      %2012 = vmatprep.subr.bf16.mxu0 0
      %2013 = vmatpush1.bf16.msra.mxu0 0
      %2014 = vmatprep.mubr.bf16.mxu0 0
      %2015 = vmatmul.mubr.bf16.gmra.mrb[0].mxu0 %v1869
      %v2016 = vpop.f32.mrb[0].mxu0
      %v2017 = vadd.f32 0.0, %v2016
      %v2018 = vpop.f32.mrb[0].mxu0
      %v2019 = vpop.f32.mrb[0].mxu0
      %v2020 = vadd.f32 0.0, %v2019
      %v2021 = vpop.f32.mrb[0].mxu0
      %2022 = vmatprep.mubr.bf16.mxu0 0
      %2023 = vmatmul.mubr.bf16.gmra.mrb[0].mxu0 %v1870
      %v2024 = vpop.f32.mrb[0].mxu0
      %v2025 = vadd.f32 0.0, %v2024
      %v2026 = vpop.f32.mrb[0].mxu0
      %v2027 = vpop.f32.mrb[0].mxu0
      %v2028 = vadd.f32 0.0, %v2027
      %v2029 = vpop.f32.mrb[0].mxu0
      %2030 = vmatprep.mubr.bf16.mxu0 0
      %2031 = vmatmul.mubr.bf16.gmra.mrb[0].mxu0 %v1871
      %v2032 = vpop.f32.mrb[0].mxu0
      %v2033 = vadd.f32 0.0, %v2032
      %v2034 = vpop.f32.mrb[0].mxu0
      %v2035 = vpop.f32.mrb[0].mxu0
      %v2036 = vadd.f32 0.0, %v2035
      %v2037 = vpop.f32.mrb[0].mxu0
      %2038 = vmatprep.mubr.bf16.mxu0 0
      %2039 = vmatmul.mubr.bf16.gmra.mrb[0].mxu0 %v1872
      %v2040 = vpop.f32.mrb[0].mxu0
      %v2041 = vadd.f32 0.0, %v2040
      %v2042 = vpop.f32.mrb[0].mxu0
      %v2043 = vpop.f32.mrb[0].mxu0
      %v2044 = vadd.f32 0.0, %v2043
      %v2045 = vpop.f32.mrb[0].mxu0
      %2046 = vmatprep.mubr.bf16.mxu0 0
      %2047 = vmatmul.mubr.bf16.gmra.mrb[0].mxu0 %v1873
      %v2048 = vpop.f32.mrb[0].mxu0
      %v2049 = vadd.f32 0.0, %v2048
      %v2050 = vpop.f32.mrb[0].mxu0
      %v2051 = vpop.f32.mrb[0].mxu0
      %v2052 = vadd.f32 0.0, %v2051
      %v2053 = vpop.f32.mrb[0].mxu0
      %2054 = vmatprep.mubr.bf16.mxu0 0
      %2055 = vmatmul.mubr.bf16.gmra.mrb[0].mxu0 %v1874
      %v2056 = vpop.f32.mrb[0].mxu0
      %v2057 = vadd.f32 0.0, %v2056
      %v2058 = vpop.f32.mrb[0].mxu0
      %v2059 = vpop.f32.mrb[0].mxu0
      %v2060 = vadd.f32 0.0, %v2059
      %v2061 = vpop.f32.mrb[0].mxu0
      %2062 = vmatprep.mubr.bf16.mxu0 0
      %2063 = vmatmul.mubr.bf16.gmra.mrb[0].mxu0 %v1875
      %v2064 = vpop.f32.mrb[0].mxu0
      %v2065 = vadd.f32 0.0, %v2064
      %v2066 = vpop.f32.mrb[0].mxu0
      %v2067 = vpop.f32.mrb[0].mxu0
      %v2068 = vadd.f32 0.0, %v2067
      %v2069 = vpop.f32.mrb[0].mxu0
      %2070 = vmatprep.mubr.bf16.mxu0 0
      %2071 = vmatmul.mubr.bf16.gmra.mrb[0].mxu0 %v1876
      %v2072 = vpop.f32.mrb[0].mxu0
      %v2073 = vadd.f32 0.0, %v2072
      %v2074 = vpop.f32.mrb[0].mxu0
      %v2075 = vpop.f32.mrb[0].mxu0
      %v2076 = vadd.f32 0.0, %v2075
      %v2077 = vpop.f32.mrb[0].mxu0
      %2078 = vmatprep.mubr.bf16.mxu0 0
      %2079 = vmatmul.mubr.bf16.gmra.mrb[0].mxu0 %v1877
      %v2080 = vpop.f32.mrb[0].mxu0
      %v2081 = vadd.f32 0.0, %v2080
      %v2082 = vpop.f32.mrb[0].mxu0
      %v2083 = vpop.f32.mrb[0].mxu0
      %v2084 = vadd.f32 0.0, %v2083
      %v2085 = vpop.f32.mrb[0].mxu0
      %2086 = vmatprep.mubr.bf16.mxu0 0
      %2087 = vmatmul.mubr.bf16.gmra.mrb[0].mxu0 %v1878
      %v2088 = vpop.f32.mrb[0].mxu0
      %v2089 = vadd.f32 0.0, %v2088
      %v2090 = vpop.f32.mrb[0].mxu0
      %v2091 = vpop.f32.mrb[0].mxu0
      %v2092 = vadd.f32 0.0, %v2091
      %v2093 = vpop.f32.mrb[0].mxu0
      %2094 = vmatprep.mubr.bf16.mxu0 0
      %2095 = vmatmul.mubr.bf16.gmra.mrb[0].mxu0 %v1879
      %v2096 = vpop.f32.mrb[0].mxu0
      %v2097 = vadd.f32 0.0, %v2096
      %v2098 = vpop.f32.mrb[0].mxu0
      %v2099 = vpop.f32.mrb[0].mxu0
      %v2100 = vadd.f32 0.0, %v2099
      %v2101 = vpop.f32.mrb[0].mxu0
      %2102 = vmatprep.mubr.bf16.mxu0 0
      %2103 = vmatmul.mubr.bf16.gmra.mrb[0].mxu0 %v1880
      %v2104 = vpop.f32.mrb[0].mxu0
      %v2105 = vadd.f32 0.0, %v2104
      %v2106 = vpop.f32.mrb[0].mxu0
      %v2107 = vpop.f32.mrb[0].mxu0
      %v2108 = vadd.f32 0.0, %v2107
      %v2109 = vpop.f32.mrb[0].mxu0
      %2110 = vmatprep.mubr.bf16.mxu0 0
      %2111 = vmatmul.mubr.bf16.gmra.mrb[0].mxu0 %v1881
      %v2112 = vpop.f32.mrb[0].mxu0
      %v2113 = vadd.f32 0.0, %v2112
      %v2114 = vpop.f32.mrb[0].mxu0
      %v2115 = vpop.f32.mrb[0].mxu0
      %v2116 = vadd.f32 0.0, %v2115
      %v2117 = vpop.f32.mrb[0].mxu0
      %2118 = vmatprep.mubr.bf16.mxu0 0
      %2119 = vmatmul.mubr.bf16.gmra.mrb[0].mxu0 %v1882
      %v2120 = vpop.f32.mrb[0].mxu0
      %v2121 = vadd.f32 0.0, %v2120
      %v2122 = vpop.f32.mrb[0].mxu0
      %v2123 = vpop.f32.mrb[0].mxu0
      %v2124 = vadd.f32 0.0, %v2123
      %v2125 = vpop.f32.mrb[0].mxu0
      %2126 = vmatprep.mubr.bf16.mxu0 0
      %2127 = vmatmul.mubr.bf16.gmra.mrb[0].mxu0 %v1883
      %v2128 = vpop.f32.mrb[0].mxu0
      %v2129 = vadd.f32 0.0, %v2128
      %v2130 = vpop.f32.mrb[0].mxu0
      %v2131 = vpop.f32.mrb[0].mxu0
      %v2132 = vadd.f32 0.0, %v2131
      %v2133 = vpop.f32.mrb[0].mxu0
      %2134 = vmatprep.mubr.bf16.mxu0 0
      %2135 = vmatmul.mubr.bf16.gmra.mrb[0].mxu0 %v1884
      %v2136 = vpop.f32.mrb[0].mxu0
      %v2137 = vadd.f32 0.0, %v2136
      %v2138 = vpop.f32.mrb[0].mxu0
      %v2139 = vpop.f32.mrb[0].mxu0
      %v2140 = vadd.f32 0.0, %v2139
      %v2141 = vpop.f32.mrb[0].mxu0
      %2142 = vdwg.mxu0
      %v2143 = vadd.f32 %v1885, %v2017
      %v2144 = vadd.f32 %v1886, %v2020
      %v2145 = vadd.f32 %v1887, %v2025
      %v2146 = vadd.f32 %v1888, %v2028
      %v2147 = vadd.f32 %v1889, %v2033
      %v2148 = vadd.f32 %v1890, %v2036
      %v2149 = vadd.f32 %v1891, %v2041
      %v2150 = vadd.f32 %v1892, %v2044
      %v2151 = vadd.f32 %v1893, %v2049
      %v2152 = vadd.f32 %v1894, %v2052
      %v2153 = vadd.f32 %v1895, %v2057
      %v2154 = vadd.f32 %v1896, %v2060
      %v2155 = vadd.f32 %v1897, %v2065
      %v2156 = vadd.f32 %v1898, %v2068
      %v2157 = vadd.f32 %v1899, %v2073
      %v2158 = vadd.f32 %v1900, %v2076
      %v2159 = vadd.f32 %v1901, %v2081
      %v2160 = vadd.f32 %v1902, %v2084
      %v2161 = vadd.f32 %v1903, %v2089
      %v2162 = vadd.f32 %v1904, %v2092
      %v2163 = vadd.f32 %v1905, %v2097
      %v2164 = vadd.f32 %v1906, %v2100
      %v2165 = vadd.f32 %v1907, %v2105
      %v2166 = vadd.f32 %v1908, %v2108
      %v2167 = vadd.f32 %v1909, %v2113
      %v2168 = vadd.f32 %v1910, %v2116
      %v2169 = vadd.f32 %v1911, %v2121
      %v2170 = vadd.f32 %v1912, %v2124
      %v2171 = vadd.f32 %v1913, %v2129
      %v2172 = vadd.f32 %v1914, %v2132
      %v2173 = vadd.f32 %v1915, %v2137
      %v2174 = vadd.f32 %v1916, %v2140
      %2175 = vst [vmem:[#allocation3] sm:$0xff] %v2143
      %2176 = vst [vmem:[#allocation3 + $0x8] sm:$0xff] %v2144
      %2177 = vst [vmem:[#allocation3 + $0x10] sm:$0xff] %v2145
      %2178 = vst [vmem:[#allocation3 + $0x18] sm:$0xff] %v2146
      %2179 = vst [vmem:[#allocation3 + $0x20] sm:$0xff] %v2147
      %2180 = vst [vmem:[#allocation3 + $0x28] sm:$0xff] %v2148
      %2181 = vst [vmem:[#allocation3 + $0x30] sm:$0xff] %v2149
      %2182 = vst [vmem:[#allocation3 + $0x38] sm:$0xff] %v2150
      %2183 = vst [vmem:[#allocation3 + $0x40] sm:$0xff] %v2151
      %2184 = vst [vmem:[#allocation3 + $0x48] sm:$0xff] %v2152
      %2185 = vst [vmem:[#allocation3 + $0x50] sm:$0xff] %v2153
      %2186 = vst [vmem:[#allocation3 + $0x58] sm:$0xff] %v2154
      %2187 = vst [vmem:[#allocation3 + $0x60] sm:$0xff] %v2155
      %2188 = vst [vmem:[#allocation3 + $0x68] sm:$0xff] %v2156
      %2189 = vst [vmem:[#allocation3 + $0x70] sm:$0xff] %v2157
      %2190 = vst [vmem:[#allocation3 + $0x78] sm:$0xff] %v2158
      %2191 = vst [vmem:[#allocation3 + $0x80] sm:$0xff] %v2159
      %2192 = vst [vmem:[#allocation3 + $0x88] sm:$0xff] %v2160
      %2193 = vst [vmem:[#allocation3 + $0x90] sm:$0xff] %v2161
      %2194 = vst [vmem:[#allocation3 + $0x98] sm:$0xff] %v2162
      %2195 = vst [vmem:[#allocation3 + $0xa0] sm:$0xff] %v2163
      %2196 = vst [vmem:[#allocation3 + $0xa8] sm:$0xff] %v2164
      %2197 = vst [vmem:[#allocation3 + $0xb0] sm:$0xff] %v2165
      %2198 = vst [vmem:[#allocation3 + $0xb8] sm:$0xff] %v2166
      %2199 = vst [vmem:[#allocation3 + $0xc0] sm:$0xff] %v2167
      %2200 = vst [vmem:[#allocation3 + $0xc8] sm:$0xff] %v2168
      %2201 = vst [vmem:[#allocation3 + $0xd0] sm:$0xff] %v2169
      %2202 = vst [vmem:[#allocation3 + $0xd8] sm:$0xff] %v2170
      %2203 = vst [vmem:[#allocation3 + $0xe0] sm:$0xff] %v2171
      %2204 = vst [vmem:[#allocation3 + $0xe8] sm:$0xff] %v2172
      %2205 = vst [vmem:[#allocation3 + $0xf0] sm:$0xff] %v2173
      %2206 = vst [vmem:[#allocation3 + $0xf8] sm:$0xff] %v2174
      %v2207 = vld [vmem:[%s293 + $0x2] sm:$0xff]
      %v2208 = vld [vmem:[%s293 + $0xa] sm:$0xff]
      %v2209 = vld [vmem:[%s293 + $0x1a] sm:$0xff]
      %v2210 = vld [vmem:[%s293 + $0x22] sm:$0xff]
      %v2211 = vld [vmem:[%s293 + $0x32] sm:$0xff]
      %v2212 = vld [vmem:[%s293 + $0x3a] sm:$0xff]
      %v2213 = vld [vmem:[%s293 + $0x4a] sm:$0xff]
      %v2214 = vld [vmem:[%s293 + $0x52] sm:$0xff]
      %v2215 = vld [vmem:[%s293 + $0x62] sm:$0xff]
      %v2216 = vld [vmem:[%s293 + $0x6a] sm:$0xff]
      %v2217 = vld [vmem:[%s293 + $0x7a] sm:$0xff]
      %v2218 = vld [vmem:[%s293 + $0x82] sm:$0xff]
      %v2219 = vld [vmem:[%s293 + $0x92] sm:$0xff]
      %v2220 = vld [vmem:[%s293 + $0x9a] sm:$0xff]
      %v2221 = vld [vmem:[%s293 + $0xaa] sm:$0xff]
      %v2222 = vld [vmem:[%s293 + $0xb2] sm:$0xff]
      %v2223 = vld [vmem:[%s293 + $0xc2] sm:$0xff]
      %v2224 = vld [vmem:[%s293 + $0xca] sm:$0xff]
      %v2225 = vld [vmem:[%s293 + $0xda] sm:$0xff]
      %v2226 = vld [vmem:[%s293 + $0xe2] sm:$0xff]
      %v2227 = vld [vmem:[%s293 + $0xf2] sm:$0xff]
      %v2228 = vld [vmem:[%s293 + $0xfa] sm:$0xff]
      %v2229 = vld [vmem:[%s293 + $0x10a] sm:$0xff]
      %v2230 = vld [vmem:[%s293 + $0x112] sm:$0xff]
      %v2231 = vld [vmem:[%s293 + $0x122] sm:$0xff]
      %v2232 = vld [vmem:[%s293 + $0x12a] sm:$0xff]
      %v2233 = vld [vmem:[%s293 + $0x13a] sm:$0xff]
      %v2234 = vld [vmem:[%s293 + $0x142] sm:$0xff]
      %v2235 = vld [vmem:[%s293 + $0x152] sm:$0xff]
      %v2236 = vld [vmem:[%s293 + $0x15a] sm:$0xff]
      %v2237 = vld [vmem:[%s293 + $0x16a] sm:$0xff]
      %v2238 = vld [vmem:[%s293 + $0x172] sm:$0xff]
      %v2239 = vpack.c.bf16 %v2208, %v2207
      %v2240 = vpack.c.bf16 %v2210, %v2209
      %v2241 = vpack.c.bf16 %v2212, %v2211
      %v2242 = vpack.c.bf16 %v2214, %v2213
      %v2243 = vpack.c.bf16 %v2216, %v2215
      %v2244 = vpack.c.bf16 %v2218, %v2217
      %v2245 = vpack.c.bf16 %v2220, %v2219
      %v2246 = vpack.c.bf16 %v2222, %v2221
      %v2247 = vpack.c.bf16 %v2224, %v2223
      %v2248 = vpack.c.bf16 %v2226, %v2225
      %v2249 = vpack.c.bf16 %v2228, %v2227
      %v2250 = vpack.c.bf16 %v2230, %v2229
      %v2251 = vpack.c.bf16 %v2232, %v2231
      %v2252 = vpack.c.bf16 %v2234, %v2233
      %v2253 = vpack.c.bf16 %v2236, %v2235
      %v2254 = vpack.c.bf16 %v2238, %v2237
      %v2255 = vld [vmem:[#allocation3] sm:$0xff]
      %v2256 = vld [vmem:[#allocation3 + $0x8] sm:$0xff]
      %v2257 = vld [vmem:[#allocation3 + $0x10] sm:$0xff]
      %v2258 = vld [vmem:[#allocation3 + $0x18] sm:$0xff]
      %v2259 = vld [vmem:[#allocation3 + $0x20] sm:$0xff]
      %v2260 = vld [vmem:[#allocation3 + $0x28] sm:$0xff]
      %v2261 = vld [vmem:[#allocation3 + $0x30] sm:$0xff]
      %v2262 = vld [vmem:[#allocation3 + $0x38] sm:$0xff]
      %v2263 = vld [vmem:[#allocation3 + $0x40] sm:$0xff]
      %v2264 = vld [vmem:[#allocation3 + $0x48] sm:$0xff]
      %v2265 = vld [vmem:[#allocation3 + $0x50] sm:$0xff]
      %v2266 = vld [vmem:[#allocation3 + $0x58] sm:$0xff]
      %v2267 = vld [vmem:[#allocation3 + $0x60] sm:$0xff]
      %v2268 = vld [vmem:[#allocation3 + $0x68] sm:$0xff]
      %v2269 = vld [vmem:[#allocation3 + $0x70] sm:$0xff]
      %v2270 = vld [vmem:[#allocation3 + $0x78] sm:$0xff]
      %v2271 = vld [vmem:[#allocation3 + $0x80] sm:$0xff]
      %v2272 = vld [vmem:[#allocation3 + $0x88] sm:$0xff]
      %v2273 = vld [vmem:[#allocation3 + $0x90] sm:$0xff]
      %v2274 = vld [vmem:[#allocation3 + $0x98] sm:$0xff]
      %v2275 = vld [vmem:[#allocation3 + $0xa0] sm:$0xff]
      %v2276 = vld [vmem:[#allocation3 + $0xa8] sm:$0xff]
      %v2277 = vld [vmem:[#allocation3 + $0xb0] sm:$0xff]
      %v2278 = vld [vmem:[#allocation3 + $0xb8] sm:$0xff]
      %v2279 = vld [vmem:[#allocation3 + $0xc0] sm:$0xff]
      %v2280 = vld [vmem:[#allocation3 + $0xc8] sm:$0xff]
      %v2281 = vld [vmem:[#allocation3 + $0xd0] sm:$0xff]
      %v2282 = vld [vmem:[#allocation3 + $0xd8] sm:$0xff]
      %v2283 = vld [vmem:[#allocation3 + $0xe0] sm:$0xff]
      %v2284 = vld [vmem:[#allocation3 + $0xe8] sm:$0xff]
      %v2285 = vld [vmem:[#allocation3 + $0xf0] sm:$0xff]
      %v2286 = vld [vmem:[#allocation3 + $0xf8] sm:$0xff]
      %s2287 = scalar_lea.vmem %s1, 320
      %v2288 = vld [vmem:[%s2287] sm:$0xf]
      %v2289 = vld [vmem:[%s2287 + $0x4] sm:$0xf]
      %v2290 = vld [vmem:[%s2287 + $0x8] sm:$0xf]
      %v2291 = vld [vmem:[%s2287 + $0xc] sm:$0xf]
      %v2292 = vld [vmem:[%s2287 + $0x10] sm:$0xf]
      %v2293 = vld [vmem:[%s2287 + $0x14] sm:$0xf]
      %v2294 = vld [vmem:[%s2287 + $0x18] sm:$0xf]
      %v2295 = vld [vmem:[%s2287 + $0x1c] sm:$0xf]
      %v2296 = vld [vmem:[%s2287 + $0x20] sm:$0xf]
      %v2297 = vld [vmem:[%s2287 + $0x24] sm:$0xf]
      %v2298 = vld [vmem:[%s2287 + $0x28] sm:$0xf]
      %v2299 = vld [vmem:[%s2287 + $0x2c] sm:$0xf]
      %v2300 = vld [vmem:[%s2287 + $0x30] sm:$0xf]
      %v2301 = vld [vmem:[%s2287 + $0x34] sm:$0xf]
      %v2302 = vld [vmem:[%s2287 + $0x38] sm:$0xf]
      %v2303 = vld [vmem:[%s2287 + $0x3c] sm:$0xf]
      %v2320 = vunpack.c.l.b16 %v2288
      %v2321 = vunpack.c.l.b16 %v2289
      %v2322 = vunpack.c.l.b16 %v2290
      %v2323 = vunpack.c.l.b16 %v2291
      %v2324 = vunpack.c.l.b16 %v2292
      %v2325 = vunpack.c.l.b16 %v2293
      %v2326 = vunpack.c.l.b16 %v2294
      %v2327 = vunpack.c.l.b16 %v2295
      %v2328 = vunpack.c.l.b16 %v2296
      %v2329 = vunpack.c.l.b16 %v2297
      %v2330 = vunpack.c.l.b16 %v2298
      %v2331 = vunpack.c.l.b16 %v2299
      %v2332 = vunpack.c.l.b16 %v2300
      %v2333 = vunpack.c.l.b16 %v2301
      %v2334 = vunpack.c.l.b16 %v2302
      %v2335 = vunpack.c.l.b16 %v2303
      %v2336 = vpack.c.b16 %v2321, %v2320
      %v2337 = vpack.c.b16 %v2323, %v2322
      %v2338 = vpack.c.b16 %v2325, %v2324
      %v2339 = vpack.c.b16 %v2327, %v2326
      %v2340 = vpack.c.b16 %v2329, %v2328
      %v2341 = vpack.c.b16 %v2331, %v2330
      %v2342 = vpack.c.b16 %v2333, %v2332
      %v2343 = vpack.c.b16 %v2335, %v2334
      %2352 = vmatprep.subr.bf16.mxu0 0
      %2353 = vmatpush1.bf16.msra.mxu0 %v2336
      %2354 = vmatprep.subr.bf16.mxu0 0
      %2355 = vmatpush1.bf16.msra.mxu0 %v2337
      %2356 = vmatprep.subr.bf16.mxu0 0
      %2357 = vmatpush1.bf16.msra.mxu0 %v2338
      %2358 = vmatprep.subr.bf16.mxu0 0
      %2359 = vmatpush1.bf16.msra.mxu0 %v2339
      %2360 = vmatprep.subr.bf16.mxu0 0
      %2361 = vmatpush1.bf16.msra.mxu0 %v2340
      %2362 = vmatprep.subr.bf16.mxu0 0
      %2363 = vmatpush1.bf16.msra.mxu0 %v2341
      %2364 = vmatprep.subr.bf16.mxu0 0
      %2365 = vmatpush1.bf16.msra.mxu0 %v2342
      %2366 = vmatprep.subr.bf16.mxu0 0
      %2367 = vmatpush1.bf16.msra.mxu0 %v2343
      %2368 = vmatprep.subr.bf16.mxu0 0
      %2369 = vmatpush1.bf16.msra.mxu0 0
      %2370 = vmatprep.subr.bf16.mxu0 0
      %2371 = vmatpush1.bf16.msra.mxu0 0
      %2372 = vmatprep.subr.bf16.mxu0 0
      %2373 = vmatpush1.bf16.msra.mxu0 0
      %2374 = vmatprep.subr.bf16.mxu0 0
      %2375 = vmatpush1.bf16.msra.mxu0 0
      %2376 = vmatprep.subr.bf16.mxu0 0
      %2377 = vmatpush1.bf16.msra.mxu0 0
      %2378 = vmatprep.subr.bf16.mxu0 0
      %2379 = vmatpush1.bf16.msra.mxu0 0
      %2380 = vmatprep.subr.bf16.mxu0 0
      %2381 = vmatpush1.bf16.msra.mxu0 0
      %2382 = vmatprep.subr.bf16.mxu0 0
      %2383 = vmatpush1.bf16.msra.mxu0 0
      %2384 = vmatprep.mubr.bf16.mxu0 0
      %2385 = vmatmul.mubr.bf16.gmra.mrb[0].mxu0 %v2239
      %v2386 = vpop.f32.mrb[0].mxu0
      %v2387 = vadd.f32 0.0, %v2386
      %v2388 = vpop.f32.mrb[0].mxu0
      %v2389 = vpop.f32.mrb[0].mxu0
      %v2390 = vadd.f32 0.0, %v2389
      %v2391 = vpop.f32.mrb[0].mxu0
      %2392 = vmatprep.mubr.bf16.mxu0 0
      %2393 = vmatmul.mubr.bf16.gmra.mrb[0].mxu0 %v2240
      %v2394 = vpop.f32.mrb[0].mxu0
      %v2395 = vadd.f32 0.0, %v2394
      %v2396 = vpop.f32.mrb[0].mxu0
      %v2397 = vpop.f32.mrb[0].mxu0
      %v2398 = vadd.f32 0.0, %v2397
      %v2399 = vpop.f32.mrb[0].mxu0
      %2400 = vmatprep.mubr.bf16.mxu0 0
      %2401 = vmatmul.mubr.bf16.gmra.mrb[0].mxu0 %v2241
      %v2402 = vpop.f32.mrb[0].mxu0
      %v2403 = vadd.f32 0.0, %v2402
      %v2404 = vpop.f32.mrb[0].mxu0
      %v2405 = vpop.f32.mrb[0].mxu0
      %v2406 = vadd.f32 0.0, %v2405
      %v2407 = vpop.f32.mrb[0].mxu0
      %2408 = vmatprep.mubr.bf16.mxu0 0
      %2409 = vmatmul.mubr.bf16.gmra.mrb[0].mxu0 %v2242
      %v2410 = vpop.f32.mrb[0].mxu0
      %v2411 = vadd.f32 0.0, %v2410
      %v2412 = vpop.f32.mrb[0].mxu0
      %v2413 = vpop.f32.mrb[0].mxu0
      %v2414 = vadd.f32 0.0, %v2413
      %v2415 = vpop.f32.mrb[0].mxu0
      %2416 = vmatprep.mubr.bf16.mxu0 0
      %2417 = vmatmul.mubr.bf16.gmra.mrb[0].mxu0 %v2243
      %v2418 = vpop.f32.mrb[0].mxu0
      %v2419 = vadd.f32 0.0, %v2418
      %v2420 = vpop.f32.mrb[0].mxu0
      %v2421 = vpop.f32.mrb[0].mxu0
      %v2422 = vadd.f32 0.0, %v2421
      %v2423 = vpop.f32.mrb[0].mxu0
      %2424 = vmatprep.mubr.bf16.mxu0 0
      %2425 = vmatmul.mubr.bf16.gmra.mrb[0].mxu0 %v2244
      %v2426 = vpop.f32.mrb[0].mxu0
      %v2427 = vadd.f32 0.0, %v2426
      %v2428 = vpop.f32.mrb[0].mxu0
      %v2429 = vpop.f32.mrb[0].mxu0
      %v2430 = vadd.f32 0.0, %v2429
      %v2431 = vpop.f32.mrb[0].mxu0
      %2432 = vmatprep.mubr.bf16.mxu0 0
      %2433 = vmatmul.mubr.bf16.gmra.mrb[0].mxu0 %v2245
      %v2434 = vpop.f32.mrb[0].mxu0
      %v2435 = vadd.f32 0.0, %v2434
      %v2436 = vpop.f32.mrb[0].mxu0
      %v2437 = vpop.f32.mrb[0].mxu0
      %v2438 = vadd.f32 0.0, %v2437
      %v2439 = vpop.f32.mrb[0].mxu0
      %2440 = vmatprep.mubr.bf16.mxu0 0
      %2441 = vmatmul.mubr.bf16.gmra.mrb[0].mxu0 %v2246
      %v2442 = vpop.f32.mrb[0].mxu0
      %v2443 = vadd.f32 0.0, %v2442
      %v2444 = vpop.f32.mrb[0].mxu0
      %v2445 = vpop.f32.mrb[0].mxu0
      %v2446 = vadd.f32 0.0, %v2445
      %v2447 = vpop.f32.mrb[0].mxu0
      %2448 = vmatprep.mubr.bf16.mxu0 0
      %2449 = vmatmul.mubr.bf16.gmra.mrb[0].mxu0 %v2247
      %v2450 = vpop.f32.mrb[0].mxu0
      %v2451 = vadd.f32 0.0, %v2450
      %v2452 = vpop.f32.mrb[0].mxu0
      %v2453 = vpop.f32.mrb[0].mxu0
      %v2454 = vadd.f32 0.0, %v2453
      %v2455 = vpop.f32.mrb[0].mxu0
      %2456 = vmatprep.mubr.bf16.mxu0 0
      %2457 = vmatmul.mubr.bf16.gmra.mrb[0].mxu0 %v2248
      %v2458 = vpop.f32.mrb[0].mxu0
      %v2459 = vadd.f32 0.0, %v2458
      %v2460 = vpop.f32.mrb[0].mxu0
      %v2461 = vpop.f32.mrb[0].mxu0
      %v2462 = vadd.f32 0.0, %v2461
      %v2463 = vpop.f32.mrb[0].mxu0
      %2464 = vmatprep.mubr.bf16.mxu0 0
      %2465 = vmatmul.mubr.bf16.gmra.mrb[0].mxu0 %v2249
      %v2466 = vpop.f32.mrb[0].mxu0
      %v2467 = vadd.f32 0.0, %v2466
      %v2468 = vpop.f32.mrb[0].mxu0
      %v2469 = vpop.f32.mrb[0].mxu0
      %v2470 = vadd.f32 0.0, %v2469
      %v2471 = vpop.f32.mrb[0].mxu0
      %2472 = vmatprep.mubr.bf16.mxu0 0
      %2473 = vmatmul.mubr.bf16.gmra.mrb[0].mxu0 %v2250
      %v2474 = vpop.f32.mrb[0].mxu0
      %v2475 = vadd.f32 0.0, %v2474
      %v2476 = vpop.f32.mrb[0].mxu0
      %v2477 = vpop.f32.mrb[0].mxu0
      %v2478 = vadd.f32 0.0, %v2477
      %v2479 = vpop.f32.mrb[0].mxu0
      %2480 = vmatprep.mubr.bf16.mxu0 0
      %2481 = vmatmul.mubr.bf16.gmra.mrb[0].mxu0 %v2251
      %v2482 = vpop.f32.mrb[0].mxu0
      %v2483 = vadd.f32 0.0, %v2482
      %v2484 = vpop.f32.mrb[0].mxu0
      %v2485 = vpop.f32.mrb[0].mxu0
      %v2486 = vadd.f32 0.0, %v2485
      %v2487 = vpop.f32.mrb[0].mxu0
      %2488 = vmatprep.mubr.bf16.mxu0 0
      %2489 = vmatmul.mubr.bf16.gmra.mrb[0].mxu0 %v2252
      %v2490 = vpop.f32.mrb[0].mxu0
      %v2491 = vadd.f32 0.0, %v2490
      %v2492 = vpop.f32.mrb[0].mxu0
      %v2493 = vpop.f32.mrb[0].mxu0
      %v2494 = vadd.f32 0.0, %v2493
      %v2495 = vpop.f32.mrb[0].mxu0
      %2496 = vmatprep.mubr.bf16.mxu0 0
      %2497 = vmatmul.mubr.bf16.gmra.mrb[0].mxu0 %v2253
      %v2498 = vpop.f32.mrb[0].mxu0
      %v2499 = vadd.f32 0.0, %v2498
      %v2500 = vpop.f32.mrb[0].mxu0
      %v2501 = vpop.f32.mrb[0].mxu0
      %v2502 = vadd.f32 0.0, %v2501
      %v2503 = vpop.f32.mrb[0].mxu0
      %2504 = vmatprep.mubr.bf16.mxu0 0
      %2505 = vmatmul.mubr.bf16.gmra.mrb[0].mxu0 %v2254
      %v2506 = vpop.f32.mrb[0].mxu0
      %v2507 = vadd.f32 0.0, %v2506
      %v2508 = vpop.f32.mrb[0].mxu0
      %v2509 = vpop.f32.mrb[0].mxu0
      %v2510 = vadd.f32 0.0, %v2509
      %v2511 = vpop.f32.mrb[0].mxu0
      %2512 = vdwg.mxu0
      %v2513 = vadd.f32 %v2255, %v2387
      %v2514 = vadd.f32 %v2256, %v2390
      %v2515 = vadd.f32 %v2257, %v2395
      %v2516 = vadd.f32 %v2258, %v2398
      %v2517 = vadd.f32 %v2259, %v2403
      %v2518 = vadd.f32 %v2260, %v2406
      %v2519 = vadd.f32 %v2261, %v2411
      %v2520 = vadd.f32 %v2262, %v2414
      %v2521 = vadd.f32 %v2263, %v2419
      %v2522 = vadd.f32 %v2264, %v2422
      %v2523 = vadd.f32 %v2265, %v2427
      %v2524 = vadd.f32 %v2266, %v2430
      %v2525 = vadd.f32 %v2267, %v2435
      %v2526 = vadd.f32 %v2268, %v2438
      %v2527 = vadd.f32 %v2269, %v2443
      %v2528 = vadd.f32 %v2270, %v2446
      %v2529 = vadd.f32 %v2271, %v2451
      %v2530 = vadd.f32 %v2272, %v2454
      %v2531 = vadd.f32 %v2273, %v2459
      %v2532 = vadd.f32 %v2274, %v2462
      %v2533 = vadd.f32 %v2275, %v2467
      %v2534 = vadd.f32 %v2276, %v2470
      %v2535 = vadd.f32 %v2277, %v2475
      %v2536 = vadd.f32 %v2278, %v2478
      %v2537 = vadd.f32 %v2279, %v2483
      %v2538 = vadd.f32 %v2280, %v2486
      %v2539 = vadd.f32 %v2281, %v2491
      %v2540 = vadd.f32 %v2282, %v2494
      %v2541 = vadd.f32 %v2283, %v2499
      %v2542 = vadd.f32 %v2284, %v2502
      %v2543 = vadd.f32 %v2285, %v2507
      %v2544 = vadd.f32 %v2286, %v2510
      %2545 = vst [vmem:[#allocation3] sm:$0xff] %v2513
      %2546 = vst [vmem:[#allocation3 + $0x8] sm:$0xff] %v2514
      %2547 = vst [vmem:[#allocation3 + $0x10] sm:$0xff] %v2515
      %2548 = vst [vmem:[#allocation3 + $0x18] sm:$0xff] %v2516
      %2549 = vst [vmem:[#allocation3 + $0x20] sm:$0xff] %v2517
      %2550 = vst [vmem:[#allocation3 + $0x28] sm:$0xff] %v2518
      %2551 = vst [vmem:[#allocation3 + $0x30] sm:$0xff] %v2519
      %2552 = vst [vmem:[#allocation3 + $0x38] sm:$0xff] %v2520
      %2553 = vst [vmem:[#allocation3 + $0x40] sm:$0xff] %v2521
      %2554 = vst [vmem:[#allocation3 + $0x48] sm:$0xff] %v2522
      %2555 = vst [vmem:[#allocation3 + $0x50] sm:$0xff] %v2523
      %2556 = vst [vmem:[#allocation3 + $0x58] sm:$0xff] %v2524
      %2557 = vst [vmem:[#allocation3 + $0x60] sm:$0xff] %v2525
      %2558 = vst [vmem:[#allocation3 + $0x68] sm:$0xff] %v2526
      %2559 = vst [vmem:[#allocation3 + $0x70] sm:$0xff] %v2527
      %2560 = vst [vmem:[#allocation3 + $0x78] sm:$0xff] %v2528
      %2561 = vst [vmem:[#allocation3 + $0x80] sm:$0xff] %v2529
      %2562 = vst [vmem:[#allocation3 + $0x88] sm:$0xff] %v2530
      %2563 = vst [vmem:[#allocation3 + $0x90] sm:$0xff] %v2531
      %2564 = vst [vmem:[#allocation3 + $0x98] sm:$0xff] %v2532
      %2565 = vst [vmem:[#allocation3 + $0xa0] sm:$0xff] %v2533
      %2566 = vst [vmem:[#allocation3 + $0xa8] sm:$0xff] %v2534
      %2567 = vst [vmem:[#allocation3 + $0xb0] sm:$0xff] %v2535
      %2568 = vst [vmem:[#allocation3 + $0xb8] sm:$0xff] %v2536
      %2569 = vst [vmem:[#allocation3 + $0xc0] sm:$0xff] %v2537
      %2570 = vst [vmem:[#allocation3 + $0xc8] sm:$0xff] %v2538
      %2571 = vst [vmem:[#allocation3 + $0xd0] sm:$0xff] %v2539
      %2572 = vst [vmem:[#allocation3 + $0xd8] sm:$0xff] %v2540
      %2573 = vst [vmem:[#allocation3 + $0xe0] sm:$0xff] %v2541
      %2574 = vst [vmem:[#allocation3 + $0xe8] sm:$0xff] %v2542
      %2575 = vst [vmem:[#allocation3 + $0xf0] sm:$0xff] %v2543
      %2576 = vst [vmem:[#allocation3 + $0xf8] sm:$0xff] %v2544
      %s2577 = scalar_lea.vmem [#allocation2], 48
      %v2578 = vld [vmem:[%s2577] sm:$0xff]
      %v2579 = vld [vmem:[%s2577 + $0x8] sm:$0xff]
      %v2580 = vld [vmem:[%s2577 + $0x18] sm:$0xff]
      %v2581 = vld [vmem:[%s2577 + $0x20] sm:$0xff]
      %v2582 = vld [vmem:[%s2577 + $0x30] sm:$0xff]
      %v2583 = vld [vmem:[%s2577 + $0x38] sm:$0xff]
      %v2584 = vld [vmem:[%s2577 + $0x48] sm:$0xff]
      %v2585 = vld [vmem:[%s2577 + $0x50] sm:$0xff]
      %v2586 = vld [vmem:[%s2577 + $0x60] sm:$0xff]
      %v2587 = vld [vmem:[%s2577 + $0x68] sm:$0xff]
      %v2588 = vld [vmem:[%s2577 + $0x78] sm:$0xff]
      %v2589 = vld [vmem:[%s2577 + $0x80] sm:$0xff]
      %v2590 = vld [vmem:[%s2577 + $0x90] sm:$0xff]
      %v2591 = vld [vmem:[%s2577 + $0x98] sm:$0xff]
      %v2592 = vld [vmem:[%s2577 + $0xa8] sm:$0xff]
      %v2593 = vld [vmem:[%s2577 + $0xb0] sm:$0xff]
      %v2594 = vld [vmem:[%s2577 + $0xc0] sm:$0xff]
      %v2595 = vld [vmem:[%s2577 + $0xc8] sm:$0xff]
      %v2596 = vld [vmem:[%s2577 + $0xd8] sm:$0xff]
      %v2597 = vld [vmem:[%s2577 + $0xe0] sm:$0xff]
      %v2598 = vld [vmem:[%s2577 + $0xf0] sm:$0xff]
      %v2599 = vld [vmem:[%s2577 + $0xf8] sm:$0xff]
      %v2600 = vld [vmem:[%s2577 + $0x108] sm:$0xff]
      %v2601 = vld [vmem:[%s2577 + $0x110] sm:$0xff]
      %v2602 = vld [vmem:[%s2577 + $0x120] sm:$0xff]
      %v2603 = vld [vmem:[%s2577 + $0x128] sm:$0xff]
      %v2604 = vld [vmem:[%s2577 + $0x138] sm:$0xff]
      %v2605 = vld [vmem:[%s2577 + $0x140] sm:$0xff]
      %v2606 = vld [vmem:[%s2577 + $0x150] sm:$0xff]
      %v2607 = vld [vmem:[%s2577 + $0x158] sm:$0xff]
      %v2608 = vld [vmem:[%s2577 + $0x168] sm:$0xff]
      %v2609 = vld [vmem:[%s2577 + $0x170] sm:$0xff]
      %v2610 = vpack.c.bf16 %v2579, %v2578
      %v2611 = vpack.c.bf16 %v2581, %v2580
      %v2612 = vpack.c.bf16 %v2583, %v2582
      %v2613 = vpack.c.bf16 %v2585, %v2584
      %v2614 = vpack.c.bf16 %v2587, %v2586
      %v2615 = vpack.c.bf16 %v2589, %v2588
      %v2616 = vpack.c.bf16 %v2591, %v2590
      %v2617 = vpack.c.bf16 %v2593, %v2592
      %v2618 = vpack.c.bf16 %v2595, %v2594
      %v2619 = vpack.c.bf16 %v2597, %v2596
      %v2620 = vpack.c.bf16 %v2599, %v2598
      %v2621 = vpack.c.bf16 %v2601, %v2600
      %v2622 = vpack.c.bf16 %v2603, %v2602
      %v2623 = vpack.c.bf16 %v2605, %v2604
      %v2624 = vpack.c.bf16 %v2607, %v2606
      %v2625 = vpack.c.bf16 %v2609, %v2608
      %v2626 = vld [vmem:[#allocation3] sm:$0xff]
      %v2627 = vld [vmem:[#allocation3 + $0x8] sm:$0xff]
      %v2628 = vld [vmem:[#allocation3 + $0x10] sm:$0xff]
      %v2629 = vld [vmem:[#allocation3 + $0x18] sm:$0xff]
      %v2630 = vld [vmem:[#allocation3 + $0x20] sm:$0xff]
      %v2631 = vld [vmem:[#allocation3 + $0x28] sm:$0xff]
      %v2632 = vld [vmem:[#allocation3 + $0x30] sm:$0xff]
      %v2633 = vld [vmem:[#allocation3 + $0x38] sm:$0xff]
      %v2634 = vld [vmem:[#allocation3 + $0x40] sm:$0xff]
      %v2635 = vld [vmem:[#allocation3 + $0x48] sm:$0xff]
      %v2636 = vld [vmem:[#allocation3 + $0x50] sm:$0xff]
      %v2637 = vld [vmem:[#allocation3 + $0x58] sm:$0xff]
      %v2638 = vld [vmem:[#allocation3 + $0x60] sm:$0xff]
      %v2639 = vld [vmem:[#allocation3 + $0x68] sm:$0xff]
      %v2640 = vld [vmem:[#allocation3 + $0x70] sm:$0xff]
      %v2641 = vld [vmem:[#allocation3 + $0x78] sm:$0xff]
      %v2642 = vld [vmem:[#allocation3 + $0x80] sm:$0xff]
      %v2643 = vld [vmem:[#allocation3 + $0x88] sm:$0xff]
      %v2644 = vld [vmem:[#allocation3 + $0x90] sm:$0xff]
      %v2645 = vld [vmem:[#allocation3 + $0x98] sm:$0xff]
      %v2646 = vld [vmem:[#allocation3 + $0xa0] sm:$0xff]
      %v2647 = vld [vmem:[#allocation3 + $0xa8] sm:$0xff]
      %v2648 = vld [vmem:[#allocation3 + $0xb0] sm:$0xff]
      %v2649 = vld [vmem:[#allocation3 + $0xb8] sm:$0xff]
      %v2650 = vld [vmem:[#allocation3 + $0xc0] sm:$0xff]
      %v2651 = vld [vmem:[#allocation3 + $0xc8] sm:$0xff]
      %v2652 = vld [vmem:[#allocation3 + $0xd0] sm:$0xff]
      %v2653 = vld [vmem:[#allocation3 + $0xd8] sm:$0xff]
      %v2654 = vld [vmem:[#allocation3 + $0xe0] sm:$0xff]
      %v2655 = vld [vmem:[#allocation3 + $0xe8] sm:$0xff]
      %v2656 = vld [vmem:[#allocation3 + $0xf0] sm:$0xff]
      %v2657 = vld [vmem:[#allocation3 + $0xf8] sm:$0xff]
      %s2658 = scalar_lea.vmem %s1, 384
      %v2659 = vld [vmem:[%s2658] sm:$0xf]
      %v2660 = vld [vmem:[%s2658 + $0x4] sm:$0xf]
      %v2661 = vld [vmem:[%s2658 + $0x8] sm:$0xf]
      %v2662 = vld [vmem:[%s2658 + $0xc] sm:$0xf]
      %v2663 = vld [vmem:[%s2658 + $0x10] sm:$0xf]
      %v2664 = vld [vmem:[%s2658 + $0x14] sm:$0xf]
      %v2665 = vld [vmem:[%s2658 + $0x18] sm:$0xf]
      %v2666 = vld [vmem:[%s2658 + $0x1c] sm:$0xf]
      %v2667 = vld [vmem:[%s2658 + $0x20] sm:$0xf]
      %v2668 = vld [vmem:[%s2658 + $0x24] sm:$0xf]
      %v2669 = vld [vmem:[%s2658 + $0x28] sm:$0xf]
      %v2670 = vld [vmem:[%s2658 + $0x2c] sm:$0xf]
      %v2671 = vld [vmem:[%s2658 + $0x30] sm:$0xf]
      %v2672 = vld [vmem:[%s2658 + $0x34] sm:$0xf]
      %v2673 = vld [vmem:[%s2658 + $0x38] sm:$0xf]
      %v2674 = vld [vmem:[%s2658 + $0x3c] sm:$0xf]
      %v2691 = vunpack.c.l.b16 %v2659
      %v2692 = vunpack.c.l.b16 %v2660
      %v2693 = vunpack.c.l.b16 %v2661
      %v2694 = vunpack.c.l.b16 %v2662
      %v2695 = vunpack.c.l.b16 %v2663
      %v2696 = vunpack.c.l.b16 %v2664
      %v2697 = vunpack.c.l.b16 %v2665
      %v2698 = vunpack.c.l.b16 %v2666
      %v2699 = vunpack.c.l.b16 %v2667
      %v2700 = vunpack.c.l.b16 %v2668
      %v2701 = vunpack.c.l.b16 %v2669
      %v2702 = vunpack.c.l.b16 %v2670
      %v2703 = vunpack.c.l.b16 %v2671
      %v2704 = vunpack.c.l.b16 %v2672
      %v2705 = vunpack.c.l.b16 %v2673
      %v2706 = vunpack.c.l.b16 %v2674
      %v2707 = vpack.c.b16 %v2692, %v2691
      %v2708 = vpack.c.b16 %v2694, %v2693
      %v2709 = vpack.c.b16 %v2696, %v2695
      %v2710 = vpack.c.b16 %v2698, %v2697
      %v2711 = vpack.c.b16 %v2700, %v2699
      %v2712 = vpack.c.b16 %v2702, %v2701
      %v2713 = vpack.c.b16 %v2704, %v2703
      %v2714 = vpack.c.b16 %v2706, %v2705
      %2723 = vmatprep.subr.bf16.mxu0 0
      %2724 = vmatpush1.bf16.msra.mxu0 %v2707
      %2725 = vmatprep.subr.bf16.mxu0 0
      %2726 = vmatpush1.bf16.msra.mxu0 %v2708
      %2727 = vmatprep.subr.bf16.mxu0 0
      %2728 = vmatpush1.bf16.msra.mxu0 %v2709
      %2729 = vmatprep.subr.bf16.mxu0 0
      %2730 = vmatpush1.bf16.msra.mxu0 %v2710
      %2731 = vmatprep.subr.bf16.mxu0 0
      %2732 = vmatpush1.bf16.msra.mxu0 %v2711
      %2733 = vmatprep.subr.bf16.mxu0 0
      %2734 = vmatpush1.bf16.msra.mxu0 %v2712
      %2735 = vmatprep.subr.bf16.mxu0 0
      %2736 = vmatpush1.bf16.msra.mxu0 %v2713
      %2737 = vmatprep.subr.bf16.mxu0 0
      %2738 = vmatpush1.bf16.msra.mxu0 %v2714
      %2739 = vmatprep.subr.bf16.mxu0 0
      %2740 = vmatpush1.bf16.msra.mxu0 0
      %2741 = vmatprep.subr.bf16.mxu0 0
      %2742 = vmatpush1.bf16.msra.mxu0 0
      %2743 = vmatprep.subr.bf16.mxu0 0
      %2744 = vmatpush1.bf16.msra.mxu0 0
      %2745 = vmatprep.subr.bf16.mxu0 0
      %2746 = vmatpush1.bf16.msra.mxu0 0
      %2747 = vmatprep.subr.bf16.mxu0 0
      %2748 = vmatpush1.bf16.msra.mxu0 0
      %2749 = vmatprep.subr.bf16.mxu0 0
      %2750 = vmatpush1.bf16.msra.mxu0 0
      %2751 = vmatprep.subr.bf16.mxu0 0
      %2752 = vmatpush1.bf16.msra.mxu0 0
      %2753 = vmatprep.subr.bf16.mxu0 0
      %2754 = vmatpush1.bf16.msra.mxu0 0
      %2755 = vmatprep.mubr.bf16.mxu0 0
      %2756 = vmatmul.mubr.bf16.gmra.mrb[0].mxu0 %v2610
      %v2757 = vpop.f32.mrb[0].mxu0
      %v2758 = vadd.f32 0.0, %v2757
      %v2759 = vpop.f32.mrb[0].mxu0
      %v2760 = vpop.f32.mrb[0].mxu0
      %v2761 = vadd.f32 0.0, %v2760
      %v2762 = vpop.f32.mrb[0].mxu0
      %2763 = vmatprep.mubr.bf16.mxu0 0
      %2764 = vmatmul.mubr.bf16.gmra.mrb[0].mxu0 %v2611
      %v2765 = vpop.f32.mrb[0].mxu0
      %v2766 = vadd.f32 0.0, %v2765
      %v2767 = vpop.f32.mrb[0].mxu0
      %v2768 = vpop.f32.mrb[0].mxu0
      %v2769 = vadd.f32 0.0, %v2768
      %v2770 = vpop.f32.mrb[0].mxu0
      %2771 = vmatprep.mubr.bf16.mxu0 0
      %2772 = vmatmul.mubr.bf16.gmra.mrb[0].mxu0 %v2612
      %v2773 = vpop.f32.mrb[0].mxu0
      %v2774 = vadd.f32 0.0, %v2773
      %v2775 = vpop.f32.mrb[0].mxu0
      %v2776 = vpop.f32.mrb[0].mxu0
      %v2777 = vadd.f32 0.0, %v2776
      %v2778 = vpop.f32.mrb[0].mxu0
      %2779 = vmatprep.mubr.bf16.mxu0 0
      %2780 = vmatmul.mubr.bf16.gmra.mrb[0].mxu0 %v2613
      %v2781 = vpop.f32.mrb[0].mxu0
      %v2782 = vadd.f32 0.0, %v2781
      %v2783 = vpop.f32.mrb[0].mxu0
      %v2784 = vpop.f32.mrb[0].mxu0
      %v2785 = vadd.f32 0.0, %v2784
      %v2786 = vpop.f32.mrb[0].mxu0
      %2787 = vmatprep.mubr.bf16.mxu0 0
      %2788 = vmatmul.mubr.bf16.gmra.mrb[0].mxu0 %v2614
      %v2789 = vpop.f32.mrb[0].mxu0
      %v2790 = vadd.f32 0.0, %v2789
      %v2791 = vpop.f32.mrb[0].mxu0
      %v2792 = vpop.f32.mrb[0].mxu0
      %v2793 = vadd.f32 0.0, %v2792
      %v2794 = vpop.f32.mrb[0].mxu0
      %2795 = vmatprep.mubr.bf16.mxu0 0
      %2796 = vmatmul.mubr.bf16.gmra.mrb[0].mxu0 %v2615
      %v2797 = vpop.f32.mrb[0].mxu0
      %v2798 = vadd.f32 0.0, %v2797
      %v2799 = vpop.f32.mrb[0].mxu0
      %v2800 = vpop.f32.mrb[0].mxu0
      %v2801 = vadd.f32 0.0, %v2800
      %v2802 = vpop.f32.mrb[0].mxu0
      %2803 = vmatprep.mubr.bf16.mxu0 0
      %2804 = vmatmul.mubr.bf16.gmra.mrb[0].mxu0 %v2616
      %v2805 = vpop.f32.mrb[0].mxu0
      %v2806 = vadd.f32 0.0, %v2805
      %v2807 = vpop.f32.mrb[0].mxu0
      %v2808 = vpop.f32.mrb[0].mxu0
      %v2809 = vadd.f32 0.0, %v2808
      %v2810 = vpop.f32.mrb[0].mxu0
      %2811 = vmatprep.mubr.bf16.mxu0 0
      %2812 = vmatmul.mubr.bf16.gmra.mrb[0].mxu0 %v2617
      %v2813 = vpop.f32.mrb[0].mxu0
      %v2814 = vadd.f32 0.0, %v2813
      %v2815 = vpop.f32.mrb[0].mxu0
      %v2816 = vpop.f32.mrb[0].mxu0
      %v2817 = vadd.f32 0.0, %v2816
      %v2818 = vpop.f32.mrb[0].mxu0
      %2819 = vmatprep.mubr.bf16.mxu0 0
      %2820 = vmatmul.mubr.bf16.gmra.mrb[0].mxu0 %v2618
      %v2821 = vpop.f32.mrb[0].mxu0
      %v2822 = vadd.f32 0.0, %v2821
      %v2823 = vpop.f32.mrb[0].mxu0
      %v2824 = vpop.f32.mrb[0].mxu0
      %v2825 = vadd.f32 0.0, %v2824
      %v2826 = vpop.f32.mrb[0].mxu0
      %2827 = vmatprep.mubr.bf16.mxu0 0
      %2828 = vmatmul.mubr.bf16.gmra.mrb[0].mxu0 %v2619
      %v2829 = vpop.f32.mrb[0].mxu0
      %v2830 = vadd.f32 0.0, %v2829
      %v2831 = vpop.f32.mrb[0].mxu0
      %v2832 = vpop.f32.mrb[0].mxu0
      %v2833 = vadd.f32 0.0, %v2832
      %v2834 = vpop.f32.mrb[0].mxu0
      %2835 = vmatprep.mubr.bf16.mxu0 0
      %2836 = vmatmul.mubr.bf16.gmra.mrb[0].mxu0 %v2620
      %v2837 = vpop.f32.mrb[0].mxu0
      %v2838 = vadd.f32 0.0, %v2837
      %v2839 = vpop.f32.mrb[0].mxu0
      %v2840 = vpop.f32.mrb[0].mxu0
      %v2841 = vadd.f32 0.0, %v2840
      %v2842 = vpop.f32.mrb[0].mxu0
      %2843 = vmatprep.mubr.bf16.mxu0 0
      %2844 = vmatmul.mubr.bf16.gmra.mrb[0].mxu0 %v2621
      %v2845 = vpop.f32.mrb[0].mxu0
      %v2846 = vadd.f32 0.0, %v2845
      %v2847 = vpop.f32.mrb[0].mxu0
      %v2848 = vpop.f32.mrb[0].mxu0
      %v2849 = vadd.f32 0.0, %v2848
      %v2850 = vpop.f32.mrb[0].mxu0
      %2851 = vmatprep.mubr.bf16.mxu0 0
      %2852 = vmatmul.mubr.bf16.gmra.mrb[0].mxu0 %v2622
      %v2853 = vpop.f32.mrb[0].mxu0
      %v2854 = vadd.f32 0.0, %v2853
      %v2855 = vpop.f32.mrb[0].mxu0
      %v2856 = vpop.f32.mrb[0].mxu0
      %v2857 = vadd.f32 0.0, %v2856
      %v2858 = vpop.f32.mrb[0].mxu0
      %2859 = vmatprep.mubr.bf16.mxu0 0
      %2860 = vmatmul.mubr.bf16.gmra.mrb[0].mxu0 %v2623
      %v2861 = vpop.f32.mrb[0].mxu0
      %v2862 = vadd.f32 0.0, %v2861
      %v2863 = vpop.f32.mrb[0].mxu0
      %v2864 = vpop.f32.mrb[0].mxu0
      %v2865 = vadd.f32 0.0, %v2864
      %v2866 = vpop.f32.mrb[0].mxu0
      %2867 = vmatprep.mubr.bf16.mxu0 0
      %2868 = vmatmul.mubr.bf16.gmra.mrb[0].mxu0 %v2624
      %v2869 = vpop.f32.mrb[0].mxu0
      %v2870 = vadd.f32 0.0, %v2869
      %v2871 = vpop.f32.mrb[0].mxu0
      %v2872 = vpop.f32.mrb[0].mxu0
      %v2873 = vadd.f32 0.0, %v2872
      %v2874 = vpop.f32.mrb[0].mxu0
      %2875 = vmatprep.mubr.bf16.mxu0 0
      %2876 = vmatmul.mubr.bf16.gmra.mrb[0].mxu0 %v2625
      %v2877 = vpop.f32.mrb[0].mxu0
      %v2878 = vadd.f32 0.0, %v2877
      %v2879 = vpop.f32.mrb[0].mxu0
      %v2880 = vpop.f32.mrb[0].mxu0
      %v2881 = vadd.f32 0.0, %v2880
      %v2882 = vpop.f32.mrb[0].mxu0
      %2883 = vdwg.mxu0
      %v2884 = vadd.f32 %v2626, %v2758
      %v2885 = vadd.f32 %v2627, %v2761
      %v2886 = vadd.f32 %v2628, %v2766
      %v2887 = vadd.f32 %v2629, %v2769
      %v2888 = vadd.f32 %v2630, %v2774
      %v2889 = vadd.f32 %v2631, %v2777
      %v2890 = vadd.f32 %v2632, %v2782
      %v2891 = vadd.f32 %v2633, %v2785
      %v2892 = vadd.f32 %v2634, %v2790
      %v2893 = vadd.f32 %v2635, %v2793
      %v2894 = vadd.f32 %v2636, %v2798
      %v2895 = vadd.f32 %v2637, %v2801
      %v2896 = vadd.f32 %v2638, %v2806
      %v2897 = vadd.f32 %v2639, %v2809
      %v2898 = vadd.f32 %v2640, %v2814
      %v2899 = vadd.f32 %v2641, %v2817
      %v2900 = vadd.f32 %v2642, %v2822
      %v2901 = vadd.f32 %v2643, %v2825
      %v2902 = vadd.f32 %v2644, %v2830
      %v2903 = vadd.f32 %v2645, %v2833
      %v2904 = vadd.f32 %v2646, %v2838
      %v2905 = vadd.f32 %v2647, %v2841
      %v2906 = vadd.f32 %v2648, %v2846
      %v2907 = vadd.f32 %v2649, %v2849
      %v2908 = vadd.f32 %v2650, %v2854
      %v2909 = vadd.f32 %v2651, %v2857
      %v2910 = vadd.f32 %v2652, %v2862
      %v2911 = vadd.f32 %v2653, %v2865
      %v2912 = vadd.f32 %v2654, %v2870
      %v2913 = vadd.f32 %v2655, %v2873
      %v2914 = vadd.f32 %v2656, %v2878
      %v2915 = vadd.f32 %v2657, %v2881
      %2916 = vst [vmem:[#allocation3] sm:$0xff] %v2884
      %2917 = vst [vmem:[#allocation3 + $0x8] sm:$0xff] %v2885
      %2918 = vst [vmem:[#allocation3 + $0x10] sm:$0xff] %v2886
      %2919 = vst [vmem:[#allocation3 + $0x18] sm:$0xff] %v2887
      %2920 = vst [vmem:[#allocation3 + $0x20] sm:$0xff] %v2888
      %2921 = vst [vmem:[#allocation3 + $0x28] sm:$0xff] %v2889
      %2922 = vst [vmem:[#allocation3 + $0x30] sm:$0xff] %v2890
      %2923 = vst [vmem:[#allocation3 + $0x38] sm:$0xff] %v2891
      %2924 = vst [vmem:[#allocation3 + $0x40] sm:$0xff] %v2892
      %2925 = vst [vmem:[#allocation3 + $0x48] sm:$0xff] %v2893
      %2926 = vst [vmem:[#allocation3 + $0x50] sm:$0xff] %v2894
      %2927 = vst [vmem:[#allocation3 + $0x58] sm:$0xff] %v2895
      %2928 = vst [vmem:[#allocation3 + $0x60] sm:$0xff] %v2896
      %2929 = vst [vmem:[#allocation3 + $0x68] sm:$0xff] %v2897
      %2930 = vst [vmem:[#allocation3 + $0x70] sm:$0xff] %v2898
      %2931 = vst [vmem:[#allocation3 + $0x78] sm:$0xff] %v2899
      %2932 = vst [vmem:[#allocation3 + $0x80] sm:$0xff] %v2900
      %2933 = vst [vmem:[#allocation3 + $0x88] sm:$0xff] %v2901
      %2934 = vst [vmem:[#allocation3 + $0x90] sm:$0xff] %v2902
      %2935 = vst [vmem:[#allocation3 + $0x98] sm:$0xff] %v2903
      %2936 = vst [vmem:[#allocation3 + $0xa0] sm:$0xff] %v2904
      %2937 = vst [vmem:[#allocation3 + $0xa8] sm:$0xff] %v2905
      %2938 = vst [vmem:[#allocation3 + $0xb0] sm:$0xff] %v2906
      %2939 = vst [vmem:[#allocation3 + $0xb8] sm:$0xff] %v2907
      %2940 = vst [vmem:[#allocation3 + $0xc0] sm:$0xff] %v2908
      %2941 = vst [vmem:[#allocation3 + $0xc8] sm:$0xff] %v2909
      %2942 = vst [vmem:[#allocation3 + $0xd0] sm:$0xff] %v2910
      %2943 = vst [vmem:[#allocation3 + $0xd8] sm:$0xff] %v2911
      %2944 = vst [vmem:[#allocation3 + $0xe0] sm:$0xff] %v2912
      %2945 = vst [vmem:[#allocation3 + $0xe8] sm:$0xff] %v2913
      %2946 = vst [vmem:[#allocation3 + $0xf0] sm:$0xff] %v2914
      %2947 = vst [vmem:[#allocation3 + $0xf8] sm:$0xff] %v2915
      %v2948 = vld [vmem:[%s2577 + $0x1] sm:$0xff]
      %v2949 = vld [vmem:[%s2577 + $0x9] sm:$0xff]
      %v2950 = vld [vmem:[%s2577 + $0x19] sm:$0xff]
      %v2951 = vld [vmem:[%s2577 + $0x21] sm:$0xff]
      %v2952 = vld [vmem:[%s2577 + $0x31] sm:$0xff]
      %v2953 = vld [vmem:[%s2577 + $0x39] sm:$0xff]
      %v2954 = vld [vmem:[%s2577 + $0x49] sm:$0xff]
      %v2955 = vld [vmem:[%s2577 + $0x51] sm:$0xff]
      %v2956 = vld [vmem:[%s2577 + $0x61] sm:$0xff]
      %v2957 = vld [vmem:[%s2577 + $0x69] sm:$0xff]
      %v2958 = vld [vmem:[%s2577 + $0x79] sm:$0xff]
      %v2959 = vld [vmem:[%s2577 + $0x81] sm:$0xff]
      %v2960 = vld [vmem:[%s2577 + $0x91] sm:$0xff]
      %v2961 = vld [vmem:[%s2577 + $0x99] sm:$0xff]
      %v2962 = vld [vmem:[%s2577 + $0xa9] sm:$0xff]
      %v2963 = vld [vmem:[%s2577 + $0xb1] sm:$0xff]
      %v2964 = vld [vmem:[%s2577 + $0xc1] sm:$0xff]
      %v2965 = vld [vmem:[%s2577 + $0xc9] sm:$0xff]
      %v2966 = vld [vmem:[%s2577 + $0xd9] sm:$0xff]
      %v2967 = vld [vmem:[%s2577 + $0xe1] sm:$0xff]
      %v2968 = vld [vmem:[%s2577 + $0xf1] sm:$0xff]
      %v2969 = vld [vmem:[%s2577 + $0xf9] sm:$0xff]
      %v2970 = vld [vmem:[%s2577 + $0x109] sm:$0xff]
      %v2971 = vld [vmem:[%s2577 + $0x111] sm:$0xff]
      %v2972 = vld [vmem:[%s2577 + $0x121] sm:$0xff]
      %v2973 = vld [vmem:[%s2577 + $0x129] sm:$0xff]
      %v2974 = vld [vmem:[%s2577 + $0x139] sm:$0xff]
      %v2975 = vld [vmem:[%s2577 + $0x141] sm:$0xff]
      %v2976 = vld [vmem:[%s2577 + $0x151] sm:$0xff]
      %v2977 = vld [vmem:[%s2577 + $0x159] sm:$0xff]
      %v2978 = vld [vmem:[%s2577 + $0x169] sm:$0xff]
      %v2979 = vld [vmem:[%s2577 + $0x171] sm:$0xff]
      %v2980 = vpack.c.bf16 %v2949, %v2948
      %v2981 = vpack.c.bf16 %v2951, %v2950
      %v2982 = vpack.c.bf16 %v2953, %v2952
      %v2983 = vpack.c.bf16 %v2955, %v2954
      %v2984 = vpack.c.bf16 %v2957, %v2956
      %v2985 = vpack.c.bf16 %v2959, %v2958
      %v2986 = vpack.c.bf16 %v2961, %v2960
      %v2987 = vpack.c.bf16 %v2963, %v2962
      %v2988 = vpack.c.bf16 %v2965, %v2964
      %v2989 = vpack.c.bf16 %v2967, %v2966
      %v2990 = vpack.c.bf16 %v2969, %v2968
      %v2991 = vpack.c.bf16 %v2971, %v2970
      %v2992 = vpack.c.bf16 %v2973, %v2972
      %v2993 = vpack.c.bf16 %v2975, %v2974
      %v2994 = vpack.c.bf16 %v2977, %v2976
      %v2995 = vpack.c.bf16 %v2979, %v2978
      %v2996 = vld [vmem:[#allocation3] sm:$0xff]
      %v2997 = vld [vmem:[#allocation3 + $0x8] sm:$0xff]
      %v2998 = vld [vmem:[#allocation3 + $0x10] sm:$0xff]
      %v2999 = vld [vmem:[#allocation3 + $0x18] sm:$0xff]
      %v3000 = vld [vmem:[#allocation3 + $0x20] sm:$0xff]
      %v3001 = vld [vmem:[#allocation3 + $0x28] sm:$0xff]
      %v3002 = vld [vmem:[#allocation3 + $0x30] sm:$0xff]
      %v3003 = vld [vmem:[#allocation3 + $0x38] sm:$0xff]
      %v3004 = vld [vmem:[#allocation3 + $0x40] sm:$0xff]
      %v3005 = vld [vmem:[#allocation3 + $0x48] sm:$0xff]
      %v3006 = vld [vmem:[#allocation3 + $0x50] sm:$0xff]
      %v3007 = vld [vmem:[#allocation3 + $0x58] sm:$0xff]
      %v3008 = vld [vmem:[#allocation3 + $0x60] sm:$0xff]
      %v3009 = vld [vmem:[#allocation3 + $0x68] sm:$0xff]
      %v3010 = vld [vmem:[#allocation3 + $0x70] sm:$0xff]
      %v3011 = vld [vmem:[#allocation3 + $0x78] sm:$0xff]
      %v3012 = vld [vmem:[#allocation3 + $0x80] sm:$0xff]
      %v3013 = vld [vmem:[#allocation3 + $0x88] sm:$0xff]
      %v3014 = vld [vmem:[#allocation3 + $0x90] sm:$0xff]
      %v3015 = vld [vmem:[#allocation3 + $0x98] sm:$0xff]
      %v3016 = vld [vmem:[#allocation3 + $0xa0] sm:$0xff]
      %v3017 = vld [vmem:[#allocation3 + $0xa8] sm:$0xff]
      %v3018 = vld [vmem:[#allocation3 + $0xb0] sm:$0xff]
      %v3019 = vld [vmem:[#allocation3 + $0xb8] sm:$0xff]
      %v3020 = vld [vmem:[#allocation3 + $0xc0] sm:$0xff]
      %v3021 = vld [vmem:[#allocation3 + $0xc8] sm:$0xff]
      %v3022 = vld [vmem:[#allocation3 + $0xd0] sm:$0xff]
      %v3023 = vld [vmem:[#allocation3 + $0xd8] sm:$0xff]
      %v3024 = vld [vmem:[#allocation3 + $0xe0] sm:$0xff]
      %v3025 = vld [vmem:[#allocation3 + $0xe8] sm:$0xff]
      %v3026 = vld [vmem:[#allocation3 + $0xf0] sm:$0xff]
      %v3027 = vld [vmem:[#allocation3 + $0xf8] sm:$0xff]
      %s3028 = scalar_lea.vmem %s1, 448
      %v3029 = vld [vmem:[%s3028] sm:$0xf]
      %v3030 = vld [vmem:[%s3028 + $0x4] sm:$0xf]
      %v3031 = vld [vmem:[%s3028 + $0x8] sm:$0xf]
      %v3032 = vld [vmem:[%s3028 + $0xc] sm:$0xf]
      %v3033 = vld [vmem:[%s3028 + $0x10] sm:$0xf]
      %v3034 = vld [vmem:[%s3028 + $0x14] sm:$0xf]
      %v3035 = vld [vmem:[%s3028 + $0x18] sm:$0xf]
      %v3036 = vld [vmem:[%s3028 + $0x1c] sm:$0xf]
      %v3037 = vld [vmem:[%s3028 + $0x20] sm:$0xf]
      %v3038 = vld [vmem:[%s3028 + $0x24] sm:$0xf]
      %v3039 = vld [vmem:[%s3028 + $0x28] sm:$0xf]
      %v3040 = vld [vmem:[%s3028 + $0x2c] sm:$0xf]
      %v3041 = vld [vmem:[%s3028 + $0x30] sm:$0xf]
      %v3042 = vld [vmem:[%s3028 + $0x34] sm:$0xf]
      %v3043 = vld [vmem:[%s3028 + $0x38] sm:$0xf]
      %v3044 = vld [vmem:[%s3028 + $0x3c] sm:$0xf]
      %v3061 = vunpack.c.l.b16 %v3029
      %v3062 = vunpack.c.l.b16 %v3030
      %v3063 = vunpack.c.l.b16 %v3031
      %v3064 = vunpack.c.l.b16 %v3032
      %v3065 = vunpack.c.l.b16 %v3033
      %v3066 = vunpack.c.l.b16 %v3034
      %v3067 = vunpack.c.l.b16 %v3035
      %v3068 = vunpack.c.l.b16 %v3036
      %v3069 = vunpack.c.l.b16 %v3037
      %v3070 = vunpack.c.l.b16 %v3038
      %v3071 = vunpack.c.l.b16 %v3039
      %v3072 = vunpack.c.l.b16 %v3040
      %v3073 = vunpack.c.l.b16 %v3041
      %v3074 = vunpack.c.l.b16 %v3042
      %v3075 = vunpack.c.l.b16 %v3043
      %v3076 = vunpack.c.l.b16 %v3044
      %v3077 = vpack.c.b16 %v3062, %v3061
      %v3078 = vpack.c.b16 %v3064, %v3063
      %v3079 = vpack.c.b16 %v3066, %v3065
      %v3080 = vpack.c.b16 %v3068, %v3067
      %v3081 = vpack.c.b16 %v3070, %v3069
      %v3082 = vpack.c.b16 %v3072, %v3071
      %v3083 = vpack.c.b16 %v3074, %v3073
      %v3084 = vpack.c.b16 %v3076, %v3075
      %3093 = vmatprep.subr.bf16.mxu0 0
      %3094 = vmatpush1.bf16.msra.mxu0 %v3077
      %3095 = vmatprep.subr.bf16.mxu0 0
      %3096 = vmatpush1.bf16.msra.mxu0 %v3078
      %3097 = vmatprep.subr.bf16.mxu0 0
      %3098 = vmatpush1.bf16.msra.mxu0 %v3079
      %3099 = vmatprep.subr.bf16.mxu0 0
      %3100 = vmatpush1.bf16.msra.mxu0 %v3080
      %3101 = vmatprep.subr.bf16.mxu0 0
      %3102 = vmatpush1.bf16.msra.mxu0 %v3081
      %3103 = vmatprep.subr.bf16.mxu0 0
      %3104 = vmatpush1.bf16.msra.mxu0 %v3082
      %3105 = vmatprep.subr.bf16.mxu0 0
      %3106 = vmatpush1.bf16.msra.mxu0 %v3083
      %3107 = vmatprep.subr.bf16.mxu0 0
      %3108 = vmatpush1.bf16.msra.mxu0 %v3084
      %3109 = vmatprep.subr.bf16.mxu0 0
      %3110 = vmatpush1.bf16.msra.mxu0 0
      %3111 = vmatprep.subr.bf16.mxu0 0
      %3112 = vmatpush1.bf16.msra.mxu0 0
      %3113 = vmatprep.subr.bf16.mxu0 0
      %3114 = vmatpush1.bf16.msra.mxu0 0
      %3115 = vmatprep.subr.bf16.mxu0 0
      %3116 = vmatpush1.bf16.msra.mxu0 0
      %3117 = vmatprep.subr.bf16.mxu0 0
      %3118 = vmatpush1.bf16.msra.mxu0 0
      %3119 = vmatprep.subr.bf16.mxu0 0
      %3120 = vmatpush1.bf16.msra.mxu0 0
      %3121 = vmatprep.subr.bf16.mxu0 0
      %3122 = vmatpush1.bf16.msra.mxu0 0
      %3123 = vmatprep.subr.bf16.mxu0 0
      %3124 = vmatpush1.bf16.msra.mxu0 0
      %3125 = vmatprep.mubr.bf16.mxu0 0
      %3126 = vmatmul.mubr.bf16.gmra.mrb[0].mxu0 %v2980
      %v3127 = vpop.f32.mrb[0].mxu0
      %v3128 = vadd.f32 0.0, %v3127
      %v3129 = vpop.f32.mrb[0].mxu0
      %v3130 = vpop.f32.mrb[0].mxu0
      %v3131 = vadd.f32 0.0, %v3130
      %v3132 = vpop.f32.mrb[0].mxu0
      %3133 = vmatprep.mubr.bf16.mxu0 0
      %3134 = vmatmul.mubr.bf16.gmra.mrb[0].mxu0 %v2981
      %v3135 = vpop.f32.mrb[0].mxu0
      %v3136 = vadd.f32 0.0, %v3135
      %v3137 = vpop.f32.mrb[0].mxu0
      %v3138 = vpop.f32.mrb[0].mxu0
      %v3139 = vadd.f32 0.0, %v3138
      %v3140 = vpop.f32.mrb[0].mxu0
      %3141 = vmatprep.mubr.bf16.mxu0 0
      %3142 = vmatmul.mubr.bf16.gmra.mrb[0].mxu0 %v2982
      %v3143 = vpop.f32.mrb[0].mxu0
      %v3144 = vadd.f32 0.0, %v3143
      %v3145 = vpop.f32.mrb[0].mxu0
      %v3146 = vpop.f32.mrb[0].mxu0
      %v3147 = vadd.f32 0.0, %v3146
      %v3148 = vpop.f32.mrb[0].mxu0
      %3149 = vmatprep.mubr.bf16.mxu0 0
      %3150 = vmatmul.mubr.bf16.gmra.mrb[0].mxu0 %v2983
      %v3151 = vpop.f32.mrb[0].mxu0
      %v3152 = vadd.f32 0.0, %v3151
      %v3153 = vpop.f32.mrb[0].mxu0
      %v3154 = vpop.f32.mrb[0].mxu0
      %v3155 = vadd.f32 0.0, %v3154
      %v3156 = vpop.f32.mrb[0].mxu0
      %3157 = vmatprep.mubr.bf16.mxu0 0
      %3158 = vmatmul.mubr.bf16.gmra.mrb[0].mxu0 %v2984
      %v3159 = vpop.f32.mrb[0].mxu0
      %v3160 = vadd.f32 0.0, %v3159
      %v3161 = vpop.f32.mrb[0].mxu0
      %v3162 = vpop.f32.mrb[0].mxu0
      %v3163 = vadd.f32 0.0, %v3162
      %v3164 = vpop.f32.mrb[0].mxu0
      %3165 = vmatprep.mubr.bf16.mxu0 0
      %3166 = vmatmul.mubr.bf16.gmra.mrb[0].mxu0 %v2985
      %v3167 = vpop.f32.mrb[0].mxu0
      %v3168 = vadd.f32 0.0, %v3167
      %v3169 = vpop.f32.mrb[0].mxu0
      %v3170 = vpop.f32.mrb[0].mxu0
      %v3171 = vadd.f32 0.0, %v3170
      %v3172 = vpop.f32.mrb[0].mxu0
      %3173 = vmatprep.mubr.bf16.mxu0 0
      %3174 = vmatmul.mubr.bf16.gmra.mrb[0].mxu0 %v2986
      %v3175 = vpop.f32.mrb[0].mxu0
      %v3176 = vadd.f32 0.0, %v3175
      %v3177 = vpop.f32.mrb[0].mxu0
      %v3178 = vpop.f32.mrb[0].mxu0
      %v3179 = vadd.f32 0.0, %v3178
      %v3180 = vpop.f32.mrb[0].mxu0
      %3181 = vmatprep.mubr.bf16.mxu0 0
      %3182 = vmatmul.mubr.bf16.gmra.mrb[0].mxu0 %v2987
      %v3183 = vpop.f32.mrb[0].mxu0
      %v3184 = vadd.f32 0.0, %v3183
      %v3185 = vpop.f32.mrb[0].mxu0
      %v3186 = vpop.f32.mrb[0].mxu0
      %v3187 = vadd.f32 0.0, %v3186
      %v3188 = vpop.f32.mrb[0].mxu0
      %3189 = vmatprep.mubr.bf16.mxu0 0
      %3190 = vmatmul.mubr.bf16.gmra.mrb[0].mxu0 %v2988
      %v3191 = vpop.f32.mrb[0].mxu0
      %v3192 = vadd.f32 0.0, %v3191
      %v3193 = vpop.f32.mrb[0].mxu0
      %v3194 = vpop.f32.mrb[0].mxu0
      %v3195 = vadd.f32 0.0, %v3194
      %v3196 = vpop.f32.mrb[0].mxu0
      %3197 = vmatprep.mubr.bf16.mxu0 0
      %3198 = vmatmul.mubr.bf16.gmra.mrb[0].mxu0 %v2989
      %v3199 = vpop.f32.mrb[0].mxu0
      %v3200 = vadd.f32 0.0, %v3199
      %v3201 = vpop.f32.mrb[0].mxu0
      %v3202 = vpop.f32.mrb[0].mxu0
      %v3203 = vadd.f32 0.0, %v3202
      %v3204 = vpop.f32.mrb[0].mxu0
      %3205 = vmatprep.mubr.bf16.mxu0 0
      %3206 = vmatmul.mubr.bf16.gmra.mrb[0].mxu0 %v2990
      %v3207 = vpop.f32.mrb[0].mxu0
      %v3208 = vadd.f32 0.0, %v3207
      %v3209 = vpop.f32.mrb[0].mxu0
      %v3210 = vpop.f32.mrb[0].mxu0
      %v3211 = vadd.f32 0.0, %v3210
      %v3212 = vpop.f32.mrb[0].mxu0
      %3213 = vmatprep.mubr.bf16.mxu0 0
      %3214 = vmatmul.mubr.bf16.gmra.mrb[0].mxu0 %v2991
      %v3215 = vpop.f32.mrb[0].mxu0
      %v3216 = vadd.f32 0.0, %v3215
      %v3217 = vpop.f32.mrb[0].mxu0
      %v3218 = vpop.f32.mrb[0].mxu0
      %v3219 = vadd.f32 0.0, %v3218
      %v3220 = vpop.f32.mrb[0].mxu0
      %3221 = vmatprep.mubr.bf16.mxu0 0
      %3222 = vmatmul.mubr.bf16.gmra.mrb[0].mxu0 %v2992
      %v3223 = vpop.f32.mrb[0].mxu0
      %v3224 = vadd.f32 0.0, %v3223
      %v3225 = vpop.f32.mrb[0].mxu0
      %v3226 = vpop.f32.mrb[0].mxu0
      %v3227 = vadd.f32 0.0, %v3226
      %v3228 = vpop.f32.mrb[0].mxu0
      %3229 = vmatprep.mubr.bf16.mxu0 0
      %3230 = vmatmul.mubr.bf16.gmra.mrb[0].mxu0 %v2993
      %v3231 = vpop.f32.mrb[0].mxu0
      %v3232 = vadd.f32 0.0, %v3231
      %v3233 = vpop.f32.mrb[0].mxu0
      %v3234 = vpop.f32.mrb[0].mxu0
      %v3235 = vadd.f32 0.0, %v3234
      %v3236 = vpop.f32.mrb[0].mxu0
      %3237 = vmatprep.mubr.bf16.mxu0 0
      %3238 = vmatmul.mubr.bf16.gmra.mrb[0].mxu0 %v2994
      %v3239 = vpop.f32.mrb[0].mxu0
      %v3240 = vadd.f32 0.0, %v3239
      %v3241 = vpop.f32.mrb[0].mxu0
      %v3242 = vpop.f32.mrb[0].mxu0
      %v3243 = vadd.f32 0.0, %v3242
      %v3244 = vpop.f32.mrb[0].mxu0
      %3245 = vmatprep.mubr.bf16.mxu0 0
      %3246 = vmatmul.mubr.bf16.gmra.mrb[0].mxu0 %v2995
      %v3247 = vpop.f32.mrb[0].mxu0
      %v3248 = vadd.f32 0.0, %v3247
      %v3249 = vpop.f32.mrb[0].mxu0
      %v3250 = vpop.f32.mrb[0].mxu0
      %v3251 = vadd.f32 0.0, %v3250
      %v3252 = vpop.f32.mrb[0].mxu0
      %3253 = vdwg.mxu0
      %v3254 = vadd.f32 %v2996, %v3128
      %v3255 = vadd.f32 %v2997, %v3131
      %v3256 = vadd.f32 %v2998, %v3136
      %v3257 = vadd.f32 %v2999, %v3139
      %v3258 = vadd.f32 %v3000, %v3144
      %v3259 = vadd.f32 %v3001, %v3147
      %v3260 = vadd.f32 %v3002, %v3152
      %v3261 = vadd.f32 %v3003, %v3155
      %v3262 = vadd.f32 %v3004, %v3160
      %v3263 = vadd.f32 %v3005, %v3163
      %v3264 = vadd.f32 %v3006, %v3168
      %v3265 = vadd.f32 %v3007, %v3171
      %v3266 = vadd.f32 %v3008, %v3176
      %v3267 = vadd.f32 %v3009, %v3179
      %v3268 = vadd.f32 %v3010, %v3184
      %v3269 = vadd.f32 %v3011, %v3187
      %v3270 = vadd.f32 %v3012, %v3192
      %v3271 = vadd.f32 %v3013, %v3195
      %v3272 = vadd.f32 %v3014, %v3200
      %v3273 = vadd.f32 %v3015, %v3203
      %v3274 = vadd.f32 %v3016, %v3208
      %v3275 = vadd.f32 %v3017, %v3211
      %v3276 = vadd.f32 %v3018, %v3216
      %v3277 = vadd.f32 %v3019, %v3219
      %v3278 = vadd.f32 %v3020, %v3224
      %v3279 = vadd.f32 %v3021, %v3227
      %v3280 = vadd.f32 %v3022, %v3232
      %v3281 = vadd.f32 %v3023, %v3235
      %v3282 = vadd.f32 %v3024, %v3240
      %v3283 = vadd.f32 %v3025, %v3243
      %v3284 = vadd.f32 %v3026, %v3248
      %v3285 = vadd.f32 %v3027, %v3251
      %3286 = vst [vmem:[#allocation3] sm:$0xff] %v3254
      %3287 = vst [vmem:[#allocation3 + $0x8] sm:$0xff] %v3255
      %3288 = vst [vmem:[#allocation3 + $0x10] sm:$0xff] %v3256
      %3289 = vst [vmem:[#allocation3 + $0x18] sm:$0xff] %v3257
      %3290 = vst [vmem:[#allocation3 + $0x20] sm:$0xff] %v3258
      %3291 = vst [vmem:[#allocation3 + $0x28] sm:$0xff] %v3259
      %3292 = vst [vmem:[#allocation3 + $0x30] sm:$0xff] %v3260
      %3293 = vst [vmem:[#allocation3 + $0x38] sm:$0xff] %v3261
      %3294 = vst [vmem:[#allocation3 + $0x40] sm:$0xff] %v3262
      %3295 = vst [vmem:[#allocation3 + $0x48] sm:$0xff] %v3263
      %3296 = vst [vmem:[#allocation3 + $0x50] sm:$0xff] %v3264
      %3297 = vst [vmem:[#allocation3 + $0x58] sm:$0xff] %v3265
      %3298 = vst [vmem:[#allocation3 + $0x60] sm:$0xff] %v3266
      %3299 = vst [vmem:[#allocation3 + $0x68] sm:$0xff] %v3267
      %3300 = vst [vmem:[#allocation3 + $0x70] sm:$0xff] %v3268
      %3301 = vst [vmem:[#allocation3 + $0x78] sm:$0xff] %v3269
      %3302 = vst [vmem:[#allocation3 + $0x80] sm:$0xff] %v3270
      %3303 = vst [vmem:[#allocation3 + $0x88] sm:$0xff] %v3271
      %3304 = vst [vmem:[#allocation3 + $0x90] sm:$0xff] %v3272
      %3305 = vst [vmem:[#allocation3 + $0x98] sm:$0xff] %v3273
      %3306 = vst [vmem:[#allocation3 + $0xa0] sm:$0xff] %v3274
      %3307 = vst [vmem:[#allocation3 + $0xa8] sm:$0xff] %v3275
      %3308 = vst [vmem:[#allocation3 + $0xb0] sm:$0xff] %v3276
      %3309 = vst [vmem:[#allocation3 + $0xb8] sm:$0xff] %v3277
      %3310 = vst [vmem:[#allocation3 + $0xc0] sm:$0xff] %v3278
      %3311 = vst [vmem:[#allocation3 + $0xc8] sm:$0xff] %v3279
      %3312 = vst [vmem:[#allocation3 + $0xd0] sm:$0xff] %v3280
      %3313 = vst [vmem:[#allocation3 + $0xd8] sm:$0xff] %v3281
      %3314 = vst [vmem:[#allocation3 + $0xe0] sm:$0xff] %v3282
      %3315 = vst [vmem:[#allocation3 + $0xe8] sm:$0xff] %v3283
      %3316 = vst [vmem:[#allocation3 + $0xf0] sm:$0xff] %v3284
      %3317 = vst [vmem:[#allocation3 + $0xf8] sm:$0xff] %v3285
      %v3318 = vld [vmem:[%s2577 + $0x2] sm:$0xff]
      %v3319 = vld [vmem:[%s2577 + $0xa] sm:$0xff]
      %v3320 = vld [vmem:[%s2577 + $0x1a] sm:$0xff]
      %v3321 = vld [vmem:[%s2577 + $0x22] sm:$0xff]
      %v3322 = vld [vmem:[%s2577 + $0x32] sm:$0xff]
      %v3323 = vld [vmem:[%s2577 + $0x3a] sm:$0xff]
      %v3324 = vld [vmem:[%s2577 + $0x4a] sm:$0xff]
      %v3325 = vld [vmem:[%s2577 + $0x52] sm:$0xff]
      %v3326 = vld [vmem:[%s2577 + $0x62] sm:$0xff]
      %v3327 = vld [vmem:[%s2577 + $0x6a] sm:$0xff]
      %v3328 = vld [vmem:[%s2577 + $0x7a] sm:$0xff]
      %v3329 = vld [vmem:[%s2577 + $0x82] sm:$0xff]
      %v3330 = vld [vmem:[%s2577 + $0x92] sm:$0xff]
      %v3331 = vld [vmem:[%s2577 + $0x9a] sm:$0xff]
      %v3332 = vld [vmem:[%s2577 + $0xaa] sm:$0xff]
      %v3333 = vld [vmem:[%s2577 + $0xb2] sm:$0xff]
      %v3334 = vld [vmem:[%s2577 + $0xc2] sm:$0xff]
      %v3335 = vld [vmem:[%s2577 + $0xca] sm:$0xff]
      %v3336 = vld [vmem:[%s2577 + $0xda] sm:$0xff]
      %v3337 = vld [vmem:[%s2577 + $0xe2] sm:$0xff]
      %v3338 = vld [vmem:[%s2577 + $0xf2] sm:$0xff]
      %v3339 = vld [vmem:[%s2577 + $0xfa] sm:$0xff]
      %v3340 = vld [vmem:[%s2577 + $0x10a] sm:$0xff]
      %v3341 = vld [vmem:[%s2577 + $0x112] sm:$0xff]
      %v3342 = vld [vmem:[%s2577 + $0x122] sm:$0xff]
      %v3343 = vld [vmem:[%s2577 + $0x12a] sm:$0xff]
      %v3344 = vld [vmem:[%s2577 + $0x13a] sm:$0xff]
      %v3345 = vld [vmem:[%s2577 + $0x142] sm:$0xff]
      %v3346 = vld [vmem:[%s2577 + $0x152] sm:$0xff]
      %v3347 = vld [vmem:[%s2577 + $0x15a] sm:$0xff]
      %v3348 = vld [vmem:[%s2577 + $0x16a] sm:$0xff]
      %v3349 = vld [vmem:[%s2577 + $0x172] sm:$0xff]
      %v3350 = vpack.c.bf16 %v3319, %v3318
      %v3351 = vpack.c.bf16 %v3321, %v3320
      %v3352 = vpack.c.bf16 %v3323, %v3322
      %v3353 = vpack.c.bf16 %v3325, %v3324
      %v3354 = vpack.c.bf16 %v3327, %v3326
      %v3355 = vpack.c.bf16 %v3329, %v3328
      %v3356 = vpack.c.bf16 %v3331, %v3330
      %v3357 = vpack.c.bf16 %v3333, %v3332
      %v3358 = vpack.c.bf16 %v3335, %v3334
      %v3359 = vpack.c.bf16 %v3337, %v3336
      %v3360 = vpack.c.bf16 %v3339, %v3338
      %v3361 = vpack.c.bf16 %v3341, %v3340
      %v3362 = vpack.c.bf16 %v3343, %v3342
      %v3363 = vpack.c.bf16 %v3345, %v3344
      %v3364 = vpack.c.bf16 %v3347, %v3346
      %v3365 = vpack.c.bf16 %v3349, %v3348
      %v3366 = vld [vmem:[#allocation3] sm:$0xff]
      %v3367 = vld [vmem:[#allocation3 + $0x8] sm:$0xff]
      %v3368 = vld [vmem:[#allocation3 + $0x10] sm:$0xff]
      %v3369 = vld [vmem:[#allocation3 + $0x18] sm:$0xff]
      %v3370 = vld [vmem:[#allocation3 + $0x20] sm:$0xff]
      %v3371 = vld [vmem:[#allocation3 + $0x28] sm:$0xff]
      %v3372 = vld [vmem:[#allocation3 + $0x30] sm:$0xff]
      %v3373 = vld [vmem:[#allocation3 + $0x38] sm:$0xff]
      %v3374 = vld [vmem:[#allocation3 + $0x40] sm:$0xff]
      %v3375 = vld [vmem:[#allocation3 + $0x48] sm:$0xff]
      %v3376 = vld [vmem:[#allocation3 + $0x50] sm:$0xff]
      %v3377 = vld [vmem:[#allocation3 + $0x58] sm:$0xff]
      %v3378 = vld [vmem:[#allocation3 + $0x60] sm:$0xff]
      %v3379 = vld [vmem:[#allocation3 + $0x68] sm:$0xff]
      %v3380 = vld [vmem:[#allocation3 + $0x70] sm:$0xff]
      %v3381 = vld [vmem:[#allocation3 + $0x78] sm:$0xff]
      %v3382 = vld [vmem:[#allocation3 + $0x80] sm:$0xff]
      %v3383 = vld [vmem:[#allocation3 + $0x88] sm:$0xff]
      %v3384 = vld [vmem:[#allocation3 + $0x90] sm:$0xff]
      %v3385 = vld [vmem:[#allocation3 + $0x98] sm:$0xff]
      %v3386 = vld [vmem:[#allocation3 + $0xa0] sm:$0xff]
      %v3387 = vld [vmem:[#allocation3 + $0xa8] sm:$0xff]
      %v3388 = vld [vmem:[#allocation3 + $0xb0] sm:$0xff]
      %v3389 = vld [vmem:[#allocation3 + $0xb8] sm:$0xff]
      %v3390 = vld [vmem:[#allocation3 + $0xc0] sm:$0xff]
      %v3391 = vld [vmem:[#allocation3 + $0xc8] sm:$0xff]
      %v3392 = vld [vmem:[#allocation3 + $0xd0] sm:$0xff]
      %v3393 = vld [vmem:[#allocation3 + $0xd8] sm:$0xff]
      %v3394 = vld [vmem:[#allocation3 + $0xe0] sm:$0xff]
      %v3395 = vld [vmem:[#allocation3 + $0xe8] sm:$0xff]
      %v3396 = vld [vmem:[#allocation3 + $0xf0] sm:$0xff]
      %v3397 = vld [vmem:[#allocation3 + $0xf8] sm:$0xff]
      %s3398 = scalar_lea.vmem %s1, 512
      %v3399 = vld [vmem:[%s3398] sm:$0xf]
      %v3400 = vld [vmem:[%s3398 + $0x4] sm:$0xf]
      %v3401 = vld [vmem:[%s3398 + $0x8] sm:$0xf]
      %v3402 = vld [vmem:[%s3398 + $0xc] sm:$0xf]
      %v3403 = vld [vmem:[%s3398 + $0x10] sm:$0xf]
      %v3404 = vld [vmem:[%s3398 + $0x14] sm:$0xf]
      %v3405 = vld [vmem:[%s3398 + $0x18] sm:$0xf]
      %v3406 = vld [vmem:[%s3398 + $0x1c] sm:$0xf]
      %v3407 = vld [vmem:[%s3398 + $0x20] sm:$0xf]
      %v3408 = vld [vmem:[%s3398 + $0x24] sm:$0xf]
      %v3409 = vld [vmem:[%s3398 + $0x28] sm:$0xf]
      %v3410 = vld [vmem:[%s3398 + $0x2c] sm:$0xf]
      %v3411 = vld [vmem:[%s3398 + $0x30] sm:$0xf]
      %v3412 = vld [vmem:[%s3398 + $0x34] sm:$0xf]
      %v3413 = vld [vmem:[%s3398 + $0x38] sm:$0xf]
      %v3414 = vld [vmem:[%s3398 + $0x3c] sm:$0xf]
      %v3431 = vunpack.c.l.b16 %v3399
      %v3432 = vunpack.c.l.b16 %v3400
      %v3433 = vunpack.c.l.b16 %v3401
      %v3434 = vunpack.c.l.b16 %v3402
      %v3435 = vunpack.c.l.b16 %v3403
      %v3436 = vunpack.c.l.b16 %v3404
      %v3437 = vunpack.c.l.b16 %v3405
      %v3438 = vunpack.c.l.b16 %v3406
      %v3439 = vunpack.c.l.b16 %v3407
      %v3440 = vunpack.c.l.b16 %v3408
      %v3441 = vunpack.c.l.b16 %v3409
      %v3442 = vunpack.c.l.b16 %v3410
      %v3443 = vunpack.c.l.b16 %v3411
      %v3444 = vunpack.c.l.b16 %v3412
      %v3445 = vunpack.c.l.b16 %v3413
      %v3446 = vunpack.c.l.b16 %v3414
      %v3447 = vpack.c.b16 %v3432, %v3431
      %v3448 = vpack.c.b16 %v3434, %v3433
      %v3449 = vpack.c.b16 %v3436, %v3435
      %v3450 = vpack.c.b16 %v3438, %v3437
      %v3451 = vpack.c.b16 %v3440, %v3439
      %v3452 = vpack.c.b16 %v3442, %v3441
      %v3453 = vpack.c.b16 %v3444, %v3443
      %v3454 = vpack.c.b16 %v3446, %v3445
      %3463 = vmatprep.subr.bf16.mxu0 0
      %3464 = vmatpush1.bf16.msra.mxu0 %v3447
      %3465 = vmatprep.subr.bf16.mxu0 0
      %3466 = vmatpush1.bf16.msra.mxu0 %v3448
      %3467 = vmatprep.subr.bf16.mxu0 0
      %3468 = vmatpush1.bf16.msra.mxu0 %v3449
      %3469 = vmatprep.subr.bf16.mxu0 0
      %3470 = vmatpush1.bf16.msra.mxu0 %v3450
      %3471 = vmatprep.subr.bf16.mxu0 0
      %3472 = vmatpush1.bf16.msra.mxu0 %v3451
      %3473 = vmatprep.subr.bf16.mxu0 0
      %3474 = vmatpush1.bf16.msra.mxu0 %v3452
      %3475 = vmatprep.subr.bf16.mxu0 0
      %3476 = vmatpush1.bf16.msra.mxu0 %v3453
      %3477 = vmatprep.subr.bf16.mxu0 0
      %3478 = vmatpush1.bf16.msra.mxu0 %v3454
      %3479 = vmatprep.subr.bf16.mxu0 0
      %3480 = vmatpush1.bf16.msra.mxu0 0
      %3481 = vmatprep.subr.bf16.mxu0 0
      %3482 = vmatpush1.bf16.msra.mxu0 0
      %3483 = vmatprep.subr.bf16.mxu0 0
      %3484 = vmatpush1.bf16.msra.mxu0 0
      %3485 = vmatprep.subr.bf16.mxu0 0
      %3486 = vmatpush1.bf16.msra.mxu0 0
      %3487 = vmatprep.subr.bf16.mxu0 0
      %3488 = vmatpush1.bf16.msra.mxu0 0
      %3489 = vmatprep.subr.bf16.mxu0 0
      %3490 = vmatpush1.bf16.msra.mxu0 0
      %3491 = vmatprep.subr.bf16.mxu0 0
      %3492 = vmatpush1.bf16.msra.mxu0 0
      %3493 = vmatprep.subr.bf16.mxu0 0
      %3494 = vmatpush1.bf16.msra.mxu0 0
      %3495 = vmatprep.mubr.bf16.mxu0 0
      %3496 = vmatmul.mubr.bf16.gmra.mrb[0].mxu0 %v3350
      %v3497 = vpop.f32.mrb[0].mxu0
      %v3498 = vadd.f32 0.0, %v3497
      %v3499 = vpop.f32.mrb[0].mxu0
      %v3500 = vpop.f32.mrb[0].mxu0
      %v3501 = vadd.f32 0.0, %v3500
      %v3502 = vpop.f32.mrb[0].mxu0
      %3503 = vmatprep.mubr.bf16.mxu0 0
      %3504 = vmatmul.mubr.bf16.gmra.mrb[0].mxu0 %v3351
      %v3505 = vpop.f32.mrb[0].mxu0
      %v3506 = vadd.f32 0.0, %v3505
      %v3507 = vpop.f32.mrb[0].mxu0
      %v3508 = vpop.f32.mrb[0].mxu0
      %v3509 = vadd.f32 0.0, %v3508
      %v3510 = vpop.f32.mrb[0].mxu0
      %3511 = vmatprep.mubr.bf16.mxu0 0
      %3512 = vmatmul.mubr.bf16.gmra.mrb[0].mxu0 %v3352
      %v3513 = vpop.f32.mrb[0].mxu0
      %v3514 = vadd.f32 0.0, %v3513
      %v3515 = vpop.f32.mrb[0].mxu0
      %v3516 = vpop.f32.mrb[0].mxu0
      %v3517 = vadd.f32 0.0, %v3516
      %v3518 = vpop.f32.mrb[0].mxu0
      %3519 = vmatprep.mubr.bf16.mxu0 0
      %3520 = vmatmul.mubr.bf16.gmra.mrb[0].mxu0 %v3353
      %v3521 = vpop.f32.mrb[0].mxu0
      %v3522 = vadd.f32 0.0, %v3521
      %v3523 = vpop.f32.mrb[0].mxu0
      %v3524 = vpop.f32.mrb[0].mxu0
      %v3525 = vadd.f32 0.0, %v3524
      %v3526 = vpop.f32.mrb[0].mxu0
      %3527 = vmatprep.mubr.bf16.mxu0 0
      %3528 = vmatmul.mubr.bf16.gmra.mrb[0].mxu0 %v3354
      %v3529 = vpop.f32.mrb[0].mxu0
      %v3530 = vadd.f32 0.0, %v3529
      %v3531 = vpop.f32.mrb[0].mxu0
      %v3532 = vpop.f32.mrb[0].mxu0
      %v3533 = vadd.f32 0.0, %v3532
      %v3534 = vpop.f32.mrb[0].mxu0
      %3535 = vmatprep.mubr.bf16.mxu0 0
      %3536 = vmatmul.mubr.bf16.gmra.mrb[0].mxu0 %v3355
      %v3537 = vpop.f32.mrb[0].mxu0
      %v3538 = vadd.f32 0.0, %v3537
      %v3539 = vpop.f32.mrb[0].mxu0
      %v3540 = vpop.f32.mrb[0].mxu0
      %v3541 = vadd.f32 0.0, %v3540
      %v3542 = vpop.f32.mrb[0].mxu0
      %3543 = vmatprep.mubr.bf16.mxu0 0
      %3544 = vmatmul.mubr.bf16.gmra.mrb[0].mxu0 %v3356
      %v3545 = vpop.f32.mrb[0].mxu0
      %v3546 = vadd.f32 0.0, %v3545
      %v3547 = vpop.f32.mrb[0].mxu0
      %v3548 = vpop.f32.mrb[0].mxu0
      %v3549 = vadd.f32 0.0, %v3548
      %v3550 = vpop.f32.mrb[0].mxu0
      %3551 = vmatprep.mubr.bf16.mxu0 0
      %3552 = vmatmul.mubr.bf16.gmra.mrb[0].mxu0 %v3357
      %v3553 = vpop.f32.mrb[0].mxu0
      %v3554 = vadd.f32 0.0, %v3553
      %v3555 = vpop.f32.mrb[0].mxu0
      %v3556 = vpop.f32.mrb[0].mxu0
      %v3557 = vadd.f32 0.0, %v3556
      %v3558 = vpop.f32.mrb[0].mxu0
      %3559 = vmatprep.mubr.bf16.mxu0 0
      %3560 = vmatmul.mubr.bf16.gmra.mrb[0].mxu0 %v3358
      %v3561 = vpop.f32.mrb[0].mxu0
      %v3562 = vadd.f32 0.0, %v3561
      %v3563 = vpop.f32.mrb[0].mxu0
      %v3564 = vpop.f32.mrb[0].mxu0
      %v3565 = vadd.f32 0.0, %v3564
      %v3566 = vpop.f32.mrb[0].mxu0
      %3567 = vmatprep.mubr.bf16.mxu0 0
      %3568 = vmatmul.mubr.bf16.gmra.mrb[0].mxu0 %v3359
      %v3569 = vpop.f32.mrb[0].mxu0
      %v3570 = vadd.f32 0.0, %v3569
      %v3571 = vpop.f32.mrb[0].mxu0
      %v3572 = vpop.f32.mrb[0].mxu0
      %v3573 = vadd.f32 0.0, %v3572
      %v3574 = vpop.f32.mrb[0].mxu0
      %3575 = vmatprep.mubr.bf16.mxu0 0
      %3576 = vmatmul.mubr.bf16.gmra.mrb[0].mxu0 %v3360
      %v3577 = vpop.f32.mrb[0].mxu0
      %v3578 = vadd.f32 0.0, %v3577
      %v3579 = vpop.f32.mrb[0].mxu0
      %v3580 = vpop.f32.mrb[0].mxu0
      %v3581 = vadd.f32 0.0, %v3580
      %v3582 = vpop.f32.mrb[0].mxu0
      %3583 = vmatprep.mubr.bf16.mxu0 0
      %3584 = vmatmul.mubr.bf16.gmra.mrb[0].mxu0 %v3361
      %v3585 = vpop.f32.mrb[0].mxu0
      %v3586 = vadd.f32 0.0, %v3585
      %v3587 = vpop.f32.mrb[0].mxu0
      %v3588 = vpop.f32.mrb[0].mxu0
      %v3589 = vadd.f32 0.0, %v3588
      %v3590 = vpop.f32.mrb[0].mxu0
      %3591 = vmatprep.mubr.bf16.mxu0 0
      %3592 = vmatmul.mubr.bf16.gmra.mrb[0].mxu0 %v3362
      %v3593 = vpop.f32.mrb[0].mxu0
      %v3594 = vadd.f32 0.0, %v3593
      %v3595 = vpop.f32.mrb[0].mxu0
      %v3596 = vpop.f32.mrb[0].mxu0
      %v3597 = vadd.f32 0.0, %v3596
      %v3598 = vpop.f32.mrb[0].mxu0
      %3599 = vmatprep.mubr.bf16.mxu0 0
      %3600 = vmatmul.mubr.bf16.gmra.mrb[0].mxu0 %v3363
      %v3601 = vpop.f32.mrb[0].mxu0
      %v3602 = vadd.f32 0.0, %v3601
      %v3603 = vpop.f32.mrb[0].mxu0
      %v3604 = vpop.f32.mrb[0].mxu0
      %v3605 = vadd.f32 0.0, %v3604
      %v3606 = vpop.f32.mrb[0].mxu0
      %3607 = vmatprep.mubr.bf16.mxu0 0
      %3608 = vmatmul.mubr.bf16.gmra.mrb[0].mxu0 %v3364
      %v3609 = vpop.f32.mrb[0].mxu0
      %v3610 = vadd.f32 0.0, %v3609
      %v3611 = vpop.f32.mrb[0].mxu0
      %v3612 = vpop.f32.mrb[0].mxu0
      %v3613 = vadd.f32 0.0, %v3612
      %v3614 = vpop.f32.mrb[0].mxu0
      %3615 = vmatprep.mubr.bf16.mxu0 0
      %3616 = vmatmul.mubr.bf16.gmra.mrb[0].mxu0 %v3365
      %v3617 = vpop.f32.mrb[0].mxu0
      %v3618 = vadd.f32 0.0, %v3617
      %v3619 = vpop.f32.mrb[0].mxu0
      %v3620 = vpop.f32.mrb[0].mxu0
      %v3621 = vadd.f32 0.0, %v3620
      %v3622 = vpop.f32.mrb[0].mxu0
      %3623 = vdwg.mxu0
      %v3624 = vadd.f32 %v3366, %v3498
      %v3625 = vadd.f32 %v3367, %v3501
      %v3626 = vadd.f32 %v3368, %v3506
      %v3627 = vadd.f32 %v3369, %v3509
      %v3628 = vadd.f32 %v3370, %v3514
      %v3629 = vadd.f32 %v3371, %v3517
      %v3630 = vadd.f32 %v3372, %v3522
      %v3631 = vadd.f32 %v3373, %v3525
      %v3632 = vadd.f32 %v3374, %v3530
      %v3633 = vadd.f32 %v3375, %v3533
      %v3634 = vadd.f32 %v3376, %v3538
      %v3635 = vadd.f32 %v3377, %v3541
      %v3636 = vadd.f32 %v3378, %v3546
      %v3637 = vadd.f32 %v3379, %v3549
      %v3638 = vadd.f32 %v3380, %v3554
      %v3639 = vadd.f32 %v3381, %v3557
      %v3640 = vadd.f32 %v3382, %v3562
      %v3641 = vadd.f32 %v3383, %v3565
      %v3642 = vadd.f32 %v3384, %v3570
      %v3643 = vadd.f32 %v3385, %v3573
      %v3644 = vadd.f32 %v3386, %v3578
      %v3645 = vadd.f32 %v3387, %v3581
      %v3646 = vadd.f32 %v3388, %v3586
      %v3647 = vadd.f32 %v3389, %v3589
      %v3648 = vadd.f32 %v3390, %v3594
      %v3649 = vadd.f32 %v3391, %v3597
      %v3650 = vadd.f32 %v3392, %v3602
      %v3651 = vadd.f32 %v3393, %v3605
      %v3652 = vadd.f32 %v3394, %v3610
      %v3653 = vadd.f32 %v3395, %v3613
      %v3654 = vadd.f32 %v3396, %v3618
      %v3655 = vadd.f32 %v3397, %v3621
      %3656 = vst [vmem:[#allocation3] sm:$0xff] %v3624
      %3657 = vst [vmem:[#allocation3 + $0x8] sm:$0xff] %v3625
      %3658 = vst [vmem:[#allocation3 + $0x10] sm:$0xff] %v3626
      %3659 = vst [vmem:[#allocation3 + $0x18] sm:$0xff] %v3627
      %3660 = vst [vmem:[#allocation3 + $0x20] sm:$0xff] %v3628
      %3661 = vst [vmem:[#allocation3 + $0x28] sm:$0xff] %v3629
      %3662 = vst [vmem:[#allocation3 + $0x30] sm:$0xff] %v3630
      %3663 = vst [vmem:[#allocation3 + $0x38] sm:$0xff] %v3631
      %3664 = vst [vmem:[#allocation3 + $0x40] sm:$0xff] %v3632
      %3665 = vst [vmem:[#allocation3 + $0x48] sm:$0xff] %v3633
      %3666 = vst [vmem:[#allocation3 + $0x50] sm:$0xff] %v3634
      %3667 = vst [vmem:[#allocation3 + $0x58] sm:$0xff] %v3635
      %3668 = vst [vmem:[#allocation3 + $0x60] sm:$0xff] %v3636
      %3669 = vst [vmem:[#allocation3 + $0x68] sm:$0xff] %v3637
      %3670 = vst [vmem:[#allocation3 + $0x70] sm:$0xff] %v3638
      %3671 = vst [vmem:[#allocation3 + $0x78] sm:$0xff] %v3639
      %3672 = vst [vmem:[#allocation3 + $0x80] sm:$0xff] %v3640
      %3673 = vst [vmem:[#allocation3 + $0x88] sm:$0xff] %v3641
      %3674 = vst [vmem:[#allocation3 + $0x90] sm:$0xff] %v3642
      %3675 = vst [vmem:[#allocation3 + $0x98] sm:$0xff] %v3643
      %3676 = vst [vmem:[#allocation3 + $0xa0] sm:$0xff] %v3644
      %3677 = vst [vmem:[#allocation3 + $0xa8] sm:$0xff] %v3645
      %3678 = vst [vmem:[#allocation3 + $0xb0] sm:$0xff] %v3646
      %3679 = vst [vmem:[#allocation3 + $0xb8] sm:$0xff] %v3647
      %3680 = vst [vmem:[#allocation3 + $0xc0] sm:$0xff] %v3648
      %3681 = vst [vmem:[#allocation3 + $0xc8] sm:$0xff] %v3649
      %3682 = vst [vmem:[#allocation3 + $0xd0] sm:$0xff] %v3650
      %3683 = vst [vmem:[#allocation3 + $0xd8] sm:$0xff] %v3651
      %3684 = vst [vmem:[#allocation3 + $0xe0] sm:$0xff] %v3652
      %3685 = vst [vmem:[#allocation3 + $0xe8] sm:$0xff] %v3653
      %3686 = vst [vmem:[#allocation3 + $0xf0] sm:$0xff] %v3654
      %3687 = vst [vmem:[#allocation3 + $0xf8] sm:$0xff] %v3655
      %v3688 = vld [vmem:[#allocation3] sm:$0xff]
      %v3689 = vld [vmem:[#allocation3 + $0x8] sm:$0xff]
      %v3690 = vld [vmem:[#allocation3 + $0x10] sm:$0xff]
      %v3691 = vld [vmem:[#allocation3 + $0x18] sm:$0xff]
      %v3692 = vld [vmem:[#allocation3 + $0x20] sm:$0xff]
      %v3693 = vld [vmem:[#allocation3 + $0x28] sm:$0xff]
      %v3694 = vld [vmem:[#allocation3 + $0x30] sm:$0xff]
      %v3695 = vld [vmem:[#allocation3 + $0x38] sm:$0xff]
      %v3696 = vld [vmem:[#allocation3 + $0x40] sm:$0xff]
      %v3697 = vld [vmem:[#allocation3 + $0x48] sm:$0xff]
      %v3698 = vld [vmem:[#allocation3 + $0x50] sm:$0xff]
      %v3699 = vld [vmem:[#allocation3 + $0x58] sm:$0xff]
      %v3700 = vld [vmem:[#allocation3 + $0x60] sm:$0xff]
      %v3701 = vld [vmem:[#allocation3 + $0x68] sm:$0xff]
      %v3702 = vld [vmem:[#allocation3 + $0x70] sm:$0xff]
      %v3703 = vld [vmem:[#allocation3 + $0x78] sm:$0xff]
      %v3704 = vld [vmem:[#allocation3 + $0x80] sm:$0xff]
      %v3705 = vld [vmem:[#allocation3 + $0x88] sm:$0xff]
      %v3706 = vld [vmem:[#allocation3 + $0x90] sm:$0xff]
      %v3707 = vld [vmem:[#allocation3 + $0x98] sm:$0xff]
      %v3708 = vld [vmem:[#allocation3 + $0xa0] sm:$0xff]
      %v3709 = vld [vmem:[#allocation3 + $0xa8] sm:$0xff]
      %v3710 = vld [vmem:[#allocation3 + $0xb0] sm:$0xff]
      %v3711 = vld [vmem:[#allocation3 + $0xb8] sm:$0xff]
      %v3712 = vld [vmem:[#allocation3 + $0xc0] sm:$0xff]
      %v3713 = vld [vmem:[#allocation3 + $0xc8] sm:$0xff]
      %v3714 = vld [vmem:[#allocation3 + $0xd0] sm:$0xff]
      %v3715 = vld [vmem:[#allocation3 + $0xd8] sm:$0xff]
      %v3716 = vld [vmem:[#allocation3 + $0xe0] sm:$0xff]
      %v3717 = vld [vmem:[#allocation3 + $0xe8] sm:$0xff]
      %v3718 = vld [vmem:[#allocation3 + $0xf0] sm:$0xff]
      %v3719 = vld [vmem:[#allocation3 + $0xf8] sm:$0xff]
      %v3720 = vld [vmem:[#allocation4] sm:$0x1]
      %v3721 = vadd.f32 %v3688, %v3689
      %v3722 = vadd.f32 %v3721, %v3690
      %v3723 = vadd.f32 %v3722, %v3691
      %v3724 = vadd.f32 %v3723, %v3692
      %v3725 = vadd.f32 %v3724, %v3693
      %v3726 = vadd.f32 %v3725, %v3694
      %v3727 = vadd.f32 %v3726, %v3695
      %v3728 = vadd.f32 %v3727, %v3696
      %v3729 = vadd.f32 %v3728, %v3697
      %v3730 = vadd.f32 %v3729, %v3698
      %v3731 = vadd.f32 %v3730, %v3699
      %v3732 = vadd.f32 %v3731, %v3700
      %v3733 = vadd.f32 %v3732, %v3701
      %v3734 = vadd.f32 %v3733, %v3702
      %v3735 = vadd.f32 %v3734, %v3703
      %v3736 = vadd.f32 %v3735, %v3704
      %v3737 = vadd.f32 %v3736, %v3705
      %v3738 = vadd.f32 %v3737, %v3706
      %v3739 = vadd.f32 %v3738, %v3707
      %v3740 = vadd.f32 %v3739, %v3708
      %v3741 = vadd.f32 %v3740, %v3709
      %v3742 = vadd.f32 %v3741, %v3710
      %v3743 = vadd.f32 %v3742, %v3711
      %v3744 = vadd.f32 %v3743, %v3712
      %v3745 = vadd.f32 %v3744, %v3713
      %v3746 = vadd.f32 %v3745, %v3714
      %v3747 = vadd.f32 %v3746, %v3715
      %v3748 = vadd.f32 %v3747, %v3716
      %v3749 = vadd.f32 %v3748, %v3717
      %v3750 = vadd.f32 %v3749, %v3718
      %v3751 = vadd.f32 %v3750, %v3719
      %v3752 = vrot.slane %v3751, 4
      %v3753 = vadd.f32 %v3751, %v3752
      %v3754 = vrot.slane %v3753, 2
      %v3755 = vadd.f32 %v3753, %v3754
      %v3756 = vrot.slane %v3755, 1
      %v3757 = vadd.f32 %v3755, %v3756
      %v3758 = vadd.f32 %v3720, %v3757
      %3759 = vst [vmem:[#allocation4] sm:$0x1] %v3758
      %v3760 = vld [vmem:[#allocation4 + $0x1] sm:$0x1]
      %v3761 = vmul.f32 %v3688, %v3688
      %v3762 = vmul.f32 %v3689, %v3689
      %v3763 = vmul.f32 %v3690, %v3690
      %v3764 = vmul.f32 %v3691, %v3691
      %v3765 = vmul.f32 %v3692, %v3692
      %v3766 = vmul.f32 %v3693, %v3693
      %v3767 = vmul.f32 %v3694, %v3694
      %v3768 = vmul.f32 %v3695, %v3695
      %v3769 = vmul.f32 %v3696, %v3696
      %v3770 = vmul.f32 %v3697, %v3697
      %v3771 = vmul.f32 %v3698, %v3698
      %v3772 = vmul.f32 %v3699, %v3699
      %v3773 = vmul.f32 %v3700, %v3700
      %v3774 = vmul.f32 %v3701, %v3701
      %v3775 = vmul.f32 %v3702, %v3702
      %v3776 = vmul.f32 %v3703, %v3703
      %v3777 = vmul.f32 %v3704, %v3704
      %v3778 = vmul.f32 %v3705, %v3705
      %v3779 = vmul.f32 %v3706, %v3706
      %v3780 = vmul.f32 %v3707, %v3707
      %v3781 = vmul.f32 %v3708, %v3708
      %v3782 = vmul.f32 %v3709, %v3709
      %v3783 = vmul.f32 %v3710, %v3710
      %v3784 = vmul.f32 %v3711, %v3711
      %v3785 = vmul.f32 %v3712, %v3712
      %v3786 = vmul.f32 %v3713, %v3713
      %v3787 = vmul.f32 %v3714, %v3714
      %v3788 = vmul.f32 %v3715, %v3715
      %v3789 = vmul.f32 %v3716, %v3716
      %v3790 = vmul.f32 %v3717, %v3717
      %v3791 = vmul.f32 %v3718, %v3718
      %v3792 = vmul.f32 %v3719, %v3719
      %v3793 = vadd.f32 %v3761, %v3762
      %v3794 = vadd.f32 %v3793, %v3763
      %v3795 = vadd.f32 %v3794, %v3764
      %v3796 = vadd.f32 %v3795, %v3765
      %v3797 = vadd.f32 %v3796, %v3766
      %v3798 = vadd.f32 %v3797, %v3767
      %v3799 = vadd.f32 %v3798, %v3768
      %v3800 = vadd.f32 %v3799, %v3769
      %v3801 = vadd.f32 %v3800, %v3770
      %v3802 = vadd.f32 %v3801, %v3771
      %v3803 = vadd.f32 %v3802, %v3772
      %v3804 = vadd.f32 %v3803, %v3773
      %v3805 = vadd.f32 %v3804, %v3774
      %v3806 = vadd.f32 %v3805, %v3775
      %v3807 = vadd.f32 %v3806, %v3776
      %v3808 = vadd.f32 %v3807, %v3777
      %v3809 = vadd.f32 %v3808, %v3778
      %v3810 = vadd.f32 %v3809, %v3779
      %v3811 = vadd.f32 %v3810, %v3780
      %v3812 = vadd.f32 %v3811, %v3781
      %v3813 = vadd.f32 %v3812, %v3782
      %v3814 = vadd.f32 %v3813, %v3783
      %v3815 = vadd.f32 %v3814, %v3784
      %v3816 = vadd.f32 %v3815, %v3785
      %v3817 = vadd.f32 %v3816, %v3786
      %v3818 = vadd.f32 %v3817, %v3787
      %v3819 = vadd.f32 %v3818, %v3788
      %v3820 = vadd.f32 %v3819, %v3789
      %v3821 = vadd.f32 %v3820, %v3790
      %v3822 = vadd.f32 %v3821, %v3791
      %v3823 = vadd.f32 %v3822, %v3792
      %v3824 = vrot.slane %v3823, 4
      %v3825 = vadd.f32 %v3823, %v3824
      %v3826 = vrot.slane %v3825, 2
      %v3827 = vadd.f32 %v3825, %v3826
      %v3828 = vrot.slane %v3827, 1
      %v3829 = vadd.f32 %v3827, %v3828
      %v3830 = vadd.f32 %v3760, %v3829
      %3831 = vst [vmem:[#allocation4 + $0x1] sm:$0x1] %v3830
      %3832 = vst [vmem:[%s168] sm:$0xff] %v3688
      %3833 = vst [vmem:[%s168 + $0x8] sm:$0xff] %v3689
      %3834 = vst [vmem:[%s168 + $0x10] sm:$0xff] %v3690
      %3835 = vst [vmem:[%s168 + $0x18] sm:$0xff] %v3691
      %3836 = vst [vmem:[%s168 + $0x20] sm:$0xff] %v3692
      %3837 = vst [vmem:[%s168 + $0x28] sm:$0xff] %v3693
      %3838 = vst [vmem:[%s168 + $0x30] sm:$0xff] %v3694
      %3839 = vst [vmem:[%s168 + $0x38] sm:$0xff] %v3695
      %3840 = vst [vmem:[%s168 + $0x40] sm:$0xff] %v3696
      %3841 = vst [vmem:[%s168 + $0x48] sm:$0xff] %v3697
      %3842 = vst [vmem:[%s168 + $0x50] sm:$0xff] %v3698
      %3843 = vst [vmem:[%s168 + $0x58] sm:$0xff] %v3699
      %3844 = vst [vmem:[%s168 + $0x60] sm:$0xff] %v3700
      %3845 = vst [vmem:[%s168 + $0x68] sm:$0xff] %v3701
      %3846 = vst [vmem:[%s168 + $0x70] sm:$0xff] %v3702
      %3847 = vst [vmem:[%s168 + $0x78] sm:$0xff] %v3703
      %3848 = vst [vmem:[%s168 + $0x80] sm:$0xff] %v3704
      %3849 = vst [vmem:[%s168 + $0x88] sm:$0xff] %v3705
      %3850 = vst [vmem:[%s168 + $0x90] sm:$0xff] %v3706
      %3851 = vst [vmem:[%s168 + $0x98] sm:$0xff] %v3707
      %3852 = vst [vmem:[%s168 + $0xa0] sm:$0xff] %v3708
      %3853 = vst [vmem:[%s168 + $0xa8] sm:$0xff] %v3709
      %3854 = vst [vmem:[%s168 + $0xb0] sm:$0xff] %v3710
      %3855 = vst [vmem:[%s168 + $0xb8] sm:$0xff] %v3711
      %3856 = vst [vmem:[%s168 + $0xc0] sm:$0xff] %v3712
      %3857 = vst [vmem:[%s168 + $0xc8] sm:$0xff] %v3713
      %3858 = vst [vmem:[%s168 + $0xd0] sm:$0xff] %v3714
      %3859 = vst [vmem:[%s168 + $0xd8] sm:$0xff] %v3715
      %3860 = vst [vmem:[%s168 + $0xe0] sm:$0xff] %v3716
      %3861 = vst [vmem:[%s168 + $0xe8] sm:$0xff] %v3717
      %3862 = vst [vmem:[%s168 + $0xf0] sm:$0xff] %v3718
      %3863 = vst [vmem:[%s168 + $0xf8] sm:$0xff] %v3719
      %v3864 = vld [vmem:[#allocation4] sm:$0x3]
      %3865 = vst [vmem:[%s3] sm:$0x3] %v3864
      %p3866 = scmp.lt.s32.totalorder %s15, 1
      %s3867 = scalar_select %p3866, %s15, 1
      %s3868 = smul.addr %s3867, 32
      %s3869 = smul.addr %s3868, 8
      %s3870 = scalar_lea.vmem %s2, %s3869
      // Predicated region
      $region33: #{basic_block_forward.3} parent=27 // pred_check
        %p3871 = pneg %p80
      $region34: #{basic_block_forward.3} parent=27 // pred_check_branch
        %3873 = sbr.rel (%p3871) target = $region36
      $region35: #{basic_block_forward.3} parent=27 // pred_region
        _
      $region36: #{basic_block_forward.3} parent=27 // pred_fallthru
        _
      // Predicated region
      $region37: #{basic_block_forward.3} parent=27 // pred_check
        %p3874 = pneg %p101
      $region38: #{basic_block_forward.3} parent=27 // pred_check_branch
        %3876 = sbr.rel (%p3874) target = $region40
      $region39: #{basic_block_forward.3} parent=27 // pred_region
        _
      $region40: #{basic_block_forward.3} parent=27 // pred_fallthru
        _
      // Predicated region
      $region41: #{basic_block_forward.3} parent=27 // pred_check
        %p3877 = pneg %p101
      $region42: #{basic_block_forward.3} parent=27 // pred_check_branch
        %3879 = sbr.rel (%p3877) target = $region44
      $region43: #{basic_block_forward.3} parent=27 // pred_region
        _
      $region44: #{basic_block_forward.3} parent=27 // pred_fallthru
        _
    $region28: #{basic_block_forward.3} parent=5 // pred_fallthru
      _
    %p3880 = scmp.le.s32.totalorder 2, %s10
    // Predicated region
    $region45: #{basic_block_forward.3} parent=5 // pred_check
      %p3881 = pneg %p3880
    $region46: #{basic_block_forward.3} parent=5 // pred_check_branch
      %3883 = sbr.rel (%p3881) target = $region48
    $region47: #{basic_block_forward.3} parent=5 // pred_region
      %s3884 = ssub.s32 %s10, 2
      // Predicated region
      $region49: #{basic_block_forward.3} parent=47 // pred_check
        %p3885 = pneg %p86
      $region50: #{basic_block_forward.3} parent=47 // pred_check_branch
        %3887 = sbr.rel (%p3885) target = $region52
      $region51: #{basic_block_forward.3} parent=47 // pred_region
        %p3888 = scmp.lt.s32.totalorder %s16, 1
        %s3889 = scalar_select %p3888, %s16, 1
        %s3890 = smul.addr %s3889, 32
        %s3891 = smul.addr %s3890, 8
        %s3892 = scalar_lea.vmem %s2, %s3891
      $region52: #{basic_block_forward.3} parent=47 // pred_fallthru
        _
    $region48: #{basic_block_forward.3} parent=5 // pred_fallthru
      _
  $region6: #{basic_block_forward.3} parent=0 // loop_footer
    %s14 = sadd.s32 1, %s10
  $region7: #{basic_block_forward.3} parent=0 // loop_footer_branch
    %9 = sbr.rel target = $region3
  $region8: #{basic_block_forward.3} parent=0 // loop_exit
    _

// kernel: basic_block_forward.4
$region0: #{basic_block_forward.4}
  #allocation0 [shape = 'u32[]', space=smem, size = 0x4, offset = 0x4, fixed_abs, tag = 'smem constant byte address 0x4 - core index']
  #allocation1 [shape = 'u32[144,128]{1,0:T(1,128)}', space=vmem, size = 0x12000, scoped, tag = 'internal scratch']
  #allocation2 [shape = 'f32[18,18,128]{2,1,0:T(8,128)}', space=vmem, size = 0x36000, scoped, tag = 'scratch operand']
  #allocation3 [shape = 'f32[256,128]{1,0:T(8,128)}', space=vmem, size = 0x20000, scoped, tag = 'scratch operand']
  #allocation4 [shape = 'f32[2,128]{1,0:T(2,128)}', space=vmem, size = 0x400, scoped, tag = 'scratch operand']
  %s0 = inlined_call_operand.vmem [shape: f32[2,16,16,128], index: 0, kind: input, shape index: {}]
  %s1 = inlined_call_operand.vmem [shape: f32[2,128], index: 1, kind: input, shape index: {}]
  %s2 = inlined_call_operand.vmem [shape: bf16[9,128,128], index: 2, kind: input, shape index: {}]
  %s3 = inlined_call_operand.vmem [shape: f32[2,16,16,128], index: 3, kind: output, shape index: {0}]
  %s4 = inlined_call_operand.vmem [shape: f32[2,128], index: 4, kind: output, shape index: {1}]
  %5 = xla_tuple %s3, %s4
  %s6 = sld [smem:[#allocation0]]
  $region57: #{basic_block_forward.4} parent=0
    _
  %s8 = ssub.s32 1, %s6
  %s9 = scalar_select 0, %s8, %s6
  loop: start=0, step=1, limit=4
  $region2: #{basic_block_forward.4} parent=0 // loop_pre_header
    _
  $region3: #{basic_block_forward.4} parent=0 // loop_header
    %s11 = sphi 0, %s15
    %p12 = scmp.ge.s32.totalorder %s11, 4
    %s21 = sphi 0, %s23
    %s24 = sphi 0, %s21
    %s25 = sphi 0, %s24
    %s41 = sphi 0, %s25
    %s45 = sphi 0, %s45
    %s47 = sphi 0, %s45
    %s48 = sphi 0, %s47
    %s62 = sphi 0, %s48
    %s66 = sphi 0, %s66
    %s68 = sphi 0, %s66
    %s69 = sphi 0, %s68
    %s83 = sphi 0, %s69
    %s89 = sphi 0, %s91
    %s92 = sphi 0, %s89
    %s93 = sphi 0, %s92
    %s109 = sphi 0, %s93
    %s113 = sphi 0, %s113
    %s115 = sphi 0, %s113
    %s116 = sphi 0, %s115
    %s130 = sphi 0, %s116
  $region4: #{basic_block_forward.4} parent=0 // loop_header_branch
    %14 = sbr.rel (%p12) target = $region8
  $region5: #{basic_block_forward.4} parent=0 // loop_body
    %s16 = ssub.s32 %s11, 1
    %s17 = ssub.s32 %s11, 2
    %s18 = sadd.s32 %s11, 1
    %s19 = ssub.s32 %s11, %s18
    %p20 = scmp.eq.s32.totalorder %s19, 0
    %s22 = sadd.s32 %s21, 1
    %s23 = scalar_select %p20, %s21, %s22
    %p26 = pneg %p20
    %p27 = scmp.eq.s32.totalorder %s11, 1
    %p28 = por %p26, %p27
    %p29 = scmp.ne.s32.totalorder %s21, %s24
    %p30 = scmp.eq.s32.totalorder %s11, 0
    %p31 = por %p29, %p30
    %p32 = scmp.ne.s32.totalorder %s21, %s24
    %p33 = scmp.eq.s32.totalorder %s16, 1
    %p34 = por %p32, %p33
    %p35 = scmp.ne.s32.totalorder %s24, %s25
    %p36 = scmp.eq.s32.totalorder %s16, 0
    %p37 = por %p35, %p36
    %p38 = scmp.ne.s32.totalorder %s24, %s25
    %p39 = scmp.eq.s32.totalorder %s17, 1
    %p40 = por %p38, %p39
    %p42 = scmp.ne.s32.totalorder %s25, %s41
    %p43 = scmp.eq.s32.totalorder %s17, 0
    %p44 = por %p42, %p43
    %s46 = sadd.s32 %s45, 1
    %p49 = scmp.eq.s32.totalorder %s11, 1
    %p50 = scmp.ne.s32.totalorder %s45, %s47
    %p51 = scmp.eq.s32.totalorder %s11, 0
    %p52 = por %p50, %p51
    %p53 = scmp.ne.s32.totalorder %s45, %s47
    %p54 = scmp.eq.s32.totalorder %s16, 1
    %p55 = por %p53, %p54
    %p56 = scmp.ne.s32.totalorder %s47, %s48
    %p57 = scmp.eq.s32.totalorder %s16, 0
    %p58 = por %p56, %p57
    %p59 = scmp.ne.s32.totalorder %s47, %s48
    %p60 = scmp.eq.s32.totalorder %s17, 1
    %p61 = por %p59, %p60
    %p63 = scmp.ne.s32.totalorder %s48, %s62
    %p64 = scmp.eq.s32.totalorder %s17, 0
    %p65 = por %p63, %p64
    %s67 = sadd.s32 %s66, 1
    %p70 = scmp.eq.s32.totalorder %s11, 1
    %p71 = scmp.ne.s32.totalorder %s66, %s68
    %p72 = scmp.eq.s32.totalorder %s11, 0
    %p73 = por %p71, %p72
    %p74 = scmp.ne.s32.totalorder %s66, %s68
    %p75 = scmp.eq.s32.totalorder %s16, 1
    %p76 = por %p74, %p75
    %p77 = scmp.ne.s32.totalorder %s68, %s69
    %p78 = scmp.eq.s32.totalorder %s16, 0
    %p79 = por %p77, %p78
    %p80 = scmp.ne.s32.totalorder %s68, %s69
    %p81 = scmp.eq.s32.totalorder %s17, 1
    %p82 = por %p80, %p81
    %p84 = scmp.ne.s32.totalorder %s69, %s83
    %p85 = scmp.eq.s32.totalorder %s17, 0
    %p86 = por %p84, %p85
    %s87 = ssub.s32 %s11, %s18
    %p88 = scmp.eq.s32.totalorder %s87, 0
    %s90 = sadd.s32 %s89, 1
    %s91 = scalar_select %p88, %s89, %s90
    %p94 = pneg %p88
    %p95 = scmp.eq.s32.totalorder %s11, 1
    %p96 = por %p94, %p95
    %p97 = scmp.ne.s32.totalorder %s89, %s92
    %p98 = scmp.eq.s32.totalorder %s11, 0
    %p99 = por %p97, %p98
    %p100 = scmp.ne.s32.totalorder %s89, %s92
    %p101 = scmp.eq.s32.totalorder %s16, 1
    %p102 = por %p100, %p101
    %p103 = scmp.ne.s32.totalorder %s92, %s93
    %p104 = scmp.eq.s32.totalorder %s16, 0
    %p105 = por %p103, %p104
    %p106 = scmp.ne.s32.totalorder %s92, %s93
    %p107 = scmp.eq.s32.totalorder %s17, 1
    %p108 = por %p106, %p107
    %p110 = scmp.ne.s32.totalorder %s93, %s109
    %p111 = scmp.eq.s32.totalorder %s17, 0
    %p112 = por %p110, %p111
    %s114 = sadd.s32 %s113, 1
    %p117 = scmp.eq.s32.totalorder %s11, 1
    %p118 = scmp.ne.s32.totalorder %s113, %s115
    %p119 = scmp.eq.s32.totalorder %s11, 0
    %p120 = por %p118, %p119
    %p121 = scmp.ne.s32.totalorder %s113, %s115
    %p122 = scmp.eq.s32.totalorder %s16, 1
    %p123 = por %p121, %p122
    %p124 = scmp.ne.s32.totalorder %s115, %s116
    %p125 = scmp.eq.s32.totalorder %s16, 0
    %p126 = por %p124, %p125
    %p127 = scmp.ne.s32.totalorder %s115, %s116
    %p128 = scmp.eq.s32.totalorder %s17, 1
    %p129 = por %p127, %p128
    %p131 = scmp.ne.s32.totalorder %s116, %s130
    %p132 = scmp.eq.s32.totalorder %s17, 0
    %p133 = por %p131, %p132
    %p134 = scmp.le.s32.totalorder 1, %s11
    %p135 = scmp.lt.s32.totalorder %s11, 3
    %p136 = pnand %p134, %p135
    %p137 = pneg %p136
    // Predicated region
    $region9: #{basic_block_forward.4} parent=5 // pred_check
      _
    $region10: #{basic_block_forward.4} parent=5 // pred_check_branch
      %139 = sbr.rel (%p136) target = $region12
    $region11: #{basic_block_forward.4} parent=5 // pred_region
      %s140 = ssub.s32 %s11, 1
      // Predicated region
      $region13: #{basic_block_forward.4} parent=11 // pred_check
        %p141 = pneg %p58
      $region14: #{basic_block_forward.4} parent=11 // pred_check_branch
        %143 = sbr.rel (%p141) target = $region16
      $region15: #{basic_block_forward.4} parent=11 // pred_region
        _
      $region16: #{basic_block_forward.4} parent=11 // pred_fallthru
        _
      // Predicated region
      $region17: #{basic_block_forward.4} parent=11 // pred_check
        %p144 = pneg %p79
      $region18: #{basic_block_forward.4} parent=11 // pred_check_branch
        %146 = sbr.rel (%p144) target = $region20
      $region19: #{basic_block_forward.4} parent=11 // pred_region
        _
      $region20: #{basic_block_forward.4} parent=11 // pred_fallthru
        _
    $region12: #{basic_block_forward.4} parent=5 // pred_fallthru
      _
    %p147 = scmp.lt.s32.totalorder %s11, 2
    // Predicated region
    $region21: #{basic_block_forward.4} parent=5 // pred_check
      %p148 = pneg %p147
    $region22: #{basic_block_forward.4} parent=5 // pred_check_branch
      %150 = sbr.rel (%p148) target = $region24
    $region23: #{basic_block_forward.4} parent=5 // pred_region
      // Predicated region
      $region25: #{basic_block_forward.4} parent=23 // pred_check
        %p151 = pneg %p31
      $region26: #{basic_block_forward.4} parent=23 // pred_check_branch
        %153 = sbr.rel (%p151) target = $region28
      $region27: #{basic_block_forward.4} parent=23 // pred_region
        %p154 = scmp.lt.s32.totalorder %s11, 1
        %s155 = scalar_select %p154, %s11, 1
        %s156 = smul.addr %s155, 32
        %s157 = smul.addr %s156, 8
        %s158 = scalar_lea.vmem %s0, %s157
      $region28: #{basic_block_forward.4} parent=23 // pred_fallthru
        _
    $region24: #{basic_block_forward.4} parent=5 // pred_fallthru
      _
    %p159 = scmp.le.s32.totalorder 1, %s11
    %p160 = scmp.lt.s32.totalorder %s11, 3
    %p161 = pnand %p159, %p160
    %p162 = pneg %p161
    // Predicated region
    $region29: #{basic_block_forward.4} parent=5 // pred_check
      _
    $region30: #{basic_block_forward.4} parent=5 // pred_check_branch
      %164 = sbr.rel (%p161) target = $region32
    $region31: #{basic_block_forward.4} parent=5 // pred_region
      %s165 = ssub.s32 %s11, 1
      %p166 = scmp.lt.s32.totalorder %s16, 1
      %s167 = scalar_select %p166, %s16, 1
      %s168 = smul.addr %s167, 32
      %s169 = smul.addr %s168, 8
      %s170 = scalar_lea.vmem %s0, %s169
      %p171 = pneg %p37
      %p172 = pneg %p34
      %p173 = pneg %p58
      %p174 = pneg %p55
      %p175 = pneg %p79
      %p176 = pneg %p76
      %p177 = pneg %p105
      %p178 = pneg %p102
      %p179 = scmp.lt.s32.totalorder %s16, 1
      %s180 = scalar_select %p179, %s16, 1
      %s181 = smul.addr %s180, 32
      %s182 = smul.addr %s181, 8
      %s183 = scalar_lea.vmem %s3, %s182
      %p184 = pneg %p126
      %p185 = pneg %p123
      %p186 = scmp.lt.s32.totalorder %s16, 1
      %s187 = scalar_select %p186, %s16, 1
      %s188 = smul.addr %s187, 32
      %s189 = smul.addr %s188, 8
      %s190 = scalar_lea.vmem %s0, %s189
      %p191 = scmp.lt.s32.totalorder %s16, 1
      %s192 = scalar_select %p191, %s16, 1
      %s193 = smul.addr %s192, 32
      %s194 = smul.addr %s193, 8
      %s195 = scalar_lea.vmem %s3, %s194
      %p197 = scmp.eq.s32.totalorder %s16, 0
      // Predicated region
      $region33: #{basic_block_forward.4} parent=31 // pred_check
        %p198 = pneg %p197
      $region34: #{basic_block_forward.4} parent=31 // pred_check_branch
        %200 = sbr.rel (%p198) target = $region36
      $region35: #{basic_block_forward.4} parent=31 // pred_region
        %201 = vst [vmem:[#allocation2] sm:$0xff] 0.0
        %202 = vst [vmem:[#allocation2 + $0x8] sm:$0xff] 0.0
        %203 = vst [vmem:[#allocation2 + $0x10] sm:$0x3] 0.0
        %204 = vst [vmem:[#allocation2 + $0x18] sm:$0xff] 0.0
        %205 = vst [vmem:[#allocation2 + $0x20] sm:$0xff] 0.0
        %206 = vst [vmem:[#allocation2 + $0x28] sm:$0x3] 0.0
        %207 = vst [vmem:[#allocation2 + $0x30] sm:$0xff] 0.0
        %208 = vst [vmem:[#allocation2 + $0x38] sm:$0xff] 0.0
        %209 = vst [vmem:[#allocation2 + $0x40] sm:$0x3] 0.0
        %210 = vst [vmem:[#allocation2 + $0x48] sm:$0xff] 0.0
        %211 = vst [vmem:[#allocation2 + $0x50] sm:$0xff] 0.0
        %212 = vst [vmem:[#allocation2 + $0x58] sm:$0x3] 0.0
        %213 = vst [vmem:[#allocation2 + $0x60] sm:$0xff] 0.0
        %214 = vst [vmem:[#allocation2 + $0x68] sm:$0xff] 0.0
        %215 = vst [vmem:[#allocation2 + $0x70] sm:$0x3] 0.0
        %216 = vst [vmem:[#allocation2 + $0x78] sm:$0xff] 0.0
        %217 = vst [vmem:[#allocation2 + $0x80] sm:$0xff] 0.0
        %218 = vst [vmem:[#allocation2 + $0x88] sm:$0x3] 0.0
        %219 = vst [vmem:[#allocation2 + $0x90] sm:$0xff] 0.0
        %220 = vst [vmem:[#allocation2 + $0x98] sm:$0xff] 0.0
        %221 = vst [vmem:[#allocation2 + $0xa0] sm:$0x3] 0.0
        %222 = vst [vmem:[#allocation2 + $0xa8] sm:$0xff] 0.0
        %223 = vst [vmem:[#allocation2 + $0xb0] sm:$0xff] 0.0
        %224 = vst [vmem:[#allocation2 + $0xb8] sm:$0x3] 0.0
        %225 = vst [vmem:[#allocation2 + $0xc0] sm:$0xff] 0.0
        %226 = vst [vmem:[#allocation2 + $0xc8] sm:$0xff] 0.0
        %227 = vst [vmem:[#allocation2 + $0xd0] sm:$0x3] 0.0
        %228 = vst [vmem:[#allocation2 + $0xd8] sm:$0xff] 0.0
        %229 = vst [vmem:[#allocation2 + $0xe0] sm:$0xff] 0.0
        %230 = vst [vmem:[#allocation2 + $0xe8] sm:$0x3] 0.0
        %231 = vst [vmem:[#allocation2 + $0xf0] sm:$0xff] 0.0
        %232 = vst [vmem:[#allocation2 + $0xf8] sm:$0xff] 0.0
        %233 = vst [vmem:[#allocation2 + $0x100] sm:$0x3] 0.0
        %234 = vst [vmem:[#allocation2 + $0x108] sm:$0xff] 0.0
        %235 = vst [vmem:[#allocation2 + $0x110] sm:$0xff] 0.0
        %236 = vst [vmem:[#allocation2 + $0x118] sm:$0x3] 0.0
        %237 = vst [vmem:[#allocation2 + $0x120] sm:$0xff] 0.0
        %238 = vst [vmem:[#allocation2 + $0x128] sm:$0xff] 0.0
        %239 = vst [vmem:[#allocation2 + $0x130] sm:$0x3] 0.0
        %240 = vst [vmem:[#allocation2 + $0x138] sm:$0xff] 0.0
        %241 = vst [vmem:[#allocation2 + $0x140] sm:$0xff] 0.0
        %242 = vst [vmem:[#allocation2 + $0x148] sm:$0x3] 0.0
        %243 = vst [vmem:[#allocation2 + $0x150] sm:$0xff] 0.0
        %244 = vst [vmem:[#allocation2 + $0x158] sm:$0xff] 0.0
        %245 = vst [vmem:[#allocation2 + $0x160] sm:$0x3] 0.0
        %246 = vst [vmem:[#allocation2 + $0x168] sm:$0xff] 0.0
        %247 = vst [vmem:[#allocation2 + $0x170] sm:$0xff] 0.0
        %248 = vst [vmem:[#allocation2 + $0x178] sm:$0x3] 0.0
        %249 = vst [vmem:[#allocation2 + $0x180] sm:$0xff] 0.0
        %250 = vst [vmem:[#allocation2 + $0x188] sm:$0xff] 0.0
        %251 = vst [vmem:[#allocation2 + $0x190] sm:$0x3] 0.0
        %252 = vst [vmem:[#allocation2 + $0x198] sm:$0xff] 0.0
        %253 = vst [vmem:[#allocation2 + $0x1a0] sm:$0xff] 0.0
        %254 = vst [vmem:[#allocation2 + $0x1a8] sm:$0x3] 0.0
        %255 = vst [vmem:[#allocation4] sm:$0x3] 0.0
      $region36: #{basic_block_forward.4} parent=31 // pred_fallthru
        _
      %v256 = vld [vmem:[%s1] sm:$0x1]
      %v257 = vld [vmem:[%s1 + $0x1] sm:$0x1]
      %v258 = vld [vmem:[%s190] sm:$0xff]
      %v259 = vld [vmem:[%s190 + $0x8] sm:$0xff]
      %v260 = vld [vmem:[%s190 + $0x10] sm:$0xff]
      %v261 = vld [vmem:[%s190 + $0x18] sm:$0xff]
      %v262 = vld [vmem:[%s190 + $0x20] sm:$0xff]
      %v263 = vld [vmem:[%s190 + $0x28] sm:$0xff]
      %v264 = vld [vmem:[%s190 + $0x30] sm:$0xff]
      %v265 = vld [vmem:[%s190 + $0x38] sm:$0xff]
      %v266 = vld [vmem:[%s190 + $0x40] sm:$0xff]
      %v267 = vld [vmem:[%s190 + $0x48] sm:$0xff]
      %v268 = vld [vmem:[%s190 + $0x50] sm:$0xff]
      %v269 = vld [vmem:[%s190 + $0x58] sm:$0xff]
      %v270 = vld [vmem:[%s190 + $0x60] sm:$0xff]
      %v271 = vld [vmem:[%s190 + $0x68] sm:$0xff]
      %v272 = vld [vmem:[%s190 + $0x70] sm:$0xff]
      %v273 = vld [vmem:[%s190 + $0x78] sm:$0xff]
      %v274 = vld [vmem:[%s190 + $0x80] sm:$0xff]
      %v275 = vld [vmem:[%s190 + $0x88] sm:$0xff]
      %v276 = vld [vmem:[%s190 + $0x90] sm:$0xff]
      %v277 = vld [vmem:[%s190 + $0x98] sm:$0xff]
      %v278 = vld [vmem:[%s190 + $0xa0] sm:$0xff]
      %v279 = vld [vmem:[%s190 + $0xa8] sm:$0xff]
      %v280 = vld [vmem:[%s190 + $0xb0] sm:$0xff]
      %v281 = vld [vmem:[%s190 + $0xb8] sm:$0xff]
      %v282 = vld [vmem:[%s190 + $0xc0] sm:$0xff]
      %v283 = vld [vmem:[%s190 + $0xc8] sm:$0xff]
      %v284 = vld [vmem:[%s190 + $0xd0] sm:$0xff]
      %v285 = vld [vmem:[%s190 + $0xd8] sm:$0xff]
      %v286 = vld [vmem:[%s190 + $0xe0] sm:$0xff]
      %v287 = vld [vmem:[%s190 + $0xe8] sm:$0xff]
      %v288 = vld [vmem:[%s190 + $0xf0] sm:$0xff]
      %v289 = vld [vmem:[%s190 + $0xf8] sm:$0xff]
      %v290 = vlaneseq
      %v291 = vshrl.u32 %v290, 7
      %v292 = vsub.s32 0, %v291
      %v293 = vrot.slane %v256, %v292
      %v294 = vmul.f32 %v258, %v293
      %v295 = vmul.f32 %v259, %v293
      %v296 = vmul.f32 %v260, %v293
      %v297 = vmul.f32 %v261, %v293
      %v298 = vmul.f32 %v262, %v293
      %v299 = vmul.f32 %v263, %v293
      %v300 = vmul.f32 %v264, %v293
      %v301 = vmul.f32 %v265, %v293
      %v302 = vmul.f32 %v266, %v293
      %v303 = vmul.f32 %v267, %v293
      %v304 = vmul.f32 %v268, %v293
      %v305 = vmul.f32 %v269, %v293
      %v306 = vmul.f32 %v270, %v293
      %v307 = vmul.f32 %v271, %v293
      %v308 = vmul.f32 %v272, %v293
      %v309 = vmul.f32 %v273, %v293
      %v310 = vmul.f32 %v274, %v293
      %v311 = vmul.f32 %v275, %v293
      %v312 = vmul.f32 %v276, %v293
      %v313 = vmul.f32 %v277, %v293
      %v314 = vmul.f32 %v278, %v293
      %v315 = vmul.f32 %v279, %v293
      %v316 = vmul.f32 %v280, %v293
      %v317 = vmul.f32 %v281, %v293
      %v318 = vmul.f32 %v282, %v293
      %v319 = vmul.f32 %v283, %v293
      %v320 = vmul.f32 %v284, %v293
      %v321 = vmul.f32 %v285, %v293
      %v322 = vmul.f32 %v286, %v293
      %v323 = vmul.f32 %v287, %v293
      %v324 = vmul.f32 %v288, %v293
      %v325 = vmul.f32 %v289, %v293
      %v326 = vlaneseq
      %v327 = vshrl.u32 %v326, 7
      %v328 = vsub.s32 0, %v327
      %v329 = vrot.slane %v257, %v328
      %v330 = vadd.f32 %v294, %v329
      %v331 = vadd.f32 %v295, %v329
      %v332 = vadd.f32 %v296, %v329
      %v333 = vadd.f32 %v297, %v329
      %v334 = vadd.f32 %v298, %v329
      %v335 = vadd.f32 %v299, %v329
      %v336 = vadd.f32 %v300, %v329
      %v337 = vadd.f32 %v301, %v329
      %v338 = vadd.f32 %v302, %v329
      %v339 = vadd.f32 %v303, %v329
      %v340 = vadd.f32 %v304, %v329
      %v341 = vadd.f32 %v305, %v329
      %v342 = vadd.f32 %v306, %v329
      %v343 = vadd.f32 %v307, %v329
      %v344 = vadd.f32 %v308, %v329
      %v345 = vadd.f32 %v309, %v329
      %v346 = vadd.f32 %v310, %v329
      %v347 = vadd.f32 %v311, %v329
      %v348 = vadd.f32 %v312, %v329
      %v349 = vadd.f32 %v313, %v329
      %v350 = vadd.f32 %v314, %v329
      %v351 = vadd.f32 %v315, %v329
      %v352 = vadd.f32 %v316, %v329
      %v353 = vadd.f32 %v317, %v329
      %v354 = vadd.f32 %v318, %v329
      %v355 = vadd.f32 %v319, %v329
      %v356 = vadd.f32 %v320, %v329
      %v357 = vadd.f32 %v321, %v329
      %v358 = vadd.f32 %v322, %v329
      %v359 = vadd.f32 %v323, %v329
      %v360 = vadd.f32 %v324, %v329
      %v361 = vadd.f32 %v325, %v329
      %v362 = vmax.f32 %v330, 0.0
      %v363 = vmax.f32 %v331, 0.0
      %v364 = vmax.f32 %v332, 0.0
      %v365 = vmax.f32 %v333, 0.0
      %v366 = vmax.f32 %v334, 0.0
      %v367 = vmax.f32 %v335, 0.0
      %v368 = vmax.f32 %v336, 0.0
      %v369 = vmax.f32 %v337, 0.0
      %v370 = vmax.f32 %v338, 0.0
      %v371 = vmax.f32 %v339, 0.0
      %v372 = vmax.f32 %v340, 0.0
      %v373 = vmax.f32 %v341, 0.0
      %v374 = vmax.f32 %v342, 0.0
      %v375 = vmax.f32 %v343, 0.0
      %v376 = vmax.f32 %v344, 0.0
      %v377 = vmax.f32 %v345, 0.0
      %v378 = vmax.f32 %v346, 0.0
      %v379 = vmax.f32 %v347, 0.0
      %v380 = vmax.f32 %v348, 0.0
      %v381 = vmax.f32 %v349, 0.0
      %v382 = vmax.f32 %v350, 0.0
      %v383 = vmax.f32 %v351, 0.0
      %v384 = vmax.f32 %v352, 0.0
      %v385 = vmax.f32 %v353, 0.0
      %v386 = vmax.f32 %v354, 0.0
      %v387 = vmax.f32 %v355, 0.0
      %v388 = vmax.f32 %v356, 0.0
      %v389 = vmax.f32 %v357, 0.0
      %v390 = vmax.f32 %v358, 0.0
      %v391 = vmax.f32 %v359, 0.0
      %v392 = vmax.f32 %v360, 0.0
      %v393 = vmax.f32 %v361, 0.0
      %s394 = scalar_lea.vmem [#allocation2], 24
      %395 = vst [vmem:[%s394 + $0x1] sm:$0xff] %v362
      %396 = vst [vmem:[%s394 + $0x9] sm:$0xff] %v363
      %397 = vst [vmem:[%s394 + $0x19] sm:$0xff] %v364
      %398 = vst [vmem:[%s394 + $0x21] sm:$0xff] %v365
      %399 = vst [vmem:[%s394 + $0x31] sm:$0xff] %v366
      %400 = vst [vmem:[%s394 + $0x39] sm:$0xff] %v367
      %401 = vst [vmem:[%s394 + $0x49] sm:$0xff] %v368
      %402 = vst [vmem:[%s394 + $0x51] sm:$0xff] %v369
      %403 = vst [vmem:[%s394 + $0x61] sm:$0xff] %v370
      %404 = vst [vmem:[%s394 + $0x69] sm:$0xff] %v371
      %405 = vst [vmem:[%s394 + $0x79] sm:$0xff] %v372
      %406 = vst [vmem:[%s394 + $0x81] sm:$0xff] %v373
      %407 = vst [vmem:[%s394 + $0x91] sm:$0xff] %v374
      %408 = vst [vmem:[%s394 + $0x99] sm:$0xff] %v375
      %409 = vst [vmem:[%s394 + $0xa9] sm:$0xff] %v376
      %410 = vst [vmem:[%s394 + $0xb1] sm:$0xff] %v377
      %411 = vst [vmem:[%s394 + $0xc1] sm:$0xff] %v378
      %412 = vst [vmem:[%s394 + $0xc9] sm:$0xff] %v379
      %413 = vst [vmem:[%s394 + $0xd9] sm:$0xff] %v380
      %414 = vst [vmem:[%s394 + $0xe1] sm:$0xff] %v381
      %415 = vst [vmem:[%s394 + $0xf1] sm:$0xff] %v382
      %416 = vst [vmem:[%s394 + $0xf9] sm:$0xff] %v383
      %417 = vst [vmem:[%s394 + $0x109] sm:$0xff] %v384
      %418 = vst [vmem:[%s394 + $0x111] sm:$0xff] %v385
      %419 = vst [vmem:[%s394 + $0x121] sm:$0xff] %v386
      %420 = vst [vmem:[%s394 + $0x129] sm:$0xff] %v387
      %421 = vst [vmem:[%s394 + $0x139] sm:$0xff] %v388
      %422 = vst [vmem:[%s394 + $0x141] sm:$0xff] %v389
      %423 = vst [vmem:[%s394 + $0x151] sm:$0xff] %v390
      %424 = vst [vmem:[%s394 + $0x159] sm:$0xff] %v391
      %425 = vst [vmem:[%s394 + $0x169] sm:$0xff] %v392
      %426 = vst [vmem:[%s394 + $0x171] sm:$0xff] %v393
      %427 = vst [vmem:[#allocation3] sm:$0xff] 0.0
      %428 = vst [vmem:[#allocation3 + $0x8] sm:$0xff] 0.0
      %429 = vst [vmem:[#allocation3 + $0x10] sm:$0xff] 0.0
      %430 = vst [vmem:[#allocation3 + $0x18] sm:$0xff] 0.0
      %431 = vst [vmem:[#allocation3 + $0x20] sm:$0xff] 0.0
      %432 = vst [vmem:[#allocation3 + $0x28] sm:$0xff] 0.0
      %433 = vst [vmem:[#allocation3 + $0x30] sm:$0xff] 0.0
      %434 = vst [vmem:[#allocation3 + $0x38] sm:$0xff] 0.0
      %435 = vst [vmem:[#allocation3 + $0x40] sm:$0xff] 0.0
      %436 = vst [vmem:[#allocation3 + $0x48] sm:$0xff] 0.0
      %437 = vst [vmem:[#allocation3 + $0x50] sm:$0xff] 0.0
      %438 = vst [vmem:[#allocation3 + $0x58] sm:$0xff] 0.0
      %439 = vst [vmem:[#allocation3 + $0x60] sm:$0xff] 0.0
      %440 = vst [vmem:[#allocation3 + $0x68] sm:$0xff] 0.0
      %441 = vst [vmem:[#allocation3 + $0x70] sm:$0xff] 0.0
      %442 = vst [vmem:[#allocation3 + $0x78] sm:$0xff] 0.0
      %443 = vst [vmem:[#allocation3 + $0x80] sm:$0xff] 0.0
      %444 = vst [vmem:[#allocation3 + $0x88] sm:$0xff] 0.0
      %445 = vst [vmem:[#allocation3 + $0x90] sm:$0xff] 0.0
      %446 = vst [vmem:[#allocation3 + $0x98] sm:$0xff] 0.0
      %447 = vst [vmem:[#allocation3 + $0xa0] sm:$0xff] 0.0
      %448 = vst [vmem:[#allocation3 + $0xa8] sm:$0xff] 0.0
      %449 = vst [vmem:[#allocation3 + $0xb0] sm:$0xff] 0.0
      %450 = vst [vmem:[#allocation3 + $0xb8] sm:$0xff] 0.0
      %451 = vst [vmem:[#allocation3 + $0xc0] sm:$0xff] 0.0
      %452 = vst [vmem:[#allocation3 + $0xc8] sm:$0xff] 0.0
      %453 = vst [vmem:[#allocation3 + $0xd0] sm:$0xff] 0.0
      %454 = vst [vmem:[#allocation3 + $0xd8] sm:$0xff] 0.0
      %455 = vst [vmem:[#allocation3 + $0xe0] sm:$0xff] 0.0
      %456 = vst [vmem:[#allocation3 + $0xe8] sm:$0xff] 0.0
      %457 = vst [vmem:[#allocation3 + $0xf0] sm:$0xff] 0.0
      %458 = vst [vmem:[#allocation3 + $0xf8] sm:$0xff] 0.0
      %v459 = vld [vmem:[#allocation2] sm:$0xff]
      %v460 = vld [vmem:[#allocation2 + $0x8] sm:$0xff]
      %v461 = vld [vmem:[#allocation2 + $0x18] sm:$0xff]
      %v462 = vld [vmem:[#allocation2 + $0x20] sm:$0xff]
      %v463 = vld [vmem:[#allocation2 + $0x30] sm:$0xff]
      %v464 = vld [vmem:[#allocation2 + $0x38] sm:$0xff]
      %v465 = vld [vmem:[#allocation2 + $0x48] sm:$0xff]
      %v466 = vld [vmem:[#allocation2 + $0x50] sm:$0xff]
      %v467 = vld [vmem:[#allocation2 + $0x60] sm:$0xff]
      %v468 = vld [vmem:[#allocation2 + $0x68] sm:$0xff]
      %v469 = vld [vmem:[#allocation2 + $0x78] sm:$0xff]
      %v470 = vld [vmem:[#allocation2 + $0x80] sm:$0xff]
      %v471 = vld [vmem:[#allocation2 + $0x90] sm:$0xff]
      %v472 = vld [vmem:[#allocation2 + $0x98] sm:$0xff]
      %v473 = vld [vmem:[#allocation2 + $0xa8] sm:$0xff]
      %v474 = vld [vmem:[#allocation2 + $0xb0] sm:$0xff]
      %v475 = vld [vmem:[#allocation2 + $0xc0] sm:$0xff]
      %v476 = vld [vmem:[#allocation2 + $0xc8] sm:$0xff]
      %v477 = vld [vmem:[#allocation2 + $0xd8] sm:$0xff]
      %v478 = vld [vmem:[#allocation2 + $0xe0] sm:$0xff]
      %v479 = vld [vmem:[#allocation2 + $0xf0] sm:$0xff]
      %v480 = vld [vmem:[#allocation2 + $0xf8] sm:$0xff]
      %v481 = vld [vmem:[#allocation2 + $0x108] sm:$0xff]
      %v482 = vld [vmem:[#allocation2 + $0x110] sm:$0xff]
      %v483 = vld [vmem:[#allocation2 + $0x120] sm:$0xff]
      %v484 = vld [vmem:[#allocation2 + $0x128] sm:$0xff]
      %v485 = vld [vmem:[#allocation2 + $0x138] sm:$0xff]
      %v486 = vld [vmem:[#allocation2 + $0x140] sm:$0xff]
      %v487 = vld [vmem:[#allocation2 + $0x150] sm:$0xff]
      %v488 = vld [vmem:[#allocation2 + $0x158] sm:$0xff]
      %v489 = vld [vmem:[#allocation2 + $0x168] sm:$0xff]
      %v490 = vld [vmem:[#allocation2 + $0x170] sm:$0xff]
      %v491 = vpack.c.bf16 %v460, %v459
      %v492 = vpack.c.bf16 %v462, %v461
      %v493 = vpack.c.bf16 %v464, %v463
      %v494 = vpack.c.bf16 %v466, %v465
      %v495 = vpack.c.bf16 %v468, %v467
      %v496 = vpack.c.bf16 %v470, %v469
      %v497 = vpack.c.bf16 %v472, %v471
      %v498 = vpack.c.bf16 %v474, %v473
      %v499 = vpack.c.bf16 %v476, %v475
      %v500 = vpack.c.bf16 %v478, %v477
      %v501 = vpack.c.bf16 %v480, %v479
      %v502 = vpack.c.bf16 %v482, %v481
      %v503 = vpack.c.bf16 %v484, %v483
      %v504 = vpack.c.bf16 %v486, %v485
      %v505 = vpack.c.bf16 %v488, %v487
      %v506 = vpack.c.bf16 %v490, %v489
      %v507 = vld [vmem:[#allocation3] sm:$0xff]
      %v508 = vld [vmem:[#allocation3 + $0x8] sm:$0xff]
      %v509 = vld [vmem:[#allocation3 + $0x10] sm:$0xff]
      %v510 = vld [vmem:[#allocation3 + $0x18] sm:$0xff]
      %v511 = vld [vmem:[#allocation3 + $0x20] sm:$0xff]
      %v512 = vld [vmem:[#allocation3 + $0x28] sm:$0xff]
      %v513 = vld [vmem:[#allocation3 + $0x30] sm:$0xff]
      %v514 = vld [vmem:[#allocation3 + $0x38] sm:$0xff]
      %v515 = vld [vmem:[#allocation3 + $0x40] sm:$0xff]
      %v516 = vld [vmem:[#allocation3 + $0x48] sm:$0xff]
      %v517 = vld [vmem:[#allocation3 + $0x50] sm:$0xff]
      %v518 = vld [vmem:[#allocation3 + $0x58] sm:$0xff]
      %v519 = vld [vmem:[#allocation3 + $0x60] sm:$0xff]
      %v520 = vld [vmem:[#allocation3 + $0x68] sm:$0xff]
      %v521 = vld [vmem:[#allocation3 + $0x70] sm:$0xff]
      %v522 = vld [vmem:[#allocation3 + $0x78] sm:$0xff]
      %v523 = vld [vmem:[#allocation3 + $0x80] sm:$0xff]
      %v524 = vld [vmem:[#allocation3 + $0x88] sm:$0xff]
      %v525 = vld [vmem:[#allocation3 + $0x90] sm:$0xff]
      %v526 = vld [vmem:[#allocation3 + $0x98] sm:$0xff]
      %v527 = vld [vmem:[#allocation3 + $0xa0] sm:$0xff]
      %v528 = vld [vmem:[#allocation3 + $0xa8] sm:$0xff]
      %v529 = vld [vmem:[#allocation3 + $0xb0] sm:$0xff]
      %v530 = vld [vmem:[#allocation3 + $0xb8] sm:$0xff]
      %v531 = vld [vmem:[#allocation3 + $0xc0] sm:$0xff]
      %v532 = vld [vmem:[#allocation3 + $0xc8] sm:$0xff]
      %v533 = vld [vmem:[#allocation3 + $0xd0] sm:$0xff]
      %v534 = vld [vmem:[#allocation3 + $0xd8] sm:$0xff]
      %v535 = vld [vmem:[#allocation3 + $0xe0] sm:$0xff]
      %v536 = vld [vmem:[#allocation3 + $0xe8] sm:$0xff]
      %v537 = vld [vmem:[#allocation3 + $0xf0] sm:$0xff]
      %v538 = vld [vmem:[#allocation3 + $0xf8] sm:$0xff]
      %v539 = vld [vmem:[%s2] sm:$0xf]
      %v540 = vld [vmem:[%s2 + $0x4] sm:$0xf]
      %v541 = vld [vmem:[%s2 + $0x8] sm:$0xf]
      %v542 = vld [vmem:[%s2 + $0xc] sm:$0xf]
      %v543 = vld [vmem:[%s2 + $0x10] sm:$0xf]
      %v544 = vld [vmem:[%s2 + $0x14] sm:$0xf]
      %v545 = vld [vmem:[%s2 + $0x18] sm:$0xf]
      %v546 = vld [vmem:[%s2 + $0x1c] sm:$0xf]
      %v547 = vld [vmem:[%s2 + $0x20] sm:$0xf]
      %v548 = vld [vmem:[%s2 + $0x24] sm:$0xf]
      %v549 = vld [vmem:[%s2 + $0x28] sm:$0xf]
      %v550 = vld [vmem:[%s2 + $0x2c] sm:$0xf]
      %v551 = vld [vmem:[%s2 + $0x30] sm:$0xf]
      %v552 = vld [vmem:[%s2 + $0x34] sm:$0xf]
      %v553 = vld [vmem:[%s2 + $0x38] sm:$0xf]
      %v554 = vld [vmem:[%s2 + $0x3c] sm:$0xf]
      %v571 = vunpack.c.l.b16 %v539
      %v572 = vunpack.c.l.b16 %v540
      %v573 = vunpack.c.l.b16 %v541
      %v574 = vunpack.c.l.b16 %v542
      %v575 = vunpack.c.l.b16 %v543
      %v576 = vunpack.c.l.b16 %v544
      %v577 = vunpack.c.l.b16 %v545
      %v578 = vunpack.c.l.b16 %v546
      %v579 = vunpack.c.l.b16 %v547
      %v580 = vunpack.c.l.b16 %v548
      %v581 = vunpack.c.l.b16 %v549
      %v582 = vunpack.c.l.b16 %v550
      %v583 = vunpack.c.l.b16 %v551
      %v584 = vunpack.c.l.b16 %v552
      %v585 = vunpack.c.l.b16 %v553
      %v586 = vunpack.c.l.b16 %v554
      %v587 = vpack.c.b16 %v572, %v571
      %v588 = vpack.c.b16 %v574, %v573
      %v589 = vpack.c.b16 %v576, %v575
      %v590 = vpack.c.b16 %v578, %v577
      %v591 = vpack.c.b16 %v580, %v579
      %v592 = vpack.c.b16 %v582, %v581
      %v593 = vpack.c.b16 %v584, %v583
      %v594 = vpack.c.b16 %v586, %v585
      %603 = vmatprep.subr.bf16.mxu0 0
      %604 = vmatpush1.bf16.msra.mxu0 %v587
      %605 = vmatprep.subr.bf16.mxu0 0
      %606 = vmatpush1.bf16.msra.mxu0 %v588
      %607 = vmatprep.subr.bf16.mxu0 0
      %608 = vmatpush1.bf16.msra.mxu0 %v589
      %609 = vmatprep.subr.bf16.mxu0 0
      %610 = vmatpush1.bf16.msra.mxu0 %v590
      %611 = vmatprep.subr.bf16.mxu0 0
      %612 = vmatpush1.bf16.msra.mxu0 %v591
      %613 = vmatprep.subr.bf16.mxu0 0
      %614 = vmatpush1.bf16.msra.mxu0 %v592
      %615 = vmatprep.subr.bf16.mxu0 0
      %616 = vmatpush1.bf16.msra.mxu0 %v593
      %617 = vmatprep.subr.bf16.mxu0 0
      %618 = vmatpush1.bf16.msra.mxu0 %v594
      %619 = vmatprep.subr.bf16.mxu0 0
      %620 = vmatpush1.bf16.msra.mxu0 0
      %621 = vmatprep.subr.bf16.mxu0 0
      %622 = vmatpush1.bf16.msra.mxu0 0
      %623 = vmatprep.subr.bf16.mxu0 0
      %624 = vmatpush1.bf16.msra.mxu0 0
      %625 = vmatprep.subr.bf16.mxu0 0
      %626 = vmatpush1.bf16.msra.mxu0 0
      %627 = vmatprep.subr.bf16.mxu0 0
      %628 = vmatpush1.bf16.msra.mxu0 0
      %629 = vmatprep.subr.bf16.mxu0 0
      %630 = vmatpush1.bf16.msra.mxu0 0
      %631 = vmatprep.subr.bf16.mxu0 0
      %632 = vmatpush1.bf16.msra.mxu0 0
      %633 = vmatprep.subr.bf16.mxu0 0
      %634 = vmatpush1.bf16.msra.mxu0 0
      %635 = vmatprep.mubr.bf16.mxu0 0
      %636 = vmatmul.mubr.bf16.gmra.mrb[0].mxu0 %v491
      %v637 = vpop.f32.mrb[0].mxu0
      %v638 = vadd.f32 0.0, %v637
      %v639 = vpop.f32.mrb[0].mxu0
      %v640 = vpop.f32.mrb[0].mxu0
      %v641 = vadd.f32 0.0, %v640
      %v642 = vpop.f32.mrb[0].mxu0
      %643 = vmatprep.mubr.bf16.mxu0 0
      %644 = vmatmul.mubr.bf16.gmra.mrb[0].mxu0 %v492
      %v645 = vpop.f32.mrb[0].mxu0
      %v646 = vadd.f32 0.0, %v645
      %v647 = vpop.f32.mrb[0].mxu0
      %v648 = vpop.f32.mrb[0].mxu0
      %v649 = vadd.f32 0.0, %v648
      %v650 = vpop.f32.mrb[0].mxu0
      %651 = vmatprep.mubr.bf16.mxu0 0
      %652 = vmatmul.mubr.bf16.gmra.mrb[0].mxu0 %v493
      %v653 = vpop.f32.mrb[0].mxu0
      %v654 = vadd.f32 0.0, %v653
      %v655 = vpop.f32.mrb[0].mxu0
      %v656 = vpop.f32.mrb[0].mxu0
      %v657 = vadd.f32 0.0, %v656
      %v658 = vpop.f32.mrb[0].mxu0
      %659 = vmatprep.mubr.bf16.mxu0 0
      %660 = vmatmul.mubr.bf16.gmra.mrb[0].mxu0 %v494
      %v661 = vpop.f32.mrb[0].mxu0
      %v662 = vadd.f32 0.0, %v661
      %v663 = vpop.f32.mrb[0].mxu0
      %v664 = vpop.f32.mrb[0].mxu0
      %v665 = vadd.f32 0.0, %v664
      %v666 = vpop.f32.mrb[0].mxu0
      %667 = vmatprep.mubr.bf16.mxu0 0
      %668 = vmatmul.mubr.bf16.gmra.mrb[0].mxu0 %v495
      %v669 = vpop.f32.mrb[0].mxu0
      %v670 = vadd.f32 0.0, %v669
      %v671 = vpop.f32.mrb[0].mxu0
      %v672 = vpop.f32.mrb[0].mxu0
      %v673 = vadd.f32 0.0, %v672
      %v674 = vpop.f32.mrb[0].mxu0
      %675 = vmatprep.mubr.bf16.mxu0 0
      %676 = vmatmul.mubr.bf16.gmra.mrb[0].mxu0 %v496
      %v677 = vpop.f32.mrb[0].mxu0
      %v678 = vadd.f32 0.0, %v677
      %v679 = vpop.f32.mrb[0].mxu0
      %v680 = vpop.f32.mrb[0].mxu0
      %v681 = vadd.f32 0.0, %v680
      %v682 = vpop.f32.mrb[0].mxu0
      %683 = vmatprep.mubr.bf16.mxu0 0
      %684 = vmatmul.mubr.bf16.gmra.mrb[0].mxu0 %v497
      %v685 = vpop.f32.mrb[0].mxu0
      %v686 = vadd.f32 0.0, %v685
      %v687 = vpop.f32.mrb[0].mxu0
      %v688 = vpop.f32.mrb[0].mxu0
      %v689 = vadd.f32 0.0, %v688
      %v690 = vpop.f32.mrb[0].mxu0
      %691 = vmatprep.mubr.bf16.mxu0 0
      %692 = vmatmul.mubr.bf16.gmra.mrb[0].mxu0 %v498
      %v693 = vpop.f32.mrb[0].mxu0
      %v694 = vadd.f32 0.0, %v693
      %v695 = vpop.f32.mrb[0].mxu0
      %v696 = vpop.f32.mrb[0].mxu0
      %v697 = vadd.f32 0.0, %v696
      %v698 = vpop.f32.mrb[0].mxu0
      %699 = vmatprep.mubr.bf16.mxu0 0
      %700 = vmatmul.mubr.bf16.gmra.mrb[0].mxu0 %v499
      %v701 = vpop.f32.mrb[0].mxu0
      %v702 = vadd.f32 0.0, %v701
      %v703 = vpop.f32.mrb[0].mxu0
      %v704 = vpop.f32.mrb[0].mxu0
      %v705 = vadd.f32 0.0, %v704
      %v706 = vpop.f32.mrb[0].mxu0
      %707 = vmatprep.mubr.bf16.mxu0 0
      %708 = vmatmul.mubr.bf16.gmra.mrb[0].mxu0 %v500
      %v709 = vpop.f32.mrb[0].mxu0
      %v710 = vadd.f32 0.0, %v709
      %v711 = vpop.f32.mrb[0].mxu0
      %v712 = vpop.f32.mrb[0].mxu0
      %v713 = vadd.f32 0.0, %v712
      %v714 = vpop.f32.mrb[0].mxu0
      %715 = vmatprep.mubr.bf16.mxu0 0
      %716 = vmatmul.mubr.bf16.gmra.mrb[0].mxu0 %v501
      %v717 = vpop.f32.mrb[0].mxu0
      %v718 = vadd.f32 0.0, %v717
      %v719 = vpop.f32.mrb[0].mxu0
      %v720 = vpop.f32.mrb[0].mxu0
      %v721 = vadd.f32 0.0, %v720
      %v722 = vpop.f32.mrb[0].mxu0
      %723 = vmatprep.mubr.bf16.mxu0 0
      %724 = vmatmul.mubr.bf16.gmra.mrb[0].mxu0 %v502
      %v725 = vpop.f32.mrb[0].mxu0
      %v726 = vadd.f32 0.0, %v725
      %v727 = vpop.f32.mrb[0].mxu0
      %v728 = vpop.f32.mrb[0].mxu0
      %v729 = vadd.f32 0.0, %v728
      %v730 = vpop.f32.mrb[0].mxu0
      %731 = vmatprep.mubr.bf16.mxu0 0
      %732 = vmatmul.mubr.bf16.gmra.mrb[0].mxu0 %v503
      %v733 = vpop.f32.mrb[0].mxu0
      %v734 = vadd.f32 0.0, %v733
      %v735 = vpop.f32.mrb[0].mxu0
      %v736 = vpop.f32.mrb[0].mxu0
      %v737 = vadd.f32 0.0, %v736
      %v738 = vpop.f32.mrb[0].mxu0
      %739 = vmatprep.mubr.bf16.mxu0 0
      %740 = vmatmul.mubr.bf16.gmra.mrb[0].mxu0 %v504
      %v741 = vpop.f32.mrb[0].mxu0
      %v742 = vadd.f32 0.0, %v741
      %v743 = vpop.f32.mrb[0].mxu0
      %v744 = vpop.f32.mrb[0].mxu0
      %v745 = vadd.f32 0.0, %v744
      %v746 = vpop.f32.mrb[0].mxu0
      %747 = vmatprep.mubr.bf16.mxu0 0
      %748 = vmatmul.mubr.bf16.gmra.mrb[0].mxu0 %v505
      %v749 = vpop.f32.mrb[0].mxu0
      %v750 = vadd.f32 0.0, %v749
      %v751 = vpop.f32.mrb[0].mxu0
      %v752 = vpop.f32.mrb[0].mxu0
      %v753 = vadd.f32 0.0, %v752
      %v754 = vpop.f32.mrb[0].mxu0
      %755 = vmatprep.mubr.bf16.mxu0 0
      %756 = vmatmul.mubr.bf16.gmra.mrb[0].mxu0 %v506
      %v757 = vpop.f32.mrb[0].mxu0
      %v758 = vadd.f32 0.0, %v757
      %v759 = vpop.f32.mrb[0].mxu0
      %v760 = vpop.f32.mrb[0].mxu0
      %v761 = vadd.f32 0.0, %v760
      %v762 = vpop.f32.mrb[0].mxu0
      %763 = vdwg.mxu0
      %v764 = vadd.f32 %v507, %v638
      %v765 = vadd.f32 %v508, %v641
      %v766 = vadd.f32 %v509, %v646
      %v767 = vadd.f32 %v510, %v649
      %v768 = vadd.f32 %v511, %v654
      %v769 = vadd.f32 %v512, %v657
      %v770 = vadd.f32 %v513, %v662
      %v771 = vadd.f32 %v514, %v665
      %v772 = vadd.f32 %v515, %v670
      %v773 = vadd.f32 %v516, %v673
      %v774 = vadd.f32 %v517, %v678
      %v775 = vadd.f32 %v518, %v681
      %v776 = vadd.f32 %v519, %v686
      %v777 = vadd.f32 %v520, %v689
      %v778 = vadd.f32 %v521, %v694
      %v779 = vadd.f32 %v522, %v697
      %v780 = vadd.f32 %v523, %v702
      %v781 = vadd.f32 %v524, %v705
      %v782 = vadd.f32 %v525, %v710
      %v783 = vadd.f32 %v526, %v713
      %v784 = vadd.f32 %v527, %v718
      %v785 = vadd.f32 %v528, %v721
      %v786 = vadd.f32 %v529, %v726
      %v787 = vadd.f32 %v530, %v729
      %v788 = vadd.f32 %v531, %v734
      %v789 = vadd.f32 %v532, %v737
      %v790 = vadd.f32 %v533, %v742
      %v791 = vadd.f32 %v534, %v745
      %v792 = vadd.f32 %v535, %v750
      %v793 = vadd.f32 %v536, %v753
      %v794 = vadd.f32 %v537, %v758
      %v795 = vadd.f32 %v538, %v761
      %796 = vst [vmem:[#allocation3] sm:$0xff] %v764
      %797 = vst [vmem:[#allocation3 + $0x8] sm:$0xff] %v765
      %798 = vst [vmem:[#allocation3 + $0x10] sm:$0xff] %v766
      %799 = vst [vmem:[#allocation3 + $0x18] sm:$0xff] %v767
      %800 = vst [vmem:[#allocation3 + $0x20] sm:$0xff] %v768
      %801 = vst [vmem:[#allocation3 + $0x28] sm:$0xff] %v769
      %802 = vst [vmem:[#allocation3 + $0x30] sm:$0xff] %v770
      %803 = vst [vmem:[#allocation3 + $0x38] sm:$0xff] %v771
      %804 = vst [vmem:[#allocation3 + $0x40] sm:$0xff] %v772
      %805 = vst [vmem:[#allocation3 + $0x48] sm:$0xff] %v773
      %806 = vst [vmem:[#allocation3 + $0x50] sm:$0xff] %v774
      %807 = vst [vmem:[#allocation3 + $0x58] sm:$0xff] %v775
      %808 = vst [vmem:[#allocation3 + $0x60] sm:$0xff] %v776
      %809 = vst [vmem:[#allocation3 + $0x68] sm:$0xff] %v777
      %810 = vst [vmem:[#allocation3 + $0x70] sm:$0xff] %v778
      %811 = vst [vmem:[#allocation3 + $0x78] sm:$0xff] %v779
      %812 = vst [vmem:[#allocation3 + $0x80] sm:$0xff] %v780
      %813 = vst [vmem:[#allocation3 + $0x88] sm:$0xff] %v781
      %814 = vst [vmem:[#allocation3 + $0x90] sm:$0xff] %v782
      %815 = vst [vmem:[#allocation3 + $0x98] sm:$0xff] %v783
      %816 = vst [vmem:[#allocation3 + $0xa0] sm:$0xff] %v784
      %817 = vst [vmem:[#allocation3 + $0xa8] sm:$0xff] %v785
      %818 = vst [vmem:[#allocation3 + $0xb0] sm:$0xff] %v786
      %819 = vst [vmem:[#allocation3 + $0xb8] sm:$0xff] %v787
      %820 = vst [vmem:[#allocation3 + $0xc0] sm:$0xff] %v788
      %821 = vst [vmem:[#allocation3 + $0xc8] sm:$0xff] %v789
      %822 = vst [vmem:[#allocation3 + $0xd0] sm:$0xff] %v790
      %823 = vst [vmem:[#allocation3 + $0xd8] sm:$0xff] %v791
      %824 = vst [vmem:[#allocation3 + $0xe0] sm:$0xff] %v792
      %825 = vst [vmem:[#allocation3 + $0xe8] sm:$0xff] %v793
      %826 = vst [vmem:[#allocation3 + $0xf0] sm:$0xff] %v794
      %827 = vst [vmem:[#allocation3 + $0xf8] sm:$0xff] %v795
      %v828 = vld [vmem:[#allocation2 + $0x1] sm:$0xff]
      %v829 = vld [vmem:[#allocation2 + $0x9] sm:$0xff]
      %v830 = vld [vmem:[#allocation2 + $0x19] sm:$0xff]
      %v831 = vld [vmem:[#allocation2 + $0x21] sm:$0xff]
      %v832 = vld [vmem:[#allocation2 + $0x31] sm:$0xff]
      %v833 = vld [vmem:[#allocation2 + $0x39] sm:$0xff]
      %v834 = vld [vmem:[#allocation2 + $0x49] sm:$0xff]
      %v835 = vld [vmem:[#allocation2 + $0x51] sm:$0xff]
      %v836 = vld [vmem:[#allocation2 + $0x61] sm:$0xff]
      %v837 = vld [vmem:[#allocation2 + $0x69] sm:$0xff]
      %v838 = vld [vmem:[#allocation2 + $0x79] sm:$0xff]
      %v839 = vld [vmem:[#allocation2 + $0x81] sm:$0xff]
      %v840 = vld [vmem:[#allocation2 + $0x91] sm:$0xff]
      %v841 = vld [vmem:[#allocation2 + $0x99] sm:$0xff]
      %v842 = vld [vmem:[#allocation2 + $0xa9] sm:$0xff]
      %v843 = vld [vmem:[#allocation2 + $0xb1] sm:$0xff]
      %v844 = vld [vmem:[#allocation2 + $0xc1] sm:$0xff]
      %v845 = vld [vmem:[#allocation2 + $0xc9] sm:$0xff]
      %v846 = vld [vmem:[#allocation2 + $0xd9] sm:$0xff]
      %v847 = vld [vmem:[#allocation2 + $0xe1] sm:$0xff]
      %v848 = vld [vmem:[#allocation2 + $0xf1] sm:$0xff]
      %v849 = vld [vmem:[#allocation2 + $0xf9] sm:$0xff]
      %v850 = vld [vmem:[#allocation2 + $0x109] sm:$0xff]
      %v851 = vld [vmem:[#allocation2 + $0x111] sm:$0xff]
      %v852 = vld [vmem:[#allocation2 + $0x121] sm:$0xff]
      %v853 = vld [vmem:[#allocation2 + $0x129] sm:$0xff]
      %v854 = vld [vmem:[#allocation2 + $0x139] sm:$0xff]
      %v855 = vld [vmem:[#allocation2 + $0x141] sm:$0xff]
      %v856 = vld [vmem:[#allocation2 + $0x151] sm:$0xff]
      %v857 = vld [vmem:[#allocation2 + $0x159] sm:$0xff]
      %v858 = vld [vmem:[#allocation2 + $0x169] sm:$0xff]
      %v859 = vld [vmem:[#allocation2 + $0x171] sm:$0xff]
      %v860 = vpack.c.bf16 %v829, %v828
      %v861 = vpack.c.bf16 %v831, %v830
      %v862 = vpack.c.bf16 %v833, %v832
      %v863 = vpack.c.bf16 %v835, %v834
      %v864 = vpack.c.bf16 %v837, %v836
      %v865 = vpack.c.bf16 %v839, %v838
      %v866 = vpack.c.bf16 %v841, %v840
      %v867 = vpack.c.bf16 %v843, %v842
      %v868 = vpack.c.bf16 %v845, %v844
      %v869 = vpack.c.bf16 %v847, %v846
      %v870 = vpack.c.bf16 %v849, %v848
      %v871 = vpack.c.bf16 %v851, %v850
      %v872 = vpack.c.bf16 %v853, %v852
      %v873 = vpack.c.bf16 %v855, %v854
      %v874 = vpack.c.bf16 %v857, %v856
      %v875 = vpack.c.bf16 %v859, %v858
      %v876 = vld [vmem:[#allocation3] sm:$0xff]
      %v877 = vld [vmem:[#allocation3 + $0x8] sm:$0xff]
      %v878 = vld [vmem:[#allocation3 + $0x10] sm:$0xff]
      %v879 = vld [vmem:[#allocation3 + $0x18] sm:$0xff]
      %v880 = vld [vmem:[#allocation3 + $0x20] sm:$0xff]
      %v881 = vld [vmem:[#allocation3 + $0x28] sm:$0xff]
      %v882 = vld [vmem:[#allocation3 + $0x30] sm:$0xff]
      %v883 = vld [vmem:[#allocation3 + $0x38] sm:$0xff]
      %v884 = vld [vmem:[#allocation3 + $0x40] sm:$0xff]
      %v885 = vld [vmem:[#allocation3 + $0x48] sm:$0xff]
      %v886 = vld [vmem:[#allocation3 + $0x50] sm:$0xff]
      %v887 = vld [vmem:[#allocation3 + $0x58] sm:$0xff]
      %v888 = vld [vmem:[#allocation3 + $0x60] sm:$0xff]
      %v889 = vld [vmem:[#allocation3 + $0x68] sm:$0xff]
      %v890 = vld [vmem:[#allocation3 + $0x70] sm:$0xff]
      %v891 = vld [vmem:[#allocation3 + $0x78] sm:$0xff]
      %v892 = vld [vmem:[#allocation3 + $0x80] sm:$0xff]
      %v893 = vld [vmem:[#allocation3 + $0x88] sm:$0xff]
      %v894 = vld [vmem:[#allocation3 + $0x90] sm:$0xff]
      %v895 = vld [vmem:[#allocation3 + $0x98] sm:$0xff]
      %v896 = vld [vmem:[#allocation3 + $0xa0] sm:$0xff]
      %v897 = vld [vmem:[#allocation3 + $0xa8] sm:$0xff]
      %v898 = vld [vmem:[#allocation3 + $0xb0] sm:$0xff]
      %v899 = vld [vmem:[#allocation3 + $0xb8] sm:$0xff]
      %v900 = vld [vmem:[#allocation3 + $0xc0] sm:$0xff]
      %v901 = vld [vmem:[#allocation3 + $0xc8] sm:$0xff]
      %v902 = vld [vmem:[#allocation3 + $0xd0] sm:$0xff]
      %v903 = vld [vmem:[#allocation3 + $0xd8] sm:$0xff]
      %v904 = vld [vmem:[#allocation3 + $0xe0] sm:$0xff]
      %v905 = vld [vmem:[#allocation3 + $0xe8] sm:$0xff]
      %v906 = vld [vmem:[#allocation3 + $0xf0] sm:$0xff]
      %v907 = vld [vmem:[#allocation3 + $0xf8] sm:$0xff]
      %s908 = scalar_lea.vmem %s2, 64
      %v909 = vld [vmem:[%s908] sm:$0xf]
      %v910 = vld [vmem:[%s908 + $0x4] sm:$0xf]
      %v911 = vld [vmem:[%s908 + $0x8] sm:$0xf]
      %v912 = vld [vmem:[%s908 + $0xc] sm:$0xf]
      %v913 = vld [vmem:[%s908 + $0x10] sm:$0xf]
      %v914 = vld [vmem:[%s908 + $0x14] sm:$0xf]
      %v915 = vld [vmem:[%s908 + $0x18] sm:$0xf]
      %v916 = vld [vmem:[%s908 + $0x1c] sm:$0xf]
      %v917 = vld [vmem:[%s908 + $0x20] sm:$0xf]
      %v918 = vld [vmem:[%s908 + $0x24] sm:$0xf]
      %v919 = vld [vmem:[%s908 + $0x28] sm:$0xf]
      %v920 = vld [vmem:[%s908 + $0x2c] sm:$0xf]
      %v921 = vld [vmem:[%s908 + $0x30] sm:$0xf]
      %v922 = vld [vmem:[%s908 + $0x34] sm:$0xf]
      %v923 = vld [vmem:[%s908 + $0x38] sm:$0xf]
      %v924 = vld [vmem:[%s908 + $0x3c] sm:$0xf]
      %v941 = vunpack.c.l.b16 %v909
      %v942 = vunpack.c.l.b16 %v910
      %v943 = vunpack.c.l.b16 %v911
      %v944 = vunpack.c.l.b16 %v912
      %v945 = vunpack.c.l.b16 %v913
      %v946 = vunpack.c.l.b16 %v914
      %v947 = vunpack.c.l.b16 %v915
      %v948 = vunpack.c.l.b16 %v916
      %v949 = vunpack.c.l.b16 %v917
      %v950 = vunpack.c.l.b16 %v918
      %v951 = vunpack.c.l.b16 %v919
      %v952 = vunpack.c.l.b16 %v920
      %v953 = vunpack.c.l.b16 %v921
      %v954 = vunpack.c.l.b16 %v922
      %v955 = vunpack.c.l.b16 %v923
      %v956 = vunpack.c.l.b16 %v924
      %v957 = vpack.c.b16 %v942, %v941
      %v958 = vpack.c.b16 %v944, %v943
      %v959 = vpack.c.b16 %v946, %v945
      %v960 = vpack.c.b16 %v948, %v947
      %v961 = vpack.c.b16 %v950, %v949
      %v962 = vpack.c.b16 %v952, %v951
      %v963 = vpack.c.b16 %v954, %v953
      %v964 = vpack.c.b16 %v956, %v955
      %973 = vmatprep.subr.bf16.mxu0 0
      %974 = vmatpush1.bf16.msra.mxu0 %v957
      %975 = vmatprep.subr.bf16.mxu0 0
      %976 = vmatpush1.bf16.msra.mxu0 %v958
      %977 = vmatprep.subr.bf16.mxu0 0
      %978 = vmatpush1.bf16.msra.mxu0 %v959
      %979 = vmatprep.subr.bf16.mxu0 0
      %980 = vmatpush1.bf16.msra.mxu0 %v960
      %981 = vmatprep.subr.bf16.mxu0 0
      %982 = vmatpush1.bf16.msra.mxu0 %v961
      %983 = vmatprep.subr.bf16.mxu0 0
      %984 = vmatpush1.bf16.msra.mxu0 %v962
      %985 = vmatprep.subr.bf16.mxu0 0
      %986 = vmatpush1.bf16.msra.mxu0 %v963
      %987 = vmatprep.subr.bf16.mxu0 0
      %988 = vmatpush1.bf16.msra.mxu0 %v964
      %989 = vmatprep.subr.bf16.mxu0 0
      %990 = vmatpush1.bf16.msra.mxu0 0
      %991 = vmatprep.subr.bf16.mxu0 0
      %992 = vmatpush1.bf16.msra.mxu0 0
      %993 = vmatprep.subr.bf16.mxu0 0
      %994 = vmatpush1.bf16.msra.mxu0 0
      %995 = vmatprep.subr.bf16.mxu0 0
      %996 = vmatpush1.bf16.msra.mxu0 0
      %997 = vmatprep.subr.bf16.mxu0 0
      %998 = vmatpush1.bf16.msra.mxu0 0
      %999 = vmatprep.subr.bf16.mxu0 0
      %1000 = vmatpush1.bf16.msra.mxu0 0
      %1001 = vmatprep.subr.bf16.mxu0 0
      %1002 = vmatpush1.bf16.msra.mxu0 0
      %1003 = vmatprep.subr.bf16.mxu0 0
      %1004 = vmatpush1.bf16.msra.mxu0 0
      %1005 = vmatprep.mubr.bf16.mxu0 0
      %1006 = vmatmul.mubr.bf16.gmra.mrb[0].mxu0 %v860
      %v1007 = vpop.f32.mrb[0].mxu0
      %v1008 = vadd.f32 0.0, %v1007
      %v1009 = vpop.f32.mrb[0].mxu0
      %v1010 = vpop.f32.mrb[0].mxu0
      %v1011 = vadd.f32 0.0, %v1010
      %v1012 = vpop.f32.mrb[0].mxu0
      %1013 = vmatprep.mubr.bf16.mxu0 0
      %1014 = vmatmul.mubr.bf16.gmra.mrb[0].mxu0 %v861
      %v1015 = vpop.f32.mrb[0].mxu0
      %v1016 = vadd.f32 0.0, %v1015
      %v1017 = vpop.f32.mrb[0].mxu0
      %v1018 = vpop.f32.mrb[0].mxu0
      %v1019 = vadd.f32 0.0, %v1018
      %v1020 = vpop.f32.mrb[0].mxu0
      %1021 = vmatprep.mubr.bf16.mxu0 0
      %1022 = vmatmul.mubr.bf16.gmra.mrb[0].mxu0 %v862
      %v1023 = vpop.f32.mrb[0].mxu0
      %v1024 = vadd.f32 0.0, %v1023
      %v1025 = vpop.f32.mrb[0].mxu0
      %v1026 = vpop.f32.mrb[0].mxu0
      %v1027 = vadd.f32 0.0, %v1026
      %v1028 = vpop.f32.mrb[0].mxu0
      %1029 = vmatprep.mubr.bf16.mxu0 0
      %1030 = vmatmul.mubr.bf16.gmra.mrb[0].mxu0 %v863
      %v1031 = vpop.f32.mrb[0].mxu0
      %v1032 = vadd.f32 0.0, %v1031
      %v1033 = vpop.f32.mrb[0].mxu0
      %v1034 = vpop.f32.mrb[0].mxu0
      %v1035 = vadd.f32 0.0, %v1034
      %v1036 = vpop.f32.mrb[0].mxu0
      %1037 = vmatprep.mubr.bf16.mxu0 0
      %1038 = vmatmul.mubr.bf16.gmra.mrb[0].mxu0 %v864
      %v1039 = vpop.f32.mrb[0].mxu0
      %v1040 = vadd.f32 0.0, %v1039
      %v1041 = vpop.f32.mrb[0].mxu0
      %v1042 = vpop.f32.mrb[0].mxu0
      %v1043 = vadd.f32 0.0, %v1042
      %v1044 = vpop.f32.mrb[0].mxu0
      %1045 = vmatprep.mubr.bf16.mxu0 0
      %1046 = vmatmul.mubr.bf16.gmra.mrb[0].mxu0 %v865
      %v1047 = vpop.f32.mrb[0].mxu0
      %v1048 = vadd.f32 0.0, %v1047
      %v1049 = vpop.f32.mrb[0].mxu0
      %v1050 = vpop.f32.mrb[0].mxu0
      %v1051 = vadd.f32 0.0, %v1050
      %v1052 = vpop.f32.mrb[0].mxu0
      %1053 = vmatprep.mubr.bf16.mxu0 0
      %1054 = vmatmul.mubr.bf16.gmra.mrb[0].mxu0 %v866
      %v1055 = vpop.f32.mrb[0].mxu0
      %v1056 = vadd.f32 0.0, %v1055
      %v1057 = vpop.f32.mrb[0].mxu0
      %v1058 = vpop.f32.mrb[0].mxu0
      %v1059 = vadd.f32 0.0, %v1058
      %v1060 = vpop.f32.mrb[0].mxu0
      %1061 = vmatprep.mubr.bf16.mxu0 0
      %1062 = vmatmul.mubr.bf16.gmra.mrb[0].mxu0 %v867
      %v1063 = vpop.f32.mrb[0].mxu0
      %v1064 = vadd.f32 0.0, %v1063
      %v1065 = vpop.f32.mrb[0].mxu0
      %v1066 = vpop.f32.mrb[0].mxu0
      %v1067 = vadd.f32 0.0, %v1066
      %v1068 = vpop.f32.mrb[0].mxu0
      %1069 = vmatprep.mubr.bf16.mxu0 0
      %1070 = vmatmul.mubr.bf16.gmra.mrb[0].mxu0 %v868
      %v1071 = vpop.f32.mrb[0].mxu0
      %v1072 = vadd.f32 0.0, %v1071
      %v1073 = vpop.f32.mrb[0].mxu0
      %v1074 = vpop.f32.mrb[0].mxu0
      %v1075 = vadd.f32 0.0, %v1074
      %v1076 = vpop.f32.mrb[0].mxu0
      %1077 = vmatprep.mubr.bf16.mxu0 0
      %1078 = vmatmul.mubr.bf16.gmra.mrb[0].mxu0 %v869
      %v1079 = vpop.f32.mrb[0].mxu0
      %v1080 = vadd.f32 0.0, %v1079
      %v1081 = vpop.f32.mrb[0].mxu0
      %v1082 = vpop.f32.mrb[0].mxu0
      %v1083 = vadd.f32 0.0, %v1082
      %v1084 = vpop.f32.mrb[0].mxu0
      %1085 = vmatprep.mubr.bf16.mxu0 0
      %1086 = vmatmul.mubr.bf16.gmra.mrb[0].mxu0 %v870
      %v1087 = vpop.f32.mrb[0].mxu0
      %v1088 = vadd.f32 0.0, %v1087
      %v1089 = vpop.f32.mrb[0].mxu0
      %v1090 = vpop.f32.mrb[0].mxu0
      %v1091 = vadd.f32 0.0, %v1090
      %v1092 = vpop.f32.mrb[0].mxu0
      %1093 = vmatprep.mubr.bf16.mxu0 0
      %1094 = vmatmul.mubr.bf16.gmra.mrb[0].mxu0 %v871
      %v1095 = vpop.f32.mrb[0].mxu0
      %v1096 = vadd.f32 0.0, %v1095
      %v1097 = vpop.f32.mrb[0].mxu0
      %v1098 = vpop.f32.mrb[0].mxu0
      %v1099 = vadd.f32 0.0, %v1098
      %v1100 = vpop.f32.mrb[0].mxu0
      %1101 = vmatprep.mubr.bf16.mxu0 0
      %1102 = vmatmul.mubr.bf16.gmra.mrb[0].mxu0 %v872
      %v1103 = vpop.f32.mrb[0].mxu0
      %v1104 = vadd.f32 0.0, %v1103
      %v1105 = vpop.f32.mrb[0].mxu0
      %v1106 = vpop.f32.mrb[0].mxu0
      %v1107 = vadd.f32 0.0, %v1106
      %v1108 = vpop.f32.mrb[0].mxu0
      %1109 = vmatprep.mubr.bf16.mxu0 0
      %1110 = vmatmul.mubr.bf16.gmra.mrb[0].mxu0 %v873
      %v1111 = vpop.f32.mrb[0].mxu0
      %v1112 = vadd.f32 0.0, %v1111
      %v1113 = vpop.f32.mrb[0].mxu0
      %v1114 = vpop.f32.mrb[0].mxu0
      %v1115 = vadd.f32 0.0, %v1114
      %v1116 = vpop.f32.mrb[0].mxu0
      %1117 = vmatprep.mubr.bf16.mxu0 0
      %1118 = vmatmul.mubr.bf16.gmra.mrb[0].mxu0 %v874
      %v1119 = vpop.f32.mrb[0].mxu0
      %v1120 = vadd.f32 0.0, %v1119
      %v1121 = vpop.f32.mrb[0].mxu0
      %v1122 = vpop.f32.mrb[0].mxu0
      %v1123 = vadd.f32 0.0, %v1122
      %v1124 = vpop.f32.mrb[0].mxu0
      %1125 = vmatprep.mubr.bf16.mxu0 0
      %1126 = vmatmul.mubr.bf16.gmra.mrb[0].mxu0 %v875
      %v1127 = vpop.f32.mrb[0].mxu0
      %v1128 = vadd.f32 0.0, %v1127
      %v1129 = vpop.f32.mrb[0].mxu0
      %v1130 = vpop.f32.mrb[0].mxu0
      %v1131 = vadd.f32 0.0, %v1130
      %v1132 = vpop.f32.mrb[0].mxu0
      %1133 = vdwg.mxu0
      %v1134 = vadd.f32 %v876, %v1008
      %v1135 = vadd.f32 %v877, %v1011
      %v1136 = vadd.f32 %v878, %v1016
      %v1137 = vadd.f32 %v879, %v1019
      %v1138 = vadd.f32 %v880, %v1024
      %v1139 = vadd.f32 %v881, %v1027
      %v1140 = vadd.f32 %v882, %v1032
      %v1141 = vadd.f32 %v883, %v1035
      %v1142 = vadd.f32 %v884, %v1040
      %v1143 = vadd.f32 %v885, %v1043
      %v1144 = vadd.f32 %v886, %v1048
      %v1145 = vadd.f32 %v887, %v1051
      %v1146 = vadd.f32 %v888, %v1056
      %v1147 = vadd.f32 %v889, %v1059
      %v1148 = vadd.f32 %v890, %v1064
      %v1149 = vadd.f32 %v891, %v1067
      %v1150 = vadd.f32 %v892, %v1072
      %v1151 = vadd.f32 %v893, %v1075
      %v1152 = vadd.f32 %v894, %v1080
      %v1153 = vadd.f32 %v895, %v1083
      %v1154 = vadd.f32 %v896, %v1088
      %v1155 = vadd.f32 %v897, %v1091
      %v1156 = vadd.f32 %v898, %v1096
      %v1157 = vadd.f32 %v899, %v1099
      %v1158 = vadd.f32 %v900, %v1104
      %v1159 = vadd.f32 %v901, %v1107
      %v1160 = vadd.f32 %v902, %v1112
      %v1161 = vadd.f32 %v903, %v1115
      %v1162 = vadd.f32 %v904, %v1120
      %v1163 = vadd.f32 %v905, %v1123
      %v1164 = vadd.f32 %v906, %v1128
      %v1165 = vadd.f32 %v907, %v1131
      %1166 = vst [vmem:[#allocation3] sm:$0xff] %v1134
      %1167 = vst [vmem:[#allocation3 + $0x8] sm:$0xff] %v1135
      %1168 = vst [vmem:[#allocation3 + $0x10] sm:$0xff] %v1136
      %1169 = vst [vmem:[#allocation3 + $0x18] sm:$0xff] %v1137
      %1170 = vst [vmem:[#allocation3 + $0x20] sm:$0xff] %v1138
      %1171 = vst [vmem:[#allocation3 + $0x28] sm:$0xff] %v1139
      %1172 = vst [vmem:[#allocation3 + $0x30] sm:$0xff] %v1140
      %1173 = vst [vmem:[#allocation3 + $0x38] sm:$0xff] %v1141
      %1174 = vst [vmem:[#allocation3 + $0x40] sm:$0xff] %v1142
      %1175 = vst [vmem:[#allocation3 + $0x48] sm:$0xff] %v1143
      %1176 = vst [vmem:[#allocation3 + $0x50] sm:$0xff] %v1144
      %1177 = vst [vmem:[#allocation3 + $0x58] sm:$0xff] %v1145
      %1178 = vst [vmem:[#allocation3 + $0x60] sm:$0xff] %v1146
      %1179 = vst [vmem:[#allocation3 + $0x68] sm:$0xff] %v1147
      %1180 = vst [vmem:[#allocation3 + $0x70] sm:$0xff] %v1148
      %1181 = vst [vmem:[#allocation3 + $0x78] sm:$0xff] %v1149
      %1182 = vst [vmem:[#allocation3 + $0x80] sm:$0xff] %v1150
      %1183 = vst [vmem:[#allocation3 + $0x88] sm:$0xff] %v1151
      %1184 = vst [vmem:[#allocation3 + $0x90] sm:$0xff] %v1152
      %1185 = vst [vmem:[#allocation3 + $0x98] sm:$0xff] %v1153
      %1186 = vst [vmem:[#allocation3 + $0xa0] sm:$0xff] %v1154
      %1187 = vst [vmem:[#allocation3 + $0xa8] sm:$0xff] %v1155
      %1188 = vst [vmem:[#allocation3 + $0xb0] sm:$0xff] %v1156
      %1189 = vst [vmem:[#allocation3 + $0xb8] sm:$0xff] %v1157
      %1190 = vst [vmem:[#allocation3 + $0xc0] sm:$0xff] %v1158
      %1191 = vst [vmem:[#allocation3 + $0xc8] sm:$0xff] %v1159
      %1192 = vst [vmem:[#allocation3 + $0xd0] sm:$0xff] %v1160
      %1193 = vst [vmem:[#allocation3 + $0xd8] sm:$0xff] %v1161
      %1194 = vst [vmem:[#allocation3 + $0xe0] sm:$0xff] %v1162
      %1195 = vst [vmem:[#allocation3 + $0xe8] sm:$0xff] %v1163
      %1196 = vst [vmem:[#allocation3 + $0xf0] sm:$0xff] %v1164
      %1197 = vst [vmem:[#allocation3 + $0xf8] sm:$0xff] %v1165
      %v1198 = vld [vmem:[#allocation2 + $0x2] sm:$0xff]
      %v1199 = vld [vmem:[#allocation2 + $0xa] sm:$0xff]
      %v1200 = vld [vmem:[#allocation2 + $0x1a] sm:$0xff]
      %v1201 = vld [vmem:[#allocation2 + $0x22] sm:$0xff]
      %v1202 = vld [vmem:[#allocation2 + $0x32] sm:$0xff]
      %v1203 = vld [vmem:[#allocation2 + $0x3a] sm:$0xff]
      %v1204 = vld [vmem:[#allocation2 + $0x4a] sm:$0xff]
      %v1205 = vld [vmem:[#allocation2 + $0x52] sm:$0xff]
      %v1206 = vld [vmem:[#allocation2 + $0x62] sm:$0xff]
      %v1207 = vld [vmem:[#allocation2 + $0x6a] sm:$0xff]
      %v1208 = vld [vmem:[#allocation2 + $0x7a] sm:$0xff]
      %v1209 = vld [vmem:[#allocation2 + $0x82] sm:$0xff]
      %v1210 = vld [vmem:[#allocation2 + $0x92] sm:$0xff]
      %v1211 = vld [vmem:[#allocation2 + $0x9a] sm:$0xff]
      %v1212 = vld [vmem:[#allocation2 + $0xaa] sm:$0xff]
      %v1213 = vld [vmem:[#allocation2 + $0xb2] sm:$0xff]
      %v1214 = vld [vmem:[#allocation2 + $0xc2] sm:$0xff]
      %v1215 = vld [vmem:[#allocation2 + $0xca] sm:$0xff]
      %v1216 = vld [vmem:[#allocation2 + $0xda] sm:$0xff]
      %v1217 = vld [vmem:[#allocation2 + $0xe2] sm:$0xff]
      %v1218 = vld [vmem:[#allocation2 + $0xf2] sm:$0xff]
      %v1219 = vld [vmem:[#allocation2 + $0xfa] sm:$0xff]
      %v1220 = vld [vmem:[#allocation2 + $0x10a] sm:$0xff]
      %v1221 = vld [vmem:[#allocation2 + $0x112] sm:$0xff]
      %v1222 = vld [vmem:[#allocation2 + $0x122] sm:$0xff]
      %v1223 = vld [vmem:[#allocation2 + $0x12a] sm:$0xff]
      %v1224 = vld [vmem:[#allocation2 + $0x13a] sm:$0xff]
      %v1225 = vld [vmem:[#allocation2 + $0x142] sm:$0xff]
      %v1226 = vld [vmem:[#allocation2 + $0x152] sm:$0xff]
      %v1227 = vld [vmem:[#allocation2 + $0x15a] sm:$0xff]
      %v1228 = vld [vmem:[#allocation2 + $0x16a] sm:$0xff]
      %v1229 = vld [vmem:[#allocation2 + $0x172] sm:$0xff]
      %v1230 = vpack.c.bf16 %v1199, %v1198
      %v1231 = vpack.c.bf16 %v1201, %v1200
      %v1232 = vpack.c.bf16 %v1203, %v1202
      %v1233 = vpack.c.bf16 %v1205, %v1204
      %v1234 = vpack.c.bf16 %v1207, %v1206
      %v1235 = vpack.c.bf16 %v1209, %v1208
      %v1236 = vpack.c.bf16 %v1211, %v1210
      %v1237 = vpack.c.bf16 %v1213, %v1212
      %v1238 = vpack.c.bf16 %v1215, %v1214
      %v1239 = vpack.c.bf16 %v1217, %v1216
      %v1240 = vpack.c.bf16 %v1219, %v1218
      %v1241 = vpack.c.bf16 %v1221, %v1220
      %v1242 = vpack.c.bf16 %v1223, %v1222
      %v1243 = vpack.c.bf16 %v1225, %v1224
      %v1244 = vpack.c.bf16 %v1227, %v1226
      %v1245 = vpack.c.bf16 %v1229, %v1228
      %v1246 = vld [vmem:[#allocation3] sm:$0xff]
      %v1247 = vld [vmem:[#allocation3 + $0x8] sm:$0xff]
      %v1248 = vld [vmem:[#allocation3 + $0x10] sm:$0xff]
      %v1249 = vld [vmem:[#allocation3 + $0x18] sm:$0xff]
      %v1250 = vld [vmem:[#allocation3 + $0x20] sm:$0xff]
      %v1251 = vld [vmem:[#allocation3 + $0x28] sm:$0xff]
      %v1252 = vld [vmem:[#allocation3 + $0x30] sm:$0xff]
      %v1253 = vld [vmem:[#allocation3 + $0x38] sm:$0xff]
      %v1254 = vld [vmem:[#allocation3 + $0x40] sm:$0xff]
      %v1255 = vld [vmem:[#allocation3 + $0x48] sm:$0xff]
      %v1256 = vld [vmem:[#allocation3 + $0x50] sm:$0xff]
      %v1257 = vld [vmem:[#allocation3 + $0x58] sm:$0xff]
      %v1258 = vld [vmem:[#allocation3 + $0x60] sm:$0xff]
      %v1259 = vld [vmem:[#allocation3 + $0x68] sm:$0xff]
      %v1260 = vld [vmem:[#allocation3 + $0x70] sm:$0xff]
      %v1261 = vld [vmem:[#allocation3 + $0x78] sm:$0xff]
      %v1262 = vld [vmem:[#allocation3 + $0x80] sm:$0xff]
      %v1263 = vld [vmem:[#allocation3 + $0x88] sm:$0xff]
      %v1264 = vld [vmem:[#allocation3 + $0x90] sm:$0xff]
      %v1265 = vld [vmem:[#allocation3 + $0x98] sm:$0xff]
      %v1266 = vld [vmem:[#allocation3 + $0xa0] sm:$0xff]
      %v1267 = vld [vmem:[#allocation3 + $0xa8] sm:$0xff]
      %v1268 = vld [vmem:[#allocation3 + $0xb0] sm:$0xff]
      %v1269 = vld [vmem:[#allocation3 + $0xb8] sm:$0xff]
      %v1270 = vld [vmem:[#allocation3 + $0xc0] sm:$0xff]
      %v1271 = vld [vmem:[#allocation3 + $0xc8] sm:$0xff]
      %v1272 = vld [vmem:[#allocation3 + $0xd0] sm:$0xff]
      %v1273 = vld [vmem:[#allocation3 + $0xd8] sm:$0xff]
      %v1274 = vld [vmem:[#allocation3 + $0xe0] sm:$0xff]
      %v1275 = vld [vmem:[#allocation3 + $0xe8] sm:$0xff]
      %v1276 = vld [vmem:[#allocation3 + $0xf0] sm:$0xff]
      %v1277 = vld [vmem:[#allocation3 + $0xf8] sm:$0xff]
      %s1278 = scalar_lea.vmem %s2, 128
      %v1279 = vld [vmem:[%s1278] sm:$0xf]
      %v1280 = vld [vmem:[%s1278 + $0x4] sm:$0xf]
      %v1281 = vld [vmem:[%s1278 + $0x8] sm:$0xf]
      %v1282 = vld [vmem:[%s1278 + $0xc] sm:$0xf]
      %v1283 = vld [vmem:[%s1278 + $0x10] sm:$0xf]
      %v1284 = vld [vmem:[%s1278 + $0x14] sm:$0xf]
      %v1285 = vld [vmem:[%s1278 + $0x18] sm:$0xf]
      %v1286 = vld [vmem:[%s1278 + $0x1c] sm:$0xf]
      %v1287 = vld [vmem:[%s1278 + $0x20] sm:$0xf]
      %v1288 = vld [vmem:[%s1278 + $0x24] sm:$0xf]
      %v1289 = vld [vmem:[%s1278 + $0x28] sm:$0xf]
      %v1290 = vld [vmem:[%s1278 + $0x2c] sm:$0xf]
      %v1291 = vld [vmem:[%s1278 + $0x30] sm:$0xf]
      %v1292 = vld [vmem:[%s1278 + $0x34] sm:$0xf]
      %v1293 = vld [vmem:[%s1278 + $0x38] sm:$0xf]
      %v1294 = vld [vmem:[%s1278 + $0x3c] sm:$0xf]
      %v1311 = vunpack.c.l.b16 %v1279
      %v1312 = vunpack.c.l.b16 %v1280
      %v1313 = vunpack.c.l.b16 %v1281
      %v1314 = vunpack.c.l.b16 %v1282
      %v1315 = vunpack.c.l.b16 %v1283
      %v1316 = vunpack.c.l.b16 %v1284
      %v1317 = vunpack.c.l.b16 %v1285
      %v1318 = vunpack.c.l.b16 %v1286
      %v1319 = vunpack.c.l.b16 %v1287
      %v1320 = vunpack.c.l.b16 %v1288
      %v1321 = vunpack.c.l.b16 %v1289
      %v1322 = vunpack.c.l.b16 %v1290
      %v1323 = vunpack.c.l.b16 %v1291
      %v1324 = vunpack.c.l.b16 %v1292
      %v1325 = vunpack.c.l.b16 %v1293
      %v1326 = vunpack.c.l.b16 %v1294
      %v1327 = vpack.c.b16 %v1312, %v1311
      %v1328 = vpack.c.b16 %v1314, %v1313
      %v1329 = vpack.c.b16 %v1316, %v1315
      %v1330 = vpack.c.b16 %v1318, %v1317
      %v1331 = vpack.c.b16 %v1320, %v1319
      %v1332 = vpack.c.b16 %v1322, %v1321
      %v1333 = vpack.c.b16 %v1324, %v1323
      %v1334 = vpack.c.b16 %v1326, %v1325
      %1343 = vmatprep.subr.bf16.mxu0 0
      %1344 = vmatpush1.bf16.msra.mxu0 %v1327
      %1345 = vmatprep.subr.bf16.mxu0 0
      %1346 = vmatpush1.bf16.msra.mxu0 %v1328
      %1347 = vmatprep.subr.bf16.mxu0 0
      %1348 = vmatpush1.bf16.msra.mxu0 %v1329
      %1349 = vmatprep.subr.bf16.mxu0 0
      %1350 = vmatpush1.bf16.msra.mxu0 %v1330
      %1351 = vmatprep.subr.bf16.mxu0 0
      %1352 = vmatpush1.bf16.msra.mxu0 %v1331
      %1353 = vmatprep.subr.bf16.mxu0 0
      %1354 = vmatpush1.bf16.msra.mxu0 %v1332
      %1355 = vmatprep.subr.bf16.mxu0 0
      %1356 = vmatpush1.bf16.msra.mxu0 %v1333
      %1357 = vmatprep.subr.bf16.mxu0 0
      %1358 = vmatpush1.bf16.msra.mxu0 %v1334
      %1359 = vmatprep.subr.bf16.mxu0 0
      %1360 = vmatpush1.bf16.msra.mxu0 0
      %1361 = vmatprep.subr.bf16.mxu0 0
      %1362 = vmatpush1.bf16.msra.mxu0 0
      %1363 = vmatprep.subr.bf16.mxu0 0
      %1364 = vmatpush1.bf16.msra.mxu0 0
      %1365 = vmatprep.subr.bf16.mxu0 0
      %1366 = vmatpush1.bf16.msra.mxu0 0
      %1367 = vmatprep.subr.bf16.mxu0 0
      %1368 = vmatpush1.bf16.msra.mxu0 0
      %1369 = vmatprep.subr.bf16.mxu0 0
      %1370 = vmatpush1.bf16.msra.mxu0 0
      %1371 = vmatprep.subr.bf16.mxu0 0
      %1372 = vmatpush1.bf16.msra.mxu0 0
      %1373 = vmatprep.subr.bf16.mxu0 0
      %1374 = vmatpush1.bf16.msra.mxu0 0
      %1375 = vmatprep.mubr.bf16.mxu0 0
      %1376 = vmatmul.mubr.bf16.gmra.mrb[0].mxu0 %v1230
      %v1377 = vpop.f32.mrb[0].mxu0
      %v1378 = vadd.f32 0.0, %v1377
      %v1379 = vpop.f32.mrb[0].mxu0
      %v1380 = vpop.f32.mrb[0].mxu0
      %v1381 = vadd.f32 0.0, %v1380
      %v1382 = vpop.f32.mrb[0].mxu0
      %1383 = vmatprep.mubr.bf16.mxu0 0
      %1384 = vmatmul.mubr.bf16.gmra.mrb[0].mxu0 %v1231
      %v1385 = vpop.f32.mrb[0].mxu0
      %v1386 = vadd.f32 0.0, %v1385
      %v1387 = vpop.f32.mrb[0].mxu0
      %v1388 = vpop.f32.mrb[0].mxu0
      %v1389 = vadd.f32 0.0, %v1388
      %v1390 = vpop.f32.mrb[0].mxu0
      %1391 = vmatprep.mubr.bf16.mxu0 0
      %1392 = vmatmul.mubr.bf16.gmra.mrb[0].mxu0 %v1232
      %v1393 = vpop.f32.mrb[0].mxu0
      %v1394 = vadd.f32 0.0, %v1393
      %v1395 = vpop.f32.mrb[0].mxu0
      %v1396 = vpop.f32.mrb[0].mxu0
      %v1397 = vadd.f32 0.0, %v1396
      %v1398 = vpop.f32.mrb[0].mxu0
      %1399 = vmatprep.mubr.bf16.mxu0 0
      %1400 = vmatmul.mubr.bf16.gmra.mrb[0].mxu0 %v1233
      %v1401 = vpop.f32.mrb[0].mxu0
      %v1402 = vadd.f32 0.0, %v1401
      %v1403 = vpop.f32.mrb[0].mxu0
      %v1404 = vpop.f32.mrb[0].mxu0
      %v1405 = vadd.f32 0.0, %v1404
      %v1406 = vpop.f32.mrb[0].mxu0
      %1407 = vmatprep.mubr.bf16.mxu0 0
      %1408 = vmatmul.mubr.bf16.gmra.mrb[0].mxu0 %v1234
      %v1409 = vpop.f32.mrb[0].mxu0
      %v1410 = vadd.f32 0.0, %v1409
      %v1411 = vpop.f32.mrb[0].mxu0
      %v1412 = vpop.f32.mrb[0].mxu0
      %v1413 = vadd.f32 0.0, %v1412
      %v1414 = vpop.f32.mrb[0].mxu0
      %1415 = vmatprep.mubr.bf16.mxu0 0
      %1416 = vmatmul.mubr.bf16.gmra.mrb[0].mxu0 %v1235
      %v1417 = vpop.f32.mrb[0].mxu0
      %v1418 = vadd.f32 0.0, %v1417
      %v1419 = vpop.f32.mrb[0].mxu0
      %v1420 = vpop.f32.mrb[0].mxu0
      %v1421 = vadd.f32 0.0, %v1420
      %v1422 = vpop.f32.mrb[0].mxu0
      %1423 = vmatprep.mubr.bf16.mxu0 0
      %1424 = vmatmul.mubr.bf16.gmra.mrb[0].mxu0 %v1236
      %v1425 = vpop.f32.mrb[0].mxu0
      %v1426 = vadd.f32 0.0, %v1425
      %v1427 = vpop.f32.mrb[0].mxu0
      %v1428 = vpop.f32.mrb[0].mxu0
      %v1429 = vadd.f32 0.0, %v1428
      %v1430 = vpop.f32.mrb[0].mxu0
      %1431 = vmatprep.mubr.bf16.mxu0 0
      %1432 = vmatmul.mubr.bf16.gmra.mrb[0].mxu0 %v1237
      %v1433 = vpop.f32.mrb[0].mxu0
      %v1434 = vadd.f32 0.0, %v1433
      %v1435 = vpop.f32.mrb[0].mxu0
      %v1436 = vpop.f32.mrb[0].mxu0
      %v1437 = vadd.f32 0.0, %v1436
      %v1438 = vpop.f32.mrb[0].mxu0
      %1439 = vmatprep.mubr.bf16.mxu0 0
      %1440 = vmatmul.mubr.bf16.gmra.mrb[0].mxu0 %v1238
      %v1441 = vpop.f32.mrb[0].mxu0
      %v1442 = vadd.f32 0.0, %v1441
      %v1443 = vpop.f32.mrb[0].mxu0
      %v1444 = vpop.f32.mrb[0].mxu0
      %v1445 = vadd.f32 0.0, %v1444
      %v1446 = vpop.f32.mrb[0].mxu0
      %1447 = vmatprep.mubr.bf16.mxu0 0
      %1448 = vmatmul.mubr.bf16.gmra.mrb[0].mxu0 %v1239
      %v1449 = vpop.f32.mrb[0].mxu0
      %v1450 = vadd.f32 0.0, %v1449
      %v1451 = vpop.f32.mrb[0].mxu0
      %v1452 = vpop.f32.mrb[0].mxu0
      %v1453 = vadd.f32 0.0, %v1452
      %v1454 = vpop.f32.mrb[0].mxu0
      %1455 = vmatprep.mubr.bf16.mxu0 0
      %1456 = vmatmul.mubr.bf16.gmra.mrb[0].mxu0 %v1240
      %v1457 = vpop.f32.mrb[0].mxu0
      %v1458 = vadd.f32 0.0, %v1457
      %v1459 = vpop.f32.mrb[0].mxu0
      %v1460 = vpop.f32.mrb[0].mxu0
      %v1461 = vadd.f32 0.0, %v1460
      %v1462 = vpop.f32.mrb[0].mxu0
      %1463 = vmatprep.mubr.bf16.mxu0 0
      %1464 = vmatmul.mubr.bf16.gmra.mrb[0].mxu0 %v1241
      %v1465 = vpop.f32.mrb[0].mxu0
      %v1466 = vadd.f32 0.0, %v1465
      %v1467 = vpop.f32.mrb[0].mxu0
      %v1468 = vpop.f32.mrb[0].mxu0
      %v1469 = vadd.f32 0.0, %v1468
      %v1470 = vpop.f32.mrb[0].mxu0
      %1471 = vmatprep.mubr.bf16.mxu0 0
      %1472 = vmatmul.mubr.bf16.gmra.mrb[0].mxu0 %v1242
      %v1473 = vpop.f32.mrb[0].mxu0
      %v1474 = vadd.f32 0.0, %v1473
      %v1475 = vpop.f32.mrb[0].mxu0
      %v1476 = vpop.f32.mrb[0].mxu0
      %v1477 = vadd.f32 0.0, %v1476
      %v1478 = vpop.f32.mrb[0].mxu0
      %1479 = vmatprep.mubr.bf16.mxu0 0
      %1480 = vmatmul.mubr.bf16.gmra.mrb[0].mxu0 %v1243
      %v1481 = vpop.f32.mrb[0].mxu0
      %v1482 = vadd.f32 0.0, %v1481
      %v1483 = vpop.f32.mrb[0].mxu0
      %v1484 = vpop.f32.mrb[0].mxu0
      %v1485 = vadd.f32 0.0, %v1484
      %v1486 = vpop.f32.mrb[0].mxu0
      %1487 = vmatprep.mubr.bf16.mxu0 0
      %1488 = vmatmul.mubr.bf16.gmra.mrb[0].mxu0 %v1244
      %v1489 = vpop.f32.mrb[0].mxu0
      %v1490 = vadd.f32 0.0, %v1489
      %v1491 = vpop.f32.mrb[0].mxu0
      %v1492 = vpop.f32.mrb[0].mxu0
      %v1493 = vadd.f32 0.0, %v1492
      %v1494 = vpop.f32.mrb[0].mxu0
      %1495 = vmatprep.mubr.bf16.mxu0 0
      %1496 = vmatmul.mubr.bf16.gmra.mrb[0].mxu0 %v1245
      %v1497 = vpop.f32.mrb[0].mxu0
      %v1498 = vadd.f32 0.0, %v1497
      %v1499 = vpop.f32.mrb[0].mxu0
      %v1500 = vpop.f32.mrb[0].mxu0
      %v1501 = vadd.f32 0.0, %v1500
      %v1502 = vpop.f32.mrb[0].mxu0
      %1503 = vdwg.mxu0
      %v1504 = vadd.f32 %v1246, %v1378
      %v1505 = vadd.f32 %v1247, %v1381
      %v1506 = vadd.f32 %v1248, %v1386
      %v1507 = vadd.f32 %v1249, %v1389
      %v1508 = vadd.f32 %v1250, %v1394
      %v1509 = vadd.f32 %v1251, %v1397
      %v1510 = vadd.f32 %v1252, %v1402
      %v1511 = vadd.f32 %v1253, %v1405
      %v1512 = vadd.f32 %v1254, %v1410
      %v1513 = vadd.f32 %v1255, %v1413
      %v1514 = vadd.f32 %v1256, %v1418
      %v1515 = vadd.f32 %v1257, %v1421
      %v1516 = vadd.f32 %v1258, %v1426
      %v1517 = vadd.f32 %v1259, %v1429
      %v1518 = vadd.f32 %v1260, %v1434
      %v1519 = vadd.f32 %v1261, %v1437
      %v1520 = vadd.f32 %v1262, %v1442
      %v1521 = vadd.f32 %v1263, %v1445
      %v1522 = vadd.f32 %v1264, %v1450
      %v1523 = vadd.f32 %v1265, %v1453
      %v1524 = vadd.f32 %v1266, %v1458
      %v1525 = vadd.f32 %v1267, %v1461
      %v1526 = vadd.f32 %v1268, %v1466
      %v1527 = vadd.f32 %v1269, %v1469
      %v1528 = vadd.f32 %v1270, %v1474
      %v1529 = vadd.f32 %v1271, %v1477
      %v1530 = vadd.f32 %v1272, %v1482
      %v1531 = vadd.f32 %v1273, %v1485
      %v1532 = vadd.f32 %v1274, %v1490
      %v1533 = vadd.f32 %v1275, %v1493
      %v1534 = vadd.f32 %v1276, %v1498
      %v1535 = vadd.f32 %v1277, %v1501
      %1536 = vst [vmem:[#allocation3] sm:$0xff] %v1504
      %1537 = vst [vmem:[#allocation3 + $0x8] sm:$0xff] %v1505
      %1538 = vst [vmem:[#allocation3 + $0x10] sm:$0xff] %v1506
      %1539 = vst [vmem:[#allocation3 + $0x18] sm:$0xff] %v1507
      %1540 = vst [vmem:[#allocation3 + $0x20] sm:$0xff] %v1508
      %1541 = vst [vmem:[#allocation3 + $0x28] sm:$0xff] %v1509
      %1542 = vst [vmem:[#allocation3 + $0x30] sm:$0xff] %v1510
      %1543 = vst [vmem:[#allocation3 + $0x38] sm:$0xff] %v1511
      %1544 = vst [vmem:[#allocation3 + $0x40] sm:$0xff] %v1512
      %1545 = vst [vmem:[#allocation3 + $0x48] sm:$0xff] %v1513
      %1546 = vst [vmem:[#allocation3 + $0x50] sm:$0xff] %v1514
      %1547 = vst [vmem:[#allocation3 + $0x58] sm:$0xff] %v1515
      %1548 = vst [vmem:[#allocation3 + $0x60] sm:$0xff] %v1516
      %1549 = vst [vmem:[#allocation3 + $0x68] sm:$0xff] %v1517
      %1550 = vst [vmem:[#allocation3 + $0x70] sm:$0xff] %v1518
      %1551 = vst [vmem:[#allocation3 + $0x78] sm:$0xff] %v1519
      %1552 = vst [vmem:[#allocation3 + $0x80] sm:$0xff] %v1520
      %1553 = vst [vmem:[#allocation3 + $0x88] sm:$0xff] %v1521
      %1554 = vst [vmem:[#allocation3 + $0x90] sm:$0xff] %v1522
      %1555 = vst [vmem:[#allocation3 + $0x98] sm:$0xff] %v1523
      %1556 = vst [vmem:[#allocation3 + $0xa0] sm:$0xff] %v1524
      %1557 = vst [vmem:[#allocation3 + $0xa8] sm:$0xff] %v1525
      %1558 = vst [vmem:[#allocation3 + $0xb0] sm:$0xff] %v1526
      %1559 = vst [vmem:[#allocation3 + $0xb8] sm:$0xff] %v1527
      %1560 = vst [vmem:[#allocation3 + $0xc0] sm:$0xff] %v1528
      %1561 = vst [vmem:[#allocation3 + $0xc8] sm:$0xff] %v1529
      %1562 = vst [vmem:[#allocation3 + $0xd0] sm:$0xff] %v1530
      %1563 = vst [vmem:[#allocation3 + $0xd8] sm:$0xff] %v1531
      %1564 = vst [vmem:[#allocation3 + $0xe0] sm:$0xff] %v1532
      %1565 = vst [vmem:[#allocation3 + $0xe8] sm:$0xff] %v1533
      %1566 = vst [vmem:[#allocation3 + $0xf0] sm:$0xff] %v1534
      %1567 = vst [vmem:[#allocation3 + $0xf8] sm:$0xff] %v1535
      %v1568 = vld [vmem:[%s394] sm:$0xff]
      %v1569 = vld [vmem:[%s394 + $0x8] sm:$0xff]
      %v1570 = vld [vmem:[%s394 + $0x18] sm:$0xff]
      %v1571 = vld [vmem:[%s394 + $0x20] sm:$0xff]
      %v1572 = vld [vmem:[%s394 + $0x30] sm:$0xff]
      %v1573 = vld [vmem:[%s394 + $0x38] sm:$0xff]
      %v1574 = vld [vmem:[%s394 + $0x48] sm:$0xff]
      %v1575 = vld [vmem:[%s394 + $0x50] sm:$0xff]
      %v1576 = vld [vmem:[%s394 + $0x60] sm:$0xff]
      %v1577 = vld [vmem:[%s394 + $0x68] sm:$0xff]
      %v1578 = vld [vmem:[%s394 + $0x78] sm:$0xff]
      %v1579 = vld [vmem:[%s394 + $0x80] sm:$0xff]
      %v1580 = vld [vmem:[%s394 + $0x90] sm:$0xff]
      %v1581 = vld [vmem:[%s394 + $0x98] sm:$0xff]
      %v1582 = vld [vmem:[%s394 + $0xa8] sm:$0xff]
      %v1583 = vld [vmem:[%s394 + $0xb0] sm:$0xff]
      %v1584 = vld [vmem:[%s394 + $0xc0] sm:$0xff]
      %v1585 = vld [vmem:[%s394 + $0xc8] sm:$0xff]
      %v1586 = vld [vmem:[%s394 + $0xd8] sm:$0xff]
      %v1587 = vld [vmem:[%s394 + $0xe0] sm:$0xff]
      %v1588 = vld [vmem:[%s394 + $0xf0] sm:$0xff]
      %v1589 = vld [vmem:[%s394 + $0xf8] sm:$0xff]
      %v1590 = vld [vmem:[%s394 + $0x108] sm:$0xff]
      %v1591 = vld [vmem:[%s394 + $0x110] sm:$0xff]
      %v1592 = vld [vmem:[%s394 + $0x120] sm:$0xff]
      %v1593 = vld [vmem:[%s394 + $0x128] sm:$0xff]
      %v1594 = vld [vmem:[%s394 + $0x138] sm:$0xff]
      %v1595 = vld [vmem:[%s394 + $0x140] sm:$0xff]
      %v1596 = vld [vmem:[%s394 + $0x150] sm:$0xff]
      %v1597 = vld [vmem:[%s394 + $0x158] sm:$0xff]
      %v1598 = vld [vmem:[%s394 + $0x168] sm:$0xff]
      %v1599 = vld [vmem:[%s394 + $0x170] sm:$0xff]
      %v1600 = vpack.c.bf16 %v1569, %v1568
      %v1601 = vpack.c.bf16 %v1571, %v1570
      %v1602 = vpack.c.bf16 %v1573, %v1572
      %v1603 = vpack.c.bf16 %v1575, %v1574
      %v1604 = vpack.c.bf16 %v1577, %v1576
      %v1605 = vpack.c.bf16 %v1579, %v1578
      %v1606 = vpack.c.bf16 %v1581, %v1580
      %v1607 = vpack.c.bf16 %v1583, %v1582
      %v1608 = vpack.c.bf16 %v1585, %v1584
      %v1609 = vpack.c.bf16 %v1587, %v1586
      %v1610 = vpack.c.bf16 %v1589, %v1588
      %v1611 = vpack.c.bf16 %v1591, %v1590
      %v1612 = vpack.c.bf16 %v1593, %v1592
      %v1613 = vpack.c.bf16 %v1595, %v1594
      %v1614 = vpack.c.bf16 %v1597, %v1596
      %v1615 = vpack.c.bf16 %v1599, %v1598
      %v1616 = vld [vmem:[#allocation3] sm:$0xff]
      %v1617 = vld [vmem:[#allocation3 + $0x8] sm:$0xff]
      %v1618 = vld [vmem:[#allocation3 + $0x10] sm:$0xff]
      %v1619 = vld [vmem:[#allocation3 + $0x18] sm:$0xff]
      %v1620 = vld [vmem:[#allocation3 + $0x20] sm:$0xff]
      %v1621 = vld [vmem:[#allocation3 + $0x28] sm:$0xff]
      %v1622 = vld [vmem:[#allocation3 + $0x30] sm:$0xff]
      %v1623 = vld [vmem:[#allocation3 + $0x38] sm:$0xff]
      %v1624 = vld [vmem:[#allocation3 + $0x40] sm:$0xff]
      %v1625 = vld [vmem:[#allocation3 + $0x48] sm:$0xff]
      %v1626 = vld [vmem:[#allocation3 + $0x50] sm:$0xff]
      %v1627 = vld [vmem:[#allocation3 + $0x58] sm:$0xff]
      %v1628 = vld [vmem:[#allocation3 + $0x60] sm:$0xff]
      %v1629 = vld [vmem:[#allocation3 + $0x68] sm:$0xff]
      %v1630 = vld [vmem:[#allocation3 + $0x70] sm:$0xff]
      %v1631 = vld [vmem:[#allocation3 + $0x78] sm:$0xff]
      %v1632 = vld [vmem:[#allocation3 + $0x80] sm:$0xff]
      %v1633 = vld [vmem:[#allocation3 + $0x88] sm:$0xff]
      %v1634 = vld [vmem:[#allocation3 + $0x90] sm:$0xff]
      %v1635 = vld [vmem:[#allocation3 + $0x98] sm:$0xff]
      %v1636 = vld [vmem:[#allocation3 + $0xa0] sm:$0xff]
      %v1637 = vld [vmem:[#allocation3 + $0xa8] sm:$0xff]
      %v1638 = vld [vmem:[#allocation3 + $0xb0] sm:$0xff]
      %v1639 = vld [vmem:[#allocation3 + $0xb8] sm:$0xff]
      %v1640 = vld [vmem:[#allocation3 + $0xc0] sm:$0xff]
      %v1641 = vld [vmem:[#allocation3 + $0xc8] sm:$0xff]
      %v1642 = vld [vmem:[#allocation3 + $0xd0] sm:$0xff]
      %v1643 = vld [vmem:[#allocation3 + $0xd8] sm:$0xff]
      %v1644 = vld [vmem:[#allocation3 + $0xe0] sm:$0xff]
      %v1645 = vld [vmem:[#allocation3 + $0xe8] sm:$0xff]
      %v1646 = vld [vmem:[#allocation3 + $0xf0] sm:$0xff]
      %v1647 = vld [vmem:[#allocation3 + $0xf8] sm:$0xff]
      %s1648 = scalar_lea.vmem %s2, 192
      %v1649 = vld [vmem:[%s1648] sm:$0xf]
      %v1650 = vld [vmem:[%s1648 + $0x4] sm:$0xf]
      %v1651 = vld [vmem:[%s1648 + $0x8] sm:$0xf]
      %v1652 = vld [vmem:[%s1648 + $0xc] sm:$0xf]
      %v1653 = vld [vmem:[%s1648 + $0x10] sm:$0xf]
      %v1654 = vld [vmem:[%s1648 + $0x14] sm:$0xf]
      %v1655 = vld [vmem:[%s1648 + $0x18] sm:$0xf]
      %v1656 = vld [vmem:[%s1648 + $0x1c] sm:$0xf]
      %v1657 = vld [vmem:[%s1648 + $0x20] sm:$0xf]
      %v1658 = vld [vmem:[%s1648 + $0x24] sm:$0xf]
      %v1659 = vld [vmem:[%s1648 + $0x28] sm:$0xf]
      %v1660 = vld [vmem:[%s1648 + $0x2c] sm:$0xf]
      %v1661 = vld [vmem:[%s1648 + $0x30] sm:$0xf]
      %v1662 = vld [vmem:[%s1648 + $0x34] sm:$0xf]
      %v1663 = vld [vmem:[%s1648 + $0x38] sm:$0xf]
      %v1664 = vld [vmem:[%s1648 + $0x3c] sm:$0xf]
      %v1681 = vunpack.c.l.b16 %v1649
      %v1682 = vunpack.c.l.b16 %v1650
      %v1683 = vunpack.c.l.b16 %v1651
      %v1684 = vunpack.c.l.b16 %v1652
      %v1685 = vunpack.c.l.b16 %v1653
      %v1686 = vunpack.c.l.b16 %v1654
      %v1687 = vunpack.c.l.b16 %v1655
      %v1688 = vunpack.c.l.b16 %v1656
      %v1689 = vunpack.c.l.b16 %v1657
      %v1690 = vunpack.c.l.b16 %v1658
      %v1691 = vunpack.c.l.b16 %v1659
      %v1692 = vunpack.c.l.b16 %v1660
      %v1693 = vunpack.c.l.b16 %v1661
      %v1694 = vunpack.c.l.b16 %v1662
      %v1695 = vunpack.c.l.b16 %v1663
      %v1696 = vunpack.c.l.b16 %v1664
      %v1697 = vpack.c.b16 %v1682, %v1681
      %v1698 = vpack.c.b16 %v1684, %v1683
      %v1699 = vpack.c.b16 %v1686, %v1685
      %v1700 = vpack.c.b16 %v1688, %v1687
      %v1701 = vpack.c.b16 %v1690, %v1689
      %v1702 = vpack.c.b16 %v1692, %v1691
      %v1703 = vpack.c.b16 %v1694, %v1693
      %v1704 = vpack.c.b16 %v1696, %v1695
      %1713 = vmatprep.subr.bf16.mxu0 0
      %1714 = vmatpush1.bf16.msra.mxu0 %v1697
      %1715 = vmatprep.subr.bf16.mxu0 0
      %1716 = vmatpush1.bf16.msra.mxu0 %v1698
      %1717 = vmatprep.subr.bf16.mxu0 0
      %1718 = vmatpush1.bf16.msra.mxu0 %v1699
      %1719 = vmatprep.subr.bf16.mxu0 0
      %1720 = vmatpush1.bf16.msra.mxu0 %v1700
      %1721 = vmatprep.subr.bf16.mxu0 0
      %1722 = vmatpush1.bf16.msra.mxu0 %v1701
      %1723 = vmatprep.subr.bf16.mxu0 0
      %1724 = vmatpush1.bf16.msra.mxu0 %v1702
      %1725 = vmatprep.subr.bf16.mxu0 0
      %1726 = vmatpush1.bf16.msra.mxu0 %v1703
      %1727 = vmatprep.subr.bf16.mxu0 0
      %1728 = vmatpush1.bf16.msra.mxu0 %v1704
      %1729 = vmatprep.subr.bf16.mxu0 0
      %1730 = vmatpush1.bf16.msra.mxu0 0
      %1731 = vmatprep.subr.bf16.mxu0 0
      %1732 = vmatpush1.bf16.msra.mxu0 0
      %1733 = vmatprep.subr.bf16.mxu0 0
      %1734 = vmatpush1.bf16.msra.mxu0 0
      %1735 = vmatprep.subr.bf16.mxu0 0
      %1736 = vmatpush1.bf16.msra.mxu0 0
      %1737 = vmatprep.subr.bf16.mxu0 0
      %1738 = vmatpush1.bf16.msra.mxu0 0
      %1739 = vmatprep.subr.bf16.mxu0 0
      %1740 = vmatpush1.bf16.msra.mxu0 0
      %1741 = vmatprep.subr.bf16.mxu0 0
      %1742 = vmatpush1.bf16.msra.mxu0 0
      %1743 = vmatprep.subr.bf16.mxu0 0
      %1744 = vmatpush1.bf16.msra.mxu0 0
      %1745 = vmatprep.mubr.bf16.mxu0 0
      %1746 = vmatmul.mubr.bf16.gmra.mrb[0].mxu0 %v1600
      %v1747 = vpop.f32.mrb[0].mxu0
      %v1748 = vadd.f32 0.0, %v1747
      %v1749 = vpop.f32.mrb[0].mxu0
      %v1750 = vpop.f32.mrb[0].mxu0
      %v1751 = vadd.f32 0.0, %v1750
      %v1752 = vpop.f32.mrb[0].mxu0
      %1753 = vmatprep.mubr.bf16.mxu0 0
      %1754 = vmatmul.mubr.bf16.gmra.mrb[0].mxu0 %v1601
      %v1755 = vpop.f32.mrb[0].mxu0
      %v1756 = vadd.f32 0.0, %v1755
      %v1757 = vpop.f32.mrb[0].mxu0
      %v1758 = vpop.f32.mrb[0].mxu0
      %v1759 = vadd.f32 0.0, %v1758
      %v1760 = vpop.f32.mrb[0].mxu0
      %1761 = vmatprep.mubr.bf16.mxu0 0
      %1762 = vmatmul.mubr.bf16.gmra.mrb[0].mxu0 %v1602
      %v1763 = vpop.f32.mrb[0].mxu0
      %v1764 = vadd.f32 0.0, %v1763
      %v1765 = vpop.f32.mrb[0].mxu0
      %v1766 = vpop.f32.mrb[0].mxu0
      %v1767 = vadd.f32 0.0, %v1766
      %v1768 = vpop.f32.mrb[0].mxu0
      %1769 = vmatprep.mubr.bf16.mxu0 0
      %1770 = vmatmul.mubr.bf16.gmra.mrb[0].mxu0 %v1603
      %v1771 = vpop.f32.mrb[0].mxu0
      %v1772 = vadd.f32 0.0, %v1771
      %v1773 = vpop.f32.mrb[0].mxu0
      %v1774 = vpop.f32.mrb[0].mxu0
      %v1775 = vadd.f32 0.0, %v1774
      %v1776 = vpop.f32.mrb[0].mxu0
      %1777 = vmatprep.mubr.bf16.mxu0 0
      %1778 = vmatmul.mubr.bf16.gmra.mrb[0].mxu0 %v1604
      %v1779 = vpop.f32.mrb[0].mxu0
      %v1780 = vadd.f32 0.0, %v1779
      %v1781 = vpop.f32.mrb[0].mxu0
      %v1782 = vpop.f32.mrb[0].mxu0
      %v1783 = vadd.f32 0.0, %v1782
      %v1784 = vpop.f32.mrb[0].mxu0
      %1785 = vmatprep.mubr.bf16.mxu0 0
      %1786 = vmatmul.mubr.bf16.gmra.mrb[0].mxu0 %v1605
      %v1787 = vpop.f32.mrb[0].mxu0
      %v1788 = vadd.f32 0.0, %v1787
      %v1789 = vpop.f32.mrb[0].mxu0
      %v1790 = vpop.f32.mrb[0].mxu0
      %v1791 = vadd.f32 0.0, %v1790
      %v1792 = vpop.f32.mrb[0].mxu0
      %1793 = vmatprep.mubr.bf16.mxu0 0
      %1794 = vmatmul.mubr.bf16.gmra.mrb[0].mxu0 %v1606
      %v1795 = vpop.f32.mrb[0].mxu0
      %v1796 = vadd.f32 0.0, %v1795
      %v1797 = vpop.f32.mrb[0].mxu0
      %v1798 = vpop.f32.mrb[0].mxu0
      %v1799 = vadd.f32 0.0, %v1798
      %v1800 = vpop.f32.mrb[0].mxu0
      %1801 = vmatprep.mubr.bf16.mxu0 0
      %1802 = vmatmul.mubr.bf16.gmra.mrb[0].mxu0 %v1607
      %v1803 = vpop.f32.mrb[0].mxu0
      %v1804 = vadd.f32 0.0, %v1803
      %v1805 = vpop.f32.mrb[0].mxu0
      %v1806 = vpop.f32.mrb[0].mxu0
      %v1807 = vadd.f32 0.0, %v1806
      %v1808 = vpop.f32.mrb[0].mxu0
      %1809 = vmatprep.mubr.bf16.mxu0 0
      %1810 = vmatmul.mubr.bf16.gmra.mrb[0].mxu0 %v1608
      %v1811 = vpop.f32.mrb[0].mxu0
      %v1812 = vadd.f32 0.0, %v1811
      %v1813 = vpop.f32.mrb[0].mxu0
      %v1814 = vpop.f32.mrb[0].mxu0
      %v1815 = vadd.f32 0.0, %v1814
      %v1816 = vpop.f32.mrb[0].mxu0
      %1817 = vmatprep.mubr.bf16.mxu0 0
      %1818 = vmatmul.mubr.bf16.gmra.mrb[0].mxu0 %v1609
      %v1819 = vpop.f32.mrb[0].mxu0
      %v1820 = vadd.f32 0.0, %v1819
      %v1821 = vpop.f32.mrb[0].mxu0
      %v1822 = vpop.f32.mrb[0].mxu0
      %v1823 = vadd.f32 0.0, %v1822
      %v1824 = vpop.f32.mrb[0].mxu0
      %1825 = vmatprep.mubr.bf16.mxu0 0
      %1826 = vmatmul.mubr.bf16.gmra.mrb[0].mxu0 %v1610
      %v1827 = vpop.f32.mrb[0].mxu0
      %v1828 = vadd.f32 0.0, %v1827
      %v1829 = vpop.f32.mrb[0].mxu0
      %v1830 = vpop.f32.mrb[0].mxu0
      %v1831 = vadd.f32 0.0, %v1830
      %v1832 = vpop.f32.mrb[0].mxu0
      %1833 = vmatprep.mubr.bf16.mxu0 0
      %1834 = vmatmul.mubr.bf16.gmra.mrb[0].mxu0 %v1611
      %v1835 = vpop.f32.mrb[0].mxu0
      %v1836 = vadd.f32 0.0, %v1835
      %v1837 = vpop.f32.mrb[0].mxu0
      %v1838 = vpop.f32.mrb[0].mxu0
      %v1839 = vadd.f32 0.0, %v1838
      %v1840 = vpop.f32.mrb[0].mxu0
      %1841 = vmatprep.mubr.bf16.mxu0 0
      %1842 = vmatmul.mubr.bf16.gmra.mrb[0].mxu0 %v1612
      %v1843 = vpop.f32.mrb[0].mxu0
      %v1844 = vadd.f32 0.0, %v1843
      %v1845 = vpop.f32.mrb[0].mxu0
      %v1846 = vpop.f32.mrb[0].mxu0
      %v1847 = vadd.f32 0.0, %v1846
      %v1848 = vpop.f32.mrb[0].mxu0
      %1849 = vmatprep.mubr.bf16.mxu0 0
      %1850 = vmatmul.mubr.bf16.gmra.mrb[0].mxu0 %v1613
      %v1851 = vpop.f32.mrb[0].mxu0
      %v1852 = vadd.f32 0.0, %v1851
      %v1853 = vpop.f32.mrb[0].mxu0
      %v1854 = vpop.f32.mrb[0].mxu0
      %v1855 = vadd.f32 0.0, %v1854
      %v1856 = vpop.f32.mrb[0].mxu0
      %1857 = vmatprep.mubr.bf16.mxu0 0
      %1858 = vmatmul.mubr.bf16.gmra.mrb[0].mxu0 %v1614
      %v1859 = vpop.f32.mrb[0].mxu0
      %v1860 = vadd.f32 0.0, %v1859
      %v1861 = vpop.f32.mrb[0].mxu0
      %v1862 = vpop.f32.mrb[0].mxu0
      %v1863 = vadd.f32 0.0, %v1862
      %v1864 = vpop.f32.mrb[0].mxu0
      %1865 = vmatprep.mubr.bf16.mxu0 0
      %1866 = vmatmul.mubr.bf16.gmra.mrb[0].mxu0 %v1615
      %v1867 = vpop.f32.mrb[0].mxu0
      %v1868 = vadd.f32 0.0, %v1867
      %v1869 = vpop.f32.mrb[0].mxu0
      %v1870 = vpop.f32.mrb[0].mxu0
      %v1871 = vadd.f32 0.0, %v1870
      %v1872 = vpop.f32.mrb[0].mxu0
      %1873 = vdwg.mxu0
      %v1874 = vadd.f32 %v1616, %v1748
      %v1875 = vadd.f32 %v1617, %v1751
      %v1876 = vadd.f32 %v1618, %v1756
      %v1877 = vadd.f32 %v1619, %v1759
      %v1878 = vadd.f32 %v1620, %v1764
      %v1879 = vadd.f32 %v1621, %v1767
      %v1880 = vadd.f32 %v1622, %v1772
      %v1881 = vadd.f32 %v1623, %v1775
      %v1882 = vadd.f32 %v1624, %v1780
      %v1883 = vadd.f32 %v1625, %v1783
      %v1884 = vadd.f32 %v1626, %v1788
      %v1885 = vadd.f32 %v1627, %v1791
      %v1886 = vadd.f32 %v1628, %v1796
      %v1887 = vadd.f32 %v1629, %v1799
      %v1888 = vadd.f32 %v1630, %v1804
      %v1889 = vadd.f32 %v1631, %v1807
      %v1890 = vadd.f32 %v1632, %v1812
      %v1891 = vadd.f32 %v1633, %v1815
      %v1892 = vadd.f32 %v1634, %v1820
      %v1893 = vadd.f32 %v1635, %v1823
      %v1894 = vadd.f32 %v1636, %v1828
      %v1895 = vadd.f32 %v1637, %v1831
      %v1896 = vadd.f32 %v1638, %v1836
      %v1897 = vadd.f32 %v1639, %v1839
      %v1898 = vadd.f32 %v1640, %v1844
      %v1899 = vadd.f32 %v1641, %v1847
      %v1900 = vadd.f32 %v1642, %v1852
      %v1901 = vadd.f32 %v1643, %v1855
      %v1902 = vadd.f32 %v1644, %v1860
      %v1903 = vadd.f32 %v1645, %v1863
      %v1904 = vadd.f32 %v1646, %v1868
      %v1905 = vadd.f32 %v1647, %v1871
      %1906 = vst [vmem:[#allocation3] sm:$0xff] %v1874
      %1907 = vst [vmem:[#allocation3 + $0x8] sm:$0xff] %v1875
      %1908 = vst [vmem:[#allocation3 + $0x10] sm:$0xff] %v1876
      %1909 = vst [vmem:[#allocation3 + $0x18] sm:$0xff] %v1877
      %1910 = vst [vmem:[#allocation3 + $0x20] sm:$0xff] %v1878
      %1911 = vst [vmem:[#allocation3 + $0x28] sm:$0xff] %v1879
      %1912 = vst [vmem:[#allocation3 + $0x30] sm:$0xff] %v1880
      %1913 = vst [vmem:[#allocation3 + $0x38] sm:$0xff] %v1881
      %1914 = vst [vmem:[#allocation3 + $0x40] sm:$0xff] %v1882
      %1915 = vst [vmem:[#allocation3 + $0x48] sm:$0xff] %v1883
      %1916 = vst [vmem:[#allocation3 + $0x50] sm:$0xff] %v1884
      %1917 = vst [vmem:[#allocation3 + $0x58] sm:$0xff] %v1885
      %1918 = vst [vmem:[#allocation3 + $0x60] sm:$0xff] %v1886
      %1919 = vst [vmem:[#allocation3 + $0x68] sm:$0xff] %v1887
      %1920 = vst [vmem:[#allocation3 + $0x70] sm:$0xff] %v1888
      %1921 = vst [vmem:[#allocation3 + $0x78] sm:$0xff] %v1889
      %1922 = vst [vmem:[#allocation3 + $0x80] sm:$0xff] %v1890
      %1923 = vst [vmem:[#allocation3 + $0x88] sm:$0xff] %v1891
      %1924 = vst [vmem:[#allocation3 + $0x90] sm:$0xff] %v1892
      %1925 = vst [vmem:[#allocation3 + $0x98] sm:$0xff] %v1893
      %1926 = vst [vmem:[#allocation3 + $0xa0] sm:$0xff] %v1894
      %1927 = vst [vmem:[#allocation3 + $0xa8] sm:$0xff] %v1895
      %1928 = vst [vmem:[#allocation3 + $0xb0] sm:$0xff] %v1896
      %1929 = vst [vmem:[#allocation3 + $0xb8] sm:$0xff] %v1897
      %1930 = vst [vmem:[#allocation3 + $0xc0] sm:$0xff] %v1898
      %1931 = vst [vmem:[#allocation3 + $0xc8] sm:$0xff] %v1899
      %1932 = vst [vmem:[#allocation3 + $0xd0] sm:$0xff] %v1900
      %1933 = vst [vmem:[#allocation3 + $0xd8] sm:$0xff] %v1901
      %1934 = vst [vmem:[#allocation3 + $0xe0] sm:$0xff] %v1902
      %1935 = vst [vmem:[#allocation3 + $0xe8] sm:$0xff] %v1903
      %1936 = vst [vmem:[#allocation3 + $0xf0] sm:$0xff] %v1904
      %1937 = vst [vmem:[#allocation3 + $0xf8] sm:$0xff] %v1905
      %v1938 = vld [vmem:[%s394 + $0x1] sm:$0xff]
      %v1939 = vld [vmem:[%s394 + $0x9] sm:$0xff]
      %v1940 = vld [vmem:[%s394 + $0x19] sm:$0xff]
      %v1941 = vld [vmem:[%s394 + $0x21] sm:$0xff]
      %v1942 = vld [vmem:[%s394 + $0x31] sm:$0xff]
      %v1943 = vld [vmem:[%s394 + $0x39] sm:$0xff]
      %v1944 = vld [vmem:[%s394 + $0x49] sm:$0xff]
      %v1945 = vld [vmem:[%s394 + $0x51] sm:$0xff]
      %v1946 = vld [vmem:[%s394 + $0x61] sm:$0xff]
      %v1947 = vld [vmem:[%s394 + $0x69] sm:$0xff]
      %v1948 = vld [vmem:[%s394 + $0x79] sm:$0xff]
      %v1949 = vld [vmem:[%s394 + $0x81] sm:$0xff]
      %v1950 = vld [vmem:[%s394 + $0x91] sm:$0xff]
      %v1951 = vld [vmem:[%s394 + $0x99] sm:$0xff]
      %v1952 = vld [vmem:[%s394 + $0xa9] sm:$0xff]
      %v1953 = vld [vmem:[%s394 + $0xb1] sm:$0xff]
      %v1954 = vld [vmem:[%s394 + $0xc1] sm:$0xff]
      %v1955 = vld [vmem:[%s394 + $0xc9] sm:$0xff]
      %v1956 = vld [vmem:[%s394 + $0xd9] sm:$0xff]
      %v1957 = vld [vmem:[%s394 + $0xe1] sm:$0xff]
      %v1958 = vld [vmem:[%s394 + $0xf1] sm:$0xff]
      %v1959 = vld [vmem:[%s394 + $0xf9] sm:$0xff]
      %v1960 = vld [vmem:[%s394 + $0x109] sm:$0xff]
      %v1961 = vld [vmem:[%s394 + $0x111] sm:$0xff]
      %v1962 = vld [vmem:[%s394 + $0x121] sm:$0xff]
      %v1963 = vld [vmem:[%s394 + $0x129] sm:$0xff]
      %v1964 = vld [vmem:[%s394 + $0x139] sm:$0xff]
      %v1965 = vld [vmem:[%s394 + $0x141] sm:$0xff]
      %v1966 = vld [vmem:[%s394 + $0x151] sm:$0xff]
      %v1967 = vld [vmem:[%s394 + $0x159] sm:$0xff]
      %v1968 = vld [vmem:[%s394 + $0x169] sm:$0xff]
      %v1969 = vld [vmem:[%s394 + $0x171] sm:$0xff]
      %v1970 = vpack.c.bf16 %v1939, %v1938
      %v1971 = vpack.c.bf16 %v1941, %v1940
      %v1972 = vpack.c.bf16 %v1943, %v1942
      %v1973 = vpack.c.bf16 %v1945, %v1944
      %v1974 = vpack.c.bf16 %v1947, %v1946
      %v1975 = vpack.c.bf16 %v1949, %v1948
      %v1976 = vpack.c.bf16 %v1951, %v1950
      %v1977 = vpack.c.bf16 %v1953, %v1952
      %v1978 = vpack.c.bf16 %v1955, %v1954
      %v1979 = vpack.c.bf16 %v1957, %v1956
      %v1980 = vpack.c.bf16 %v1959, %v1958
      %v1981 = vpack.c.bf16 %v1961, %v1960
      %v1982 = vpack.c.bf16 %v1963, %v1962
      %v1983 = vpack.c.bf16 %v1965, %v1964
      %v1984 = vpack.c.bf16 %v1967, %v1966
      %v1985 = vpack.c.bf16 %v1969, %v1968
      %v1986 = vld [vmem:[#allocation3] sm:$0xff]
      %v1987 = vld [vmem:[#allocation3 + $0x8] sm:$0xff]
      %v1988 = vld [vmem:[#allocation3 + $0x10] sm:$0xff]
      %v1989 = vld [vmem:[#allocation3 + $0x18] sm:$0xff]
      %v1990 = vld [vmem:[#allocation3 + $0x20] sm:$0xff]
      %v1991 = vld [vmem:[#allocation3 + $0x28] sm:$0xff]
      %v1992 = vld [vmem:[#allocation3 + $0x30] sm:$0xff]
      %v1993 = vld [vmem:[#allocation3 + $0x38] sm:$0xff]
      %v1994 = vld [vmem:[#allocation3 + $0x40] sm:$0xff]
      %v1995 = vld [vmem:[#allocation3 + $0x48] sm:$0xff]
      %v1996 = vld [vmem:[#allocation3 + $0x50] sm:$0xff]
      %v1997 = vld [vmem:[#allocation3 + $0x58] sm:$0xff]
      %v1998 = vld [vmem:[#allocation3 + $0x60] sm:$0xff]
      %v1999 = vld [vmem:[#allocation3 + $0x68] sm:$0xff]
      %v2000 = vld [vmem:[#allocation3 + $0x70] sm:$0xff]
      %v2001 = vld [vmem:[#allocation3 + $0x78] sm:$0xff]
      %v2002 = vld [vmem:[#allocation3 + $0x80] sm:$0xff]
      %v2003 = vld [vmem:[#allocation3 + $0x88] sm:$0xff]
      %v2004 = vld [vmem:[#allocation3 + $0x90] sm:$0xff]
      %v2005 = vld [vmem:[#allocation3 + $0x98] sm:$0xff]
      %v2006 = vld [vmem:[#allocation3 + $0xa0] sm:$0xff]
      %v2007 = vld [vmem:[#allocation3 + $0xa8] sm:$0xff]
      %v2008 = vld [vmem:[#allocation3 + $0xb0] sm:$0xff]
      %v2009 = vld [vmem:[#allocation3 + $0xb8] sm:$0xff]
      %v2010 = vld [vmem:[#allocation3 + $0xc0] sm:$0xff]
      %v2011 = vld [vmem:[#allocation3 + $0xc8] sm:$0xff]
      %v2012 = vld [vmem:[#allocation3 + $0xd0] sm:$0xff]
      %v2013 = vld [vmem:[#allocation3 + $0xd8] sm:$0xff]
      %v2014 = vld [vmem:[#allocation3 + $0xe0] sm:$0xff]
      %v2015 = vld [vmem:[#allocation3 + $0xe8] sm:$0xff]
      %v2016 = vld [vmem:[#allocation3 + $0xf0] sm:$0xff]
      %v2017 = vld [vmem:[#allocation3 + $0xf8] sm:$0xff]
      %s2018 = scalar_lea.vmem %s2, 256
      %v2019 = vld [vmem:[%s2018] sm:$0xf]
      %v2020 = vld [vmem:[%s2018 + $0x4] sm:$0xf]
      %v2021 = vld [vmem:[%s2018 + $0x8] sm:$0xf]
      %v2022 = vld [vmem:[%s2018 + $0xc] sm:$0xf]
      %v2023 = vld [vmem:[%s2018 + $0x10] sm:$0xf]
      %v2024 = vld [vmem:[%s2018 + $0x14] sm:$0xf]
      %v2025 = vld [vmem:[%s2018 + $0x18] sm:$0xf]
      %v2026 = vld [vmem:[%s2018 + $0x1c] sm:$0xf]
      %v2027 = vld [vmem:[%s2018 + $0x20] sm:$0xf]
      %v2028 = vld [vmem:[%s2018 + $0x24] sm:$0xf]
      %v2029 = vld [vmem:[%s2018 + $0x28] sm:$0xf]
      %v2030 = vld [vmem:[%s2018 + $0x2c] sm:$0xf]
      %v2031 = vld [vmem:[%s2018 + $0x30] sm:$0xf]
      %v2032 = vld [vmem:[%s2018 + $0x34] sm:$0xf]
      %v2033 = vld [vmem:[%s2018 + $0x38] sm:$0xf]
      %v2034 = vld [vmem:[%s2018 + $0x3c] sm:$0xf]
      %v2051 = vunpack.c.l.b16 %v2019
      %v2052 = vunpack.c.l.b16 %v2020
      %v2053 = vunpack.c.l.b16 %v2021
      %v2054 = vunpack.c.l.b16 %v2022
      %v2055 = vunpack.c.l.b16 %v2023
      %v2056 = vunpack.c.l.b16 %v2024
      %v2057 = vunpack.c.l.b16 %v2025
      %v2058 = vunpack.c.l.b16 %v2026
      %v2059 = vunpack.c.l.b16 %v2027
      %v2060 = vunpack.c.l.b16 %v2028
      %v2061 = vunpack.c.l.b16 %v2029
      %v2062 = vunpack.c.l.b16 %v2030
      %v2063 = vunpack.c.l.b16 %v2031
      %v2064 = vunpack.c.l.b16 %v2032
      %v2065 = vunpack.c.l.b16 %v2033
      %v2066 = vunpack.c.l.b16 %v2034
      %v2067 = vpack.c.b16 %v2052, %v2051
      %v2068 = vpack.c.b16 %v2054, %v2053
      %v2069 = vpack.c.b16 %v2056, %v2055
      %v2070 = vpack.c.b16 %v2058, %v2057
      %v2071 = vpack.c.b16 %v2060, %v2059
      %v2072 = vpack.c.b16 %v2062, %v2061
      %v2073 = vpack.c.b16 %v2064, %v2063
      %v2074 = vpack.c.b16 %v2066, %v2065
      %2083 = vmatprep.subr.bf16.mxu0 0
      %2084 = vmatpush1.bf16.msra.mxu0 %v2067
      %2085 = vmatprep.subr.bf16.mxu0 0
      %2086 = vmatpush1.bf16.msra.mxu0 %v2068
      %2087 = vmatprep.subr.bf16.mxu0 0
      %2088 = vmatpush1.bf16.msra.mxu0 %v2069
      %2089 = vmatprep.subr.bf16.mxu0 0
      %2090 = vmatpush1.bf16.msra.mxu0 %v2070
      %2091 = vmatprep.subr.bf16.mxu0 0
      %2092 = vmatpush1.bf16.msra.mxu0 %v2071
      %2093 = vmatprep.subr.bf16.mxu0 0
      %2094 = vmatpush1.bf16.msra.mxu0 %v2072
      %2095 = vmatprep.subr.bf16.mxu0 0
      %2096 = vmatpush1.bf16.msra.mxu0 %v2073
      %2097 = vmatprep.subr.bf16.mxu0 0
      %2098 = vmatpush1.bf16.msra.mxu0 %v2074
      %2099 = vmatprep.subr.bf16.mxu0 0
      %2100 = vmatpush1.bf16.msra.mxu0 0
      %2101 = vmatprep.subr.bf16.mxu0 0
      %2102 = vmatpush1.bf16.msra.mxu0 0
      %2103 = vmatprep.subr.bf16.mxu0 0
      %2104 = vmatpush1.bf16.msra.mxu0 0
      %2105 = vmatprep.subr.bf16.mxu0 0
      %2106 = vmatpush1.bf16.msra.mxu0 0
      %2107 = vmatprep.subr.bf16.mxu0 0
      %2108 = vmatpush1.bf16.msra.mxu0 0
      %2109 = vmatprep.subr.bf16.mxu0 0
      %2110 = vmatpush1.bf16.msra.mxu0 0
      %2111 = vmatprep.subr.bf16.mxu0 0
      %2112 = vmatpush1.bf16.msra.mxu0 0
      %2113 = vmatprep.subr.bf16.mxu0 0
      %2114 = vmatpush1.bf16.msra.mxu0 0
      %2115 = vmatprep.mubr.bf16.mxu0 0
      %2116 = vmatmul.mubr.bf16.gmra.mrb[0].mxu0 %v1970
      %v2117 = vpop.f32.mrb[0].mxu0
      %v2118 = vadd.f32 0.0, %v2117
      %v2119 = vpop.f32.mrb[0].mxu0
      %v2120 = vpop.f32.mrb[0].mxu0
      %v2121 = vadd.f32 0.0, %v2120
      %v2122 = vpop.f32.mrb[0].mxu0
      %2123 = vmatprep.mubr.bf16.mxu0 0
      %2124 = vmatmul.mubr.bf16.gmra.mrb[0].mxu0 %v1971
      %v2125 = vpop.f32.mrb[0].mxu0
      %v2126 = vadd.f32 0.0, %v2125
      %v2127 = vpop.f32.mrb[0].mxu0
      %v2128 = vpop.f32.mrb[0].mxu0
      %v2129 = vadd.f32 0.0, %v2128
      %v2130 = vpop.f32.mrb[0].mxu0
      %2131 = vmatprep.mubr.bf16.mxu0 0
      %2132 = vmatmul.mubr.bf16.gmra.mrb[0].mxu0 %v1972
      %v2133 = vpop.f32.mrb[0].mxu0
      %v2134 = vadd.f32 0.0, %v2133
      %v2135 = vpop.f32.mrb[0].mxu0
      %v2136 = vpop.f32.mrb[0].mxu0
      %v2137 = vadd.f32 0.0, %v2136
      %v2138 = vpop.f32.mrb[0].mxu0
      %2139 = vmatprep.mubr.bf16.mxu0 0
      %2140 = vmatmul.mubr.bf16.gmra.mrb[0].mxu0 %v1973
      %v2141 = vpop.f32.mrb[0].mxu0
      %v2142 = vadd.f32 0.0, %v2141
      %v2143 = vpop.f32.mrb[0].mxu0
      %v2144 = vpop.f32.mrb[0].mxu0
      %v2145 = vadd.f32 0.0, %v2144
      %v2146 = vpop.f32.mrb[0].mxu0
      %2147 = vmatprep.mubr.bf16.mxu0 0
      %2148 = vmatmul.mubr.bf16.gmra.mrb[0].mxu0 %v1974
      %v2149 = vpop.f32.mrb[0].mxu0
      %v2150 = vadd.f32 0.0, %v2149
      %v2151 = vpop.f32.mrb[0].mxu0
      %v2152 = vpop.f32.mrb[0].mxu0
      %v2153 = vadd.f32 0.0, %v2152
      %v2154 = vpop.f32.mrb[0].mxu0
      %2155 = vmatprep.mubr.bf16.mxu0 0
      %2156 = vmatmul.mubr.bf16.gmra.mrb[0].mxu0 %v1975
      %v2157 = vpop.f32.mrb[0].mxu0
      %v2158 = vadd.f32 0.0, %v2157
      %v2159 = vpop.f32.mrb[0].mxu0
      %v2160 = vpop.f32.mrb[0].mxu0
      %v2161 = vadd.f32 0.0, %v2160
      %v2162 = vpop.f32.mrb[0].mxu0
      %2163 = vmatprep.mubr.bf16.mxu0 0
      %2164 = vmatmul.mubr.bf16.gmra.mrb[0].mxu0 %v1976
      %v2165 = vpop.f32.mrb[0].mxu0
      %v2166 = vadd.f32 0.0, %v2165
      %v2167 = vpop.f32.mrb[0].mxu0
      %v2168 = vpop.f32.mrb[0].mxu0
      %v2169 = vadd.f32 0.0, %v2168
      %v2170 = vpop.f32.mrb[0].mxu0
      %2171 = vmatprep.mubr.bf16.mxu0 0
      %2172 = vmatmul.mubr.bf16.gmra.mrb[0].mxu0 %v1977
      %v2173 = vpop.f32.mrb[0].mxu0
      %v2174 = vadd.f32 0.0, %v2173
      %v2175 = vpop.f32.mrb[0].mxu0
      %v2176 = vpop.f32.mrb[0].mxu0
      %v2177 = vadd.f32 0.0, %v2176
      %v2178 = vpop.f32.mrb[0].mxu0
      %2179 = vmatprep.mubr.bf16.mxu0 0
      %2180 = vmatmul.mubr.bf16.gmra.mrb[0].mxu0 %v1978
      %v2181 = vpop.f32.mrb[0].mxu0
      %v2182 = vadd.f32 0.0, %v2181
      %v2183 = vpop.f32.mrb[0].mxu0
      %v2184 = vpop.f32.mrb[0].mxu0
      %v2185 = vadd.f32 0.0, %v2184
      %v2186 = vpop.f32.mrb[0].mxu0
      %2187 = vmatprep.mubr.bf16.mxu0 0
      %2188 = vmatmul.mubr.bf16.gmra.mrb[0].mxu0 %v1979
      %v2189 = vpop.f32.mrb[0].mxu0
      %v2190 = vadd.f32 0.0, %v2189
      %v2191 = vpop.f32.mrb[0].mxu0
      %v2192 = vpop.f32.mrb[0].mxu0
      %v2193 = vadd.f32 0.0, %v2192
      %v2194 = vpop.f32.mrb[0].mxu0
      %2195 = vmatprep.mubr.bf16.mxu0 0
      %2196 = vmatmul.mubr.bf16.gmra.mrb[0].mxu0 %v1980
      %v2197 = vpop.f32.mrb[0].mxu0
      %v2198 = vadd.f32 0.0, %v2197
      %v2199 = vpop.f32.mrb[0].mxu0
      %v2200 = vpop.f32.mrb[0].mxu0
      %v2201 = vadd.f32 0.0, %v2200
      %v2202 = vpop.f32.mrb[0].mxu0
      %2203 = vmatprep.mubr.bf16.mxu0 0
      %2204 = vmatmul.mubr.bf16.gmra.mrb[0].mxu0 %v1981
      %v2205 = vpop.f32.mrb[0].mxu0
      %v2206 = vadd.f32 0.0, %v2205
      %v2207 = vpop.f32.mrb[0].mxu0
      %v2208 = vpop.f32.mrb[0].mxu0
      %v2209 = vadd.f32 0.0, %v2208
      %v2210 = vpop.f32.mrb[0].mxu0
      %2211 = vmatprep.mubr.bf16.mxu0 0
      %2212 = vmatmul.mubr.bf16.gmra.mrb[0].mxu0 %v1982
      %v2213 = vpop.f32.mrb[0].mxu0
      %v2214 = vadd.f32 0.0, %v2213
      %v2215 = vpop.f32.mrb[0].mxu0
      %v2216 = vpop.f32.mrb[0].mxu0
      %v2217 = vadd.f32 0.0, %v2216
      %v2218 = vpop.f32.mrb[0].mxu0
      %2219 = vmatprep.mubr.bf16.mxu0 0
      %2220 = vmatmul.mubr.bf16.gmra.mrb[0].mxu0 %v1983
      %v2221 = vpop.f32.mrb[0].mxu0
      %v2222 = vadd.f32 0.0, %v2221
      %v2223 = vpop.f32.mrb[0].mxu0
      %v2224 = vpop.f32.mrb[0].mxu0
      %v2225 = vadd.f32 0.0, %v2224
      %v2226 = vpop.f32.mrb[0].mxu0
      %2227 = vmatprep.mubr.bf16.mxu0 0
      %2228 = vmatmul.mubr.bf16.gmra.mrb[0].mxu0 %v1984
      %v2229 = vpop.f32.mrb[0].mxu0
      %v2230 = vadd.f32 0.0, %v2229
      %v2231 = vpop.f32.mrb[0].mxu0
      %v2232 = vpop.f32.mrb[0].mxu0
      %v2233 = vadd.f32 0.0, %v2232
      %v2234 = vpop.f32.mrb[0].mxu0
      %2235 = vmatprep.mubr.bf16.mxu0 0
      %2236 = vmatmul.mubr.bf16.gmra.mrb[0].mxu0 %v1985
      %v2237 = vpop.f32.mrb[0].mxu0
      %v2238 = vadd.f32 0.0, %v2237
      %v2239 = vpop.f32.mrb[0].mxu0
      %v2240 = vpop.f32.mrb[0].mxu0
      %v2241 = vadd.f32 0.0, %v2240
      %v2242 = vpop.f32.mrb[0].mxu0
      %2243 = vdwg.mxu0
      %v2244 = vadd.f32 %v1986, %v2118
      %v2245 = vadd.f32 %v1987, %v2121
      %v2246 = vadd.f32 %v1988, %v2126
      %v2247 = vadd.f32 %v1989, %v2129
      %v2248 = vadd.f32 %v1990, %v2134
      %v2249 = vadd.f32 %v1991, %v2137
      %v2250 = vadd.f32 %v1992, %v2142
      %v2251 = vadd.f32 %v1993, %v2145
      %v2252 = vadd.f32 %v1994, %v2150
      %v2253 = vadd.f32 %v1995, %v2153
      %v2254 = vadd.f32 %v1996, %v2158
      %v2255 = vadd.f32 %v1997, %v2161
      %v2256 = vadd.f32 %v1998, %v2166
      %v2257 = vadd.f32 %v1999, %v2169
      %v2258 = vadd.f32 %v2000, %v2174
      %v2259 = vadd.f32 %v2001, %v2177
      %v2260 = vadd.f32 %v2002, %v2182
      %v2261 = vadd.f32 %v2003, %v2185
      %v2262 = vadd.f32 %v2004, %v2190
      %v2263 = vadd.f32 %v2005, %v2193
      %v2264 = vadd.f32 %v2006, %v2198
      %v2265 = vadd.f32 %v2007, %v2201
      %v2266 = vadd.f32 %v2008, %v2206
      %v2267 = vadd.f32 %v2009, %v2209
      %v2268 = vadd.f32 %v2010, %v2214
      %v2269 = vadd.f32 %v2011, %v2217
      %v2270 = vadd.f32 %v2012, %v2222
      %v2271 = vadd.f32 %v2013, %v2225
      %v2272 = vadd.f32 %v2014, %v2230
      %v2273 = vadd.f32 %v2015, %v2233
      %v2274 = vadd.f32 %v2016, %v2238
      %v2275 = vadd.f32 %v2017, %v2241
      %2276 = vst [vmem:[#allocation3] sm:$0xff] %v2244
      %2277 = vst [vmem:[#allocation3 + $0x8] sm:$0xff] %v2245
      %2278 = vst [vmem:[#allocation3 + $0x10] sm:$0xff] %v2246
      %2279 = vst [vmem:[#allocation3 + $0x18] sm:$0xff] %v2247
      %2280 = vst [vmem:[#allocation3 + $0x20] sm:$0xff] %v2248
      %2281 = vst [vmem:[#allocation3 + $0x28] sm:$0xff] %v2249
      %2282 = vst [vmem:[#allocation3 + $0x30] sm:$0xff] %v2250
      %2283 = vst [vmem:[#allocation3 + $0x38] sm:$0xff] %v2251
      %2284 = vst [vmem:[#allocation3 + $0x40] sm:$0xff] %v2252
      %2285 = vst [vmem:[#allocation3 + $0x48] sm:$0xff] %v2253
      %2286 = vst [vmem:[#allocation3 + $0x50] sm:$0xff] %v2254
      %2287 = vst [vmem:[#allocation3 + $0x58] sm:$0xff] %v2255
      %2288 = vst [vmem:[#allocation3 + $0x60] sm:$0xff] %v2256
      %2289 = vst [vmem:[#allocation3 + $0x68] sm:$0xff] %v2257
      %2290 = vst [vmem:[#allocation3 + $0x70] sm:$0xff] %v2258
      %2291 = vst [vmem:[#allocation3 + $0x78] sm:$0xff] %v2259
      %2292 = vst [vmem:[#allocation3 + $0x80] sm:$0xff] %v2260
      %2293 = vst [vmem:[#allocation3 + $0x88] sm:$0xff] %v2261
      %2294 = vst [vmem:[#allocation3 + $0x90] sm:$0xff] %v2262
      %2295 = vst [vmem:[#allocation3 + $0x98] sm:$0xff] %v2263
      %2296 = vst [vmem:[#allocation3 + $0xa0] sm:$0xff] %v2264
      %2297 = vst [vmem:[#allocation3 + $0xa8] sm:$0xff] %v2265
      %2298 = vst [vmem:[#allocation3 + $0xb0] sm:$0xff] %v2266
      %2299 = vst [vmem:[#allocation3 + $0xb8] sm:$0xff] %v2267
      %2300 = vst [vmem:[#allocation3 + $0xc0] sm:$0xff] %v2268
      %2301 = vst [vmem:[#allocation3 + $0xc8] sm:$0xff] %v2269
      %2302 = vst [vmem:[#allocation3 + $0xd0] sm:$0xff] %v2270
      %2303 = vst [vmem:[#allocation3 + $0xd8] sm:$0xff] %v2271
      %2304 = vst [vmem:[#allocation3 + $0xe0] sm:$0xff] %v2272
      %2305 = vst [vmem:[#allocation3 + $0xe8] sm:$0xff] %v2273
      %2306 = vst [vmem:[#allocation3 + $0xf0] sm:$0xff] %v2274
      %2307 = vst [vmem:[#allocation3 + $0xf8] sm:$0xff] %v2275
      %v2308 = vld [vmem:[%s394 + $0x2] sm:$0xff]
      %v2309 = vld [vmem:[%s394 + $0xa] sm:$0xff]
      %v2310 = vld [vmem:[%s394 + $0x1a] sm:$0xff]
      %v2311 = vld [vmem:[%s394 + $0x22] sm:$0xff]
      %v2312 = vld [vmem:[%s394 + $0x32] sm:$0xff]
      %v2313 = vld [vmem:[%s394 + $0x3a] sm:$0xff]
      %v2314 = vld [vmem:[%s394 + $0x4a] sm:$0xff]
      %v2315 = vld [vmem:[%s394 + $0x52] sm:$0xff]
      %v2316 = vld [vmem:[%s394 + $0x62] sm:$0xff]
      %v2317 = vld [vmem:[%s394 + $0x6a] sm:$0xff]
      %v2318 = vld [vmem:[%s394 + $0x7a] sm:$0xff]
      %v2319 = vld [vmem:[%s394 + $0x82] sm:$0xff]
      %v2320 = vld [vmem:[%s394 + $0x92] sm:$0xff]
      %v2321 = vld [vmem:[%s394 + $0x9a] sm:$0xff]
      %v2322 = vld [vmem:[%s394 + $0xaa] sm:$0xff]
      %v2323 = vld [vmem:[%s394 + $0xb2] sm:$0xff]
      %v2324 = vld [vmem:[%s394 + $0xc2] sm:$0xff]
      %v2325 = vld [vmem:[%s394 + $0xca] sm:$0xff]
      %v2326 = vld [vmem:[%s394 + $0xda] sm:$0xff]
      %v2327 = vld [vmem:[%s394 + $0xe2] sm:$0xff]
      %v2328 = vld [vmem:[%s394 + $0xf2] sm:$0xff]
      %v2329 = vld [vmem:[%s394 + $0xfa] sm:$0xff]
      %v2330 = vld [vmem:[%s394 + $0x10a] sm:$0xff]
      %v2331 = vld [vmem:[%s394 + $0x112] sm:$0xff]
      %v2332 = vld [vmem:[%s394 + $0x122] sm:$0xff]
      %v2333 = vld [vmem:[%s394 + $0x12a] sm:$0xff]
      %v2334 = vld [vmem:[%s394 + $0x13a] sm:$0xff]
      %v2335 = vld [vmem:[%s394 + $0x142] sm:$0xff]
      %v2336 = vld [vmem:[%s394 + $0x152] sm:$0xff]
      %v2337 = vld [vmem:[%s394 + $0x15a] sm:$0xff]
      %v2338 = vld [vmem:[%s394 + $0x16a] sm:$0xff]
      %v2339 = vld [vmem:[%s394 + $0x172] sm:$0xff]
      %v2340 = vpack.c.bf16 %v2309, %v2308
      %v2341 = vpack.c.bf16 %v2311, %v2310
      %v2342 = vpack.c.bf16 %v2313, %v2312
      %v2343 = vpack.c.bf16 %v2315, %v2314
      %v2344 = vpack.c.bf16 %v2317, %v2316
      %v2345 = vpack.c.bf16 %v2319, %v2318
      %v2346 = vpack.c.bf16 %v2321, %v2320
      %v2347 = vpack.c.bf16 %v2323, %v2322
      %v2348 = vpack.c.bf16 %v2325, %v2324
      %v2349 = vpack.c.bf16 %v2327, %v2326
      %v2350 = vpack.c.bf16 %v2329, %v2328
      %v2351 = vpack.c.bf16 %v2331, %v2330
      %v2352 = vpack.c.bf16 %v2333, %v2332
      %v2353 = vpack.c.bf16 %v2335, %v2334
      %v2354 = vpack.c.bf16 %v2337, %v2336
      %v2355 = vpack.c.bf16 %v2339, %v2338
      %v2356 = vld [vmem:[#allocation3] sm:$0xff]
      %v2357 = vld [vmem:[#allocation3 + $0x8] sm:$0xff]
      %v2358 = vld [vmem:[#allocation3 + $0x10] sm:$0xff]
      %v2359 = vld [vmem:[#allocation3 + $0x18] sm:$0xff]
      %v2360 = vld [vmem:[#allocation3 + $0x20] sm:$0xff]
      %v2361 = vld [vmem:[#allocation3 + $0x28] sm:$0xff]
      %v2362 = vld [vmem:[#allocation3 + $0x30] sm:$0xff]
      %v2363 = vld [vmem:[#allocation3 + $0x38] sm:$0xff]
      %v2364 = vld [vmem:[#allocation3 + $0x40] sm:$0xff]
      %v2365 = vld [vmem:[#allocation3 + $0x48] sm:$0xff]
      %v2366 = vld [vmem:[#allocation3 + $0x50] sm:$0xff]
      %v2367 = vld [vmem:[#allocation3 + $0x58] sm:$0xff]
      %v2368 = vld [vmem:[#allocation3 + $0x60] sm:$0xff]
      %v2369 = vld [vmem:[#allocation3 + $0x68] sm:$0xff]
      %v2370 = vld [vmem:[#allocation3 + $0x70] sm:$0xff]
      %v2371 = vld [vmem:[#allocation3 + $0x78] sm:$0xff]
      %v2372 = vld [vmem:[#allocation3 + $0x80] sm:$0xff]
      %v2373 = vld [vmem:[#allocation3 + $0x88] sm:$0xff]
      %v2374 = vld [vmem:[#allocation3 + $0x90] sm:$0xff]
      %v2375 = vld [vmem:[#allocation3 + $0x98] sm:$0xff]
      %v2376 = vld [vmem:[#allocation3 + $0xa0] sm:$0xff]
      %v2377 = vld [vmem:[#allocation3 + $0xa8] sm:$0xff]
      %v2378 = vld [vmem:[#allocation3 + $0xb0] sm:$0xff]
      %v2379 = vld [vmem:[#allocation3 + $0xb8] sm:$0xff]
      %v2380 = vld [vmem:[#allocation3 + $0xc0] sm:$0xff]
      %v2381 = vld [vmem:[#allocation3 + $0xc8] sm:$0xff]
      %v2382 = vld [vmem:[#allocation3 + $0xd0] sm:$0xff]
      %v2383 = vld [vmem:[#allocation3 + $0xd8] sm:$0xff]
      %v2384 = vld [vmem:[#allocation3 + $0xe0] sm:$0xff]
      %v2385 = vld [vmem:[#allocation3 + $0xe8] sm:$0xff]
      %v2386 = vld [vmem:[#allocation3 + $0xf0] sm:$0xff]
      %v2387 = vld [vmem:[#allocation3 + $0xf8] sm:$0xff]
      %s2388 = scalar_lea.vmem %s2, 320
      %v2389 = vld [vmem:[%s2388] sm:$0xf]
      %v2390 = vld [vmem:[%s2388 + $0x4] sm:$0xf]
      %v2391 = vld [vmem:[%s2388 + $0x8] sm:$0xf]
      %v2392 = vld [vmem:[%s2388 + $0xc] sm:$0xf]
      %v2393 = vld [vmem:[%s2388 + $0x10] sm:$0xf]
      %v2394 = vld [vmem:[%s2388 + $0x14] sm:$0xf]
      %v2395 = vld [vmem:[%s2388 + $0x18] sm:$0xf]
      %v2396 = vld [vmem:[%s2388 + $0x1c] sm:$0xf]
      %v2397 = vld [vmem:[%s2388 + $0x20] sm:$0xf]
      %v2398 = vld [vmem:[%s2388 + $0x24] sm:$0xf]
      %v2399 = vld [vmem:[%s2388 + $0x28] sm:$0xf]
      %v2400 = vld [vmem:[%s2388 + $0x2c] sm:$0xf]
      %v2401 = vld [vmem:[%s2388 + $0x30] sm:$0xf]
      %v2402 = vld [vmem:[%s2388 + $0x34] sm:$0xf]
      %v2403 = vld [vmem:[%s2388 + $0x38] sm:$0xf]
      %v2404 = vld [vmem:[%s2388 + $0x3c] sm:$0xf]
      %v2421 = vunpack.c.l.b16 %v2389
      %v2422 = vunpack.c.l.b16 %v2390
      %v2423 = vunpack.c.l.b16 %v2391
      %v2424 = vunpack.c.l.b16 %v2392
      %v2425 = vunpack.c.l.b16 %v2393
      %v2426 = vunpack.c.l.b16 %v2394
      %v2427 = vunpack.c.l.b16 %v2395
      %v2428 = vunpack.c.l.b16 %v2396
      %v2429 = vunpack.c.l.b16 %v2397
      %v2430 = vunpack.c.l.b16 %v2398
      %v2431 = vunpack.c.l.b16 %v2399
      %v2432 = vunpack.c.l.b16 %v2400
      %v2433 = vunpack.c.l.b16 %v2401
      %v2434 = vunpack.c.l.b16 %v2402
      %v2435 = vunpack.c.l.b16 %v2403
      %v2436 = vunpack.c.l.b16 %v2404
      %v2437 = vpack.c.b16 %v2422, %v2421
      %v2438 = vpack.c.b16 %v2424, %v2423
      %v2439 = vpack.c.b16 %v2426, %v2425
      %v2440 = vpack.c.b16 %v2428, %v2427
      %v2441 = vpack.c.b16 %v2430, %v2429
      %v2442 = vpack.c.b16 %v2432, %v2431
      %v2443 = vpack.c.b16 %v2434, %v2433
      %v2444 = vpack.c.b16 %v2436, %v2435
      %2453 = vmatprep.subr.bf16.mxu0 0
      %2454 = vmatpush1.bf16.msra.mxu0 %v2437
      %2455 = vmatprep.subr.bf16.mxu0 0
      %2456 = vmatpush1.bf16.msra.mxu0 %v2438
      %2457 = vmatprep.subr.bf16.mxu0 0
      %2458 = vmatpush1.bf16.msra.mxu0 %v2439
      %2459 = vmatprep.subr.bf16.mxu0 0
      %2460 = vmatpush1.bf16.msra.mxu0 %v2440
      %2461 = vmatprep.subr.bf16.mxu0 0
      %2462 = vmatpush1.bf16.msra.mxu0 %v2441
      %2463 = vmatprep.subr.bf16.mxu0 0
      %2464 = vmatpush1.bf16.msra.mxu0 %v2442
      %2465 = vmatprep.subr.bf16.mxu0 0
      %2466 = vmatpush1.bf16.msra.mxu0 %v2443
      %2467 = vmatprep.subr.bf16.mxu0 0
      %2468 = vmatpush1.bf16.msra.mxu0 %v2444
      %2469 = vmatprep.subr.bf16.mxu0 0
      %2470 = vmatpush1.bf16.msra.mxu0 0
      %2471 = vmatprep.subr.bf16.mxu0 0
      %2472 = vmatpush1.bf16.msra.mxu0 0
      %2473 = vmatprep.subr.bf16.mxu0 0
      %2474 = vmatpush1.bf16.msra.mxu0 0
      %2475 = vmatprep.subr.bf16.mxu0 0
      %2476 = vmatpush1.bf16.msra.mxu0 0
      %2477 = vmatprep.subr.bf16.mxu0 0
      %2478 = vmatpush1.bf16.msra.mxu0 0
      %2479 = vmatprep.subr.bf16.mxu0 0
      %2480 = vmatpush1.bf16.msra.mxu0 0
      %2481 = vmatprep.subr.bf16.mxu0 0
      %2482 = vmatpush1.bf16.msra.mxu0 0
      %2483 = vmatprep.subr.bf16.mxu0 0
      %2484 = vmatpush1.bf16.msra.mxu0 0
      %2485 = vmatprep.mubr.bf16.mxu0 0
      %2486 = vmatmul.mubr.bf16.gmra.mrb[0].mxu0 %v2340
      %v2487 = vpop.f32.mrb[0].mxu0
      %v2488 = vadd.f32 0.0, %v2487
      %v2489 = vpop.f32.mrb[0].mxu0
      %v2490 = vpop.f32.mrb[0].mxu0
      %v2491 = vadd.f32 0.0, %v2490
      %v2492 = vpop.f32.mrb[0].mxu0
      %2493 = vmatprep.mubr.bf16.mxu0 0
      %2494 = vmatmul.mubr.bf16.gmra.mrb[0].mxu0 %v2341
      %v2495 = vpop.f32.mrb[0].mxu0
      %v2496 = vadd.f32 0.0, %v2495
      %v2497 = vpop.f32.mrb[0].mxu0
      %v2498 = vpop.f32.mrb[0].mxu0
      %v2499 = vadd.f32 0.0, %v2498
      %v2500 = vpop.f32.mrb[0].mxu0
      %2501 = vmatprep.mubr.bf16.mxu0 0
      %2502 = vmatmul.mubr.bf16.gmra.mrb[0].mxu0 %v2342
      %v2503 = vpop.f32.mrb[0].mxu0
      %v2504 = vadd.f32 0.0, %v2503
      %v2505 = vpop.f32.mrb[0].mxu0
      %v2506 = vpop.f32.mrb[0].mxu0
      %v2507 = vadd.f32 0.0, %v2506
      %v2508 = vpop.f32.mrb[0].mxu0
      %2509 = vmatprep.mubr.bf16.mxu0 0
      %2510 = vmatmul.mubr.bf16.gmra.mrb[0].mxu0 %v2343
      %v2511 = vpop.f32.mrb[0].mxu0
      %v2512 = vadd.f32 0.0, %v2511
      %v2513 = vpop.f32.mrb[0].mxu0
      %v2514 = vpop.f32.mrb[0].mxu0
      %v2515 = vadd.f32 0.0, %v2514
      %v2516 = vpop.f32.mrb[0].mxu0
      %2517 = vmatprep.mubr.bf16.mxu0 0
      %2518 = vmatmul.mubr.bf16.gmra.mrb[0].mxu0 %v2344
      %v2519 = vpop.f32.mrb[0].mxu0
      %v2520 = vadd.f32 0.0, %v2519
      %v2521 = vpop.f32.mrb[0].mxu0
      %v2522 = vpop.f32.mrb[0].mxu0
      %v2523 = vadd.f32 0.0, %v2522
      %v2524 = vpop.f32.mrb[0].mxu0
      %2525 = vmatprep.mubr.bf16.mxu0 0
      %2526 = vmatmul.mubr.bf16.gmra.mrb[0].mxu0 %v2345
      %v2527 = vpop.f32.mrb[0].mxu0
      %v2528 = vadd.f32 0.0, %v2527
      %v2529 = vpop.f32.mrb[0].mxu0
      %v2530 = vpop.f32.mrb[0].mxu0
      %v2531 = vadd.f32 0.0, %v2530
      %v2532 = vpop.f32.mrb[0].mxu0
      %2533 = vmatprep.mubr.bf16.mxu0 0
      %2534 = vmatmul.mubr.bf16.gmra.mrb[0].mxu0 %v2346
      %v2535 = vpop.f32.mrb[0].mxu0
      %v2536 = vadd.f32 0.0, %v2535
      %v2537 = vpop.f32.mrb[0].mxu0
      %v2538 = vpop.f32.mrb[0].mxu0
      %v2539 = vadd.f32 0.0, %v2538
      %v2540 = vpop.f32.mrb[0].mxu0
      %2541 = vmatprep.mubr.bf16.mxu0 0
      %2542 = vmatmul.mubr.bf16.gmra.mrb[0].mxu0 %v2347
      %v2543 = vpop.f32.mrb[0].mxu0
      %v2544 = vadd.f32 0.0, %v2543
      %v2545 = vpop.f32.mrb[0].mxu0
      %v2546 = vpop.f32.mrb[0].mxu0
      %v2547 = vadd.f32 0.0, %v2546
      %v2548 = vpop.f32.mrb[0].mxu0
      %2549 = vmatprep.mubr.bf16.mxu0 0
      %2550 = vmatmul.mubr.bf16.gmra.mrb[0].mxu0 %v2348
      %v2551 = vpop.f32.mrb[0].mxu0
      %v2552 = vadd.f32 0.0, %v2551
      %v2553 = vpop.f32.mrb[0].mxu0
      %v2554 = vpop.f32.mrb[0].mxu0
      %v2555 = vadd.f32 0.0, %v2554
      %v2556 = vpop.f32.mrb[0].mxu0
      %2557 = vmatprep.mubr.bf16.mxu0 0
      %2558 = vmatmul.mubr.bf16.gmra.mrb[0].mxu0 %v2349
      %v2559 = vpop.f32.mrb[0].mxu0
      %v2560 = vadd.f32 0.0, %v2559
      %v2561 = vpop.f32.mrb[0].mxu0
      %v2562 = vpop.f32.mrb[0].mxu0
      %v2563 = vadd.f32 0.0, %v2562
      %v2564 = vpop.f32.mrb[0].mxu0
      %2565 = vmatprep.mubr.bf16.mxu0 0
      %2566 = vmatmul.mubr.bf16.gmra.mrb[0].mxu0 %v2350
      %v2567 = vpop.f32.mrb[0].mxu0
      %v2568 = vadd.f32 0.0, %v2567
      %v2569 = vpop.f32.mrb[0].mxu0
      %v2570 = vpop.f32.mrb[0].mxu0
      %v2571 = vadd.f32 0.0, %v2570
      %v2572 = vpop.f32.mrb[0].mxu0
      %2573 = vmatprep.mubr.bf16.mxu0 0
      %2574 = vmatmul.mubr.bf16.gmra.mrb[0].mxu0 %v2351
      %v2575 = vpop.f32.mrb[0].mxu0
      %v2576 = vadd.f32 0.0, %v2575
      %v2577 = vpop.f32.mrb[0].mxu0
      %v2578 = vpop.f32.mrb[0].mxu0
      %v2579 = vadd.f32 0.0, %v2578
      %v2580 = vpop.f32.mrb[0].mxu0
      %2581 = vmatprep.mubr.bf16.mxu0 0
      %2582 = vmatmul.mubr.bf16.gmra.mrb[0].mxu0 %v2352
      %v2583 = vpop.f32.mrb[0].mxu0
      %v2584 = vadd.f32 0.0, %v2583
      %v2585 = vpop.f32.mrb[0].mxu0
      %v2586 = vpop.f32.mrb[0].mxu0
      %v2587 = vadd.f32 0.0, %v2586
      %v2588 = vpop.f32.mrb[0].mxu0
      %2589 = vmatprep.mubr.bf16.mxu0 0
      %2590 = vmatmul.mubr.bf16.gmra.mrb[0].mxu0 %v2353
      %v2591 = vpop.f32.mrb[0].mxu0
      %v2592 = vadd.f32 0.0, %v2591
      %v2593 = vpop.f32.mrb[0].mxu0
      %v2594 = vpop.f32.mrb[0].mxu0
      %v2595 = vadd.f32 0.0, %v2594
      %v2596 = vpop.f32.mrb[0].mxu0
      %2597 = vmatprep.mubr.bf16.mxu0 0
      %2598 = vmatmul.mubr.bf16.gmra.mrb[0].mxu0 %v2354
      %v2599 = vpop.f32.mrb[0].mxu0
      %v2600 = vadd.f32 0.0, %v2599
      %v2601 = vpop.f32.mrb[0].mxu0
      %v2602 = vpop.f32.mrb[0].mxu0
      %v2603 = vadd.f32 0.0, %v2602
      %v2604 = vpop.f32.mrb[0].mxu0
      %2605 = vmatprep.mubr.bf16.mxu0 0
      %2606 = vmatmul.mubr.bf16.gmra.mrb[0].mxu0 %v2355
      %v2607 = vpop.f32.mrb[0].mxu0
      %v2608 = vadd.f32 0.0, %v2607
      %v2609 = vpop.f32.mrb[0].mxu0
      %v2610 = vpop.f32.mrb[0].mxu0
      %v2611 = vadd.f32 0.0, %v2610
      %v2612 = vpop.f32.mrb[0].mxu0
      %2613 = vdwg.mxu0
      %v2614 = vadd.f32 %v2356, %v2488
      %v2615 = vadd.f32 %v2357, %v2491
      %v2616 = vadd.f32 %v2358, %v2496
      %v2617 = vadd.f32 %v2359, %v2499
      %v2618 = vadd.f32 %v2360, %v2504
      %v2619 = vadd.f32 %v2361, %v2507
      %v2620 = vadd.f32 %v2362, %v2512
      %v2621 = vadd.f32 %v2363, %v2515
      %v2622 = vadd.f32 %v2364, %v2520
      %v2623 = vadd.f32 %v2365, %v2523
      %v2624 = vadd.f32 %v2366, %v2528
      %v2625 = vadd.f32 %v2367, %v2531
      %v2626 = vadd.f32 %v2368, %v2536
      %v2627 = vadd.f32 %v2369, %v2539
      %v2628 = vadd.f32 %v2370, %v2544
      %v2629 = vadd.f32 %v2371, %v2547
      %v2630 = vadd.f32 %v2372, %v2552
      %v2631 = vadd.f32 %v2373, %v2555
      %v2632 = vadd.f32 %v2374, %v2560
      %v2633 = vadd.f32 %v2375, %v2563
      %v2634 = vadd.f32 %v2376, %v2568
      %v2635 = vadd.f32 %v2377, %v2571
      %v2636 = vadd.f32 %v2378, %v2576
      %v2637 = vadd.f32 %v2379, %v2579
      %v2638 = vadd.f32 %v2380, %v2584
      %v2639 = vadd.f32 %v2381, %v2587
      %v2640 = vadd.f32 %v2382, %v2592
      %v2641 = vadd.f32 %v2383, %v2595
      %v2642 = vadd.f32 %v2384, %v2600
      %v2643 = vadd.f32 %v2385, %v2603
      %v2644 = vadd.f32 %v2386, %v2608
      %v2645 = vadd.f32 %v2387, %v2611
      %2646 = vst [vmem:[#allocation3] sm:$0xff] %v2614
      %2647 = vst [vmem:[#allocation3 + $0x8] sm:$0xff] %v2615
      %2648 = vst [vmem:[#allocation3 + $0x10] sm:$0xff] %v2616
      %2649 = vst [vmem:[#allocation3 + $0x18] sm:$0xff] %v2617
      %2650 = vst [vmem:[#allocation3 + $0x20] sm:$0xff] %v2618
      %2651 = vst [vmem:[#allocation3 + $0x28] sm:$0xff] %v2619
      %2652 = vst [vmem:[#allocation3 + $0x30] sm:$0xff] %v2620
      %2653 = vst [vmem:[#allocation3 + $0x38] sm:$0xff] %v2621
      %2654 = vst [vmem:[#allocation3 + $0x40] sm:$0xff] %v2622
      %2655 = vst [vmem:[#allocation3 + $0x48] sm:$0xff] %v2623
      %2656 = vst [vmem:[#allocation3 + $0x50] sm:$0xff] %v2624
      %2657 = vst [vmem:[#allocation3 + $0x58] sm:$0xff] %v2625
      %2658 = vst [vmem:[#allocation3 + $0x60] sm:$0xff] %v2626
      %2659 = vst [vmem:[#allocation3 + $0x68] sm:$0xff] %v2627
      %2660 = vst [vmem:[#allocation3 + $0x70] sm:$0xff] %v2628
      %2661 = vst [vmem:[#allocation3 + $0x78] sm:$0xff] %v2629
      %2662 = vst [vmem:[#allocation3 + $0x80] sm:$0xff] %v2630
      %2663 = vst [vmem:[#allocation3 + $0x88] sm:$0xff] %v2631
      %2664 = vst [vmem:[#allocation3 + $0x90] sm:$0xff] %v2632
      %2665 = vst [vmem:[#allocation3 + $0x98] sm:$0xff] %v2633
      %2666 = vst [vmem:[#allocation3 + $0xa0] sm:$0xff] %v2634
      %2667 = vst [vmem:[#allocation3 + $0xa8] sm:$0xff] %v2635
      %2668 = vst [vmem:[#allocation3 + $0xb0] sm:$0xff] %v2636
      %2669 = vst [vmem:[#allocation3 + $0xb8] sm:$0xff] %v2637
      %2670 = vst [vmem:[#allocation3 + $0xc0] sm:$0xff] %v2638
      %2671 = vst [vmem:[#allocation3 + $0xc8] sm:$0xff] %v2639
      %2672 = vst [vmem:[#allocation3 + $0xd0] sm:$0xff] %v2640
      %2673 = vst [vmem:[#allocation3 + $0xd8] sm:$0xff] %v2641
      %2674 = vst [vmem:[#allocation3 + $0xe0] sm:$0xff] %v2642
      %2675 = vst [vmem:[#allocation3 + $0xe8] sm:$0xff] %v2643
      %2676 = vst [vmem:[#allocation3 + $0xf0] sm:$0xff] %v2644
      %2677 = vst [vmem:[#allocation3 + $0xf8] sm:$0xff] %v2645
      %s2678 = scalar_lea.vmem [#allocation2], 48
      %v2679 = vld [vmem:[%s2678] sm:$0xff]
      %v2680 = vld [vmem:[%s2678 + $0x8] sm:$0xff]
      %v2681 = vld [vmem:[%s2678 + $0x18] sm:$0xff]
      %v2682 = vld [vmem:[%s2678 + $0x20] sm:$0xff]
      %v2683 = vld [vmem:[%s2678 + $0x30] sm:$0xff]
      %v2684 = vld [vmem:[%s2678 + $0x38] sm:$0xff]
      %v2685 = vld [vmem:[%s2678 + $0x48] sm:$0xff]
      %v2686 = vld [vmem:[%s2678 + $0x50] sm:$0xff]
      %v2687 = vld [vmem:[%s2678 + $0x60] sm:$0xff]
      %v2688 = vld [vmem:[%s2678 + $0x68] sm:$0xff]
      %v2689 = vld [vmem:[%s2678 + $0x78] sm:$0xff]
      %v2690 = vld [vmem:[%s2678 + $0x80] sm:$0xff]
      %v2691 = vld [vmem:[%s2678 + $0x90] sm:$0xff]
      %v2692 = vld [vmem:[%s2678 + $0x98] sm:$0xff]
      %v2693 = vld [vmem:[%s2678 + $0xa8] sm:$0xff]
      %v2694 = vld [vmem:[%s2678 + $0xb0] sm:$0xff]
      %v2695 = vld [vmem:[%s2678 + $0xc0] sm:$0xff]
      %v2696 = vld [vmem:[%s2678 + $0xc8] sm:$0xff]
      %v2697 = vld [vmem:[%s2678 + $0xd8] sm:$0xff]
      %v2698 = vld [vmem:[%s2678 + $0xe0] sm:$0xff]
      %v2699 = vld [vmem:[%s2678 + $0xf0] sm:$0xff]
      %v2700 = vld [vmem:[%s2678 + $0xf8] sm:$0xff]
      %v2701 = vld [vmem:[%s2678 + $0x108] sm:$0xff]
      %v2702 = vld [vmem:[%s2678 + $0x110] sm:$0xff]
      %v2703 = vld [vmem:[%s2678 + $0x120] sm:$0xff]
      %v2704 = vld [vmem:[%s2678 + $0x128] sm:$0xff]
      %v2705 = vld [vmem:[%s2678 + $0x138] sm:$0xff]
      %v2706 = vld [vmem:[%s2678 + $0x140] sm:$0xff]
      %v2707 = vld [vmem:[%s2678 + $0x150] sm:$0xff]
      %v2708 = vld [vmem:[%s2678 + $0x158] sm:$0xff]
      %v2709 = vld [vmem:[%s2678 + $0x168] sm:$0xff]
      %v2710 = vld [vmem:[%s2678 + $0x170] sm:$0xff]
      %v2711 = vpack.c.bf16 %v2680, %v2679
      %v2712 = vpack.c.bf16 %v2682, %v2681
      %v2713 = vpack.c.bf16 %v2684, %v2683
      %v2714 = vpack.c.bf16 %v2686, %v2685
      %v2715 = vpack.c.bf16 %v2688, %v2687
      %v2716 = vpack.c.bf16 %v2690, %v2689
      %v2717 = vpack.c.bf16 %v2692, %v2691
      %v2718 = vpack.c.bf16 %v2694, %v2693
      %v2719 = vpack.c.bf16 %v2696, %v2695
      %v2720 = vpack.c.bf16 %v2698, %v2697
      %v2721 = vpack.c.bf16 %v2700, %v2699
      %v2722 = vpack.c.bf16 %v2702, %v2701
      %v2723 = vpack.c.bf16 %v2704, %v2703
      %v2724 = vpack.c.bf16 %v2706, %v2705
      %v2725 = vpack.c.bf16 %v2708, %v2707
      %v2726 = vpack.c.bf16 %v2710, %v2709
      %v2727 = vld [vmem:[#allocation3] sm:$0xff]
      %v2728 = vld [vmem:[#allocation3 + $0x8] sm:$0xff]
      %v2729 = vld [vmem:[#allocation3 + $0x10] sm:$0xff]
      %v2730 = vld [vmem:[#allocation3 + $0x18] sm:$0xff]
      %v2731 = vld [vmem:[#allocation3 + $0x20] sm:$0xff]
      %v2732 = vld [vmem:[#allocation3 + $0x28] sm:$0xff]
      %v2733 = vld [vmem:[#allocation3 + $0x30] sm:$0xff]
      %v2734 = vld [vmem:[#allocation3 + $0x38] sm:$0xff]
      %v2735 = vld [vmem:[#allocation3 + $0x40] sm:$0xff]
      %v2736 = vld [vmem:[#allocation3 + $0x48] sm:$0xff]
      %v2737 = vld [vmem:[#allocation3 + $0x50] sm:$0xff]
      %v2738 = vld [vmem:[#allocation3 + $0x58] sm:$0xff]
      %v2739 = vld [vmem:[#allocation3 + $0x60] sm:$0xff]
      %v2740 = vld [vmem:[#allocation3 + $0x68] sm:$0xff]
      %v2741 = vld [vmem:[#allocation3 + $0x70] sm:$0xff]
      %v2742 = vld [vmem:[#allocation3 + $0x78] sm:$0xff]
      %v2743 = vld [vmem:[#allocation3 + $0x80] sm:$0xff]
      %v2744 = vld [vmem:[#allocation3 + $0x88] sm:$0xff]
      %v2745 = vld [vmem:[#allocation3 + $0x90] sm:$0xff]
      %v2746 = vld [vmem:[#allocation3 + $0x98] sm:$0xff]
      %v2747 = vld [vmem:[#allocation3 + $0xa0] sm:$0xff]
      %v2748 = vld [vmem:[#allocation3 + $0xa8] sm:$0xff]
      %v2749 = vld [vmem:[#allocation3 + $0xb0] sm:$0xff]
      %v2750 = vld [vmem:[#allocation3 + $0xb8] sm:$0xff]
      %v2751 = vld [vmem:[#allocation3 + $0xc0] sm:$0xff]
      %v2752 = vld [vmem:[#allocation3 + $0xc8] sm:$0xff]
      %v2753 = vld [vmem:[#allocation3 + $0xd0] sm:$0xff]
      %v2754 = vld [vmem:[#allocation3 + $0xd8] sm:$0xff]
      %v2755 = vld [vmem:[#allocation3 + $0xe0] sm:$0xff]
      %v2756 = vld [vmem:[#allocation3 + $0xe8] sm:$0xff]
      %v2757 = vld [vmem:[#allocation3 + $0xf0] sm:$0xff]
      %v2758 = vld [vmem:[#allocation3 + $0xf8] sm:$0xff]
      %s2759 = scalar_lea.vmem %s2, 384
      %v2760 = vld [vmem:[%s2759] sm:$0xf]
      %v2761 = vld [vmem:[%s2759 + $0x4] sm:$0xf]
      %v2762 = vld [vmem:[%s2759 + $0x8] sm:$0xf]
      %v2763 = vld [vmem:[%s2759 + $0xc] sm:$0xf]
      %v2764 = vld [vmem:[%s2759 + $0x10] sm:$0xf]
      %v2765 = vld [vmem:[%s2759 + $0x14] sm:$0xf]
      %v2766 = vld [vmem:[%s2759 + $0x18] sm:$0xf]
      %v2767 = vld [vmem:[%s2759 + $0x1c] sm:$0xf]
      %v2768 = vld [vmem:[%s2759 + $0x20] sm:$0xf]
      %v2769 = vld [vmem:[%s2759 + $0x24] sm:$0xf]
      %v2770 = vld [vmem:[%s2759 + $0x28] sm:$0xf]
      %v2771 = vld [vmem:[%s2759 + $0x2c] sm:$0xf]
      %v2772 = vld [vmem:[%s2759 + $0x30] sm:$0xf]
      %v2773 = vld [vmem:[%s2759 + $0x34] sm:$0xf]
      %v2774 = vld [vmem:[%s2759 + $0x38] sm:$0xf]
      %v2775 = vld [vmem:[%s2759 + $0x3c] sm:$0xf]
      %v2792 = vunpack.c.l.b16 %v2760
      %v2793 = vunpack.c.l.b16 %v2761
      %v2794 = vunpack.c.l.b16 %v2762
      %v2795 = vunpack.c.l.b16 %v2763
      %v2796 = vunpack.c.l.b16 %v2764
      %v2797 = vunpack.c.l.b16 %v2765
      %v2798 = vunpack.c.l.b16 %v2766
      %v2799 = vunpack.c.l.b16 %v2767
      %v2800 = vunpack.c.l.b16 %v2768
      %v2801 = vunpack.c.l.b16 %v2769
      %v2802 = vunpack.c.l.b16 %v2770
      %v2803 = vunpack.c.l.b16 %v2771
      %v2804 = vunpack.c.l.b16 %v2772
      %v2805 = vunpack.c.l.b16 %v2773
      %v2806 = vunpack.c.l.b16 %v2774
      %v2807 = vunpack.c.l.b16 %v2775
      %v2808 = vpack.c.b16 %v2793, %v2792
      %v2809 = vpack.c.b16 %v2795, %v2794
      %v2810 = vpack.c.b16 %v2797, %v2796
      %v2811 = vpack.c.b16 %v2799, %v2798
      %v2812 = vpack.c.b16 %v2801, %v2800
      %v2813 = vpack.c.b16 %v2803, %v2802
      %v2814 = vpack.c.b16 %v2805, %v2804
      %v2815 = vpack.c.b16 %v2807, %v2806
      %2824 = vmatprep.subr.bf16.mxu0 0
      %2825 = vmatpush1.bf16.msra.mxu0 %v2808
      %2826 = vmatprep.subr.bf16.mxu0 0
      %2827 = vmatpush1.bf16.msra.mxu0 %v2809
      %2828 = vmatprep.subr.bf16.mxu0 0
      %2829 = vmatpush1.bf16.msra.mxu0 %v2810
      %2830 = vmatprep.subr.bf16.mxu0 0
      %2831 = vmatpush1.bf16.msra.mxu0 %v2811
      %2832 = vmatprep.subr.bf16.mxu0 0
      %2833 = vmatpush1.bf16.msra.mxu0 %v2812
      %2834 = vmatprep.subr.bf16.mxu0 0
      %2835 = vmatpush1.bf16.msra.mxu0 %v2813
      %2836 = vmatprep.subr.bf16.mxu0 0
      %2837 = vmatpush1.bf16.msra.mxu0 %v2814
      %2838 = vmatprep.subr.bf16.mxu0 0
      %2839 = vmatpush1.bf16.msra.mxu0 %v2815
      %2840 = vmatprep.subr.bf16.mxu0 0
      %2841 = vmatpush1.bf16.msra.mxu0 0
      %2842 = vmatprep.subr.bf16.mxu0 0
      %2843 = vmatpush1.bf16.msra.mxu0 0
      %2844 = vmatprep.subr.bf16.mxu0 0
      %2845 = vmatpush1.bf16.msra.mxu0 0
      %2846 = vmatprep.subr.bf16.mxu0 0
      %2847 = vmatpush1.bf16.msra.mxu0 0
      %2848 = vmatprep.subr.bf16.mxu0 0
      %2849 = vmatpush1.bf16.msra.mxu0 0
      %2850 = vmatprep.subr.bf16.mxu0 0
      %2851 = vmatpush1.bf16.msra.mxu0 0
      %2852 = vmatprep.subr.bf16.mxu0 0
      %2853 = vmatpush1.bf16.msra.mxu0 0
      %2854 = vmatprep.subr.bf16.mxu0 0
      %2855 = vmatpush1.bf16.msra.mxu0 0
      %2856 = vmatprep.mubr.bf16.mxu0 0
      %2857 = vmatmul.mubr.bf16.gmra.mrb[0].mxu0 %v2711
      %v2858 = vpop.f32.mrb[0].mxu0
      %v2859 = vadd.f32 0.0, %v2858
      %v2860 = vpop.f32.mrb[0].mxu0
      %v2861 = vpop.f32.mrb[0].mxu0
      %v2862 = vadd.f32 0.0, %v2861
      %v2863 = vpop.f32.mrb[0].mxu0
      %2864 = vmatprep.mubr.bf16.mxu0 0
      %2865 = vmatmul.mubr.bf16.gmra.mrb[0].mxu0 %v2712
      %v2866 = vpop.f32.mrb[0].mxu0
      %v2867 = vadd.f32 0.0, %v2866
      %v2868 = vpop.f32.mrb[0].mxu0
      %v2869 = vpop.f32.mrb[0].mxu0
      %v2870 = vadd.f32 0.0, %v2869
      %v2871 = vpop.f32.mrb[0].mxu0
      %2872 = vmatprep.mubr.bf16.mxu0 0
      %2873 = vmatmul.mubr.bf16.gmra.mrb[0].mxu0 %v2713
      %v2874 = vpop.f32.mrb[0].mxu0
      %v2875 = vadd.f32 0.0, %v2874
      %v2876 = vpop.f32.mrb[0].mxu0
      %v2877 = vpop.f32.mrb[0].mxu0
      %v2878 = vadd.f32 0.0, %v2877
      %v2879 = vpop.f32.mrb[0].mxu0
      %2880 = vmatprep.mubr.bf16.mxu0 0
      %2881 = vmatmul.mubr.bf16.gmra.mrb[0].mxu0 %v2714
      %v2882 = vpop.f32.mrb[0].mxu0
      %v2883 = vadd.f32 0.0, %v2882
      %v2884 = vpop.f32.mrb[0].mxu0
      %v2885 = vpop.f32.mrb[0].mxu0
      %v2886 = vadd.f32 0.0, %v2885
      %v2887 = vpop.f32.mrb[0].mxu0
      %2888 = vmatprep.mubr.bf16.mxu0 0
      %2889 = vmatmul.mubr.bf16.gmra.mrb[0].mxu0 %v2715
      %v2890 = vpop.f32.mrb[0].mxu0
      %v2891 = vadd.f32 0.0, %v2890
      %v2892 = vpop.f32.mrb[0].mxu0
      %v2893 = vpop.f32.mrb[0].mxu0
      %v2894 = vadd.f32 0.0, %v2893
      %v2895 = vpop.f32.mrb[0].mxu0
      %2896 = vmatprep.mubr.bf16.mxu0 0
      %2897 = vmatmul.mubr.bf16.gmra.mrb[0].mxu0 %v2716
      %v2898 = vpop.f32.mrb[0].mxu0
      %v2899 = vadd.f32 0.0, %v2898
      %v2900 = vpop.f32.mrb[0].mxu0
      %v2901 = vpop.f32.mrb[0].mxu0
      %v2902 = vadd.f32 0.0, %v2901
      %v2903 = vpop.f32.mrb[0].mxu0
      %2904 = vmatprep.mubr.bf16.mxu0 0
      %2905 = vmatmul.mubr.bf16.gmra.mrb[0].mxu0 %v2717
      %v2906 = vpop.f32.mrb[0].mxu0
      %v2907 = vadd.f32 0.0, %v2906
      %v2908 = vpop.f32.mrb[0].mxu0
      %v2909 = vpop.f32.mrb[0].mxu0
      %v2910 = vadd.f32 0.0, %v2909
      %v2911 = vpop.f32.mrb[0].mxu0
      %2912 = vmatprep.mubr.bf16.mxu0 0
      %2913 = vmatmul.mubr.bf16.gmra.mrb[0].mxu0 %v2718
      %v2914 = vpop.f32.mrb[0].mxu0
      %v2915 = vadd.f32 0.0, %v2914
      %v2916 = vpop.f32.mrb[0].mxu0
      %v2917 = vpop.f32.mrb[0].mxu0
      %v2918 = vadd.f32 0.0, %v2917
      %v2919 = vpop.f32.mrb[0].mxu0
      %2920 = vmatprep.mubr.bf16.mxu0 0
      %2921 = vmatmul.mubr.bf16.gmra.mrb[0].mxu0 %v2719
      %v2922 = vpop.f32.mrb[0].mxu0
      %v2923 = vadd.f32 0.0, %v2922
      %v2924 = vpop.f32.mrb[0].mxu0
      %v2925 = vpop.f32.mrb[0].mxu0
      %v2926 = vadd.f32 0.0, %v2925
      %v2927 = vpop.f32.mrb[0].mxu0
      %2928 = vmatprep.mubr.bf16.mxu0 0
      %2929 = vmatmul.mubr.bf16.gmra.mrb[0].mxu0 %v2720
      %v2930 = vpop.f32.mrb[0].mxu0
      %v2931 = vadd.f32 0.0, %v2930
      %v2932 = vpop.f32.mrb[0].mxu0
      %v2933 = vpop.f32.mrb[0].mxu0
      %v2934 = vadd.f32 0.0, %v2933
      %v2935 = vpop.f32.mrb[0].mxu0
      %2936 = vmatprep.mubr.bf16.mxu0 0
      %2937 = vmatmul.mubr.bf16.gmra.mrb[0].mxu0 %v2721
      %v2938 = vpop.f32.mrb[0].mxu0
      %v2939 = vadd.f32 0.0, %v2938
      %v2940 = vpop.f32.mrb[0].mxu0
      %v2941 = vpop.f32.mrb[0].mxu0
      %v2942 = vadd.f32 0.0, %v2941
      %v2943 = vpop.f32.mrb[0].mxu0
      %2944 = vmatprep.mubr.bf16.mxu0 0
      %2945 = vmatmul.mubr.bf16.gmra.mrb[0].mxu0 %v2722
      %v2946 = vpop.f32.mrb[0].mxu0
      %v2947 = vadd.f32 0.0, %v2946
      %v2948 = vpop.f32.mrb[0].mxu0
      %v2949 = vpop.f32.mrb[0].mxu0
      %v2950 = vadd.f32 0.0, %v2949
      %v2951 = vpop.f32.mrb[0].mxu0
      %2952 = vmatprep.mubr.bf16.mxu0 0
      %2953 = vmatmul.mubr.bf16.gmra.mrb[0].mxu0 %v2723
      %v2954 = vpop.f32.mrb[0].mxu0
      %v2955 = vadd.f32 0.0, %v2954
      %v2956 = vpop.f32.mrb[0].mxu0
      %v2957 = vpop.f32.mrb[0].mxu0
      %v2958 = vadd.f32 0.0, %v2957
      %v2959 = vpop.f32.mrb[0].mxu0
      %2960 = vmatprep.mubr.bf16.mxu0 0
      %2961 = vmatmul.mubr.bf16.gmra.mrb[0].mxu0 %v2724
      %v2962 = vpop.f32.mrb[0].mxu0
      %v2963 = vadd.f32 0.0, %v2962
      %v2964 = vpop.f32.mrb[0].mxu0
      %v2965 = vpop.f32.mrb[0].mxu0
      %v2966 = vadd.f32 0.0, %v2965
      %v2967 = vpop.f32.mrb[0].mxu0
      %2968 = vmatprep.mubr.bf16.mxu0 0
      %2969 = vmatmul.mubr.bf16.gmra.mrb[0].mxu0 %v2725
      %v2970 = vpop.f32.mrb[0].mxu0
      %v2971 = vadd.f32 0.0, %v2970
      %v2972 = vpop.f32.mrb[0].mxu0
      %v2973 = vpop.f32.mrb[0].mxu0
      %v2974 = vadd.f32 0.0, %v2973
      %v2975 = vpop.f32.mrb[0].mxu0
      %2976 = vmatprep.mubr.bf16.mxu0 0
      %2977 = vmatmul.mubr.bf16.gmra.mrb[0].mxu0 %v2726
      %v2978 = vpop.f32.mrb[0].mxu0
      %v2979 = vadd.f32 0.0, %v2978
      %v2980 = vpop.f32.mrb[0].mxu0
      %v2981 = vpop.f32.mrb[0].mxu0
      %v2982 = vadd.f32 0.0, %v2981
      %v2983 = vpop.f32.mrb[0].mxu0
      %2984 = vdwg.mxu0
      %v2985 = vadd.f32 %v2727, %v2859
      %v2986 = vadd.f32 %v2728, %v2862
      %v2987 = vadd.f32 %v2729, %v2867
      %v2988 = vadd.f32 %v2730, %v2870
      %v2989 = vadd.f32 %v2731, %v2875
      %v2990 = vadd.f32 %v2732, %v2878
      %v2991 = vadd.f32 %v2733, %v2883
      %v2992 = vadd.f32 %v2734, %v2886
      %v2993 = vadd.f32 %v2735, %v2891
      %v2994 = vadd.f32 %v2736, %v2894
      %v2995 = vadd.f32 %v2737, %v2899
      %v2996 = vadd.f32 %v2738, %v2902
      %v2997 = vadd.f32 %v2739, %v2907
      %v2998 = vadd.f32 %v2740, %v2910
      %v2999 = vadd.f32 %v2741, %v2915
      %v3000 = vadd.f32 %v2742, %v2918
      %v3001 = vadd.f32 %v2743, %v2923
      %v3002 = vadd.f32 %v2744, %v2926
      %v3003 = vadd.f32 %v2745, %v2931
      %v3004 = vadd.f32 %v2746, %v2934
      %v3005 = vadd.f32 %v2747, %v2939
      %v3006 = vadd.f32 %v2748, %v2942
      %v3007 = vadd.f32 %v2749, %v2947
      %v3008 = vadd.f32 %v2750, %v2950
      %v3009 = vadd.f32 %v2751, %v2955
      %v3010 = vadd.f32 %v2752, %v2958
      %v3011 = vadd.f32 %v2753, %v2963
      %v3012 = vadd.f32 %v2754, %v2966
      %v3013 = vadd.f32 %v2755, %v2971
      %v3014 = vadd.f32 %v2756, %v2974
      %v3015 = vadd.f32 %v2757, %v2979
      %v3016 = vadd.f32 %v2758, %v2982
      %3017 = vst [vmem:[#allocation3] sm:$0xff] %v2985
      %3018 = vst [vmem:[#allocation3 + $0x8] sm:$0xff] %v2986
      %3019 = vst [vmem:[#allocation3 + $0x10] sm:$0xff] %v2987
      %3020 = vst [vmem:[#allocation3 + $0x18] sm:$0xff] %v2988
      %3021 = vst [vmem:[#allocation3 + $0x20] sm:$0xff] %v2989
      %3022 = vst [vmem:[#allocation3 + $0x28] sm:$0xff] %v2990
      %3023 = vst [vmem:[#allocation3 + $0x30] sm:$0xff] %v2991
      %3024 = vst [vmem:[#allocation3 + $0x38] sm:$0xff] %v2992
      %3025 = vst [vmem:[#allocation3 + $0x40] sm:$0xff] %v2993
      %3026 = vst [vmem:[#allocation3 + $0x48] sm:$0xff] %v2994
      %3027 = vst [vmem:[#allocation3 + $0x50] sm:$0xff] %v2995
      %3028 = vst [vmem:[#allocation3 + $0x58] sm:$0xff] %v2996
      %3029 = vst [vmem:[#allocation3 + $0x60] sm:$0xff] %v2997
      %3030 = vst [vmem:[#allocation3 + $0x68] sm:$0xff] %v2998
      %3031 = vst [vmem:[#allocation3 + $0x70] sm:$0xff] %v2999
      %3032 = vst [vmem:[#allocation3 + $0x78] sm:$0xff] %v3000
      %3033 = vst [vmem:[#allocation3 + $0x80] sm:$0xff] %v3001
      %3034 = vst [vmem:[#allocation3 + $0x88] sm:$0xff] %v3002
      %3035 = vst [vmem:[#allocation3 + $0x90] sm:$0xff] %v3003
      %3036 = vst [vmem:[#allocation3 + $0x98] sm:$0xff] %v3004
      %3037 = vst [vmem:[#allocation3 + $0xa0] sm:$0xff] %v3005
      %3038 = vst [vmem:[#allocation3 + $0xa8] sm:$0xff] %v3006
      %3039 = vst [vmem:[#allocation3 + $0xb0] sm:$0xff] %v3007
      %3040 = vst [vmem:[#allocation3 + $0xb8] sm:$0xff] %v3008
      %3041 = vst [vmem:[#allocation3 + $0xc0] sm:$0xff] %v3009
      %3042 = vst [vmem:[#allocation3 + $0xc8] sm:$0xff] %v3010
      %3043 = vst [vmem:[#allocation3 + $0xd0] sm:$0xff] %v3011
      %3044 = vst [vmem:[#allocation3 + $0xd8] sm:$0xff] %v3012
      %3045 = vst [vmem:[#allocation3 + $0xe0] sm:$0xff] %v3013
      %3046 = vst [vmem:[#allocation3 + $0xe8] sm:$0xff] %v3014
      %3047 = vst [vmem:[#allocation3 + $0xf0] sm:$0xff] %v3015
      %3048 = vst [vmem:[#allocation3 + $0xf8] sm:$0xff] %v3016
      %v3049 = vld [vmem:[%s2678 + $0x1] sm:$0xff]
      %v3050 = vld [vmem:[%s2678 + $0x9] sm:$0xff]
      %v3051 = vld [vmem:[%s2678 + $0x19] sm:$0xff]
      %v3052 = vld [vmem:[%s2678 + $0x21] sm:$0xff]
      %v3053 = vld [vmem:[%s2678 + $0x31] sm:$0xff]
      %v3054 = vld [vmem:[%s2678 + $0x39] sm:$0xff]
      %v3055 = vld [vmem:[%s2678 + $0x49] sm:$0xff]
      %v3056 = vld [vmem:[%s2678 + $0x51] sm:$0xff]
      %v3057 = vld [vmem:[%s2678 + $0x61] sm:$0xff]
      %v3058 = vld [vmem:[%s2678 + $0x69] sm:$0xff]
      %v3059 = vld [vmem:[%s2678 + $0x79] sm:$0xff]
      %v3060 = vld [vmem:[%s2678 + $0x81] sm:$0xff]
      %v3061 = vld [vmem:[%s2678 + $0x91] sm:$0xff]
      %v3062 = vld [vmem:[%s2678 + $0x99] sm:$0xff]
      %v3063 = vld [vmem:[%s2678 + $0xa9] sm:$0xff]
      %v3064 = vld [vmem:[%s2678 + $0xb1] sm:$0xff]
      %v3065 = vld [vmem:[%s2678 + $0xc1] sm:$0xff]
      %v3066 = vld [vmem:[%s2678 + $0xc9] sm:$0xff]
      %v3067 = vld [vmem:[%s2678 + $0xd9] sm:$0xff]
      %v3068 = vld [vmem:[%s2678 + $0xe1] sm:$0xff]
      %v3069 = vld [vmem:[%s2678 + $0xf1] sm:$0xff]
      %v3070 = vld [vmem:[%s2678 + $0xf9] sm:$0xff]
      %v3071 = vld [vmem:[%s2678 + $0x109] sm:$0xff]
      %v3072 = vld [vmem:[%s2678 + $0x111] sm:$0xff]
      %v3073 = vld [vmem:[%s2678 + $0x121] sm:$0xff]
      %v3074 = vld [vmem:[%s2678 + $0x129] sm:$0xff]
      %v3075 = vld [vmem:[%s2678 + $0x139] sm:$0xff]
      %v3076 = vld [vmem:[%s2678 + $0x141] sm:$0xff]
      %v3077 = vld [vmem:[%s2678 + $0x151] sm:$0xff]
      %v3078 = vld [vmem:[%s2678 + $0x159] sm:$0xff]
      %v3079 = vld [vmem:[%s2678 + $0x169] sm:$0xff]
      %v3080 = vld [vmem:[%s2678 + $0x171] sm:$0xff]
      %v3081 = vpack.c.bf16 %v3050, %v3049
      %v3082 = vpack.c.bf16 %v3052, %v3051
      %v3083 = vpack.c.bf16 %v3054, %v3053
      %v3084 = vpack.c.bf16 %v3056, %v3055
      %v3085 = vpack.c.bf16 %v3058, %v3057
      %v3086 = vpack.c.bf16 %v3060, %v3059
      %v3087 = vpack.c.bf16 %v3062, %v3061
      %v3088 = vpack.c.bf16 %v3064, %v3063
      %v3089 = vpack.c.bf16 %v3066, %v3065
      %v3090 = vpack.c.bf16 %v3068, %v3067
      %v3091 = vpack.c.bf16 %v3070, %v3069
      %v3092 = vpack.c.bf16 %v3072, %v3071
      %v3093 = vpack.c.bf16 %v3074, %v3073
      %v3094 = vpack.c.bf16 %v3076, %v3075
      %v3095 = vpack.c.bf16 %v3078, %v3077
      %v3096 = vpack.c.bf16 %v3080, %v3079
      %v3097 = vld [vmem:[#allocation3] sm:$0xff]
      %v3098 = vld [vmem:[#allocation3 + $0x8] sm:$0xff]
      %v3099 = vld [vmem:[#allocation3 + $0x10] sm:$0xff]
      %v3100 = vld [vmem:[#allocation3 + $0x18] sm:$0xff]
      %v3101 = vld [vmem:[#allocation3 + $0x20] sm:$0xff]
      %v3102 = vld [vmem:[#allocation3 + $0x28] sm:$0xff]
      %v3103 = vld [vmem:[#allocation3 + $0x30] sm:$0xff]
      %v3104 = vld [vmem:[#allocation3 + $0x38] sm:$0xff]
      %v3105 = vld [vmem:[#allocation3 + $0x40] sm:$0xff]
      %v3106 = vld [vmem:[#allocation3 + $0x48] sm:$0xff]
      %v3107 = vld [vmem:[#allocation3 + $0x50] sm:$0xff]
      %v3108 = vld [vmem:[#allocation3 + $0x58] sm:$0xff]
      %v3109 = vld [vmem:[#allocation3 + $0x60] sm:$0xff]
      %v3110 = vld [vmem:[#allocation3 + $0x68] sm:$0xff]
      %v3111 = vld [vmem:[#allocation3 + $0x70] sm:$0xff]
      %v3112 = vld [vmem:[#allocation3 + $0x78] sm:$0xff]
      %v3113 = vld [vmem:[#allocation3 + $0x80] sm:$0xff]
      %v3114 = vld [vmem:[#allocation3 + $0x88] sm:$0xff]
      %v3115 = vld [vmem:[#allocation3 + $0x90] sm:$0xff]
      %v3116 = vld [vmem:[#allocation3 + $0x98] sm:$0xff]
      %v3117 = vld [vmem:[#allocation3 + $0xa0] sm:$0xff]
      %v3118 = vld [vmem:[#allocation3 + $0xa8] sm:$0xff]
      %v3119 = vld [vmem:[#allocation3 + $0xb0] sm:$0xff]
      %v3120 = vld [vmem:[#allocation3 + $0xb8] sm:$0xff]
      %v3121 = vld [vmem:[#allocation3 + $0xc0] sm:$0xff]
      %v3122 = vld [vmem:[#allocation3 + $0xc8] sm:$0xff]
      %v3123 = vld [vmem:[#allocation3 + $0xd0] sm:$0xff]
      %v3124 = vld [vmem:[#allocation3 + $0xd8] sm:$0xff]
      %v3125 = vld [vmem:[#allocation3 + $0xe0] sm:$0xff]
      %v3126 = vld [vmem:[#allocation3 + $0xe8] sm:$0xff]
      %v3127 = vld [vmem:[#allocation3 + $0xf0] sm:$0xff]
      %v3128 = vld [vmem:[#allocation3 + $0xf8] sm:$0xff]
      %s3129 = scalar_lea.vmem %s2, 448
      %v3130 = vld [vmem:[%s3129] sm:$0xf]
      %v3131 = vld [vmem:[%s3129 + $0x4] sm:$0xf]
      %v3132 = vld [vmem:[%s3129 + $0x8] sm:$0xf]
      %v3133 = vld [vmem:[%s3129 + $0xc] sm:$0xf]
      %v3134 = vld [vmem:[%s3129 + $0x10] sm:$0xf]
      %v3135 = vld [vmem:[%s3129 + $0x14] sm:$0xf]
      %v3136 = vld [vmem:[%s3129 + $0x18] sm:$0xf]
      %v3137 = vld [vmem:[%s3129 + $0x1c] sm:$0xf]
      %v3138 = vld [vmem:[%s3129 + $0x20] sm:$0xf]
      %v3139 = vld [vmem:[%s3129 + $0x24] sm:$0xf]
      %v3140 = vld [vmem:[%s3129 + $0x28] sm:$0xf]
      %v3141 = vld [vmem:[%s3129 + $0x2c] sm:$0xf]
      %v3142 = vld [vmem:[%s3129 + $0x30] sm:$0xf]
      %v3143 = vld [vmem:[%s3129 + $0x34] sm:$0xf]
      %v3144 = vld [vmem:[%s3129 + $0x38] sm:$0xf]
      %v3145 = vld [vmem:[%s3129 + $0x3c] sm:$0xf]
      %v3162 = vunpack.c.l.b16 %v3130
      %v3163 = vunpack.c.l.b16 %v3131
      %v3164 = vunpack.c.l.b16 %v3132
      %v3165 = vunpack.c.l.b16 %v3133
      %v3166 = vunpack.c.l.b16 %v3134
      %v3167 = vunpack.c.l.b16 %v3135
      %v3168 = vunpack.c.l.b16 %v3136
      %v3169 = vunpack.c.l.b16 %v3137
      %v3170 = vunpack.c.l.b16 %v3138
      %v3171 = vunpack.c.l.b16 %v3139
      %v3172 = vunpack.c.l.b16 %v3140
      %v3173 = vunpack.c.l.b16 %v3141
      %v3174 = vunpack.c.l.b16 %v3142
      %v3175 = vunpack.c.l.b16 %v3143
      %v3176 = vunpack.c.l.b16 %v3144
      %v3177 = vunpack.c.l.b16 %v3145
      %v3178 = vpack.c.b16 %v3163, %v3162
      %v3179 = vpack.c.b16 %v3165, %v3164
      %v3180 = vpack.c.b16 %v3167, %v3166
      %v3181 = vpack.c.b16 %v3169, %v3168
      %v3182 = vpack.c.b16 %v3171, %v3170
      %v3183 = vpack.c.b16 %v3173, %v3172
      %v3184 = vpack.c.b16 %v3175, %v3174
      %v3185 = vpack.c.b16 %v3177, %v3176
      %3194 = vmatprep.subr.bf16.mxu0 0
      %3195 = vmatpush1.bf16.msra.mxu0 %v3178
      %3196 = vmatprep.subr.bf16.mxu0 0
      %3197 = vmatpush1.bf16.msra.mxu0 %v3179
      %3198 = vmatprep.subr.bf16.mxu0 0
      %3199 = vmatpush1.bf16.msra.mxu0 %v3180
      %3200 = vmatprep.subr.bf16.mxu0 0
      %3201 = vmatpush1.bf16.msra.mxu0 %v3181
      %3202 = vmatprep.subr.bf16.mxu0 0
      %3203 = vmatpush1.bf16.msra.mxu0 %v3182
      %3204 = vmatprep.subr.bf16.mxu0 0
      %3205 = vmatpush1.bf16.msra.mxu0 %v3183
      %3206 = vmatprep.subr.bf16.mxu0 0
      %3207 = vmatpush1.bf16.msra.mxu0 %v3184
      %3208 = vmatprep.subr.bf16.mxu0 0
      %3209 = vmatpush1.bf16.msra.mxu0 %v3185
      %3210 = vmatprep.subr.bf16.mxu0 0
      %3211 = vmatpush1.bf16.msra.mxu0 0
      %3212 = vmatprep.subr.bf16.mxu0 0
      %3213 = vmatpush1.bf16.msra.mxu0 0
      %3214 = vmatprep.subr.bf16.mxu0 0
      %3215 = vmatpush1.bf16.msra.mxu0 0
      %3216 = vmatprep.subr.bf16.mxu0 0
      %3217 = vmatpush1.bf16.msra.mxu0 0
      %3218 = vmatprep.subr.bf16.mxu0 0
      %3219 = vmatpush1.bf16.msra.mxu0 0
      %3220 = vmatprep.subr.bf16.mxu0 0
      %3221 = vmatpush1.bf16.msra.mxu0 0
      %3222 = vmatprep.subr.bf16.mxu0 0
      %3223 = vmatpush1.bf16.msra.mxu0 0
      %3224 = vmatprep.subr.bf16.mxu0 0
      %3225 = vmatpush1.bf16.msra.mxu0 0
      %3226 = vmatprep.mubr.bf16.mxu0 0
      %3227 = vmatmul.mubr.bf16.gmra.mrb[0].mxu0 %v3081
      %v3228 = vpop.f32.mrb[0].mxu0
      %v3229 = vadd.f32 0.0, %v3228
      %v3230 = vpop.f32.mrb[0].mxu0
      %v3231 = vpop.f32.mrb[0].mxu0
      %v3232 = vadd.f32 0.0, %v3231
      %v3233 = vpop.f32.mrb[0].mxu0
      %3234 = vmatprep.mubr.bf16.mxu0 0
      %3235 = vmatmul.mubr.bf16.gmra.mrb[0].mxu0 %v3082
      %v3236 = vpop.f32.mrb[0].mxu0
      %v3237 = vadd.f32 0.0, %v3236
      %v3238 = vpop.f32.mrb[0].mxu0
      %v3239 = vpop.f32.mrb[0].mxu0
      %v3240 = vadd.f32 0.0, %v3239
      %v3241 = vpop.f32.mrb[0].mxu0
      %3242 = vmatprep.mubr.bf16.mxu0 0
      %3243 = vmatmul.mubr.bf16.gmra.mrb[0].mxu0 %v3083
      %v3244 = vpop.f32.mrb[0].mxu0
      %v3245 = vadd.f32 0.0, %v3244
      %v3246 = vpop.f32.mrb[0].mxu0
      %v3247 = vpop.f32.mrb[0].mxu0
      %v3248 = vadd.f32 0.0, %v3247
      %v3249 = vpop.f32.mrb[0].mxu0
      %3250 = vmatprep.mubr.bf16.mxu0 0
      %3251 = vmatmul.mubr.bf16.gmra.mrb[0].mxu0 %v3084
      %v3252 = vpop.f32.mrb[0].mxu0
      %v3253 = vadd.f32 0.0, %v3252
      %v3254 = vpop.f32.mrb[0].mxu0
      %v3255 = vpop.f32.mrb[0].mxu0
      %v3256 = vadd.f32 0.0, %v3255
      %v3257 = vpop.f32.mrb[0].mxu0
      %3258 = vmatprep.mubr.bf16.mxu0 0
      %3259 = vmatmul.mubr.bf16.gmra.mrb[0].mxu0 %v3085
      %v3260 = vpop.f32.mrb[0].mxu0
      %v3261 = vadd.f32 0.0, %v3260
      %v3262 = vpop.f32.mrb[0].mxu0
      %v3263 = vpop.f32.mrb[0].mxu0
      %v3264 = vadd.f32 0.0, %v3263
      %v3265 = vpop.f32.mrb[0].mxu0
      %3266 = vmatprep.mubr.bf16.mxu0 0
      %3267 = vmatmul.mubr.bf16.gmra.mrb[0].mxu0 %v3086
      %v3268 = vpop.f32.mrb[0].mxu0
      %v3269 = vadd.f32 0.0, %v3268
      %v3270 = vpop.f32.mrb[0].mxu0
      %v3271 = vpop.f32.mrb[0].mxu0
      %v3272 = vadd.f32 0.0, %v3271
      %v3273 = vpop.f32.mrb[0].mxu0
      %3274 = vmatprep.mubr.bf16.mxu0 0
      %3275 = vmatmul.mubr.bf16.gmra.mrb[0].mxu0 %v3087
      %v3276 = vpop.f32.mrb[0].mxu0
      %v3277 = vadd.f32 0.0, %v3276
      %v3278 = vpop.f32.mrb[0].mxu0
      %v3279 = vpop.f32.mrb[0].mxu0
      %v3280 = vadd.f32 0.0, %v3279
      %v3281 = vpop.f32.mrb[0].mxu0
      %3282 = vmatprep.mubr.bf16.mxu0 0
      %3283 = vmatmul.mubr.bf16.gmra.mrb[0].mxu0 %v3088
      %v3284 = vpop.f32.mrb[0].mxu0
      %v3285 = vadd.f32 0.0, %v3284
      %v3286 = vpop.f32.mrb[0].mxu0
      %v3287 = vpop.f32.mrb[0].mxu0
      %v3288 = vadd.f32 0.0, %v3287
      %v3289 = vpop.f32.mrb[0].mxu0
      %3290 = vmatprep.mubr.bf16.mxu0 0
      %3291 = vmatmul.mubr.bf16.gmra.mrb[0].mxu0 %v3089
      %v3292 = vpop.f32.mrb[0].mxu0
      %v3293 = vadd.f32 0.0, %v3292
      %v3294 = vpop.f32.mrb[0].mxu0
      %v3295 = vpop.f32.mrb[0].mxu0
      %v3296 = vadd.f32 0.0, %v3295
      %v3297 = vpop.f32.mrb[0].mxu0
      %3298 = vmatprep.mubr.bf16.mxu0 0
      %3299 = vmatmul.mubr.bf16.gmra.mrb[0].mxu0 %v3090
      %v3300 = vpop.f32.mrb[0].mxu0
      %v3301 = vadd.f32 0.0, %v3300
      %v3302 = vpop.f32.mrb[0].mxu0
      %v3303 = vpop.f32.mrb[0].mxu0
      %v3304 = vadd.f32 0.0, %v3303
      %v3305 = vpop.f32.mrb[0].mxu0
      %3306 = vmatprep.mubr.bf16.mxu0 0
      %3307 = vmatmul.mubr.bf16.gmra.mrb[0].mxu0 %v3091
      %v3308 = vpop.f32.mrb[0].mxu0
      %v3309 = vadd.f32 0.0, %v3308
      %v3310 = vpop.f32.mrb[0].mxu0
      %v3311 = vpop.f32.mrb[0].mxu0
      %v3312 = vadd.f32 0.0, %v3311
      %v3313 = vpop.f32.mrb[0].mxu0
      %3314 = vmatprep.mubr.bf16.mxu0 0
      %3315 = vmatmul.mubr.bf16.gmra.mrb[0].mxu0 %v3092
      %v3316 = vpop.f32.mrb[0].mxu0
      %v3317 = vadd.f32 0.0, %v3316
      %v3318 = vpop.f32.mrb[0].mxu0
      %v3319 = vpop.f32.mrb[0].mxu0
      %v3320 = vadd.f32 0.0, %v3319
      %v3321 = vpop.f32.mrb[0].mxu0
      %3322 = vmatprep.mubr.bf16.mxu0 0
      %3323 = vmatmul.mubr.bf16.gmra.mrb[0].mxu0 %v3093
      %v3324 = vpop.f32.mrb[0].mxu0
      %v3325 = vadd.f32 0.0, %v3324
      %v3326 = vpop.f32.mrb[0].mxu0
      %v3327 = vpop.f32.mrb[0].mxu0
      %v3328 = vadd.f32 0.0, %v3327
      %v3329 = vpop.f32.mrb[0].mxu0
      %3330 = vmatprep.mubr.bf16.mxu0 0
      %3331 = vmatmul.mubr.bf16.gmra.mrb[0].mxu0 %v3094
      %v3332 = vpop.f32.mrb[0].mxu0
      %v3333 = vadd.f32 0.0, %v3332
      %v3334 = vpop.f32.mrb[0].mxu0
      %v3335 = vpop.f32.mrb[0].mxu0
      %v3336 = vadd.f32 0.0, %v3335
      %v3337 = vpop.f32.mrb[0].mxu0
      %3338 = vmatprep.mubr.bf16.mxu0 0
      %3339 = vmatmul.mubr.bf16.gmra.mrb[0].mxu0 %v3095
      %v3340 = vpop.f32.mrb[0].mxu0
      %v3341 = vadd.f32 0.0, %v3340
      %v3342 = vpop.f32.mrb[0].mxu0
      %v3343 = vpop.f32.mrb[0].mxu0
      %v3344 = vadd.f32 0.0, %v3343
      %v3345 = vpop.f32.mrb[0].mxu0
      %3346 = vmatprep.mubr.bf16.mxu0 0
      %3347 = vmatmul.mubr.bf16.gmra.mrb[0].mxu0 %v3096
      %v3348 = vpop.f32.mrb[0].mxu0
      %v3349 = vadd.f32 0.0, %v3348
      %v3350 = vpop.f32.mrb[0].mxu0
      %v3351 = vpop.f32.mrb[0].mxu0
      %v3352 = vadd.f32 0.0, %v3351
      %v3353 = vpop.f32.mrb[0].mxu0
      %3354 = vdwg.mxu0
      %v3355 = vadd.f32 %v3097, %v3229
      %v3356 = vadd.f32 %v3098, %v3232
      %v3357 = vadd.f32 %v3099, %v3237
      %v3358 = vadd.f32 %v3100, %v3240
      %v3359 = vadd.f32 %v3101, %v3245
      %v3360 = vadd.f32 %v3102, %v3248
      %v3361 = vadd.f32 %v3103, %v3253
      %v3362 = vadd.f32 %v3104, %v3256
      %v3363 = vadd.f32 %v3105, %v3261
      %v3364 = vadd.f32 %v3106, %v3264
      %v3365 = vadd.f32 %v3107, %v3269
      %v3366 = vadd.f32 %v3108, %v3272
      %v3367 = vadd.f32 %v3109, %v3277
      %v3368 = vadd.f32 %v3110, %v3280
      %v3369 = vadd.f32 %v3111, %v3285
      %v3370 = vadd.f32 %v3112, %v3288
      %v3371 = vadd.f32 %v3113, %v3293
      %v3372 = vadd.f32 %v3114, %v3296
      %v3373 = vadd.f32 %v3115, %v3301
      %v3374 = vadd.f32 %v3116, %v3304
      %v3375 = vadd.f32 %v3117, %v3309
      %v3376 = vadd.f32 %v3118, %v3312
      %v3377 = vadd.f32 %v3119, %v3317
      %v3378 = vadd.f32 %v3120, %v3320
      %v3379 = vadd.f32 %v3121, %v3325
      %v3380 = vadd.f32 %v3122, %v3328
      %v3381 = vadd.f32 %v3123, %v3333
      %v3382 = vadd.f32 %v3124, %v3336
      %v3383 = vadd.f32 %v3125, %v3341
      %v3384 = vadd.f32 %v3126, %v3344
      %v3385 = vadd.f32 %v3127, %v3349
      %v3386 = vadd.f32 %v3128, %v3352
      %3387 = vst [vmem:[#allocation3] sm:$0xff] %v3355
      %3388 = vst [vmem:[#allocation3 + $0x8] sm:$0xff] %v3356
      %3389 = vst [vmem:[#allocation3 + $0x10] sm:$0xff] %v3357
      %3390 = vst [vmem:[#allocation3 + $0x18] sm:$0xff] %v3358
      %3391 = vst [vmem:[#allocation3 + $0x20] sm:$0xff] %v3359
      %3392 = vst [vmem:[#allocation3 + $0x28] sm:$0xff] %v3360
      %3393 = vst [vmem:[#allocation3 + $0x30] sm:$0xff] %v3361
      %3394 = vst [vmem:[#allocation3 + $0x38] sm:$0xff] %v3362
      %3395 = vst [vmem:[#allocation3 + $0x40] sm:$0xff] %v3363
      %3396 = vst [vmem:[#allocation3 + $0x48] sm:$0xff] %v3364
      %3397 = vst [vmem:[#allocation3 + $0x50] sm:$0xff] %v3365
      %3398 = vst [vmem:[#allocation3 + $0x58] sm:$0xff] %v3366
      %3399 = vst [vmem:[#allocation3 + $0x60] sm:$0xff] %v3367
      %3400 = vst [vmem:[#allocation3 + $0x68] sm:$0xff] %v3368
      %3401 = vst [vmem:[#allocation3 + $0x70] sm:$0xff] %v3369
      %3402 = vst [vmem:[#allocation3 + $0x78] sm:$0xff] %v3370
      %3403 = vst [vmem:[#allocation3 + $0x80] sm:$0xff] %v3371
      %3404 = vst [vmem:[#allocation3 + $0x88] sm:$0xff] %v3372
      %3405 = vst [vmem:[#allocation3 + $0x90] sm:$0xff] %v3373
      %3406 = vst [vmem:[#allocation3 + $0x98] sm:$0xff] %v3374
      %3407 = vst [vmem:[#allocation3 + $0xa0] sm:$0xff] %v3375
      %3408 = vst [vmem:[#allocation3 + $0xa8] sm:$0xff] %v3376
      %3409 = vst [vmem:[#allocation3 + $0xb0] sm:$0xff] %v3377
      %3410 = vst [vmem:[#allocation3 + $0xb8] sm:$0xff] %v3378
      %3411 = vst [vmem:[#allocation3 + $0xc0] sm:$0xff] %v3379
      %3412 = vst [vmem:[#allocation3 + $0xc8] sm:$0xff] %v3380
      %3413 = vst [vmem:[#allocation3 + $0xd0] sm:$0xff] %v3381
      %3414 = vst [vmem:[#allocation3 + $0xd8] sm:$0xff] %v3382
      %3415 = vst [vmem:[#allocation3 + $0xe0] sm:$0xff] %v3383
      %3416 = vst [vmem:[#allocation3 + $0xe8] sm:$0xff] %v3384
      %3417 = vst [vmem:[#allocation3 + $0xf0] sm:$0xff] %v3385
      %3418 = vst [vmem:[#allocation3 + $0xf8] sm:$0xff] %v3386
      %v3419 = vld [vmem:[%s2678 + $0x2] sm:$0xff]
      %v3420 = vld [vmem:[%s2678 + $0xa] sm:$0xff]
      %v3421 = vld [vmem:[%s2678 + $0x1a] sm:$0xff]
      %v3422 = vld [vmem:[%s2678 + $0x22] sm:$0xff]
      %v3423 = vld [vmem:[%s2678 + $0x32] sm:$0xff]
      %v3424 = vld [vmem:[%s2678 + $0x3a] sm:$0xff]
      %v3425 = vld [vmem:[%s2678 + $0x4a] sm:$0xff]
      %v3426 = vld [vmem:[%s2678 + $0x52] sm:$0xff]
      %v3427 = vld [vmem:[%s2678 + $0x62] sm:$0xff]
      %v3428 = vld [vmem:[%s2678 + $0x6a] sm:$0xff]
      %v3429 = vld [vmem:[%s2678 + $0x7a] sm:$0xff]
      %v3430 = vld [vmem:[%s2678 + $0x82] sm:$0xff]
      %v3431 = vld [vmem:[%s2678 + $0x92] sm:$0xff]
      %v3432 = vld [vmem:[%s2678 + $0x9a] sm:$0xff]
      %v3433 = vld [vmem:[%s2678 + $0xaa] sm:$0xff]
      %v3434 = vld [vmem:[%s2678 + $0xb2] sm:$0xff]
      %v3435 = vld [vmem:[%s2678 + $0xc2] sm:$0xff]
      %v3436 = vld [vmem:[%s2678 + $0xca] sm:$0xff]
      %v3437 = vld [vmem:[%s2678 + $0xda] sm:$0xff]
      %v3438 = vld [vmem:[%s2678 + $0xe2] sm:$0xff]
      %v3439 = vld [vmem:[%s2678 + $0xf2] sm:$0xff]
      %v3440 = vld [vmem:[%s2678 + $0xfa] sm:$0xff]
      %v3441 = vld [vmem:[%s2678 + $0x10a] sm:$0xff]
      %v3442 = vld [vmem:[%s2678 + $0x112] sm:$0xff]
      %v3443 = vld [vmem:[%s2678 + $0x122] sm:$0xff]
      %v3444 = vld [vmem:[%s2678 + $0x12a] sm:$0xff]
      %v3445 = vld [vmem:[%s2678 + $0x13a] sm:$0xff]
      %v3446 = vld [vmem:[%s2678 + $0x142] sm:$0xff]
      %v3447 = vld [vmem:[%s2678 + $0x152] sm:$0xff]
      %v3448 = vld [vmem:[%s2678 + $0x15a] sm:$0xff]
      %v3449 = vld [vmem:[%s2678 + $0x16a] sm:$0xff]
      %v3450 = vld [vmem:[%s2678 + $0x172] sm:$0xff]
      %v3451 = vpack.c.bf16 %v3420, %v3419
      %v3452 = vpack.c.bf16 %v3422, %v3421
      %v3453 = vpack.c.bf16 %v3424, %v3423
      %v3454 = vpack.c.bf16 %v3426, %v3425
      %v3455 = vpack.c.bf16 %v3428, %v3427
      %v3456 = vpack.c.bf16 %v3430, %v3429
      %v3457 = vpack.c.bf16 %v3432, %v3431
      %v3458 = vpack.c.bf16 %v3434, %v3433
      %v3459 = vpack.c.bf16 %v3436, %v3435
      %v3460 = vpack.c.bf16 %v3438, %v3437
      %v3461 = vpack.c.bf16 %v3440, %v3439
      %v3462 = vpack.c.bf16 %v3442, %v3441
      %v3463 = vpack.c.bf16 %v3444, %v3443
      %v3464 = vpack.c.bf16 %v3446, %v3445
      %v3465 = vpack.c.bf16 %v3448, %v3447
      %v3466 = vpack.c.bf16 %v3450, %v3449
      %v3467 = vld [vmem:[#allocation3] sm:$0xff]
      %v3468 = vld [vmem:[#allocation3 + $0x8] sm:$0xff]
      %v3469 = vld [vmem:[#allocation3 + $0x10] sm:$0xff]
      %v3470 = vld [vmem:[#allocation3 + $0x18] sm:$0xff]
      %v3471 = vld [vmem:[#allocation3 + $0x20] sm:$0xff]
      %v3472 = vld [vmem:[#allocation3 + $0x28] sm:$0xff]
      %v3473 = vld [vmem:[#allocation3 + $0x30] sm:$0xff]
      %v3474 = vld [vmem:[#allocation3 + $0x38] sm:$0xff]
      %v3475 = vld [vmem:[#allocation3 + $0x40] sm:$0xff]
      %v3476 = vld [vmem:[#allocation3 + $0x48] sm:$0xff]
      %v3477 = vld [vmem:[#allocation3 + $0x50] sm:$0xff]
      %v3478 = vld [vmem:[#allocation3 + $0x58] sm:$0xff]
      %v3479 = vld [vmem:[#allocation3 + $0x60] sm:$0xff]
      %v3480 = vld [vmem:[#allocation3 + $0x68] sm:$0xff]
      %v3481 = vld [vmem:[#allocation3 + $0x70] sm:$0xff]
      %v3482 = vld [vmem:[#allocation3 + $0x78] sm:$0xff]
      %v3483 = vld [vmem:[#allocation3 + $0x80] sm:$0xff]
      %v3484 = vld [vmem:[#allocation3 + $0x88] sm:$0xff]
      %v3485 = vld [vmem:[#allocation3 + $0x90] sm:$0xff]
      %v3486 = vld [vmem:[#allocation3 + $0x98] sm:$0xff]
      %v3487 = vld [vmem:[#allocation3 + $0xa0] sm:$0xff]
      %v3488 = vld [vmem:[#allocation3 + $0xa8] sm:$0xff]
      %v3489 = vld [vmem:[#allocation3 + $0xb0] sm:$0xff]
      %v3490 = vld [vmem:[#allocation3 + $0xb8] sm:$0xff]
      %v3491 = vld [vmem:[#allocation3 + $0xc0] sm:$0xff]
      %v3492 = vld [vmem:[#allocation3 + $0xc8] sm:$0xff]
      %v3493 = vld [vmem:[#allocation3 + $0xd0] sm:$0xff]
      %v3494 = vld [vmem:[#allocation3 + $0xd8] sm:$0xff]
      %v3495 = vld [vmem:[#allocation3 + $0xe0] sm:$0xff]
      %v3496 = vld [vmem:[#allocation3 + $0xe8] sm:$0xff]
      %v3497 = vld [vmem:[#allocation3 + $0xf0] sm:$0xff]
      %v3498 = vld [vmem:[#allocation3 + $0xf8] sm:$0xff]
      %s3499 = scalar_lea.vmem %s2, 512
      %v3500 = vld [vmem:[%s3499] sm:$0xf]
      %v3501 = vld [vmem:[%s3499 + $0x4] sm:$0xf]
      %v3502 = vld [vmem:[%s3499 + $0x8] sm:$0xf]
      %v3503 = vld [vmem:[%s3499 + $0xc] sm:$0xf]
      %v3504 = vld [vmem:[%s3499 + $0x10] sm:$0xf]
      %v3505 = vld [vmem:[%s3499 + $0x14] sm:$0xf]
      %v3506 = vld [vmem:[%s3499 + $0x18] sm:$0xf]
      %v3507 = vld [vmem:[%s3499 + $0x1c] sm:$0xf]
      %v3508 = vld [vmem:[%s3499 + $0x20] sm:$0xf]
      %v3509 = vld [vmem:[%s3499 + $0x24] sm:$0xf]
      %v3510 = vld [vmem:[%s3499 + $0x28] sm:$0xf]
      %v3511 = vld [vmem:[%s3499 + $0x2c] sm:$0xf]
      %v3512 = vld [vmem:[%s3499 + $0x30] sm:$0xf]
      %v3513 = vld [vmem:[%s3499 + $0x34] sm:$0xf]
      %v3514 = vld [vmem:[%s3499 + $0x38] sm:$0xf]
      %v3515 = vld [vmem:[%s3499 + $0x3c] sm:$0xf]
      %v3532 = vunpack.c.l.b16 %v3500
      %v3533 = vunpack.c.l.b16 %v3501
      %v3534 = vunpack.c.l.b16 %v3502
      %v3535 = vunpack.c.l.b16 %v3503
      %v3536 = vunpack.c.l.b16 %v3504
      %v3537 = vunpack.c.l.b16 %v3505
      %v3538 = vunpack.c.l.b16 %v3506
      %v3539 = vunpack.c.l.b16 %v3507
      %v3540 = vunpack.c.l.b16 %v3508
      %v3541 = vunpack.c.l.b16 %v3509
      %v3542 = vunpack.c.l.b16 %v3510
      %v3543 = vunpack.c.l.b16 %v3511
      %v3544 = vunpack.c.l.b16 %v3512
      %v3545 = vunpack.c.l.b16 %v3513
      %v3546 = vunpack.c.l.b16 %v3514
      %v3547 = vunpack.c.l.b16 %v3515
      %v3548 = vpack.c.b16 %v3533, %v3532
      %v3549 = vpack.c.b16 %v3535, %v3534
      %v3550 = vpack.c.b16 %v3537, %v3536
      %v3551 = vpack.c.b16 %v3539, %v3538
      %v3552 = vpack.c.b16 %v3541, %v3540
      %v3553 = vpack.c.b16 %v3543, %v3542
      %v3554 = vpack.c.b16 %v3545, %v3544
      %v3555 = vpack.c.b16 %v3547, %v3546
      %3564 = vmatprep.subr.bf16.mxu0 0
      %3565 = vmatpush1.bf16.msra.mxu0 %v3548
      %3566 = vmatprep.subr.bf16.mxu0 0
      %3567 = vmatpush1.bf16.msra.mxu0 %v3549
      %3568 = vmatprep.subr.bf16.mxu0 0
      %3569 = vmatpush1.bf16.msra.mxu0 %v3550
      %3570 = vmatprep.subr.bf16.mxu0 0
      %3571 = vmatpush1.bf16.msra.mxu0 %v3551
      %3572 = vmatprep.subr.bf16.mxu0 0
      %3573 = vmatpush1.bf16.msra.mxu0 %v3552
      %3574 = vmatprep.subr.bf16.mxu0 0
      %3575 = vmatpush1.bf16.msra.mxu0 %v3553
      %3576 = vmatprep.subr.bf16.mxu0 0
      %3577 = vmatpush1.bf16.msra.mxu0 %v3554
      %3578 = vmatprep.subr.bf16.mxu0 0
      %3579 = vmatpush1.bf16.msra.mxu0 %v3555
      %3580 = vmatprep.subr.bf16.mxu0 0
      %3581 = vmatpush1.bf16.msra.mxu0 0
      %3582 = vmatprep.subr.bf16.mxu0 0
      %3583 = vmatpush1.bf16.msra.mxu0 0
      %3584 = vmatprep.subr.bf16.mxu0 0
      %3585 = vmatpush1.bf16.msra.mxu0 0
      %3586 = vmatprep.subr.bf16.mxu0 0
      %3587 = vmatpush1.bf16.msra.mxu0 0
      %3588 = vmatprep.subr.bf16.mxu0 0
      %3589 = vmatpush1.bf16.msra.mxu0 0
      %3590 = vmatprep.subr.bf16.mxu0 0
      %3591 = vmatpush1.bf16.msra.mxu0 0
      %3592 = vmatprep.subr.bf16.mxu0 0
      %3593 = vmatpush1.bf16.msra.mxu0 0
      %3594 = vmatprep.subr.bf16.mxu0 0
      %3595 = vmatpush1.bf16.msra.mxu0 0
      %3596 = vmatprep.mubr.bf16.mxu0 0
      %3597 = vmatmul.mubr.bf16.gmra.mrb[0].mxu0 %v3451
      %v3598 = vpop.f32.mrb[0].mxu0
      %v3599 = vadd.f32 0.0, %v3598
      %v3600 = vpop.f32.mrb[0].mxu0
      %v3601 = vpop.f32.mrb[0].mxu0
      %v3602 = vadd.f32 0.0, %v3601
      %v3603 = vpop.f32.mrb[0].mxu0
      %3604 = vmatprep.mubr.bf16.mxu0 0
      %3605 = vmatmul.mubr.bf16.gmra.mrb[0].mxu0 %v3452
      %v3606 = vpop.f32.mrb[0].mxu0
      %v3607 = vadd.f32 0.0, %v3606
      %v3608 = vpop.f32.mrb[0].mxu0
      %v3609 = vpop.f32.mrb[0].mxu0
      %v3610 = vadd.f32 0.0, %v3609
      %v3611 = vpop.f32.mrb[0].mxu0
      %3612 = vmatprep.mubr.bf16.mxu0 0
      %3613 = vmatmul.mubr.bf16.gmra.mrb[0].mxu0 %v3453
      %v3614 = vpop.f32.mrb[0].mxu0
      %v3615 = vadd.f32 0.0, %v3614
      %v3616 = vpop.f32.mrb[0].mxu0
      %v3617 = vpop.f32.mrb[0].mxu0
      %v3618 = vadd.f32 0.0, %v3617
      %v3619 = vpop.f32.mrb[0].mxu0
      %3620 = vmatprep.mubr.bf16.mxu0 0
      %3621 = vmatmul.mubr.bf16.gmra.mrb[0].mxu0 %v3454
      %v3622 = vpop.f32.mrb[0].mxu0
      %v3623 = vadd.f32 0.0, %v3622
      %v3624 = vpop.f32.mrb[0].mxu0
      %v3625 = vpop.f32.mrb[0].mxu0
      %v3626 = vadd.f32 0.0, %v3625
      %v3627 = vpop.f32.mrb[0].mxu0
      %3628 = vmatprep.mubr.bf16.mxu0 0
      %3629 = vmatmul.mubr.bf16.gmra.mrb[0].mxu0 %v3455
      %v3630 = vpop.f32.mrb[0].mxu0
      %v3631 = vadd.f32 0.0, %v3630
      %v3632 = vpop.f32.mrb[0].mxu0
      %v3633 = vpop.f32.mrb[0].mxu0
      %v3634 = vadd.f32 0.0, %v3633
      %v3635 = vpop.f32.mrb[0].mxu0
      %3636 = vmatprep.mubr.bf16.mxu0 0
      %3637 = vmatmul.mubr.bf16.gmra.mrb[0].mxu0 %v3456
      %v3638 = vpop.f32.mrb[0].mxu0
      %v3639 = vadd.f32 0.0, %v3638
      %v3640 = vpop.f32.mrb[0].mxu0
      %v3641 = vpop.f32.mrb[0].mxu0
      %v3642 = vadd.f32 0.0, %v3641
      %v3643 = vpop.f32.mrb[0].mxu0
      %3644 = vmatprep.mubr.bf16.mxu0 0
      %3645 = vmatmul.mubr.bf16.gmra.mrb[0].mxu0 %v3457
      %v3646 = vpop.f32.mrb[0].mxu0
      %v3647 = vadd.f32 0.0, %v3646
      %v3648 = vpop.f32.mrb[0].mxu0
      %v3649 = vpop.f32.mrb[0].mxu0
      %v3650 = vadd.f32 0.0, %v3649
      %v3651 = vpop.f32.mrb[0].mxu0
      %3652 = vmatprep.mubr.bf16.mxu0 0
      %3653 = vmatmul.mubr.bf16.gmra.mrb[0].mxu0 %v3458
      %v3654 = vpop.f32.mrb[0].mxu0
      %v3655 = vadd.f32 0.0, %v3654
      %v3656 = vpop.f32.mrb[0].mxu0
      %v3657 = vpop.f32.mrb[0].mxu0
      %v3658 = vadd.f32 0.0, %v3657
      %v3659 = vpop.f32.mrb[0].mxu0
      %3660 = vmatprep.mubr.bf16.mxu0 0
      %3661 = vmatmul.mubr.bf16.gmra.mrb[0].mxu0 %v3459
      %v3662 = vpop.f32.mrb[0].mxu0
      %v3663 = vadd.f32 0.0, %v3662
      %v3664 = vpop.f32.mrb[0].mxu0
      %v3665 = vpop.f32.mrb[0].mxu0
      %v3666 = vadd.f32 0.0, %v3665
      %v3667 = vpop.f32.mrb[0].mxu0
      %3668 = vmatprep.mubr.bf16.mxu0 0
      %3669 = vmatmul.mubr.bf16.gmra.mrb[0].mxu0 %v3460
      %v3670 = vpop.f32.mrb[0].mxu0
      %v3671 = vadd.f32 0.0, %v3670
      %v3672 = vpop.f32.mrb[0].mxu0
      %v3673 = vpop.f32.mrb[0].mxu0
      %v3674 = vadd.f32 0.0, %v3673
      %v3675 = vpop.f32.mrb[0].mxu0
      %3676 = vmatprep.mubr.bf16.mxu0 0
      %3677 = vmatmul.mubr.bf16.gmra.mrb[0].mxu0 %v3461
      %v3678 = vpop.f32.mrb[0].mxu0
      %v3679 = vadd.f32 0.0, %v3678
      %v3680 = vpop.f32.mrb[0].mxu0
      %v3681 = vpop.f32.mrb[0].mxu0
      %v3682 = vadd.f32 0.0, %v3681
      %v3683 = vpop.f32.mrb[0].mxu0
      %3684 = vmatprep.mubr.bf16.mxu0 0
      %3685 = vmatmul.mubr.bf16.gmra.mrb[0].mxu0 %v3462
      %v3686 = vpop.f32.mrb[0].mxu0
      %v3687 = vadd.f32 0.0, %v3686
      %v3688 = vpop.f32.mrb[0].mxu0
      %v3689 = vpop.f32.mrb[0].mxu0
      %v3690 = vadd.f32 0.0, %v3689
      %v3691 = vpop.f32.mrb[0].mxu0
      %3692 = vmatprep.mubr.bf16.mxu0 0
      %3693 = vmatmul.mubr.bf16.gmra.mrb[0].mxu0 %v3463
      %v3694 = vpop.f32.mrb[0].mxu0
      %v3695 = vadd.f32 0.0, %v3694
      %v3696 = vpop.f32.mrb[0].mxu0
      %v3697 = vpop.f32.mrb[0].mxu0
      %v3698 = vadd.f32 0.0, %v3697
      %v3699 = vpop.f32.mrb[0].mxu0
      %3700 = vmatprep.mubr.bf16.mxu0 0
      %3701 = vmatmul.mubr.bf16.gmra.mrb[0].mxu0 %v3464
      %v3702 = vpop.f32.mrb[0].mxu0
      %v3703 = vadd.f32 0.0, %v3702
      %v3704 = vpop.f32.mrb[0].mxu0
      %v3705 = vpop.f32.mrb[0].mxu0
      %v3706 = vadd.f32 0.0, %v3705
      %v3707 = vpop.f32.mrb[0].mxu0
      %3708 = vmatprep.mubr.bf16.mxu0 0
      %3709 = vmatmul.mubr.bf16.gmra.mrb[0].mxu0 %v3465
      %v3710 = vpop.f32.mrb[0].mxu0
      %v3711 = vadd.f32 0.0, %v3710
      %v3712 = vpop.f32.mrb[0].mxu0
      %v3713 = vpop.f32.mrb[0].mxu0
      %v3714 = vadd.f32 0.0, %v3713
      %v3715 = vpop.f32.mrb[0].mxu0
      %3716 = vmatprep.mubr.bf16.mxu0 0
      %3717 = vmatmul.mubr.bf16.gmra.mrb[0].mxu0 %v3466
      %v3718 = vpop.f32.mrb[0].mxu0
      %v3719 = vadd.f32 0.0, %v3718
      %v3720 = vpop.f32.mrb[0].mxu0
      %v3721 = vpop.f32.mrb[0].mxu0
      %v3722 = vadd.f32 0.0, %v3721
      %v3723 = vpop.f32.mrb[0].mxu0
      %3724 = vdwg.mxu0
      %v3725 = vadd.f32 %v3467, %v3599
      %v3726 = vadd.f32 %v3468, %v3602
      %v3727 = vadd.f32 %v3469, %v3607
      %v3728 = vadd.f32 %v3470, %v3610
      %v3729 = vadd.f32 %v3471, %v3615
      %v3730 = vadd.f32 %v3472, %v3618
      %v3731 = vadd.f32 %v3473, %v3623
      %v3732 = vadd.f32 %v3474, %v3626
      %v3733 = vadd.f32 %v3475, %v3631
      %v3734 = vadd.f32 %v3476, %v3634
      %v3735 = vadd.f32 %v3477, %v3639
      %v3736 = vadd.f32 %v3478, %v3642
      %v3737 = vadd.f32 %v3479, %v3647
      %v3738 = vadd.f32 %v3480, %v3650
      %v3739 = vadd.f32 %v3481, %v3655
      %v3740 = vadd.f32 %v3482, %v3658
      %v3741 = vadd.f32 %v3483, %v3663
      %v3742 = vadd.f32 %v3484, %v3666
      %v3743 = vadd.f32 %v3485, %v3671
      %v3744 = vadd.f32 %v3486, %v3674
      %v3745 = vadd.f32 %v3487, %v3679
      %v3746 = vadd.f32 %v3488, %v3682
      %v3747 = vadd.f32 %v3489, %v3687
      %v3748 = vadd.f32 %v3490, %v3690
      %v3749 = vadd.f32 %v3491, %v3695
      %v3750 = vadd.f32 %v3492, %v3698
      %v3751 = vadd.f32 %v3493, %v3703
      %v3752 = vadd.f32 %v3494, %v3706
      %v3753 = vadd.f32 %v3495, %v3711
      %v3754 = vadd.f32 %v3496, %v3714
      %v3755 = vadd.f32 %v3497, %v3719
      %v3756 = vadd.f32 %v3498, %v3722
      %3757 = vst [vmem:[#allocation3] sm:$0xff] %v3725
      %3758 = vst [vmem:[#allocation3 + $0x8] sm:$0xff] %v3726
      %3759 = vst [vmem:[#allocation3 + $0x10] sm:$0xff] %v3727
      %3760 = vst [vmem:[#allocation3 + $0x18] sm:$0xff] %v3728
      %3761 = vst [vmem:[#allocation3 + $0x20] sm:$0xff] %v3729
      %3762 = vst [vmem:[#allocation3 + $0x28] sm:$0xff] %v3730
      %3763 = vst [vmem:[#allocation3 + $0x30] sm:$0xff] %v3731
      %3764 = vst [vmem:[#allocation3 + $0x38] sm:$0xff] %v3732
      %3765 = vst [vmem:[#allocation3 + $0x40] sm:$0xff] %v3733
      %3766 = vst [vmem:[#allocation3 + $0x48] sm:$0xff] %v3734
      %3767 = vst [vmem:[#allocation3 + $0x50] sm:$0xff] %v3735
      %3768 = vst [vmem:[#allocation3 + $0x58] sm:$0xff] %v3736
      %3769 = vst [vmem:[#allocation3 + $0x60] sm:$0xff] %v3737
      %3770 = vst [vmem:[#allocation3 + $0x68] sm:$0xff] %v3738
      %3771 = vst [vmem:[#allocation3 + $0x70] sm:$0xff] %v3739
      %3772 = vst [vmem:[#allocation3 + $0x78] sm:$0xff] %v3740
      %3773 = vst [vmem:[#allocation3 + $0x80] sm:$0xff] %v3741
      %3774 = vst [vmem:[#allocation3 + $0x88] sm:$0xff] %v3742
      %3775 = vst [vmem:[#allocation3 + $0x90] sm:$0xff] %v3743
      %3776 = vst [vmem:[#allocation3 + $0x98] sm:$0xff] %v3744
      %3777 = vst [vmem:[#allocation3 + $0xa0] sm:$0xff] %v3745
      %3778 = vst [vmem:[#allocation3 + $0xa8] sm:$0xff] %v3746
      %3779 = vst [vmem:[#allocation3 + $0xb0] sm:$0xff] %v3747
      %3780 = vst [vmem:[#allocation3 + $0xb8] sm:$0xff] %v3748
      %3781 = vst [vmem:[#allocation3 + $0xc0] sm:$0xff] %v3749
      %3782 = vst [vmem:[#allocation3 + $0xc8] sm:$0xff] %v3750
      %3783 = vst [vmem:[#allocation3 + $0xd0] sm:$0xff] %v3751
      %3784 = vst [vmem:[#allocation3 + $0xd8] sm:$0xff] %v3752
      %3785 = vst [vmem:[#allocation3 + $0xe0] sm:$0xff] %v3753
      %3786 = vst [vmem:[#allocation3 + $0xe8] sm:$0xff] %v3754
      %3787 = vst [vmem:[#allocation3 + $0xf0] sm:$0xff] %v3755
      %3788 = vst [vmem:[#allocation3 + $0xf8] sm:$0xff] %v3756
      %v3789 = vld [vmem:[#allocation3] sm:$0xff]
      %v3790 = vld [vmem:[#allocation3 + $0x8] sm:$0xff]
      %v3791 = vld [vmem:[#allocation3 + $0x10] sm:$0xff]
      %v3792 = vld [vmem:[#allocation3 + $0x18] sm:$0xff]
      %v3793 = vld [vmem:[#allocation3 + $0x20] sm:$0xff]
      %v3794 = vld [vmem:[#allocation3 + $0x28] sm:$0xff]
      %v3795 = vld [vmem:[#allocation3 + $0x30] sm:$0xff]
      %v3796 = vld [vmem:[#allocation3 + $0x38] sm:$0xff]
      %v3797 = vld [vmem:[#allocation3 + $0x40] sm:$0xff]
      %v3798 = vld [vmem:[#allocation3 + $0x48] sm:$0xff]
      %v3799 = vld [vmem:[#allocation3 + $0x50] sm:$0xff]
      %v3800 = vld [vmem:[#allocation3 + $0x58] sm:$0xff]
      %v3801 = vld [vmem:[#allocation3 + $0x60] sm:$0xff]
      %v3802 = vld [vmem:[#allocation3 + $0x68] sm:$0xff]
      %v3803 = vld [vmem:[#allocation3 + $0x70] sm:$0xff]
      %v3804 = vld [vmem:[#allocation3 + $0x78] sm:$0xff]
      %v3805 = vld [vmem:[#allocation3 + $0x80] sm:$0xff]
      %v3806 = vld [vmem:[#allocation3 + $0x88] sm:$0xff]
      %v3807 = vld [vmem:[#allocation3 + $0x90] sm:$0xff]
      %v3808 = vld [vmem:[#allocation3 + $0x98] sm:$0xff]
      %v3809 = vld [vmem:[#allocation3 + $0xa0] sm:$0xff]
      %v3810 = vld [vmem:[#allocation3 + $0xa8] sm:$0xff]
      %v3811 = vld [vmem:[#allocation3 + $0xb0] sm:$0xff]
      %v3812 = vld [vmem:[#allocation3 + $0xb8] sm:$0xff]
      %v3813 = vld [vmem:[#allocation3 + $0xc0] sm:$0xff]
      %v3814 = vld [vmem:[#allocation3 + $0xc8] sm:$0xff]
      %v3815 = vld [vmem:[#allocation3 + $0xd0] sm:$0xff]
      %v3816 = vld [vmem:[#allocation3 + $0xd8] sm:$0xff]
      %v3817 = vld [vmem:[#allocation3 + $0xe0] sm:$0xff]
      %v3818 = vld [vmem:[#allocation3 + $0xe8] sm:$0xff]
      %v3819 = vld [vmem:[#allocation3 + $0xf0] sm:$0xff]
      %v3820 = vld [vmem:[#allocation3 + $0xf8] sm:$0xff]
      %v3821 = vld [vmem:[#allocation4] sm:$0x1]
      %v3822 = vadd.f32 %v3789, %v3790
      %v3823 = vadd.f32 %v3822, %v3791
      %v3824 = vadd.f32 %v3823, %v3792
      %v3825 = vadd.f32 %v3824, %v3793
      %v3826 = vadd.f32 %v3825, %v3794
      %v3827 = vadd.f32 %v3826, %v3795
      %v3828 = vadd.f32 %v3827, %v3796
      %v3829 = vadd.f32 %v3828, %v3797
      %v3830 = vadd.f32 %v3829, %v3798
      %v3831 = vadd.f32 %v3830, %v3799
      %v3832 = vadd.f32 %v3831, %v3800
      %v3833 = vadd.f32 %v3832, %v3801
      %v3834 = vadd.f32 %v3833, %v3802
      %v3835 = vadd.f32 %v3834, %v3803
      %v3836 = vadd.f32 %v3835, %v3804
      %v3837 = vadd.f32 %v3836, %v3805
      %v3838 = vadd.f32 %v3837, %v3806
      %v3839 = vadd.f32 %v3838, %v3807
      %v3840 = vadd.f32 %v3839, %v3808
      %v3841 = vadd.f32 %v3840, %v3809
      %v3842 = vadd.f32 %v3841, %v3810
      %v3843 = vadd.f32 %v3842, %v3811
      %v3844 = vadd.f32 %v3843, %v3812
      %v3845 = vadd.f32 %v3844, %v3813
      %v3846 = vadd.f32 %v3845, %v3814
      %v3847 = vadd.f32 %v3846, %v3815
      %v3848 = vadd.f32 %v3847, %v3816
      %v3849 = vadd.f32 %v3848, %v3817
      %v3850 = vadd.f32 %v3849, %v3818
      %v3851 = vadd.f32 %v3850, %v3819
      %v3852 = vadd.f32 %v3851, %v3820
      %v3853 = vrot.slane %v3852, 4
      %v3854 = vadd.f32 %v3852, %v3853
      %v3855 = vrot.slane %v3854, 2
      %v3856 = vadd.f32 %v3854, %v3855
      %v3857 = vrot.slane %v3856, 1
      %v3858 = vadd.f32 %v3856, %v3857
      %v3859 = vadd.f32 %v3821, %v3858
      %3860 = vst [vmem:[#allocation4] sm:$0x1] %v3859
      %v3861 = vld [vmem:[#allocation4 + $0x1] sm:$0x1]
      %v3862 = vmul.f32 %v3789, %v3789
      %v3863 = vmul.f32 %v3790, %v3790
      %v3864 = vmul.f32 %v3791, %v3791
      %v3865 = vmul.f32 %v3792, %v3792
      %v3866 = vmul.f32 %v3793, %v3793
      %v3867 = vmul.f32 %v3794, %v3794
      %v3868 = vmul.f32 %v3795, %v3795
      %v3869 = vmul.f32 %v3796, %v3796
      %v3870 = vmul.f32 %v3797, %v3797
      %v3871 = vmul.f32 %v3798, %v3798
      %v3872 = vmul.f32 %v3799, %v3799
      %v3873 = vmul.f32 %v3800, %v3800
      %v3874 = vmul.f32 %v3801, %v3801
      %v3875 = vmul.f32 %v3802, %v3802
      %v3876 = vmul.f32 %v3803, %v3803
      %v3877 = vmul.f32 %v3804, %v3804
      %v3878 = vmul.f32 %v3805, %v3805
      %v3879 = vmul.f32 %v3806, %v3806
      %v3880 = vmul.f32 %v3807, %v3807
      %v3881 = vmul.f32 %v3808, %v3808
      %v3882 = vmul.f32 %v3809, %v3809
      %v3883 = vmul.f32 %v3810, %v3810
      %v3884 = vmul.f32 %v3811, %v3811
      %v3885 = vmul.f32 %v3812, %v3812
      %v3886 = vmul.f32 %v3813, %v3813
      %v3887 = vmul.f32 %v3814, %v3814
      %v3888 = vmul.f32 %v3815, %v3815
      %v3889 = vmul.f32 %v3816, %v3816
      %v3890 = vmul.f32 %v3817, %v3817
      %v3891 = vmul.f32 %v3818, %v3818
      %v3892 = vmul.f32 %v3819, %v3819
      %v3893 = vmul.f32 %v3820, %v3820
      %v3894 = vadd.f32 %v3862, %v3863
      %v3895 = vadd.f32 %v3894, %v3864
      %v3896 = vadd.f32 %v3895, %v3865
      %v3897 = vadd.f32 %v3896, %v3866
      %v3898 = vadd.f32 %v3897, %v3867
      %v3899 = vadd.f32 %v3898, %v3868
      %v3900 = vadd.f32 %v3899, %v3869
      %v3901 = vadd.f32 %v3900, %v3870
      %v3902 = vadd.f32 %v3901, %v3871
      %v3903 = vadd.f32 %v3902, %v3872
      %v3904 = vadd.f32 %v3903, %v3873
      %v3905 = vadd.f32 %v3904, %v3874
      %v3906 = vadd.f32 %v3905, %v3875
      %v3907 = vadd.f32 %v3906, %v3876
      %v3908 = vadd.f32 %v3907, %v3877
      %v3909 = vadd.f32 %v3908, %v3878
      %v3910 = vadd.f32 %v3909, %v3879
      %v3911 = vadd.f32 %v3910, %v3880
      %v3912 = vadd.f32 %v3911, %v3881
      %v3913 = vadd.f32 %v3912, %v3882
      %v3914 = vadd.f32 %v3913, %v3883
      %v3915 = vadd.f32 %v3914, %v3884
      %v3916 = vadd.f32 %v3915, %v3885
      %v3917 = vadd.f32 %v3916, %v3886
      %v3918 = vadd.f32 %v3917, %v3887
      %v3919 = vadd.f32 %v3918, %v3888
      %v3920 = vadd.f32 %v3919, %v3889
      %v3921 = vadd.f32 %v3920, %v3890
      %v3922 = vadd.f32 %v3921, %v3891
      %v3923 = vadd.f32 %v3922, %v3892
      %v3924 = vadd.f32 %v3923, %v3893
      %v3925 = vrot.slane %v3924, 4
      %v3926 = vadd.f32 %v3924, %v3925
      %v3927 = vrot.slane %v3926, 2
      %v3928 = vadd.f32 %v3926, %v3927
      %v3929 = vrot.slane %v3928, 1
      %v3930 = vadd.f32 %v3928, %v3929
      %v3931 = vadd.f32 %v3861, %v3930
      %3932 = vst [vmem:[#allocation4 + $0x1] sm:$0x1] %v3931
      %3933 = vst [vmem:[%s195] sm:$0xff] %v3789
      %3934 = vst [vmem:[%s195 + $0x8] sm:$0xff] %v3790
      %3935 = vst [vmem:[%s195 + $0x10] sm:$0xff] %v3791
      %3936 = vst [vmem:[%s195 + $0x18] sm:$0xff] %v3792
      %3937 = vst [vmem:[%s195 + $0x20] sm:$0xff] %v3793
      %3938 = vst [vmem:[%s195 + $0x28] sm:$0xff] %v3794
      %3939 = vst [vmem:[%s195 + $0x30] sm:$0xff] %v3795
      %3940 = vst [vmem:[%s195 + $0x38] sm:$0xff] %v3796
      %3941 = vst [vmem:[%s195 + $0x40] sm:$0xff] %v3797
      %3942 = vst [vmem:[%s195 + $0x48] sm:$0xff] %v3798
      %3943 = vst [vmem:[%s195 + $0x50] sm:$0xff] %v3799
      %3944 = vst [vmem:[%s195 + $0x58] sm:$0xff] %v3800
      %3945 = vst [vmem:[%s195 + $0x60] sm:$0xff] %v3801
      %3946 = vst [vmem:[%s195 + $0x68] sm:$0xff] %v3802
      %3947 = vst [vmem:[%s195 + $0x70] sm:$0xff] %v3803
      %3948 = vst [vmem:[%s195 + $0x78] sm:$0xff] %v3804
      %3949 = vst [vmem:[%s195 + $0x80] sm:$0xff] %v3805
      %3950 = vst [vmem:[%s195 + $0x88] sm:$0xff] %v3806
      %3951 = vst [vmem:[%s195 + $0x90] sm:$0xff] %v3807
      %3952 = vst [vmem:[%s195 + $0x98] sm:$0xff] %v3808
      %3953 = vst [vmem:[%s195 + $0xa0] sm:$0xff] %v3809
      %3954 = vst [vmem:[%s195 + $0xa8] sm:$0xff] %v3810
      %3955 = vst [vmem:[%s195 + $0xb0] sm:$0xff] %v3811
      %3956 = vst [vmem:[%s195 + $0xb8] sm:$0xff] %v3812
      %3957 = vst [vmem:[%s195 + $0xc0] sm:$0xff] %v3813
      %3958 = vst [vmem:[%s195 + $0xc8] sm:$0xff] %v3814
      %3959 = vst [vmem:[%s195 + $0xd0] sm:$0xff] %v3815
      %3960 = vst [vmem:[%s195 + $0xd8] sm:$0xff] %v3816
      %3961 = vst [vmem:[%s195 + $0xe0] sm:$0xff] %v3817
      %3962 = vst [vmem:[%s195 + $0xe8] sm:$0xff] %v3818
      %3963 = vst [vmem:[%s195 + $0xf0] sm:$0xff] %v3819
      %3964 = vst [vmem:[%s195 + $0xf8] sm:$0xff] %v3820
      %v3965 = vld [vmem:[#allocation4] sm:$0x3]
      %3966 = vst [vmem:[%s4] sm:$0x3] %v3965
      %p3967 = scmp.lt.s32.totalorder %s16, 1
      %s3968 = scalar_select %p3967, %s16, 1
      %s3969 = smul.addr %s3968, 32
      %s3970 = smul.addr %s3969, 8
      %s3971 = scalar_lea.vmem %s3, %s3970
      // Predicated region
      $region37: #{basic_block_forward.4} parent=31 // pred_check
        %p3972 = pneg %p102
      $region38: #{basic_block_forward.4} parent=31 // pred_check_branch
        %3974 = sbr.rel (%p3972) target = $region40
      $region39: #{basic_block_forward.4} parent=31 // pred_region
        _
      $region40: #{basic_block_forward.4} parent=31 // pred_fallthru
        _
      // Predicated region
      $region41: #{basic_block_forward.4} parent=31 // pred_check
        %p3975 = pneg %p123
      $region42: #{basic_block_forward.4} parent=31 // pred_check_branch
        %3977 = sbr.rel (%p3975) target = $region44
      $region43: #{basic_block_forward.4} parent=31 // pred_region
        _
      $region44: #{basic_block_forward.4} parent=31 // pred_fallthru
        _
      // Predicated region
      $region45: #{basic_block_forward.4} parent=31 // pred_check
        %p3978 = pneg %p123
      $region46: #{basic_block_forward.4} parent=31 // pred_check_branch
        %3980 = sbr.rel (%p3978) target = $region48
      $region47: #{basic_block_forward.4} parent=31 // pred_region
        _
      $region48: #{basic_block_forward.4} parent=31 // pred_fallthru
        _
    $region32: #{basic_block_forward.4} parent=5 // pred_fallthru
      _
    %p3981 = scmp.le.s32.totalorder 2, %s11
    // Predicated region
    $region49: #{basic_block_forward.4} parent=5 // pred_check
      %p3982 = pneg %p3981
    $region50: #{basic_block_forward.4} parent=5 // pred_check_branch
      %3984 = sbr.rel (%p3982) target = $region52
    $region51: #{basic_block_forward.4} parent=5 // pred_region
      %s3985 = ssub.s32 %s11, 2
      // Predicated region
      $region53: #{basic_block_forward.4} parent=51 // pred_check
        %p3986 = pneg %p108
      $region54: #{basic_block_forward.4} parent=51 // pred_check_branch
        %3988 = sbr.rel (%p3986) target = $region56
      $region55: #{basic_block_forward.4} parent=51 // pred_region
        %p3989 = scmp.lt.s32.totalorder %s17, 1
        %s3990 = scalar_select %p3989, %s17, 1
        %s3991 = smul.addr %s3990, 32
        %s3992 = smul.addr %s3991, 8
        %s3993 = scalar_lea.vmem %s3, %s3992
      $region56: #{basic_block_forward.4} parent=51 // pred_fallthru
        _
    $region52: #{basic_block_forward.4} parent=5 // pred_fallthru
      _
  $region6: #{basic_block_forward.4} parent=0 // loop_footer
    %s15 = sadd.s32 1, %s11
  $region7: #{basic_block_forward.4} parent=0 // loop_footer_branch
    %10 = sbr.rel target = $region3
  $region8: #{basic_block_forward.4} parent=0 // loop_exit
    _

</llo_original>
